<compile_context>
chip_gen: v7x
topology: tpu7x:2x2x1
jax: 0.10.0
libtpu: 0.0.40
codegen_flags: <defaults>
</compile_context>

<pallas_src>
import functools

import jax
import jax.numpy as jnp
from jax.experimental import pallas as pl
from jax.experimental.pallas import tpu as pltpu


# --------------------------------------------------------------------------- #
# Fused GEMM + bias + LeakyReLU kernel
# --------------------------------------------------------------------------- #

def _fused_gemm_kernel(x_ref, w_ref, b_ref, o_ref, *, negative_slope):
    k = pl.program_id(2)

    @pl.when(k == 0)
    def _():
        o_ref[...] = jnp.zeros_like(o_ref)

    # bf16 x bf16 -> f32 accumulation on the MXU, accumulated in the resident
    # f32 output block (no separate scratch).
    o_ref[...] += jnp.dot(x_ref[...], w_ref[...],
                          preferred_element_type=jnp.float32)

    @pl.when(k == pl.num_programs(2) - 1)
    def _():
        y = o_ref[...] + b_ref[...]
        if negative_slope is not None:
            y = jnp.where(y >= 0, y, negative_slope * y)
        o_ref[...] = y


def _round_up(x, m):
    return (x + m - 1) // m * m


def _pick_k_tile(K, cap=512):
    """Pad K to a 128 multiple; pick the largest 128-multiple <= cap dividing it."""
    Kp = _round_up(K, 128)
    tk = 128
    for cand in range(128, min(cap, Kp) + 1, 128):
        if Kp % cand == 0:
            tk = cand
    return tk, Kp


def fused_gemm(x, w, b, *, negative_slope=None):
    """y = leaky_relu(x @ w + b); x:(M,K), w:(K,N), b:(N,).

    Tiled MXU GEMM: grid = (M tiles, N tiles, K tiles), K innermost reduction.
    Inputs are cast to bf16, accumulation and output are f32.
    """
    M, K = x.shape
    K2, N = w.shape
    assert K == K2

    # M aligned to 16 (bf16 sublane packing), N to 128 lanes, K per helper.
    TM = min(512, _round_up(M, 16))
    TN = min(256, _round_up(N, 128))
    TK, Kp = _pick_k_tile(K)
    Mp = _round_up(M, TM)
    Np = _round_up(N, TN)

    xp = jnp.pad(x.astype(jnp.bfloat16), ((0, Mp - M), (0, Kp - K)))
    wp = jnp.pad(w.astype(jnp.bfloat16), ((0, Kp - K), (0, Np - N)))
    bp = jnp.pad(b.astype(jnp.float32), (0, Np - N)).reshape(1, Np)

    kernel = functools.partial(_fused_gemm_kernel, negative_slope=negative_slope)
    out = pl.pallas_call(
        kernel,
        out_shape=jax.ShapeDtypeStruct((Mp, Np), jnp.float32),
        grid_spec=pltpu.PrefetchScalarGridSpec(
            num_scalar_prefetch=0,
            grid=(Mp // TM, Np // TN, Kp // TK),
            in_specs=[
                pl.BlockSpec((TM, TK), lambda i, j, k: (i, k)),
                pl.BlockSpec((TK, TN), lambda i, j, k: (k, j)),
                pl.BlockSpec((1, TN), lambda i, j, k: (0, j)),
            ],
            out_specs=pl.BlockSpec((TM, TN), lambda i, j, k: (i, j)),
        ),
        compiler_params=pltpu.CompilerParams(
            dimension_semantics=("parallel", "parallel", "arbitrary")),
    )(xp, wp, bp)
    return out[:M, :N]


# --------------------------------------------------------------------------- #
# NHWC conv-as-GEMM glue
# --------------------------------------------------------------------------- #

def im2col_nhwc(x, kh, kw, stride, pad):
    """x: (B, H, W, C) -> (B*Ho*Wo, kh*kw*C) patches, column order (kh, kw, C)."""
    B, H, W, C = x.shape
    Ho = (H + 2 * pad - kh) // stride + 1
    Wo = (W + 2 * pad - kw) // stride + 1
    xp = jnp.pad(x, ((0, 0), (pad, pad), (pad, pad), (0, 0)))
    cols = jnp.stack(
        [xp[:, i:i + stride * Ho:stride, j:j + stride * Wo:stride, :]
         for i in range(kh) for j in range(kw)],
        axis=3)                                      # (B, Ho, Wo, kh*kw, C)
    return cols.reshape(B * Ho * Wo, kh * kw * C), Ho, Wo


def conv2d_lrelu_nhwc(x, w, b, *, stride, pad, negative_slope=0.1):
    """PyTorch-equivalent Conv2d + LeakyReLU(0.1) on NHWC activations.

    x: (B, H, W, Cin) bf16/f32; w: PyTorch layout (Cout, Cin, kh, kw).
    Returns NHWC bf16 activation (B, Ho, Wo, Cout).
    """
    B = x.shape[0]
    Cout, Cin, kh, kw = w.shape
    patches, Ho, Wo = im2col_nhwc(x, kh, kw, stride, pad)
    # Reorder weight to match patch column order (kh, kw, Cin).
    wm = w.transpose(2, 3, 1, 0).reshape(kh * kw * Cin, Cout)
    y = fused_gemm(patches, wm, b, negative_slope=negative_slope)  # (B*Ho*Wo, Cout) f32
    return y.reshape(B, Ho, Wo, Cout).astype(jnp.bfloat16)


# --------------------------------------------------------------------------- #
# Model
# --------------------------------------------------------------------------- #

def init_params(key, color_channels, dim):
    specs = [
        ("c1", (64, color_channels, 3, 3)),
        ("c2", (128, 64, 4, 4)),
        ("c3", (128, 128, 3, 3)),
        ("c4", (256, 128, 4, 4)),
        ("c5", (256, 256, 3, 3)),
        ("c6", (512, 256, 4, 4)),
        ("c7", (512, 512, 3, 3)),
    ]
    keys = jax.random.split(key, len(specs) + 1)
    params = {}
    for k, (name, shp) in zip(keys[:-1], specs):
        params[name + "_w"] = 0.02 * jax.random.normal(k, shp, jnp.float32)
        params[name + "_b"] = jnp.zeros((shp[0],), jnp.float32)
    fc_in = 512 * (dim // 8) ** 2
    params["fc1_w"] = 0.02 * jax.random.normal(keys[-1], (1, fc_in), jnp.float32)
    params["fc1_b"] = jnp.zeros((1,), jnp.float32)
    return params


def discriminator_sngan_forward(params, x, dropout_p=0.0):
    # TODO(synk): dropout2d is only implemented for the default dropout_p == 0.0
    # (identity, matching the module's default forward call).
    B = x.shape[0]
    # Single NCHW -> NHWC transpose; activations stay NHWC (bf16) between layers.
    x = x.transpose(0, 2, 3, 1).astype(jnp.bfloat16)
    x = conv2d_lrelu_nhwc(x, params["c1_w"], params["c1_b"], stride=1, pad=1)
    x = conv2d_lrelu_nhwc(x, params["c2_w"], params["c2_b"], stride=2, pad=1)
    x = conv2d_lrelu_nhwc(x, params["c3_w"], params["c3_b"], stride=1, pad=1)
    x = conv2d_lrelu_nhwc(x, params["c4_w"], params["c4_b"], stride=2, pad=1)
    x = conv2d_lrelu_nhwc(x, params["c5_w"], params["c5_b"], stride=1, pad=1)
    x = conv2d_lrelu_nhwc(x, params["c6_w"], params["c6_b"], stride=2, pad=1)
    x = conv2d_lrelu_nhwc(x, params["c7_w"], params["c7_b"], stride=1, pad=1)

    # x: (B, dim//8, dim//8, 512) NHWC.  PyTorch flattens the NCHW tensor, so
    # reorder the (tiny) FC weight to NHWC-flatten order instead of transposing
    # the activation.
    _, hh, ww, C = x.shape
    x_flat = x.reshape(B, hh * ww * C)
    w_fc = (params["fc1_w"].reshape(1, C, hh, ww)
            .transpose(0, 2, 3, 1).reshape(1, hh * ww * C))
    # Few-thousand-FLOP (B x K)@(K x 1) dot: plain jnp.dot (per perf review, a
    # dedicated pallas_call here is pure launch + masked-store overhead).
    y = jnp.dot(x_flat, w_fc.T.astype(x_flat.dtype),
                preferred_element_type=jnp.float32) + params["fc1_b"]
    return y  # (B, 1) float32


if __name__ == "__main__":
    key = jax.random.PRNGKey(0)
    pkey, xkey = jax.random.split(key)
    B, C, DIM = 2, 3, 16          # args.color_channels = 3, args.dim = 16
    params = init_params(pkey, C, DIM)
    x = jax.random.normal(xkey, (B, C, DIM, DIM), dtype=jnp.float32)

    fwd = jax.jit(discriminator_sngan_forward)
    y = fwd(params, x)
    y = jax.block_until_ready(y)
    assert y.shape == (B, 1), y.shape
    assert y.dtype == jnp.float32
    print("KERNEL_OK")
</pallas_src>

<mosaic_0001>
module attributes {stable_mosaic.version = 11 : i64} {
  func.func @_fused_gemm_kernel(%arg0: i32, %arg1: i32, %arg2: i32, %arg3: memref<512x128xbf16, #tpu.memory_space<vmem>>, %arg4: memref<128x128xbf16, #tpu.memory_space<vmem>>, %arg5: memref<1x128xf32, #tpu.memory_space<vmem>>, %arg6: memref<512x128xf32, #tpu.memory_space<vmem>>) attributes {dimension_semantics = [#tpu.dimension_semantics<parallel>, #tpu.dimension_semantics<parallel>, #tpu.dimension_semantics<arbitrary>], iteration_bounds = array<i64: 1, 1, 1>, scalar_prefetch = 0 : i64, scratch_operands = 0 : i64, tpu.core_type = #tpu.core_type<tc>, window_params = [{transform_indices = @transform_0, window_bounds = array<i64: 512, 128>}, {transform_indices = @transform_1, window_bounds = array<i64: 128, 128>}, {transform_indices = @transform_2, window_bounds = array<i64: 1, 128>}, {transform_indices = @transform_3, window_bounds = array<i64: 512, 128>}]} {
    %c0_i32 = arith.constant 0 : i32
    %0 = arith.cmpi eq, %arg2, %c0_i32 : i32
    %1 = arith.extui %0 : i1 to i32
    %c0_i32_0 = arith.constant 0 : i32
    %2 = arith.cmpi ne, %1, %c0_i32_0 : i32
    scf.if %2 {
      %cst_10 = arith.constant 0.000000e+00 : f32
      %12 = vector.broadcast %cst_10 : f32 to vector<512x128xf32>
      %c0_11 = arith.constant 0 : index
      %c0_12 = arith.constant 0 : index
      %13 = vector.load %arg6[%c0_11, %c0_12] : memref<512x128xf32, #tpu.memory_space<vmem>>, vector<512x128xf32>
      tpu.vector_store %arg6[%c0_11, %c0_12], %12 {strides = array<i32>} : memref<512x128xf32, #tpu.memory_space<vmem>>, vector<512x128xf32>,
    } else {
    }
    %c0 = arith.constant 0 : index
    %c0_1 = arith.constant 0 : index
    %3 = vector.load %arg6[%c0, %c0_1] : memref<512x128xf32, #tpu.memory_space<vmem>>, vector<512x128xf32>
    %c0_2 = arith.constant 0 : index
    %c0_3 = arith.constant 0 : index
    %4 = vector.load %arg3[%c0_2, %c0_3] : memref<512x128xbf16, #tpu.memory_space<vmem>>, vector<512x128xbf16>
    %c0_4 = arith.constant 0 : index
    %c0_5 = arith.constant 0 : index
    %5 = vector.load %arg4[%c0_4, %c0_5] : memref<128x128xbf16, #tpu.memory_space<vmem>>, vector<128x128xbf16>
    %cst = arith.constant dense<0.000000e+00> : vector<512x128xf32>
    %6 = tpu.matmul %4, %5, %cst {dimension_numbers = #tpu.dot_dimension_numbers<[1], [0], [0], [1], [0, 0, 1, 1], [], []>} : vector<512x128xbf16>, vector<128x128xbf16>, vector<512x128xf32> -> vector<512x128xf32>
    %7 = arith.addf %3, %6 : vector<512x128xf32>
    %c0_6 = arith.constant 0 : index
    %c0_7 = arith.constant 0 : index
    %8 = vector.load %arg6[%c0_6, %c0_7] : memref<512x128xf32, #tpu.memory_space<vmem>>, vector<512x128xf32>
    tpu.vector_store %arg6[%c0_6, %c0_7], %7 {strides = array<i32>} : memref<512x128xf32, #tpu.memory_space<vmem>>, vector<512x128xf32>,
    %c0_i32_8 = arith.constant 0 : i32
    %9 = arith.cmpi eq, %arg2, %c0_i32_8 : i32
    %10 = arith.extui %9 : i1 to i32
    %c0_i32_9 = arith.constant 0 : i32
    %11 = arith.cmpi ne, %10, %c0_i32_9 : i32
    scf.if %11 {
      %c0_10 = arith.constant 0 : index
      %c0_11 = arith.constant 0 : index
      %12 = vector.load %arg6[%c0_10, %c0_11] : memref<512x128xf32, #tpu.memory_space<vmem>>, vector<512x128xf32>
      %c0_12 = arith.constant 0 : index
      %c0_13 = arith.constant 0 : index
      %13 = vector.load %arg5[%c0_12, %c0_13] : memref<1x128xf32, #tpu.memory_space<vmem>>, vector<1x128xf32>
      %14 = vector.broadcast %13 : vector<1x128xf32> to vector<512x128xf32>
      %15 = arith.addf %12, %14 : vector<512x128xf32>
      %cst_14 = arith.constant 0.000000e+00 : f32
      %16 = vector.broadcast %cst_14 : f32 to vector<512x128xf32>
      %17 = arith.cmpf oge, %15, %16 : vector<512x128xf32>
      %cst_15 = arith.constant 1.000000e-01 : f32
      %18 = vector.broadcast %cst_15 : f32 to vector<512x128xf32>
      %19 = arith.mulf %18, %15 : vector<512x128xf32>
      %20 = arith.select %17, %15, %19 : vector<512x128xi1>, vector<512x128xf32>
      %c0_16 = arith.constant 0 : index
      %c0_17 = arith.constant 0 : index
      %21 = vector.load %arg6[%c0_16, %c0_17] : memref<512x128xf32, #tpu.memory_space<vmem>>, vector<512x128xf32>
      tpu.vector_store %arg6[%c0_16, %c0_17], %20 {strides = array<i32>} : memref<512x128xf32, #tpu.memory_space<vmem>>, vector<512x128xf32>,
    } else {
    }
    return
  }
  func.func @transform_0(%arg0: i32, %arg1: i32, %arg2: i32) -> (i32, i32) {
    %c0_i32 = arith.constant 0 : i32
    return %arg0, %arg2 : i32, i32
  }
  func.func @transform_1(%arg0: i32, %arg1: i32, %arg2: i32) -> (i32, i32) {
    %c0_i32 = arith.constant 0 : i32
    return %arg2, %arg1 : i32, i32
  }
  func.func @transform_2(%arg0: i32, %arg1: i32, %arg2: i32) -> (i32, i32) {
    %c0_i32 = arith.constant 0 : i32
    %c0_i32_0 = arith.constant 0 : i32
    return %c0_i32, %arg1 : i32, i32
  }
  func.func @transform_3(%arg0: i32, %arg1: i32, %arg2: i32) -> (i32, i32) {
    %c0_i32 = arith.constant 0 : i32
    return %arg0, %arg1 : i32, i32
  }
}

module attributes {stable_mosaic.version = 11 : i64} {
  func.func @_fused_gemm_kernel(%arg0: i32, %arg1: i32, %arg2: i32, %arg3: memref<128x512xbf16, #tpu.memory_space<vmem>>, %arg4: memref<512x128xbf16, #tpu.memory_space<vmem>>, %arg5: memref<1x128xf32, #tpu.memory_space<vmem>>, %arg6: memref<128x128xf32, #tpu.memory_space<vmem>>) attributes {dimension_semantics = [#tpu.dimension_semantics<parallel>, #tpu.dimension_semantics<parallel>, #tpu.dimension_semantics<arbitrary>], iteration_bounds = array<i64: 1, 1, 2>, scalar_prefetch = 0 : i64, scratch_operands = 0 : i64, tpu.core_type = #tpu.core_type<tc>, window_params = [{transform_indices = @transform_0, window_bounds = array<i64: 128, 512>}, {transform_indices = @transform_1, window_bounds = array<i64: 512, 128>}, {transform_indices = @transform_2, window_bounds = array<i64: 1, 128>}, {transform_indices = @transform_3, window_bounds = array<i64: 128, 128>}]} {
    %c0_i32 = arith.constant 0 : i32
    %0 = arith.cmpi eq, %arg2, %c0_i32 : i32
    %1 = arith.extui %0 : i1 to i32
    %c0_i32_0 = arith.constant 0 : i32
    %2 = arith.cmpi ne, %1, %c0_i32_0 : i32
    scf.if %2 {
      %cst_9 = arith.constant 0.000000e+00 : f32
      %12 = vector.broadcast %cst_9 : f32 to vector<128x128xf32>
      %c0_10 = arith.constant 0 : index
      %c0_11 = arith.constant 0 : index
      %13 = vector.load %arg6[%c0_10, %c0_11] : memref<128x128xf32, #tpu.memory_space<vmem>>, vector<128x128xf32>
      tpu.vector_store %arg6[%c0_10, %c0_11], %12 {strides = array<i32>} : memref<128x128xf32, #tpu.memory_space<vmem>>, vector<128x128xf32>,
    } else {
    }
    %c0 = arith.constant 0 : index
    %c0_1 = arith.constant 0 : index
    %3 = vector.load %arg6[%c0, %c0_1] : memref<128x128xf32, #tpu.memory_space<vmem>>, vector<128x128xf32>
    %c0_2 = arith.constant 0 : index
    %c0_3 = arith.constant 0 : index
    %4 = vector.load %arg3[%c0_2, %c0_3] : memref<128x512xbf16, #tpu.memory_space<vmem>>, vector<128x512xbf16>
    %c0_4 = arith.constant 0 : index
    %c0_5 = arith.constant 0 : index
    %5 = vector.load %arg4[%c0_4, %c0_5] : memref<512x128xbf16, #tpu.memory_space<vmem>>, vector<512x128xbf16>
    %cst = arith.constant dense<0.000000e+00> : vector<128x128xf32>
    %6 = tpu.matmul %4, %5, %cst {dimension_numbers = #tpu.dot_dimension_numbers<[1], [0], [0], [1], [0, 0, 1, 1], [], []>} : vector<128x512xbf16>, vector<512x128xbf16>, vector<128x128xf32> -> vector<128x128xf32>
    %7 = arith.addf %3, %6 : vector<128x128xf32>
    %c0_6 = arith.constant 0 : index
    %c0_7 = arith.constant 0 : index
    %8 = vector.load %arg6[%c0_6, %c0_7] : memref<128x128xf32, #tpu.memory_space<vmem>>, vector<128x128xf32>
    tpu.vector_store %arg6[%c0_6, %c0_7], %7 {strides = array<i32>} : memref<128x128xf32, #tpu.memory_space<vmem>>, vector<128x128xf32>,
    %c1_i32 = arith.constant 1 : i32
    %9 = arith.cmpi eq, %arg2, %c1_i32 : i32
    %10 = arith.extui %9 : i1 to i32
    %c0_i32_8 = arith.constant 0 : i32
    %11 = arith.cmpi ne, %10, %c0_i32_8 : i32
    scf.if %11 {
      %c0_9 = arith.constant 0 : index
      %c0_10 = arith.constant 0 : index
      %12 = vector.load %arg6[%c0_9, %c0_10] : memref<128x128xf32, #tpu.memory_space<vmem>>, vector<128x128xf32>
      %c0_11 = arith.constant 0 : index
      %c0_12 = arith.constant 0 : index
      %13 = vector.load %arg5[%c0_11, %c0_12] : memref<1x128xf32, #tpu.memory_space<vmem>>, vector<1x128xf32>
      %14 = vector.broadcast %13 : vector<1x128xf32> to vector<128x128xf32>
      %15 = arith.addf %12, %14 : vector<128x128xf32>
      %cst_13 = arith.constant 0.000000e+00 : f32
      %16 = vector.broadcast %cst_13 : f32 to vector<128x128xf32>
      %17 = arith.cmpf oge, %15, %16 : vector<128x128xf32>
      %cst_14 = arith.constant 1.000000e-01 : f32
      %18 = vector.broadcast %cst_14 : f32 to vector<128x128xf32>
      %19 = arith.mulf %18, %15 : vector<128x128xf32>
      %20 = arith.select %17, %15, %19 : vector<128x128xi1>, vector<128x128xf32>
      %c0_15 = arith.constant 0 : index
      %c0_16 = arith.constant 0 : index
      %21 = vector.load %arg6[%c0_15, %c0_16] : memref<128x128xf32, #tpu.memory_space<vmem>>, vector<128x128xf32>
      tpu.vector_store %arg6[%c0_15, %c0_16], %20 {strides = array<i32>} : memref<128x128xf32, #tpu.memory_space<vmem>>, vector<128x128xf32>,
    } else {
    }
    return
  }
  func.func @transform_0(%arg0: i32, %arg1: i32, %arg2: i32) -> (i32, i32) {
    %c0_i32 = arith.constant 0 : i32
    return %arg0, %arg2 : i32, i32
  }
  func.func @transform_1(%arg0: i32, %arg1: i32, %arg2: i32) -> (i32, i32) {
    %c0_i32 = arith.constant 0 : i32
    return %arg2, %arg1 : i32, i32
  }
  func.func @transform_2(%arg0: i32, %arg1: i32, %arg2: i32) -> (i32, i32) {
    %c0_i32 = arith.constant 0 : i32
    %c0_i32_0 = arith.constant 0 : i32
    return %c0_i32, %arg1 : i32, i32
  }
  func.func @transform_3(%arg0: i32, %arg1: i32, %arg2: i32) -> (i32, i32) {
    %c0_i32 = arith.constant 0 : i32
    return %arg0, %arg1 : i32, i32
  }
}

module attributes {stable_mosaic.version = 11 : i64} {
  func.func @_fused_gemm_kernel(%arg0: i32, %arg1: i32, %arg2: i32, %arg3: memref<128x384xbf16, #tpu.memory_space<vmem>>, %arg4: memref<384x128xbf16, #tpu.memory_space<vmem>>, %arg5: memref<1x128xf32, #tpu.memory_space<vmem>>, %arg6: memref<128x128xf32, #tpu.memory_space<vmem>>) attributes {dimension_semantics = [#tpu.dimension_semantics<parallel>, #tpu.dimension_semantics<parallel>, #tpu.dimension_semantics<arbitrary>], iteration_bounds = array<i64: 1, 1, 3>, scalar_prefetch = 0 : i64, scratch_operands = 0 : i64, tpu.core_type = #tpu.core_type<tc>, window_params = [{transform_indices = @transform_0, window_bounds = array<i64: 128, 384>}, {transform_indices = @transform_1, window_bounds = array<i64: 384, 128>}, {transform_indices = @transform_2, window_bounds = array<i64: 1, 128>}, {transform_indices = @transform_3, window_bounds = array<i64: 128, 128>}]} {
    %c0_i32 = arith.constant 0 : i32
    %0 = arith.cmpi eq, %arg2, %c0_i32 : i32
    %1 = arith.extui %0 : i1 to i32
    %c0_i32_0 = arith.constant 0 : i32
    %2 = arith.cmpi ne, %1, %c0_i32_0 : i32
    scf.if %2 {
      %cst_9 = arith.constant 0.000000e+00 : f32
      %12 = vector.broadcast %cst_9 : f32 to vector<128x128xf32>
      %c0_10 = arith.constant 0 : index
      %c0_11 = arith.constant 0 : index
      %13 = vector.load %arg6[%c0_10, %c0_11] : memref<128x128xf32, #tpu.memory_space<vmem>>, vector<128x128xf32>
      tpu.vector_store %arg6[%c0_10, %c0_11], %12 {strides = array<i32>} : memref<128x128xf32, #tpu.memory_space<vmem>>, vector<128x128xf32>,
    } else {
    }
    %c0 = arith.constant 0 : index
    %c0_1 = arith.constant 0 : index
    %3 = vector.load %arg6[%c0, %c0_1] : memref<128x128xf32, #tpu.memory_space<vmem>>, vector<128x128xf32>
    %c0_2 = arith.constant 0 : index
    %c0_3 = arith.constant 0 : index
    %4 = vector.load %arg3[%c0_2, %c0_3] : memref<128x384xbf16, #tpu.memory_space<vmem>>, vector<128x384xbf16>
    %c0_4 = arith.constant 0 : index
    %c0_5 = arith.constant 0 : index
    %5 = vector.load %arg4[%c0_4, %c0_5] : memref<384x128xbf16, #tpu.memory_space<vmem>>, vector<384x128xbf16>
    %cst = arith.constant dense<0.000000e+00> : vector<128x128xf32>
    %6 = tpu.matmul %4, %5, %cst {dimension_numbers = #tpu.dot_dimension_numbers<[1], [0], [0], [1], [0, 0, 1, 1], [], []>} : vector<128x384xbf16>, vector<384x128xbf16>, vector<128x128xf32> -> vector<128x128xf32>
    %7 = arith.addf %3, %6 : vector<128x128xf32>
    %c0_6 = arith.constant 0 : index
    %c0_7 = arith.constant 0 : index
    %8 = vector.load %arg6[%c0_6, %c0_7] : memref<128x128xf32, #tpu.memory_space<vmem>>, vector<128x128xf32>
    tpu.vector_store %arg6[%c0_6, %c0_7], %7 {strides = array<i32>} : memref<128x128xf32, #tpu.memory_space<vmem>>, vector<128x128xf32>,
    %c2_i32 = arith.constant 2 : i32
    %9 = arith.cmpi eq, %arg2, %c2_i32 : i32
    %10 = arith.extui %9 : i1 to i32
    %c0_i32_8 = arith.constant 0 : i32
    %11 = arith.cmpi ne, %10, %c0_i32_8 : i32
    scf.if %11 {
      %c0_9 = arith.constant 0 : index
      %c0_10 = arith.constant 0 : index
      %12 = vector.load %arg6[%c0_9, %c0_10] : memref<128x128xf32, #tpu.memory_space<vmem>>, vector<128x128xf32>
      %c0_11 = arith.constant 0 : index
      %c0_12 = arith.constant 0 : index
      %13 = vector.load %arg5[%c0_11, %c0_12] : memref<1x128xf32, #tpu.memory_space<vmem>>, vector<1x128xf32>
      %14 = vector.broadcast %13 : vector<1x128xf32> to vector<128x128xf32>
      %15 = arith.addf %12, %14 : vector<128x128xf32>
      %cst_13 = arith.constant 0.000000e+00 : f32
      %16 = vector.broadcast %cst_13 : f32 to vector<128x128xf32>
      %17 = arith.cmpf oge, %15, %16 : vector<128x128xf32>
      %cst_14 = arith.constant 1.000000e-01 : f32
      %18 = vector.broadcast %cst_14 : f32 to vector<128x128xf32>
      %19 = arith.mulf %18, %15 : vector<128x128xf32>
      %20 = arith.select %17, %15, %19 : vector<128x128xi1>, vector<128x128xf32>
      %c0_15 = arith.constant 0 : index
      %c0_16 = arith.constant 0 : index
      %21 = vector.load %arg6[%c0_15, %c0_16] : memref<128x128xf32, #tpu.memory_space<vmem>>, vector<128x128xf32>
      tpu.vector_store %arg6[%c0_15, %c0_16], %20 {strides = array<i32>} : memref<128x128xf32, #tpu.memory_space<vmem>>, vector<128x128xf32>,
    } else {
    }
    return
  }
  func.func @transform_0(%arg0: i32, %arg1: i32, %arg2: i32) -> (i32, i32) {
    %c0_i32 = arith.constant 0 : i32
    return %arg0, %arg2 : i32, i32
  }
  func.func @transform_1(%arg0: i32, %arg1: i32, %arg2: i32) -> (i32, i32) {
    %c0_i32 = arith.constant 0 : i32
    return %arg2, %arg1 : i32, i32
  }
  func.func @transform_2(%arg0: i32, %arg1: i32, %arg2: i32) -> (i32, i32) {
    %c0_i32 = arith.constant 0 : i32
    %c0_i32_0 = arith.constant 0 : i32
    return %c0_i32, %arg1 : i32, i32
  }
  func.func @transform_3(%arg0: i32, %arg1: i32, %arg2: i32) -> (i32, i32) {
    %c0_i32 = arith.constant 0 : i32
    return %arg0, %arg1 : i32, i32
  }
}

module attributes {stable_mosaic.version = 11 : i64} {
  func.func @_fused_gemm_kernel(%arg0: i32, %arg1: i32, %arg2: i32, %arg3: memref<32x512xbf16, #tpu.memory_space<vmem>>, %arg4: memref<512x256xbf16, #tpu.memory_space<vmem>>, %arg5: memref<1x256xf32, #tpu.memory_space<vmem>>, %arg6: memref<32x256xf32, #tpu.memory_space<vmem>>) attributes {dimension_semantics = [#tpu.dimension_semantics<parallel>, #tpu.dimension_semantics<parallel>, #tpu.dimension_semantics<arbitrary>], iteration_bounds = array<i64: 1, 1, 4>, scalar_prefetch = 0 : i64, scratch_operands = 0 : i64, tpu.core_type = #tpu.core_type<tc>, window_params = [{transform_indices = @transform_0, window_bounds = array<i64: 32, 512>}, {transform_indices = @transform_1, window_bounds = array<i64: 512, 256>}, {transform_indices = @transform_2, window_bounds = array<i64: 1, 256>}, {transform_indices = @transform_3, window_bounds = array<i64: 32, 256>}]} {
    %c0_i32 = arith.constant 0 : i32
    %0 = arith.cmpi eq, %arg2, %c0_i32 : i32
    %1 = arith.extui %0 : i1 to i32
    %c0_i32_0 = arith.constant 0 : i32
    %2 = arith.cmpi ne, %1, %c0_i32_0 : i32
    scf.if %2 {
      %cst_9 = arith.constant 0.000000e+00 : f32
      %12 = vector.broadcast %cst_9 : f32 to vector<32x256xf32>
      %c0_10 = arith.constant 0 : index
      %c0_11 = arith.constant 0 : index
      %13 = vector.load %arg6[%c0_10, %c0_11] : memref<32x256xf32, #tpu.memory_space<vmem>>, vector<32x256xf32>
      tpu.vector_store %arg6[%c0_10, %c0_11], %12 {strides = array<i32>} : memref<32x256xf32, #tpu.memory_space<vmem>>, vector<32x256xf32>,
    } else {
    }
    %c0 = arith.constant 0 : index
    %c0_1 = arith.constant 0 : index
    %3 = vector.load %arg6[%c0, %c0_1] : memref<32x256xf32, #tpu.memory_space<vmem>>, vector<32x256xf32>
    %c0_2 = arith.constant 0 : index
    %c0_3 = arith.constant 0 : index
    %4 = vector.load %arg3[%c0_2, %c0_3] : memref<32x512xbf16, #tpu.memory_space<vmem>>, vector<32x512xbf16>
    %c0_4 = arith.constant 0 : index
    %c0_5 = arith.constant 0 : index
    %5 = vector.load %arg4[%c0_4, %c0_5] : memref<512x256xbf16, #tpu.memory_space<vmem>>, vector<512x256xbf16>
    %cst = arith.constant dense<0.000000e+00> : vector<32x256xf32>
    %6 = tpu.matmul %4, %5, %cst {dimension_numbers = #tpu.dot_dimension_numbers<[1], [0], [0], [1], [0, 0, 1, 1], [], []>} : vector<32x512xbf16>, vector<512x256xbf16>, vector<32x256xf32> -> vector<32x256xf32>
    %7 = arith.addf %3, %6 : vector<32x256xf32>
    %c0_6 = arith.constant 0 : index
    %c0_7 = arith.constant 0 : index
    %8 = vector.load %arg6[%c0_6, %c0_7] : memref<32x256xf32, #tpu.memory_space<vmem>>, vector<32x256xf32>
    tpu.vector_store %arg6[%c0_6, %c0_7], %7 {strides = array<i32>} : memref<32x256xf32, #tpu.memory_space<vmem>>, vector<32x256xf32>,
    %c3_i32 = arith.constant 3 : i32
    %9 = arith.cmpi eq, %arg2, %c3_i32 : i32
    %10 = arith.extui %9 : i1 to i32
    %c0_i32_8 = arith.constant 0 : i32
    %11 = arith.cmpi ne, %10, %c0_i32_8 : i32
    scf.if %11 {
      %c0_9 = arith.constant 0 : index
      %c0_10 = arith.constant 0 : index
      %12 = vector.load %arg6[%c0_9, %c0_10] : memref<32x256xf32, #tpu.memory_space<vmem>>, vector<32x256xf32>
      %c0_11 = arith.constant 0 : index
      %c0_12 = arith.constant 0 : index
      %13 = vector.load %arg5[%c0_11, %c0_12] : memref<1x256xf32, #tpu.memory_space<vmem>>, vector<1x256xf32>
      %14 = vector.broadcast %13 : vector<1x256xf32> to vector<32x256xf32>
      %15 = arith.addf %12, %14 : vector<32x256xf32>
      %cst_13 = arith.constant 0.000000e+00 : f32
      %16 = vector.broadcast %cst_13 : f32 to vector<32x256xf32>
      %17 = arith.cmpf oge, %15, %16 : vector<32x256xf32>
      %cst_14 = arith.constant 1.000000e-01 : f32
      %18 = vector.broadcast %cst_14 : f32 to vector<32x256xf32>
      %19 = arith.mulf %18, %15 : vector<32x256xf32>
      %20 = arith.select %17, %15, %19 : vector<32x256xi1>, vector<32x256xf32>
      %c0_15 = arith.constant 0 : index
      %c0_16 = arith.constant 0 : index
      %21 = vector.load %arg6[%c0_15, %c0_16] : memref<32x256xf32, #tpu.memory_space<vmem>>, vector<32x256xf32>
      tpu.vector_store %arg6[%c0_15, %c0_16], %20 {strides = array<i32>} : memref<32x256xf32, #tpu.memory_space<vmem>>, vector<32x256xf32>,
    } else {
    }
    return
  }
  func.func @transform_0(%arg0: i32, %arg1: i32, %arg2: i32) -> (i32, i32) {
    %c0_i32 = arith.constant 0 : i32
    return %arg0, %arg2 : i32, i32
  }
  func.func @transform_1(%arg0: i32, %arg1: i32, %arg2: i32) -> (i32, i32) {
    %c0_i32 = arith.constant 0 : i32
    return %arg2, %arg1 : i32, i32
  }
  func.func @transform_2(%arg0: i32, %arg1: i32, %arg2: i32) -> (i32, i32) {
    %c0_i32 = arith.constant 0 : i32
    %c0_i32_0 = arith.constant 0 : i32
    return %c0_i32, %arg1 : i32, i32
  }
  func.func @transform_3(%arg0: i32, %arg1: i32, %arg2: i32) -> (i32, i32) {
    %c0_i32 = arith.constant 0 : i32
    return %arg0, %arg1 : i32, i32
  }
}

module attributes {stable_mosaic.version = 11 : i64} {
  func.func @_fused_gemm_kernel(%arg0: i32, %arg1: i32, %arg2: i32, %arg3: memref<32x384xbf16, #tpu.memory_space<vmem>>, %arg4: memref<384x256xbf16, #tpu.memory_space<vmem>>, %arg5: memref<1x256xf32, #tpu.memory_space<vmem>>, %arg6: memref<32x256xf32, #tpu.memory_space<vmem>>) attributes {dimension_semantics = [#tpu.dimension_semantics<parallel>, #tpu.dimension_semantics<parallel>, #tpu.dimension_semantics<arbitrary>], iteration_bounds = array<i64: 1, 1, 6>, scalar_prefetch = 0 : i64, scratch_operands = 0 : i64, tpu.core_type = #tpu.core_type<tc>, window_params = [{transform_indices = @transform_0, window_bounds = array<i64: 32, 384>}, {transform_indices = @transform_1, window_bounds = array<i64: 384, 256>}, {transform_indices = @transform_2, window_bounds = array<i64: 1, 256>}, {transform_indices = @transform_3, window_bounds = array<i64: 32, 256>}]} {
    %c0_i32 = arith.constant 0 : i32
    %0 = arith.cmpi eq, %arg2, %c0_i32 : i32
    %1 = arith.extui %0 : i1 to i32
    %c0_i32_0 = arith.constant 0 : i32
    %2 = arith.cmpi ne, %1, %c0_i32_0 : i32
    scf.if %2 {
      %cst_9 = arith.constant 0.000000e+00 : f32
      %12 = vector.broadcast %cst_9 : f32 to vector<32x256xf32>
      %c0_10 = arith.constant 0 : index
      %c0_11 = arith.constant 0 : index
      %13 = vector.load %arg6[%c0_10, %c0_11] : memref<32x256xf32, #tpu.memory_space<vmem>>, vector<32x256xf32>
      tpu.vector_store %arg6[%c0_10, %c0_11], %12 {strides = array<i32>} : memref<32x256xf32, #tpu.memory_space<vmem>>, vector<32x256xf32>,
    } else {
    }
    %c0 = arith.constant 0 : index
    %c0_1 = arith.constant 0 : index
    %3 = vector.load %arg6[%c0, %c0_1] : memref<32x256xf32, #tpu.memory_space<vmem>>, vector<32x256xf32>
    %c0_2 = arith.constant 0 : index
    %c0_3 = arith.constant 0 : index
    %4 = vector.load %arg3[%c0_2, %c0_3] : memref<32x384xbf16, #tpu.memory_space<vmem>>, vector<32x384xbf16>
    %c0_4 = arith.constant 0 : index
    %c0_5 = arith.constant 0 : index
    %5 = vector.load %arg4[%c0_4, %c0_5] : memref<384x256xbf16, #tpu.memory_space<vmem>>, vector<384x256xbf16>
    %cst = arith.constant dense<0.000000e+00> : vector<32x256xf32>
    %6 = tpu.matmul %4, %5, %cst {dimension_numbers = #tpu.dot_dimension_numbers<[1], [0], [0], [1], [0, 0, 1, 1], [], []>} : vector<32x384xbf16>, vector<384x256xbf16>, vector<32x256xf32> -> vector<32x256xf32>
    %7 = arith.addf %3, %6 : vector<32x256xf32>
    %c0_6 = arith.constant 0 : index
    %c0_7 = arith.constant 0 : index
    %8 = vector.load %arg6[%c0_6, %c0_7] : memref<32x256xf32, #tpu.memory_space<vmem>>, vector<32x256xf32>
    tpu.vector_store %arg6[%c0_6, %c0_7], %7 {strides = array<i32>} : memref<32x256xf32, #tpu.memory_space<vmem>>, vector<32x256xf32>,
    %c5_i32 = arith.constant 5 : i32
    %9 = arith.cmpi eq, %arg2, %c5_i32 : i32
    %10 = arith.extui %9 : i1 to i32
    %c0_i32_8 = arith.constant 0 : i32
    %11 = arith.cmpi ne, %10, %c0_i32_8 : i32
    scf.if %11 {
      %c0_9 = arith.constant 0 : index
      %c0_10 = arith.constant 0 : index
      %12 = vector.load %arg6[%c0_9, %c0_10] : memref<32x256xf32, #tpu.memory_space<vmem>>, vector<32x256xf32>
      %c0_11 = arith.constant 0 : index
      %c0_12 = arith.constant 0 : index
      %13 = vector.load %arg5[%c0_11, %c0_12] : memref<1x256xf32, #tpu.memory_space<vmem>>, vector<1x256xf32>
      %14 = vector.broadcast %13 : vector<1x256xf32> to vector<32x256xf32>
      %15 = arith.addf %12, %14 : vector<32x256xf32>
      %cst_13 = arith.constant 0.000000e+00 : f32
      %16 = vector.broadcast %cst_13 : f32 to vector<32x256xf32>
      %17 = arith.cmpf oge, %15, %16 : vector<32x256xf32>
      %cst_14 = arith.constant 1.000000e-01 : f32
      %18 = vector.broadcast %cst_14 : f32 to vector<32x256xf32>
      %19 = arith.mulf %18, %15 : vector<32x256xf32>
      %20 = arith.select %17, %15, %19 : vector<32x256xi1>, vector<32x256xf32>
      %c0_15 = arith.constant 0 : index
      %c0_16 = arith.constant 0 : index
      %21 = vector.load %arg6[%c0_15, %c0_16] : memref<32x256xf32, #tpu.memory_space<vmem>>, vector<32x256xf32>
      tpu.vector_store %arg6[%c0_15, %c0_16], %20 {strides = array<i32>} : memref<32x256xf32, #tpu.memory_space<vmem>>, vector<32x256xf32>,
    } else {
    }
    return
  }
  func.func @transform_0(%arg0: i32, %arg1: i32, %arg2: i32) -> (i32, i32) {
    %c0_i32 = arith.constant 0 : i32
    return %arg0, %arg2 : i32, i32
  }
  func.func @transform_1(%arg0: i32, %arg1: i32, %arg2: i32) -> (i32, i32) {
    %c0_i32 = arith.constant 0 : i32
    return %arg2, %arg1 : i32, i32
  }
  func.func @transform_2(%arg0: i32, %arg1: i32, %arg2: i32) -> (i32, i32) {
    %c0_i32 = arith.constant 0 : i32
    %c0_i32_0 = arith.constant 0 : i32
    return %c0_i32, %arg1 : i32, i32
  }
  func.func @transform_3(%arg0: i32, %arg1: i32, %arg2: i32) -> (i32, i32) {
    %c0_i32 = arith.constant 0 : i32
    return %arg0, %arg1 : i32, i32
  }
}

module attributes {stable_mosaic.version = 11 : i64} {
  func.func @_fused_gemm_kernel(%arg0: i32, %arg1: i32, %arg2: i32, %arg3: memref<16x512xbf16, #tpu.memory_space<vmem>>, %arg4: memref<512x256xbf16, #tpu.memory_space<vmem>>, %arg5: memref<1x256xf32, #tpu.memory_space<vmem>>, %arg6: memref<16x256xf32, #tpu.memory_space<vmem>>) attributes {dimension_semantics = [#tpu.dimension_semantics<parallel>, #tpu.dimension_semantics<parallel>, #tpu.dimension_semantics<arbitrary>], iteration_bounds = array<i64: 1, 2, 8>, scalar_prefetch = 0 : i64, scratch_operands = 0 : i64, tpu.core_type = #tpu.core_type<tc>, window_params = [{transform_indices = @transform_0, window_bounds = array<i64: 16, 512>}, {transform_indices = @transform_1, window_bounds = array<i64: 512, 256>}, {transform_indices = @transform_2, window_bounds = array<i64: 1, 256>}, {transform_indices = @transform_3, window_bounds = array<i64: 16, 256>}]} {
    %c0_i32 = arith.constant 0 : i32
    %0 = arith.cmpi eq, %arg2, %c0_i32 : i32
    %1 = arith.extui %0 : i1 to i32
    %c0_i32_0 = arith.constant 0 : i32
    %2 = arith.cmpi ne, %1, %c0_i32_0 : i32
    scf.if %2 {
      %cst_9 = arith.constant 0.000000e+00 : f32
      %12 = vector.broadcast %cst_9 : f32 to vector<16x256xf32>
      %c0_10 = arith.constant 0 : index
      %c0_11 = arith.constant 0 : index
      %13 = vector.load %arg6[%c0_10, %c0_11] : memref<16x256xf32, #tpu.memory_space<vmem>>, vector<16x256xf32>
      tpu.vector_store %arg6[%c0_10, %c0_11], %12 {strides = array<i32>} : memref<16x256xf32, #tpu.memory_space<vmem>>, vector<16x256xf32>,
    } else {
    }
    %c0 = arith.constant 0 : index
    %c0_1 = arith.constant 0 : index
    %3 = vector.load %arg6[%c0, %c0_1] : memref<16x256xf32, #tpu.memory_space<vmem>>, vector<16x256xf32>
    %c0_2 = arith.constant 0 : index
    %c0_3 = arith.constant 0 : index
    %4 = vector.load %arg3[%c0_2, %c0_3] : memref<16x512xbf16, #tpu.memory_space<vmem>>, vector<16x512xbf16>
    %c0_4 = arith.constant 0 : index
    %c0_5 = arith.constant 0 : index
    %5 = vector.load %arg4[%c0_4, %c0_5] : memref<512x256xbf16, #tpu.memory_space<vmem>>, vector<512x256xbf16>
    %cst = arith.constant dense<0.000000e+00> : vector<16x256xf32>
    %6 = tpu.matmul %4, %5, %cst {dimension_numbers = #tpu.dot_dimension_numbers<[1], [0], [0], [1], [0, 0, 1, 1], [], []>} : vector<16x512xbf16>, vector<512x256xbf16>, vector<16x256xf32> -> vector<16x256xf32>
    %7 = arith.addf %3, %6 : vector<16x256xf32>
    %c0_6 = arith.constant 0 : index
    %c0_7 = arith.constant 0 : index
    %8 = vector.load %arg6[%c0_6, %c0_7] : memref<16x256xf32, #tpu.memory_space<vmem>>, vector<16x256xf32>
    tpu.vector_store %arg6[%c0_6, %c0_7], %7 {strides = array<i32>} : memref<16x256xf32, #tpu.memory_space<vmem>>, vector<16x256xf32>,
    %c7_i32 = arith.constant 7 : i32
    %9 = arith.cmpi eq, %arg2, %c7_i32 : i32
    %10 = arith.extui %9 : i1 to i32
    %c0_i32_8 = arith.constant 0 : i32
    %11 = arith.cmpi ne, %10, %c0_i32_8 : i32
    scf.if %11 {
      %c0_9 = arith.constant 0 : index
      %c0_10 = arith.constant 0 : index
      %12 = vector.load %arg6[%c0_9, %c0_10] : memref<16x256xf32, #tpu.memory_space<vmem>>, vector<16x256xf32>
      %c0_11 = arith.constant 0 : index
      %c0_12 = arith.constant 0 : index
      %13 = vector.load %arg5[%c0_11, %c0_12] : memref<1x256xf32, #tpu.memory_space<vmem>>, vector<1x256xf32>
      %14 = vector.broadcast %13 : vector<1x256xf32> to vector<16x256xf32>
      %15 = arith.addf %12, %14 : vector<16x256xf32>
      %cst_13 = arith.constant 0.000000e+00 : f32
      %16 = vector.broadcast %cst_13 : f32 to vector<16x256xf32>
      %17 = arith.cmpf oge, %15, %16 : vector<16x256xf32>
      %cst_14 = arith.constant 1.000000e-01 : f32
      %18 = vector.broadcast %cst_14 : f32 to vector<16x256xf32>
      %19 = arith.mulf %18, %15 : vector<16x256xf32>
      %20 = arith.select %17, %15, %19 : vector<16x256xi1>, vector<16x256xf32>
      %c0_15 = arith.constant 0 : index
      %c0_16 = arith.constant 0 : index
      %21 = vector.load %arg6[%c0_15, %c0_16] : memref<16x256xf32, #tpu.memory_space<vmem>>, vector<16x256xf32>
      tpu.vector_store %arg6[%c0_15, %c0_16], %20 {strides = array<i32>} : memref<16x256xf32, #tpu.memory_space<vmem>>, vector<16x256xf32>,
    } else {
    }
    return
  }
  func.func @transform_0(%arg0: i32, %arg1: i32, %arg2: i32) -> (i32, i32) {
    %c0_i32 = arith.constant 0 : i32
    return %arg0, %arg2 : i32, i32
  }
  func.func @transform_1(%arg0: i32, %arg1: i32, %arg2: i32) -> (i32, i32) {
    %c0_i32 = arith.constant 0 : i32
    return %arg2, %arg1 : i32, i32
  }
  func.func @transform_2(%arg0: i32, %arg1: i32, %arg2: i32) -> (i32, i32) {
    %c0_i32 = arith.constant 0 : i32
    %c0_i32_0 = arith.constant 0 : i32
    return %c0_i32, %arg1 : i32, i32
  }
  func.func @transform_3(%arg0: i32, %arg1: i32, %arg2: i32) -> (i32, i32) {
    %c0_i32 = arith.constant 0 : i32
    return %arg0, %arg1 : i32, i32
  }
}

module attributes {stable_mosaic.version = 11 : i64} {
  func.func @_fused_gemm_kernel(%arg0: i32, %arg1: i32, %arg2: i32, %arg3: memref<16x512xbf16, #tpu.memory_space<vmem>>, %arg4: memref<512x256xbf16, #tpu.memory_space<vmem>>, %arg5: memref<1x256xf32, #tpu.memory_space<vmem>>, %arg6: memref<16x256xf32, #tpu.memory_space<vmem>>) attributes {dimension_semantics = [#tpu.dimension_semantics<parallel>, #tpu.dimension_semantics<parallel>, #tpu.dimension_semantics<arbitrary>], iteration_bounds = array<i64: 1, 2, 9>, scalar_prefetch = 0 : i64, scratch_operands = 0 : i64, tpu.core_type = #tpu.core_type<tc>, window_params = [{transform_indices = @transform_0, window_bounds = array<i64: 16, 512>}, {transform_indices = @transform_1, window_bounds = array<i64: 512, 256>}, {transform_indices = @transform_2, window_bounds = array<i64: 1, 256>}, {transform_indices = @transform_3, window_bounds = array<i64: 16, 256>}]} {
    %c0_i32 = arith.constant 0 : i32
    %0 = arith.cmpi eq, %arg2, %c0_i32 : i32
    %1 = arith.extui %0 : i1 to i32
    %c0_i32_0 = arith.constant 0 : i32
    %2 = arith.cmpi ne, %1, %c0_i32_0 : i32
    scf.if %2 {
      %cst_9 = arith.constant 0.000000e+00 : f32
      %12 = vector.broadcast %cst_9 : f32 to vector<16x256xf32>
      %c0_10 = arith.constant 0 : index
      %c0_11 = arith.constant 0 : index
      %13 = vector.load %arg6[%c0_10, %c0_11] : memref<16x256xf32, #tpu.memory_space<vmem>>, vector<16x256xf32>
      tpu.vector_store %arg6[%c0_10, %c0_11], %12 {strides = array<i32>} : memref<16x256xf32, #tpu.memory_space<vmem>>, vector<16x256xf32>,
    } else {
    }
    %c0 = arith.constant 0 : index
    %c0_1 = arith.constant 0 : index
    %3 = vector.load %arg6[%c0, %c0_1] : memref<16x256xf32, #tpu.memory_space<vmem>>, vector<16x256xf32>
    %c0_2 = arith.constant 0 : index
    %c0_3 = arith.constant 0 : index
    %4 = vector.load %arg3[%c0_2, %c0_3] : memref<16x512xbf16, #tpu.memory_space<vmem>>, vector<16x512xbf16>
    %c0_4 = arith.constant 0 : index
    %c0_5 = arith.constant 0 : index
    %5 = vector.load %arg4[%c0_4, %c0_5] : memref<512x256xbf16, #tpu.memory_space<vmem>>, vector<512x256xbf16>
    %cst = arith.constant dense<0.000000e+00> : vector<16x256xf32>
    %6 = tpu.matmul %4, %5, %cst {dimension_numbers = #tpu.dot_dimension_numbers<[1], [0], [0], [1], [0, 0, 1, 1], [], []>} : vector<16x512xbf16>, vector<512x256xbf16>, vector<16x256xf32> -> vector<16x256xf32>
    %7 = arith.addf %3, %6 : vector<16x256xf32>
    %c0_6 = arith.constant 0 : index
    %c0_7 = arith.constant 0 : index
    %8 = vector.load %arg6[%c0_6, %c0_7] : memref<16x256xf32, #tpu.memory_space<vmem>>, vector<16x256xf32>
    tpu.vector_store %arg6[%c0_6, %c0_7], %7 {strides = array<i32>} : memref<16x256xf32, #tpu.memory_space<vmem>>, vector<16x256xf32>,
    %c8_i32 = arith.constant 8 : i32
    %9 = arith.cmpi eq, %arg2, %c8_i32 : i32
    %10 = arith.extui %9 : i1 to i32
    %c0_i32_8 = arith.constant 0 : i32
    %11 = arith.cmpi ne, %10, %c0_i32_8 : i32
    scf.if %11 {
      %c0_9 = arith.constant 0 : index
      %c0_10 = arith.constant 0 : index
      %12 = vector.load %arg6[%c0_9, %c0_10] : memref<16x256xf32, #tpu.memory_space<vmem>>, vector<16x256xf32>
      %c0_11 = arith.constant 0 : index
      %c0_12 = arith.constant 0 : index
      %13 = vector.load %arg5[%c0_11, %c0_12] : memref<1x256xf32, #tpu.memory_space<vmem>>, vector<1x256xf32>
      %14 = vector.broadcast %13 : vector<1x256xf32> to vector<16x256xf32>
      %15 = arith.addf %12, %14 : vector<16x256xf32>
      %cst_13 = arith.constant 0.000000e+00 : f32
      %16 = vector.broadcast %cst_13 : f32 to vector<16x256xf32>
      %17 = arith.cmpf oge, %15, %16 : vector<16x256xf32>
      %cst_14 = arith.constant 1.000000e-01 : f32
      %18 = vector.broadcast %cst_14 : f32 to vector<16x256xf32>
      %19 = arith.mulf %18, %15 : vector<16x256xf32>
      %20 = arith.select %17, %15, %19 : vector<16x256xi1>, vector<16x256xf32>
      %c0_15 = arith.constant 0 : index
      %c0_16 = arith.constant 0 : index
      %21 = vector.load %arg6[%c0_15, %c0_16] : memref<16x256xf32, #tpu.memory_space<vmem>>, vector<16x256xf32>
      tpu.vector_store %arg6[%c0_15, %c0_16], %20 {strides = array<i32>} : memref<16x256xf32, #tpu.memory_space<vmem>>, vector<16x256xf32>,
    } else {
    }
    return
  }
  func.func @transform_0(%arg0: i32, %arg1: i32, %arg2: i32) -> (i32, i32) {
    %c0_i32 = arith.constant 0 : i32
    return %arg0, %arg2 : i32, i32
  }
  func.func @transform_1(%arg0: i32, %arg1: i32, %arg2: i32) -> (i32, i32) {
    %c0_i32 = arith.constant 0 : i32
    return %arg2, %arg1 : i32, i32
  }
  func.func @transform_2(%arg0: i32, %arg1: i32, %arg2: i32) -> (i32, i32) {
    %c0_i32 = arith.constant 0 : i32
    %c0_i32_0 = arith.constant 0 : i32
    return %c0_i32, %arg1 : i32, i32
  }
  func.func @transform_3(%arg0: i32, %arg1: i32, %arg2: i32) -> (i32, i32) {
    %c0_i32 = arith.constant 0 : i32
    return %arg0, %arg1 : i32, i32
  }
}

</mosaic_0001>

<llo_original>
// kernel: discriminator_sngan_forward.7
$region0: #{discriminator_sngan_forward.7}
  #allocation0 [shape = 'u32[]', space=smem, size = 0x4, offset = 0x4, fixed_abs, tag = 'smem constant byte address 0x4 - core index']
  #allocation1 [shape = 'u32[144,128]{1,0:T(1,128)}', space=vmem, size = 0x12000, scoped, tag = 'internal scratch']
  %s0 = inlined_call_operand.vmem [shape: bf16[512,128], index: 0, kind: input, shape index: {}]
  %s1 = inlined_call_operand.vmem [shape: bf16[128,128], index: 1, kind: input, shape index: {}]
  %s2 = inlined_call_operand.vmem [shape: f32[1,128], index: 2, kind: input, shape index: {}]
  %s3 = inlined_call_operand.vmem [shape: f32[512,128], index: 3, kind: output, shape index: {}]
  %s4 = sld [smem:[#allocation0]]
  $region30: #{discriminator_sngan_forward.7} parent=0
    _
  %s6 = ssub.s32 1, %s4
  %s7 = scalar_select 0, %s6, %s4
  // Predicated region
  $region2: #{discriminator_sngan_forward.7} parent=0 // pred_check
    _
  $region3: #{discriminator_sngan_forward.7} parent=0 // pred_check_branch
    %9 = sbr.rel (0) target = $region5
  $region4: #{discriminator_sngan_forward.7} parent=0 // pred_region
    _
  $region5: #{discriminator_sngan_forward.7} parent=0 // pred_fallthru
    _
  // Predicated region
  $region6: #{discriminator_sngan_forward.7} parent=0 // pred_check
    _
  $region7: #{discriminator_sngan_forward.7} parent=0 // pred_check_branch
    %11 = sbr.rel (0) target = $region9
  $region8: #{discriminator_sngan_forward.7} parent=0 // pred_region
    _
  $region9: #{discriminator_sngan_forward.7} parent=0 // pred_fallthru
    _
  // Predicated region
  $region10: #{discriminator_sngan_forward.7} parent=0 // pred_check
    _
  $region11: #{discriminator_sngan_forward.7} parent=0 // pred_check_branch
    %13 = sbr.rel (0) target = $region13
  $region12: #{discriminator_sngan_forward.7} parent=0 // pred_region
    _
  $region13: #{discriminator_sngan_forward.7} parent=0 // pred_fallthru
    _
  %p15 = scmp.eq.s32.totalorder 0, 0
  // Predicated region
  $region14: #{discriminator_sngan_forward.7} parent=0 // pred_check
    %p16 = pneg %p15
  $region15: #{discriminator_sngan_forward.7} parent=0 // pred_check_branch
    %18 = sbr.rel (%p16) target = $region17
  $region16: #{discriminator_sngan_forward.7} parent=0 // pred_region
    %19 = vst [vmem:[%s3] sm:$0xff] 0.0
    %20 = vst [vmem:[%s3 + $0x8] sm:$0xff] 0.0
    %21 = vst [vmem:[%s3 + $0x10] sm:$0xff] 0.0
    %22 = vst [vmem:[%s3 + $0x18] sm:$0xff] 0.0
    %23 = vst [vmem:[%s3 + $0x20] sm:$0xff] 0.0
    %24 = vst [vmem:[%s3 + $0x28] sm:$0xff] 0.0
    %25 = vst [vmem:[%s3 + $0x30] sm:$0xff] 0.0
    %26 = vst [vmem:[%s3 + $0x38] sm:$0xff] 0.0
    %27 = vst [vmem:[%s3 + $0x40] sm:$0xff] 0.0
    %28 = vst [vmem:[%s3 + $0x48] sm:$0xff] 0.0
    %29 = vst [vmem:[%s3 + $0x50] sm:$0xff] 0.0
    %30 = vst [vmem:[%s3 + $0x58] sm:$0xff] 0.0
    %31 = vst [vmem:[%s3 + $0x60] sm:$0xff] 0.0
    %32 = vst [vmem:[%s3 + $0x68] sm:$0xff] 0.0
    %33 = vst [vmem:[%s3 + $0x70] sm:$0xff] 0.0
    %34 = vst [vmem:[%s3 + $0x78] sm:$0xff] 0.0
    %35 = vst [vmem:[%s3 + $0x80] sm:$0xff] 0.0
    %36 = vst [vmem:[%s3 + $0x88] sm:$0xff] 0.0
    %37 = vst [vmem:[%s3 + $0x90] sm:$0xff] 0.0
    %38 = vst [vmem:[%s3 + $0x98] sm:$0xff] 0.0
    %39 = vst [vmem:[%s3 + $0xa0] sm:$0xff] 0.0
    %40 = vst [vmem:[%s3 + $0xa8] sm:$0xff] 0.0
    %41 = vst [vmem:[%s3 + $0xb0] sm:$0xff] 0.0
    %42 = vst [vmem:[%s3 + $0xb8] sm:$0xff] 0.0
    %43 = vst [vmem:[%s3 + $0xc0] sm:$0xff] 0.0
    %44 = vst [vmem:[%s3 + $0xc8] sm:$0xff] 0.0
    %45 = vst [vmem:[%s3 + $0xd0] sm:$0xff] 0.0
    %46 = vst [vmem:[%s3 + $0xd8] sm:$0xff] 0.0
    %47 = vst [vmem:[%s3 + $0xe0] sm:$0xff] 0.0
    %48 = vst [vmem:[%s3 + $0xe8] sm:$0xff] 0.0
    %49 = vst [vmem:[%s3 + $0xf0] sm:$0xff] 0.0
    %50 = vst [vmem:[%s3 + $0xf8] sm:$0xff] 0.0
    %51 = vst [vmem:[%s3 + $0x100] sm:$0xff] 0.0
    %52 = vst [vmem:[%s3 + $0x108] sm:$0xff] 0.0
    %53 = vst [vmem:[%s3 + $0x110] sm:$0xff] 0.0
    %54 = vst [vmem:[%s3 + $0x118] sm:$0xff] 0.0
    %55 = vst [vmem:[%s3 + $0x120] sm:$0xff] 0.0
    %56 = vst [vmem:[%s3 + $0x128] sm:$0xff] 0.0
    %57 = vst [vmem:[%s3 + $0x130] sm:$0xff] 0.0
    %58 = vst [vmem:[%s3 + $0x138] sm:$0xff] 0.0
    %59 = vst [vmem:[%s3 + $0x140] sm:$0xff] 0.0
    %60 = vst [vmem:[%s3 + $0x148] sm:$0xff] 0.0
    %61 = vst [vmem:[%s3 + $0x150] sm:$0xff] 0.0
    %62 = vst [vmem:[%s3 + $0x158] sm:$0xff] 0.0
    %63 = vst [vmem:[%s3 + $0x160] sm:$0xff] 0.0
    %64 = vst [vmem:[%s3 + $0x168] sm:$0xff] 0.0
    %65 = vst [vmem:[%s3 + $0x170] sm:$0xff] 0.0
    %66 = vst [vmem:[%s3 + $0x178] sm:$0xff] 0.0
    %67 = vst [vmem:[%s3 + $0x180] sm:$0xff] 0.0
    %68 = vst [vmem:[%s3 + $0x188] sm:$0xff] 0.0
    %69 = vst [vmem:[%s3 + $0x190] sm:$0xff] 0.0
    %70 = vst [vmem:[%s3 + $0x198] sm:$0xff] 0.0
    %71 = vst [vmem:[%s3 + $0x1a0] sm:$0xff] 0.0
    %72 = vst [vmem:[%s3 + $0x1a8] sm:$0xff] 0.0
    %73 = vst [vmem:[%s3 + $0x1b0] sm:$0xff] 0.0
    %74 = vst [vmem:[%s3 + $0x1b8] sm:$0xff] 0.0
    %75 = vst [vmem:[%s3 + $0x1c0] sm:$0xff] 0.0
    %76 = vst [vmem:[%s3 + $0x1c8] sm:$0xff] 0.0
    %77 = vst [vmem:[%s3 + $0x1d0] sm:$0xff] 0.0
    %78 = vst [vmem:[%s3 + $0x1d8] sm:$0xff] 0.0
    %79 = vst [vmem:[%s3 + $0x1e0] sm:$0xff] 0.0
    %80 = vst [vmem:[%s3 + $0x1e8] sm:$0xff] 0.0
    %81 = vst [vmem:[%s3 + $0x1f0] sm:$0xff] 0.0
    %82 = vst [vmem:[%s3 + $0x1f8] sm:$0xff] 0.0
  $region17: #{discriminator_sngan_forward.7} parent=0 // pred_fallthru
    _
  %v83 = vld [vmem:[%s3] sm:$0xff]
  %v84 = vld [vmem:[%s3 + $0x8] sm:$0xff]
  %v85 = vld [vmem:[%s3 + $0x10] sm:$0xff]
  %v86 = vld [vmem:[%s3 + $0x18] sm:$0xff]
  %v87 = vld [vmem:[%s3 + $0x20] sm:$0xff]
  %v88 = vld [vmem:[%s3 + $0x28] sm:$0xff]
  %v89 = vld [vmem:[%s3 + $0x30] sm:$0xff]
  %v90 = vld [vmem:[%s3 + $0x38] sm:$0xff]
  %v91 = vld [vmem:[%s3 + $0x40] sm:$0xff]
  %v92 = vld [vmem:[%s3 + $0x48] sm:$0xff]
  %v93 = vld [vmem:[%s3 + $0x50] sm:$0xff]
  %v94 = vld [vmem:[%s3 + $0x58] sm:$0xff]
  %v95 = vld [vmem:[%s3 + $0x60] sm:$0xff]
  %v96 = vld [vmem:[%s3 + $0x68] sm:$0xff]
  %v97 = vld [vmem:[%s3 + $0x70] sm:$0xff]
  %v98 = vld [vmem:[%s3 + $0x78] sm:$0xff]
  %v99 = vld [vmem:[%s3 + $0x80] sm:$0xff]
  %v100 = vld [vmem:[%s3 + $0x88] sm:$0xff]
  %v101 = vld [vmem:[%s3 + $0x90] sm:$0xff]
  %v102 = vld [vmem:[%s3 + $0x98] sm:$0xff]
  %v103 = vld [vmem:[%s3 + $0xa0] sm:$0xff]
  %v104 = vld [vmem:[%s3 + $0xa8] sm:$0xff]
  %v105 = vld [vmem:[%s3 + $0xb0] sm:$0xff]
  %v106 = vld [vmem:[%s3 + $0xb8] sm:$0xff]
  %v107 = vld [vmem:[%s3 + $0xc0] sm:$0xff]
  %v108 = vld [vmem:[%s3 + $0xc8] sm:$0xff]
  %v109 = vld [vmem:[%s3 + $0xd0] sm:$0xff]
  %v110 = vld [vmem:[%s3 + $0xd8] sm:$0xff]
  %v111 = vld [vmem:[%s3 + $0xe0] sm:$0xff]
  %v112 = vld [vmem:[%s3 + $0xe8] sm:$0xff]
  %v113 = vld [vmem:[%s3 + $0xf0] sm:$0xff]
  %v114 = vld [vmem:[%s3 + $0xf8] sm:$0xff]
  %v115 = vld [vmem:[%s3 + $0x100] sm:$0xff]
  %v116 = vld [vmem:[%s3 + $0x108] sm:$0xff]
  %v117 = vld [vmem:[%s3 + $0x110] sm:$0xff]
  %v118 = vld [vmem:[%s3 + $0x118] sm:$0xff]
  %v119 = vld [vmem:[%s3 + $0x120] sm:$0xff]
  %v120 = vld [vmem:[%s3 + $0x128] sm:$0xff]
  %v121 = vld [vmem:[%s3 + $0x130] sm:$0xff]
  %v122 = vld [vmem:[%s3 + $0x138] sm:$0xff]
  %v123 = vld [vmem:[%s3 + $0x140] sm:$0xff]
  %v124 = vld [vmem:[%s3 + $0x148] sm:$0xff]
  %v125 = vld [vmem:[%s3 + $0x150] sm:$0xff]
  %v126 = vld [vmem:[%s3 + $0x158] sm:$0xff]
  %v127 = vld [vmem:[%s3 + $0x160] sm:$0xff]
  %v128 = vld [vmem:[%s3 + $0x168] sm:$0xff]
  %v129 = vld [vmem:[%s3 + $0x170] sm:$0xff]
  %v130 = vld [vmem:[%s3 + $0x178] sm:$0xff]
  %v131 = vld [vmem:[%s3 + $0x180] sm:$0xff]
  %v132 = vld [vmem:[%s3 + $0x188] sm:$0xff]
  %v133 = vld [vmem:[%s3 + $0x190] sm:$0xff]
  %v134 = vld [vmem:[%s3 + $0x198] sm:$0xff]
  %v135 = vld [vmem:[%s3 + $0x1a0] sm:$0xff]
  %v136 = vld [vmem:[%s3 + $0x1a8] sm:$0xff]
  %v137 = vld [vmem:[%s3 + $0x1b0] sm:$0xff]
  %v138 = vld [vmem:[%s3 + $0x1b8] sm:$0xff]
  %v139 = vld [vmem:[%s3 + $0x1c0] sm:$0xff]
  %v140 = vld [vmem:[%s3 + $0x1c8] sm:$0xff]
  %v141 = vld [vmem:[%s3 + $0x1d0] sm:$0xff]
  %v142 = vld [vmem:[%s3 + $0x1d8] sm:$0xff]
  %v143 = vld [vmem:[%s3 + $0x1e0] sm:$0xff]
  %v144 = vld [vmem:[%s3 + $0x1e8] sm:$0xff]
  %v145 = vld [vmem:[%s3 + $0x1f0] sm:$0xff]
  %v146 = vld [vmem:[%s3 + $0x1f8] sm:$0xff]
  %v147 = vld [vmem:[%s0] sm:$0xf]
  %v148 = vld [vmem:[%s0 + $0x4] sm:$0xf]
  %v149 = vld [vmem:[%s0 + $0x8] sm:$0xf]
  %v150 = vld [vmem:[%s0 + $0xc] sm:$0xf]
  %v151 = vld [vmem:[%s0 + $0x10] sm:$0xf]
  %v152 = vld [vmem:[%s0 + $0x14] sm:$0xf]
  %v153 = vld [vmem:[%s0 + $0x18] sm:$0xf]
  %v154 = vld [vmem:[%s0 + $0x1c] sm:$0xf]
  %v155 = vld [vmem:[%s0 + $0x20] sm:$0xf]
  %v156 = vld [vmem:[%s0 + $0x24] sm:$0xf]
  %v157 = vld [vmem:[%s0 + $0x28] sm:$0xf]
  %v158 = vld [vmem:[%s0 + $0x2c] sm:$0xf]
  %v159 = vld [vmem:[%s0 + $0x30] sm:$0xf]
  %v160 = vld [vmem:[%s0 + $0x34] sm:$0xf]
  %v161 = vld [vmem:[%s0 + $0x38] sm:$0xf]
  %v162 = vld [vmem:[%s0 + $0x3c] sm:$0xf]
  %v163 = vld [vmem:[%s0 + $0x40] sm:$0xf]
  %v164 = vld [vmem:[%s0 + $0x44] sm:$0xf]
  %v165 = vld [vmem:[%s0 + $0x48] sm:$0xf]
  %v166 = vld [vmem:[%s0 + $0x4c] sm:$0xf]
  %v167 = vld [vmem:[%s0 + $0x50] sm:$0xf]
  %v168 = vld [vmem:[%s0 + $0x54] sm:$0xf]
  %v169 = vld [vmem:[%s0 + $0x58] sm:$0xf]
  %v170 = vld [vmem:[%s0 + $0x5c] sm:$0xf]
  %v171 = vld [vmem:[%s0 + $0x60] sm:$0xf]
  %v172 = vld [vmem:[%s0 + $0x64] sm:$0xf]
  %v173 = vld [vmem:[%s0 + $0x68] sm:$0xf]
  %v174 = vld [vmem:[%s0 + $0x6c] sm:$0xf]
  %v175 = vld [vmem:[%s0 + $0x70] sm:$0xf]
  %v176 = vld [vmem:[%s0 + $0x74] sm:$0xf]
  %v177 = vld [vmem:[%s0 + $0x78] sm:$0xf]
  %v178 = vld [vmem:[%s0 + $0x7c] sm:$0xf]
  %v179 = vld [vmem:[%s0 + $0x80] sm:$0xf]
  %v180 = vld [vmem:[%s0 + $0x84] sm:$0xf]
  %v181 = vld [vmem:[%s0 + $0x88] sm:$0xf]
  %v182 = vld [vmem:[%s0 + $0x8c] sm:$0xf]
  %v183 = vld [vmem:[%s0 + $0x90] sm:$0xf]
  %v184 = vld [vmem:[%s0 + $0x94] sm:$0xf]
  %v185 = vld [vmem:[%s0 + $0x98] sm:$0xf]
  %v186 = vld [vmem:[%s0 + $0x9c] sm:$0xf]
  %v187 = vld [vmem:[%s0 + $0xa0] sm:$0xf]
  %v188 = vld [vmem:[%s0 + $0xa4] sm:$0xf]
  %v189 = vld [vmem:[%s0 + $0xa8] sm:$0xf]
  %v190 = vld [vmem:[%s0 + $0xac] sm:$0xf]
  %v191 = vld [vmem:[%s0 + $0xb0] sm:$0xf]
  %v192 = vld [vmem:[%s0 + $0xb4] sm:$0xf]
  %v193 = vld [vmem:[%s0 + $0xb8] sm:$0xf]
  %v194 = vld [vmem:[%s0 + $0xbc] sm:$0xf]
  %v195 = vld [vmem:[%s0 + $0xc0] sm:$0xf]
  %v196 = vld [vmem:[%s0 + $0xc4] sm:$0xf]
  %v197 = vld [vmem:[%s0 + $0xc8] sm:$0xf]
  %v198 = vld [vmem:[%s0 + $0xcc] sm:$0xf]
  %v199 = vld [vmem:[%s0 + $0xd0] sm:$0xf]
  %v200 = vld [vmem:[%s0 + $0xd4] sm:$0xf]
  %v201 = vld [vmem:[%s0 + $0xd8] sm:$0xf]
  %v202 = vld [vmem:[%s0 + $0xdc] sm:$0xf]
  %v203 = vld [vmem:[%s0 + $0xe0] sm:$0xf]
  %v204 = vld [vmem:[%s0 + $0xe4] sm:$0xf]
  %v205 = vld [vmem:[%s0 + $0xe8] sm:$0xf]
  %v206 = vld [vmem:[%s0 + $0xec] sm:$0xf]
  %v207 = vld [vmem:[%s0 + $0xf0] sm:$0xf]
  %v208 = vld [vmem:[%s0 + $0xf4] sm:$0xf]
  %v209 = vld [vmem:[%s0 + $0xf8] sm:$0xf]
  %v210 = vld [vmem:[%s0 + $0xfc] sm:$0xf]
  %v211 = vld [vmem:[%s1] sm:$0xf]
  %v212 = vld [vmem:[%s1 + $0x4] sm:$0xf]
  %v213 = vld [vmem:[%s1 + $0x8] sm:$0xf]
  %v214 = vld [vmem:[%s1 + $0xc] sm:$0xf]
  %v215 = vld [vmem:[%s1 + $0x10] sm:$0xf]
  %v216 = vld [vmem:[%s1 + $0x14] sm:$0xf]
  %v217 = vld [vmem:[%s1 + $0x18] sm:$0xf]
  %v218 = vld [vmem:[%s1 + $0x1c] sm:$0xf]
  %v219 = vld [vmem:[%s1 + $0x20] sm:$0xf]
  %v220 = vld [vmem:[%s1 + $0x24] sm:$0xf]
  %v221 = vld [vmem:[%s1 + $0x28] sm:$0xf]
  %v222 = vld [vmem:[%s1 + $0x2c] sm:$0xf]
  %v223 = vld [vmem:[%s1 + $0x30] sm:$0xf]
  %v224 = vld [vmem:[%s1 + $0x34] sm:$0xf]
  %v225 = vld [vmem:[%s1 + $0x38] sm:$0xf]
  %v226 = vld [vmem:[%s1 + $0x3c] sm:$0xf]
  %v291 = vunpack.c.l.b16 %v147
  %v292 = vunpack.c.l.b16 %v148
  %v293 = vunpack.c.l.b16 %v149
  %v294 = vunpack.c.l.b16 %v150
  %v295 = vunpack.c.l.b16 %v151
  %v296 = vunpack.c.l.b16 %v152
  %v297 = vunpack.c.l.b16 %v153
  %v298 = vunpack.c.l.b16 %v154
  %v299 = vunpack.c.l.b16 %v155
  %v300 = vunpack.c.l.b16 %v156
  %v301 = vunpack.c.l.b16 %v157
  %v302 = vunpack.c.l.b16 %v158
  %v303 = vunpack.c.l.b16 %v159
  %v304 = vunpack.c.l.b16 %v160
  %v305 = vunpack.c.l.b16 %v161
  %v306 = vunpack.c.l.b16 %v162
  %v307 = vunpack.c.l.b16 %v163
  %v308 = vunpack.c.l.b16 %v164
  %v309 = vunpack.c.l.b16 %v165
  %v310 = vunpack.c.l.b16 %v166
  %v311 = vunpack.c.l.b16 %v167
  %v312 = vunpack.c.l.b16 %v168
  %v313 = vunpack.c.l.b16 %v169
  %v314 = vunpack.c.l.b16 %v170
  %v315 = vunpack.c.l.b16 %v171
  %v316 = vunpack.c.l.b16 %v172
  %v317 = vunpack.c.l.b16 %v173
  %v318 = vunpack.c.l.b16 %v174
  %v319 = vunpack.c.l.b16 %v175
  %v320 = vunpack.c.l.b16 %v176
  %v321 = vunpack.c.l.b16 %v177
  %v322 = vunpack.c.l.b16 %v178
  %v323 = vunpack.c.l.b16 %v179
  %v324 = vunpack.c.l.b16 %v180
  %v325 = vunpack.c.l.b16 %v181
  %v326 = vunpack.c.l.b16 %v182
  %v327 = vunpack.c.l.b16 %v183
  %v328 = vunpack.c.l.b16 %v184
  %v329 = vunpack.c.l.b16 %v185
  %v330 = vunpack.c.l.b16 %v186
  %v331 = vunpack.c.l.b16 %v187
  %v332 = vunpack.c.l.b16 %v188
  %v333 = vunpack.c.l.b16 %v189
  %v334 = vunpack.c.l.b16 %v190
  %v335 = vunpack.c.l.b16 %v191
  %v336 = vunpack.c.l.b16 %v192
  %v337 = vunpack.c.l.b16 %v193
  %v338 = vunpack.c.l.b16 %v194
  %v339 = vunpack.c.l.b16 %v195
  %v340 = vunpack.c.l.b16 %v196
  %v341 = vunpack.c.l.b16 %v197
  %v342 = vunpack.c.l.b16 %v198
  %v343 = vunpack.c.l.b16 %v199
  %v344 = vunpack.c.l.b16 %v200
  %v345 = vunpack.c.l.b16 %v201
  %v346 = vunpack.c.l.b16 %v202
  %v347 = vunpack.c.l.b16 %v203
  %v348 = vunpack.c.l.b16 %v204
  %v349 = vunpack.c.l.b16 %v205
  %v350 = vunpack.c.l.b16 %v206
  %v351 = vunpack.c.l.b16 %v207
  %v352 = vunpack.c.l.b16 %v208
  %v353 = vunpack.c.l.b16 %v209
  %v354 = vunpack.c.l.b16 %v210
  %v355 = vpack.c.b16 %v292, %v291
  %v356 = vpack.c.b16 %v294, %v293
  %v357 = vpack.c.b16 %v296, %v295
  %v358 = vpack.c.b16 %v298, %v297
  %v359 = vpack.c.b16 %v300, %v299
  %v360 = vpack.c.b16 %v302, %v301
  %v361 = vpack.c.b16 %v304, %v303
  %v362 = vpack.c.b16 %v306, %v305
  %v363 = vpack.c.b16 %v308, %v307
  %v364 = vpack.c.b16 %v310, %v309
  %v365 = vpack.c.b16 %v312, %v311
  %v366 = vpack.c.b16 %v314, %v313
  %v367 = vpack.c.b16 %v316, %v315
  %v368 = vpack.c.b16 %v318, %v317
  %v369 = vpack.c.b16 %v320, %v319
  %v370 = vpack.c.b16 %v322, %v321
  %v371 = vpack.c.b16 %v324, %v323
  %v372 = vpack.c.b16 %v326, %v325
  %v373 = vpack.c.b16 %v328, %v327
  %v374 = vpack.c.b16 %v330, %v329
  %v375 = vpack.c.b16 %v332, %v331
  %v376 = vpack.c.b16 %v334, %v333
  %v377 = vpack.c.b16 %v336, %v335
  %v378 = vpack.c.b16 %v338, %v337
  %v379 = vpack.c.b16 %v340, %v339
  %v380 = vpack.c.b16 %v342, %v341
  %v381 = vpack.c.b16 %v344, %v343
  %v382 = vpack.c.b16 %v346, %v345
  %v383 = vpack.c.b16 %v348, %v347
  %v384 = vpack.c.b16 %v350, %v349
  %v385 = vpack.c.b16 %v352, %v351
  %v386 = vpack.c.b16 %v354, %v353
  %v435 = vunpack.c.l.b16 %v211
  %v436 = vunpack.c.l.b16 %v212
  %v437 = vunpack.c.l.b16 %v213
  %v438 = vunpack.c.l.b16 %v214
  %v439 = vunpack.c.l.b16 %v215
  %v440 = vunpack.c.l.b16 %v216
  %v441 = vunpack.c.l.b16 %v217
  %v442 = vunpack.c.l.b16 %v218
  %v443 = vunpack.c.l.b16 %v219
  %v444 = vunpack.c.l.b16 %v220
  %v445 = vunpack.c.l.b16 %v221
  %v446 = vunpack.c.l.b16 %v222
  %v447 = vunpack.c.l.b16 %v223
  %v448 = vunpack.c.l.b16 %v224
  %v449 = vunpack.c.l.b16 %v225
  %v450 = vunpack.c.l.b16 %v226
  %v451 = vpack.c.b16 %v436, %v435
  %v452 = vpack.c.b16 %v438, %v437
  %v453 = vpack.c.b16 %v440, %v439
  %v454 = vpack.c.b16 %v442, %v441
  %v455 = vpack.c.b16 %v444, %v443
  %v456 = vpack.c.b16 %v446, %v445
  %v457 = vpack.c.b16 %v448, %v447
  %v458 = vpack.c.b16 %v450, %v449
  %467 = vmatprep.subr.bf16.mxu0 0
  %468 = vmatpush1.bf16.msra.mxu0 %v451
  %469 = vmatprep.subr.bf16.mxu0 0
  %470 = vmatpush1.bf16.msra.mxu0 %v452
  %471 = vmatprep.subr.bf16.mxu0 0
  %472 = vmatpush1.bf16.msra.mxu0 %v453
  %473 = vmatprep.subr.bf16.mxu0 0
  %474 = vmatpush1.bf16.msra.mxu0 %v454
  %475 = vmatprep.subr.bf16.mxu0 0
  %476 = vmatpush1.bf16.msra.mxu0 %v455
  %477 = vmatprep.subr.bf16.mxu0 0
  %478 = vmatpush1.bf16.msra.mxu0 %v456
  %479 = vmatprep.subr.bf16.mxu0 0
  %480 = vmatpush1.bf16.msra.mxu0 %v457
  %481 = vmatprep.subr.bf16.mxu0 0
  %482 = vmatpush1.bf16.msra.mxu0 %v458
  %483 = vmatprep.subr.bf16.mxu0 0
  %484 = vmatpush1.bf16.msra.mxu0 0
  %485 = vmatprep.subr.bf16.mxu0 0
  %486 = vmatpush1.bf16.msra.mxu0 0
  %487 = vmatprep.subr.bf16.mxu0 0
  %488 = vmatpush1.bf16.msra.mxu0 0
  %489 = vmatprep.subr.bf16.mxu0 0
  %490 = vmatpush1.bf16.msra.mxu0 0
  %491 = vmatprep.subr.bf16.mxu0 0
  %492 = vmatpush1.bf16.msra.mxu0 0
  %493 = vmatprep.subr.bf16.mxu0 0
  %494 = vmatpush1.bf16.msra.mxu0 0
  %495 = vmatprep.subr.bf16.mxu0 0
  %496 = vmatpush1.bf16.msra.mxu0 0
  %497 = vmatprep.subr.bf16.mxu0 0
  %498 = vmatpush1.bf16.msra.mxu0 0
  %499 = vmatprep.mubr.bf16.mxu0 0
  %500 = vmatmul.mubr.bf16.gmra.mrb[0].mxu0 %v355
  %v501 = vpop.f32.mrb[0].mxu0
  %v502 = vadd.f32 0.0, %v501
  %v503 = vpop.f32.mrb[0].mxu0
  %v504 = vpop.f32.mrb[0].mxu0
  %v505 = vadd.f32 0.0, %v504
  %v506 = vpop.f32.mrb[0].mxu0
  %507 = vmatprep.mubr.bf16.mxu0 0
  %508 = vmatmul.mubr.bf16.gmra.mrb[0].mxu0 %v356
  %v509 = vpop.f32.mrb[0].mxu0
  %v510 = vadd.f32 0.0, %v509
  %v511 = vpop.f32.mrb[0].mxu0
  %v512 = vpop.f32.mrb[0].mxu0
  %v513 = vadd.f32 0.0, %v512
  %v514 = vpop.f32.mrb[0].mxu0
  %515 = vmatprep.mubr.bf16.mxu0 0
  %516 = vmatmul.mubr.bf16.gmra.mrb[0].mxu0 %v357
  %v517 = vpop.f32.mrb[0].mxu0
  %v518 = vadd.f32 0.0, %v517
  %v519 = vpop.f32.mrb[0].mxu0
  %v520 = vpop.f32.mrb[0].mxu0
  %v521 = vadd.f32 0.0, %v520
  %v522 = vpop.f32.mrb[0].mxu0
  %523 = vmatprep.mubr.bf16.mxu0 0
  %524 = vmatmul.mubr.bf16.gmra.mrb[0].mxu0 %v358
  %v525 = vpop.f32.mrb[0].mxu0
  %v526 = vadd.f32 0.0, %v525
  %v527 = vpop.f32.mrb[0].mxu0
  %v528 = vpop.f32.mrb[0].mxu0
  %v529 = vadd.f32 0.0, %v528
  %v530 = vpop.f32.mrb[0].mxu0
  %531 = vmatprep.mubr.bf16.mxu0 0
  %532 = vmatmul.mubr.bf16.gmra.mrb[0].mxu0 %v359
  %v533 = vpop.f32.mrb[0].mxu0
  %v534 = vadd.f32 0.0, %v533
  %v535 = vpop.f32.mrb[0].mxu0
  %v536 = vpop.f32.mrb[0].mxu0
  %v537 = vadd.f32 0.0, %v536
  %v538 = vpop.f32.mrb[0].mxu0
  %539 = vmatprep.mubr.bf16.mxu0 0
  %540 = vmatmul.mubr.bf16.gmra.mrb[0].mxu0 %v360
  %v541 = vpop.f32.mrb[0].mxu0
  %v542 = vadd.f32 0.0, %v541
  %v543 = vpop.f32.mrb[0].mxu0
  %v544 = vpop.f32.mrb[0].mxu0
  %v545 = vadd.f32 0.0, %v544
  %v546 = vpop.f32.mrb[0].mxu0
  %547 = vmatprep.mubr.bf16.mxu0 0
  %548 = vmatmul.mubr.bf16.gmra.mrb[0].mxu0 %v361
  %v549 = vpop.f32.mrb[0].mxu0
  %v550 = vadd.f32 0.0, %v549
  %v551 = vpop.f32.mrb[0].mxu0
  %v552 = vpop.f32.mrb[0].mxu0
  %v553 = vadd.f32 0.0, %v552
  %v554 = vpop.f32.mrb[0].mxu0
  %555 = vmatprep.mubr.bf16.mxu0 0
  %556 = vmatmul.mubr.bf16.gmra.mrb[0].mxu0 %v362
  %v557 = vpop.f32.mrb[0].mxu0
  %v558 = vadd.f32 0.0, %v557
  %v559 = vpop.f32.mrb[0].mxu0
  %v560 = vpop.f32.mrb[0].mxu0
  %v561 = vadd.f32 0.0, %v560
  %v562 = vpop.f32.mrb[0].mxu0
  %563 = vmatprep.mubr.bf16.mxu0 0
  %564 = vmatmul.mubr.bf16.gmra.mrb[0].mxu0 %v363
  %v565 = vpop.f32.mrb[0].mxu0
  %v566 = vadd.f32 0.0, %v565
  %v567 = vpop.f32.mrb[0].mxu0
  %v568 = vpop.f32.mrb[0].mxu0
  %v569 = vadd.f32 0.0, %v568
  %v570 = vpop.f32.mrb[0].mxu0
  %571 = vmatprep.mubr.bf16.mxu0 0
  %572 = vmatmul.mubr.bf16.gmra.mrb[0].mxu0 %v364
  %v573 = vpop.f32.mrb[0].mxu0
  %v574 = vadd.f32 0.0, %v573
  %v575 = vpop.f32.mrb[0].mxu0
  %v576 = vpop.f32.mrb[0].mxu0
  %v577 = vadd.f32 0.0, %v576
  %v578 = vpop.f32.mrb[0].mxu0
  %579 = vmatprep.mubr.bf16.mxu0 0
  %580 = vmatmul.mubr.bf16.gmra.mrb[0].mxu0 %v365
  %v581 = vpop.f32.mrb[0].mxu0
  %v582 = vadd.f32 0.0, %v581
  %v583 = vpop.f32.mrb[0].mxu0
  %v584 = vpop.f32.mrb[0].mxu0
  %v585 = vadd.f32 0.0, %v584
  %v586 = vpop.f32.mrb[0].mxu0
  %587 = vmatprep.mubr.bf16.mxu0 0
  %588 = vmatmul.mubr.bf16.gmra.mrb[0].mxu0 %v366
  %v589 = vpop.f32.mrb[0].mxu0
  %v590 = vadd.f32 0.0, %v589
  %v591 = vpop.f32.mrb[0].mxu0
  %v592 = vpop.f32.mrb[0].mxu0
  %v593 = vadd.f32 0.0, %v592
  %v594 = vpop.f32.mrb[0].mxu0
  %595 = vmatprep.mubr.bf16.mxu0 0
  %596 = vmatmul.mubr.bf16.gmra.mrb[0].mxu0 %v367
  %v597 = vpop.f32.mrb[0].mxu0
  %v598 = vadd.f32 0.0, %v597
  %v599 = vpop.f32.mrb[0].mxu0
  %v600 = vpop.f32.mrb[0].mxu0
  %v601 = vadd.f32 0.0, %v600
  %v602 = vpop.f32.mrb[0].mxu0
  %603 = vmatprep.mubr.bf16.mxu0 0
  %604 = vmatmul.mubr.bf16.gmra.mrb[0].mxu0 %v368
  %v605 = vpop.f32.mrb[0].mxu0
  %v606 = vadd.f32 0.0, %v605
  %v607 = vpop.f32.mrb[0].mxu0
  %v608 = vpop.f32.mrb[0].mxu0
  %v609 = vadd.f32 0.0, %v608
  %v610 = vpop.f32.mrb[0].mxu0
  %611 = vmatprep.mubr.bf16.mxu0 0
  %612 = vmatmul.mubr.bf16.gmra.mrb[0].mxu0 %v369
  %v613 = vpop.f32.mrb[0].mxu0
  %v614 = vadd.f32 0.0, %v613
  %v615 = vpop.f32.mrb[0].mxu0
  %v616 = vpop.f32.mrb[0].mxu0
  %v617 = vadd.f32 0.0, %v616
  %v618 = vpop.f32.mrb[0].mxu0
  %619 = vmatprep.mubr.bf16.mxu0 0
  %620 = vmatmul.mubr.bf16.gmra.mrb[0].mxu0 %v370
  %v621 = vpop.f32.mrb[0].mxu0
  %v622 = vadd.f32 0.0, %v621
  %v623 = vpop.f32.mrb[0].mxu0
  %v624 = vpop.f32.mrb[0].mxu0
  %v625 = vadd.f32 0.0, %v624
  %v626 = vpop.f32.mrb[0].mxu0
  %627 = vmatprep.mubr.bf16.mxu0 0
  %628 = vmatmul.mubr.bf16.gmra.mrb[0].mxu0 %v371
  %v629 = vpop.f32.mrb[0].mxu0
  %v630 = vadd.f32 0.0, %v629
  %v631 = vpop.f32.mrb[0].mxu0
  %v632 = vpop.f32.mrb[0].mxu0
  %v633 = vadd.f32 0.0, %v632
  %v634 = vpop.f32.mrb[0].mxu0
  %635 = vmatprep.mubr.bf16.mxu0 0
  %636 = vmatmul.mubr.bf16.gmra.mrb[0].mxu0 %v372
  %v637 = vpop.f32.mrb[0].mxu0
  %v638 = vadd.f32 0.0, %v637
  %v639 = vpop.f32.mrb[0].mxu0
  %v640 = vpop.f32.mrb[0].mxu0
  %v641 = vadd.f32 0.0, %v640
  %v642 = vpop.f32.mrb[0].mxu0
  %643 = vmatprep.mubr.bf16.mxu0 0
  %644 = vmatmul.mubr.bf16.gmra.mrb[0].mxu0 %v373
  %v645 = vpop.f32.mrb[0].mxu0
  %v646 = vadd.f32 0.0, %v645
  %v647 = vpop.f32.mrb[0].mxu0
  %v648 = vpop.f32.mrb[0].mxu0
  %v649 = vadd.f32 0.0, %v648
  %v650 = vpop.f32.mrb[0].mxu0
  %651 = vmatprep.mubr.bf16.mxu0 0
  %652 = vmatmul.mubr.bf16.gmra.mrb[0].mxu0 %v374
  %v653 = vpop.f32.mrb[0].mxu0
  %v654 = vadd.f32 0.0, %v653
  %v655 = vpop.f32.mrb[0].mxu0
  %v656 = vpop.f32.mrb[0].mxu0
  %v657 = vadd.f32 0.0, %v656
  %v658 = vpop.f32.mrb[0].mxu0
  %659 = vmatprep.mubr.bf16.mxu0 0
  %660 = vmatmul.mubr.bf16.gmra.mrb[0].mxu0 %v375
  %v661 = vpop.f32.mrb[0].mxu0
  %v662 = vadd.f32 0.0, %v661
  %v663 = vpop.f32.mrb[0].mxu0
  %v664 = vpop.f32.mrb[0].mxu0
  %v665 = vadd.f32 0.0, %v664
  %v666 = vpop.f32.mrb[0].mxu0
  %667 = vmatprep.mubr.bf16.mxu0 0
  %668 = vmatmul.mubr.bf16.gmra.mrb[0].mxu0 %v376
  %v669 = vpop.f32.mrb[0].mxu0
  %v670 = vadd.f32 0.0, %v669
  %v671 = vpop.f32.mrb[0].mxu0
  %v672 = vpop.f32.mrb[0].mxu0
  %v673 = vadd.f32 0.0, %v672
  %v674 = vpop.f32.mrb[0].mxu0
  %675 = vmatprep.mubr.bf16.mxu0 0
  %676 = vmatmul.mubr.bf16.gmra.mrb[0].mxu0 %v377
  %v677 = vpop.f32.mrb[0].mxu0
  %v678 = vadd.f32 0.0, %v677
  %v679 = vpop.f32.mrb[0].mxu0
  %v680 = vpop.f32.mrb[0].mxu0
  %v681 = vadd.f32 0.0, %v680
  %v682 = vpop.f32.mrb[0].mxu0
  %683 = vmatprep.mubr.bf16.mxu0 0
  %684 = vmatmul.mubr.bf16.gmra.mrb[0].mxu0 %v378
  %v685 = vpop.f32.mrb[0].mxu0
  %v686 = vadd.f32 0.0, %v685
  %v687 = vpop.f32.mrb[0].mxu0
  %v688 = vpop.f32.mrb[0].mxu0
  %v689 = vadd.f32 0.0, %v688
  %v690 = vpop.f32.mrb[0].mxu0
  %691 = vmatprep.mubr.bf16.mxu0 0
  %692 = vmatmul.mubr.bf16.gmra.mrb[0].mxu0 %v379
  %v693 = vpop.f32.mrb[0].mxu0
  %v694 = vadd.f32 0.0, %v693
  %v695 = vpop.f32.mrb[0].mxu0
  %v696 = vpop.f32.mrb[0].mxu0
  %v697 = vadd.f32 0.0, %v696
  %v698 = vpop.f32.mrb[0].mxu0
  %699 = vmatprep.mubr.bf16.mxu0 0
  %700 = vmatmul.mubr.bf16.gmra.mrb[0].mxu0 %v380
  %v701 = vpop.f32.mrb[0].mxu0
  %v702 = vadd.f32 0.0, %v701
  %v703 = vpop.f32.mrb[0].mxu0
  %v704 = vpop.f32.mrb[0].mxu0
  %v705 = vadd.f32 0.0, %v704
  %v706 = vpop.f32.mrb[0].mxu0
  %707 = vmatprep.mubr.bf16.mxu0 0
  %708 = vmatmul.mubr.bf16.gmra.mrb[0].mxu0 %v381
  %v709 = vpop.f32.mrb[0].mxu0
  %v710 = vadd.f32 0.0, %v709
  %v711 = vpop.f32.mrb[0].mxu0
  %v712 = vpop.f32.mrb[0].mxu0
  %v713 = vadd.f32 0.0, %v712
  %v714 = vpop.f32.mrb[0].mxu0
  %715 = vmatprep.mubr.bf16.mxu0 0
  %716 = vmatmul.mubr.bf16.gmra.mrb[0].mxu0 %v382
  %v717 = vpop.f32.mrb[0].mxu0
  %v718 = vadd.f32 0.0, %v717
  %v719 = vpop.f32.mrb[0].mxu0
  %v720 = vpop.f32.mrb[0].mxu0
  %v721 = vadd.f32 0.0, %v720
  %v722 = vpop.f32.mrb[0].mxu0
  %723 = vmatprep.mubr.bf16.mxu0 0
  %724 = vmatmul.mubr.bf16.gmra.mrb[0].mxu0 %v383
  %v725 = vpop.f32.mrb[0].mxu0
  %v726 = vadd.f32 0.0, %v725
  %v727 = vpop.f32.mrb[0].mxu0
  %v728 = vpop.f32.mrb[0].mxu0
  %v729 = vadd.f32 0.0, %v728
  %v730 = vpop.f32.mrb[0].mxu0
  %731 = vmatprep.mubr.bf16.mxu0 0
  %732 = vmatmul.mubr.bf16.gmra.mrb[0].mxu0 %v384
  %v733 = vpop.f32.mrb[0].mxu0
  %v734 = vadd.f32 0.0, %v733
  %v735 = vpop.f32.mrb[0].mxu0
  %v736 = vpop.f32.mrb[0].mxu0
  %v737 = vadd.f32 0.0, %v736
  %v738 = vpop.f32.mrb[0].mxu0
  %739 = vmatprep.mubr.bf16.mxu0 0
  %740 = vmatmul.mubr.bf16.gmra.mrb[0].mxu0 %v385
  %v741 = vpop.f32.mrb[0].mxu0
  %v742 = vadd.f32 0.0, %v741
  %v743 = vpop.f32.mrb[0].mxu0
  %v744 = vpop.f32.mrb[0].mxu0
  %v745 = vadd.f32 0.0, %v744
  %v746 = vpop.f32.mrb[0].mxu0
  %747 = vmatprep.mubr.bf16.mxu0 0
  %748 = vmatmul.mubr.bf16.gmra.mrb[0].mxu0 %v386
  %v749 = vpop.f32.mrb[0].mxu0
  %v750 = vadd.f32 0.0, %v749
  %v751 = vpop.f32.mrb[0].mxu0
  %v752 = vpop.f32.mrb[0].mxu0
  %v753 = vadd.f32 0.0, %v752
  %v754 = vpop.f32.mrb[0].mxu0
  %755 = vdwg.mxu0
  %v756 = vadd.f32 %v83, %v502
  %v757 = vadd.f32 %v84, %v505
  %v758 = vadd.f32 %v85, %v510
  %v759 = vadd.f32 %v86, %v513
  %v760 = vadd.f32 %v87, %v518
  %v761 = vadd.f32 %v88, %v521
  %v762 = vadd.f32 %v89, %v526
  %v763 = vadd.f32 %v90, %v529
  %v764 = vadd.f32 %v91, %v534
  %v765 = vadd.f32 %v92, %v537
  %v766 = vadd.f32 %v93, %v542
  %v767 = vadd.f32 %v94, %v545
  %v768 = vadd.f32 %v95, %v550
  %v769 = vadd.f32 %v96, %v553
  %v770 = vadd.f32 %v97, %v558
  %v771 = vadd.f32 %v98, %v561
  %v772 = vadd.f32 %v99, %v566
  %v773 = vadd.f32 %v100, %v569
  %v774 = vadd.f32 %v101, %v574
  %v775 = vadd.f32 %v102, %v577
  %v776 = vadd.f32 %v103, %v582
  %v777 = vadd.f32 %v104, %v585
  %v778 = vadd.f32 %v105, %v590
  %v779 = vadd.f32 %v106, %v593
  %v780 = vadd.f32 %v107, %v598
  %v781 = vadd.f32 %v108, %v601
  %v782 = vadd.f32 %v109, %v606
  %v783 = vadd.f32 %v110, %v609
  %v784 = vadd.f32 %v111, %v614
  %v785 = vadd.f32 %v112, %v617
  %v786 = vadd.f32 %v113, %v622
  %v787 = vadd.f32 %v114, %v625
  %v788 = vadd.f32 %v115, %v630
  %v789 = vadd.f32 %v116, %v633
  %v790 = vadd.f32 %v117, %v638
  %v791 = vadd.f32 %v118, %v641
  %v792 = vadd.f32 %v119, %v646
  %v793 = vadd.f32 %v120, %v649
  %v794 = vadd.f32 %v121, %v654
  %v795 = vadd.f32 %v122, %v657
  %v796 = vadd.f32 %v123, %v662
  %v797 = vadd.f32 %v124, %v665
  %v798 = vadd.f32 %v125, %v670
  %v799 = vadd.f32 %v126, %v673
  %v800 = vadd.f32 %v127, %v678
  %v801 = vadd.f32 %v128, %v681
  %v802 = vadd.f32 %v129, %v686
  %v803 = vadd.f32 %v130, %v689
  %v804 = vadd.f32 %v131, %v694
  %v805 = vadd.f32 %v132, %v697
  %v806 = vadd.f32 %v133, %v702
  %v807 = vadd.f32 %v134, %v705
  %v808 = vadd.f32 %v135, %v710
  %v809 = vadd.f32 %v136, %v713
  %v810 = vadd.f32 %v137, %v718
  %v811 = vadd.f32 %v138, %v721
  %v812 = vadd.f32 %v139, %v726
  %v813 = vadd.f32 %v140, %v729
  %v814 = vadd.f32 %v141, %v734
  %v815 = vadd.f32 %v142, %v737
  %v816 = vadd.f32 %v143, %v742
  %v817 = vadd.f32 %v144, %v745
  %v818 = vadd.f32 %v145, %v750
  %v819 = vadd.f32 %v146, %v753
  %820 = vst [vmem:[%s3] sm:$0xff] %v756
  %821 = vst [vmem:[%s3 + $0x8] sm:$0xff] %v757
  %822 = vst [vmem:[%s3 + $0x10] sm:$0xff] %v758
  %823 = vst [vmem:[%s3 + $0x18] sm:$0xff] %v759
  %824 = vst [vmem:[%s3 + $0x20] sm:$0xff] %v760
  %825 = vst [vmem:[%s3 + $0x28] sm:$0xff] %v761
  %826 = vst [vmem:[%s3 + $0x30] sm:$0xff] %v762
  %827 = vst [vmem:[%s3 + $0x38] sm:$0xff] %v763
  %828 = vst [vmem:[%s3 + $0x40] sm:$0xff] %v764
  %829 = vst [vmem:[%s3 + $0x48] sm:$0xff] %v765
  %830 = vst [vmem:[%s3 + $0x50] sm:$0xff] %v766
  %831 = vst [vmem:[%s3 + $0x58] sm:$0xff] %v767
  %832 = vst [vmem:[%s3 + $0x60] sm:$0xff] %v768
  %833 = vst [vmem:[%s3 + $0x68] sm:$0xff] %v769
  %834 = vst [vmem:[%s3 + $0x70] sm:$0xff] %v770
  %835 = vst [vmem:[%s3 + $0x78] sm:$0xff] %v771
  %836 = vst [vmem:[%s3 + $0x80] sm:$0xff] %v772
  %837 = vst [vmem:[%s3 + $0x88] sm:$0xff] %v773
  %838 = vst [vmem:[%s3 + $0x90] sm:$0xff] %v774
  %839 = vst [vmem:[%s3 + $0x98] sm:$0xff] %v775
  %840 = vst [vmem:[%s3 + $0xa0] sm:$0xff] %v776
  %841 = vst [vmem:[%s3 + $0xa8] sm:$0xff] %v777
  %842 = vst [vmem:[%s3 + $0xb0] sm:$0xff] %v778
  %843 = vst [vmem:[%s3 + $0xb8] sm:$0xff] %v779
  %844 = vst [vmem:[%s3 + $0xc0] sm:$0xff] %v780
  %845 = vst [vmem:[%s3 + $0xc8] sm:$0xff] %v781
  %846 = vst [vmem:[%s3 + $0xd0] sm:$0xff] %v782
  %847 = vst [vmem:[%s3 + $0xd8] sm:$0xff] %v783
  %848 = vst [vmem:[%s3 + $0xe0] sm:$0xff] %v784
  %849 = vst [vmem:[%s3 + $0xe8] sm:$0xff] %v785
  %850 = vst [vmem:[%s3 + $0xf0] sm:$0xff] %v786
  %851 = vst [vmem:[%s3 + $0xf8] sm:$0xff] %v787
  %852 = vst [vmem:[%s3 + $0x100] sm:$0xff] %v788
  %853 = vst [vmem:[%s3 + $0x108] sm:$0xff] %v789
  %854 = vst [vmem:[%s3 + $0x110] sm:$0xff] %v790
  %855 = vst [vmem:[%s3 + $0x118] sm:$0xff] %v791
  %856 = vst [vmem:[%s3 + $0x120] sm:$0xff] %v792
  %857 = vst [vmem:[%s3 + $0x128] sm:$0xff] %v793
  %858 = vst [vmem:[%s3 + $0x130] sm:$0xff] %v794
  %859 = vst [vmem:[%s3 + $0x138] sm:$0xff] %v795
  %860 = vst [vmem:[%s3 + $0x140] sm:$0xff] %v796
  %861 = vst [vmem:[%s3 + $0x148] sm:$0xff] %v797
  %862 = vst [vmem:[%s3 + $0x150] sm:$0xff] %v798
  %863 = vst [vmem:[%s3 + $0x158] sm:$0xff] %v799
  %864 = vst [vmem:[%s3 + $0x160] sm:$0xff] %v800
  %865 = vst [vmem:[%s3 + $0x168] sm:$0xff] %v801
  %866 = vst [vmem:[%s3 + $0x170] sm:$0xff] %v802
  %867 = vst [vmem:[%s3 + $0x178] sm:$0xff] %v803
  %868 = vst [vmem:[%s3 + $0x180] sm:$0xff] %v804
  %869 = vst [vmem:[%s3 + $0x188] sm:$0xff] %v805
  %870 = vst [vmem:[%s3 + $0x190] sm:$0xff] %v806
  %871 = vst [vmem:[%s3 + $0x198] sm:$0xff] %v807
  %872 = vst [vmem:[%s3 + $0x1a0] sm:$0xff] %v808
  %873 = vst [vmem:[%s3 + $0x1a8] sm:$0xff] %v809
  %874 = vst [vmem:[%s3 + $0x1b0] sm:$0xff] %v810
  %875 = vst [vmem:[%s3 + $0x1b8] sm:$0xff] %v811
  %876 = vst [vmem:[%s3 + $0x1c0] sm:$0xff] %v812
  %877 = vst [vmem:[%s3 + $0x1c8] sm:$0xff] %v813
  %878 = vst [vmem:[%s3 + $0x1d0] sm:$0xff] %v814
  %879 = vst [vmem:[%s3 + $0x1d8] sm:$0xff] %v815
  %880 = vst [vmem:[%s3 + $0x1e0] sm:$0xff] %v816
  %881 = vst [vmem:[%s3 + $0x1e8] sm:$0xff] %v817
  %882 = vst [vmem:[%s3 + $0x1f0] sm:$0xff] %v818
  %883 = vst [vmem:[%s3 + $0x1f8] sm:$0xff] %v819
  // Predicated region
  $region18: #{discriminator_sngan_forward.7} parent=0 // pred_check
    %p884 = pneg %p15
  $region19: #{discriminator_sngan_forward.7} parent=0 // pred_check_branch
    %886 = sbr.rel (%p884) target = $region21
  $region20: #{discriminator_sngan_forward.7} parent=0 // pred_region
    %v887 = vld [vmem:[%s3] sm:$0xff]
    %v888 = vld [vmem:[%s3 + $0x8] sm:$0xff]
    %v889 = vld [vmem:[%s3 + $0x10] sm:$0xff]
    %v890 = vld [vmem:[%s3 + $0x18] sm:$0xff]
    %v891 = vld [vmem:[%s3 + $0x20] sm:$0xff]
    %v892 = vld [vmem:[%s3 + $0x28] sm:$0xff]
    %v893 = vld [vmem:[%s3 + $0x30] sm:$0xff]
    %v894 = vld [vmem:[%s3 + $0x38] sm:$0xff]
    %v895 = vld [vmem:[%s3 + $0x40] sm:$0xff]
    %v896 = vld [vmem:[%s3 + $0x48] sm:$0xff]
    %v897 = vld [vmem:[%s3 + $0x50] sm:$0xff]
    %v898 = vld [vmem:[%s3 + $0x58] sm:$0xff]
    %v899 = vld [vmem:[%s3 + $0x60] sm:$0xff]
    %v900 = vld [vmem:[%s3 + $0x68] sm:$0xff]
    %v901 = vld [vmem:[%s3 + $0x70] sm:$0xff]
    %v902 = vld [vmem:[%s3 + $0x78] sm:$0xff]
    %v903 = vld [vmem:[%s3 + $0x80] sm:$0xff]
    %v904 = vld [vmem:[%s3 + $0x88] sm:$0xff]
    %v905 = vld [vmem:[%s3 + $0x90] sm:$0xff]
    %v906 = vld [vmem:[%s3 + $0x98] sm:$0xff]
    %v907 = vld [vmem:[%s3 + $0xa0] sm:$0xff]
    %v908 = vld [vmem:[%s3 + $0xa8] sm:$0xff]
    %v909 = vld [vmem:[%s3 + $0xb0] sm:$0xff]
    %v910 = vld [vmem:[%s3 + $0xb8] sm:$0xff]
    %v911 = vld [vmem:[%s3 + $0xc0] sm:$0xff]
    %v912 = vld [vmem:[%s3 + $0xc8] sm:$0xff]
    %v913 = vld [vmem:[%s3 + $0xd0] sm:$0xff]
    %v914 = vld [vmem:[%s3 + $0xd8] sm:$0xff]
    %v915 = vld [vmem:[%s3 + $0xe0] sm:$0xff]
    %v916 = vld [vmem:[%s3 + $0xe8] sm:$0xff]
    %v917 = vld [vmem:[%s3 + $0xf0] sm:$0xff]
    %v918 = vld [vmem:[%s3 + $0xf8] sm:$0xff]
    %v919 = vld [vmem:[%s3 + $0x100] sm:$0xff]
    %v920 = vld [vmem:[%s3 + $0x108] sm:$0xff]
    %v921 = vld [vmem:[%s3 + $0x110] sm:$0xff]
    %v922 = vld [vmem:[%s3 + $0x118] sm:$0xff]
    %v923 = vld [vmem:[%s3 + $0x120] sm:$0xff]
    %v924 = vld [vmem:[%s3 + $0x128] sm:$0xff]
    %v925 = vld [vmem:[%s3 + $0x130] sm:$0xff]
    %v926 = vld [vmem:[%s3 + $0x138] sm:$0xff]
    %v927 = vld [vmem:[%s3 + $0x140] sm:$0xff]
    %v928 = vld [vmem:[%s3 + $0x148] sm:$0xff]
    %v929 = vld [vmem:[%s3 + $0x150] sm:$0xff]
    %v930 = vld [vmem:[%s3 + $0x158] sm:$0xff]
    %v931 = vld [vmem:[%s3 + $0x160] sm:$0xff]
    %v932 = vld [vmem:[%s3 + $0x168] sm:$0xff]
    %v933 = vld [vmem:[%s3 + $0x170] sm:$0xff]
    %v934 = vld [vmem:[%s3 + $0x178] sm:$0xff]
    %v935 = vld [vmem:[%s3 + $0x180] sm:$0xff]
    %v936 = vld [vmem:[%s3 + $0x188] sm:$0xff]
    %v937 = vld [vmem:[%s3 + $0x190] sm:$0xff]
    %v938 = vld [vmem:[%s3 + $0x198] sm:$0xff]
    %v939 = vld [vmem:[%s3 + $0x1a0] sm:$0xff]
    %v940 = vld [vmem:[%s3 + $0x1a8] sm:$0xff]
    %v941 = vld [vmem:[%s3 + $0x1b0] sm:$0xff]
    %v942 = vld [vmem:[%s3 + $0x1b8] sm:$0xff]
    %v943 = vld [vmem:[%s3 + $0x1c0] sm:$0xff]
    %v944 = vld [vmem:[%s3 + $0x1c8] sm:$0xff]
    %v945 = vld [vmem:[%s3 + $0x1d0] sm:$0xff]
    %v946 = vld [vmem:[%s3 + $0x1d8] sm:$0xff]
    %v947 = vld [vmem:[%s3 + $0x1e0] sm:$0xff]
    %v948 = vld [vmem:[%s3 + $0x1e8] sm:$0xff]
    %v949 = vld [vmem:[%s3 + $0x1f0] sm:$0xff]
    %v950 = vld [vmem:[%s3 + $0x1f8] sm:$0xff]
    %v951 = vld [vmem:[%s2] sm:$0x1]
    %v953 = vlaneseq
    %v954 = vshrl.u32 %v953, 7
    %v955 = vsub.s32 0, %v954
    %v956 = vrot.slane %v951, %v955
    %v958 = vadd.f32 %v887, %v956
    %v959 = vadd.f32 %v888, %v956
    %v960 = vadd.f32 %v889, %v956
    %v961 = vadd.f32 %v890, %v956
    %v962 = vadd.f32 %v891, %v956
    %v963 = vadd.f32 %v892, %v956
    %v964 = vadd.f32 %v893, %v956
    %v965 = vadd.f32 %v894, %v956
    %v966 = vadd.f32 %v895, %v956
    %v967 = vadd.f32 %v896, %v956
    %v968 = vadd.f32 %v897, %v956
    %v969 = vadd.f32 %v898, %v956
    %v970 = vadd.f32 %v899, %v956
    %v971 = vadd.f32 %v900, %v956
    %v972 = vadd.f32 %v901, %v956
    %v973 = vadd.f32 %v902, %v956
    %v974 = vadd.f32 %v903, %v956
    %v975 = vadd.f32 %v904, %v956
    %v976 = vadd.f32 %v905, %v956
    %v977 = vadd.f32 %v906, %v956
    %v978 = vadd.f32 %v907, %v956
    %v979 = vadd.f32 %v908, %v956
    %v980 = vadd.f32 %v909, %v956
    %v981 = vadd.f32 %v910, %v956
    %v982 = vadd.f32 %v911, %v956
    %v983 = vadd.f32 %v912, %v956
    %v984 = vadd.f32 %v913, %v956
    %v985 = vadd.f32 %v914, %v956
    %v986 = vadd.f32 %v915, %v956
    %v987 = vadd.f32 %v916, %v956
    %v988 = vadd.f32 %v917, %v956
    %v989 = vadd.f32 %v918, %v956
    %v990 = vadd.f32 %v919, %v956
    %v991 = vadd.f32 %v920, %v956
    %v992 = vadd.f32 %v921, %v956
    %v993 = vadd.f32 %v922, %v956
    %v994 = vadd.f32 %v923, %v956
    %v995 = vadd.f32 %v924, %v956
    %v996 = vadd.f32 %v925, %v956
    %v997 = vadd.f32 %v926, %v956
    %v998 = vadd.f32 %v927, %v956
    %v999 = vadd.f32 %v928, %v956
    %v1000 = vadd.f32 %v929, %v956
    %v1001 = vadd.f32 %v930, %v956
    %v1002 = vadd.f32 %v931, %v956
    %v1003 = vadd.f32 %v932, %v956
    %v1004 = vadd.f32 %v933, %v956
    %v1005 = vadd.f32 %v934, %v956
    %v1006 = vadd.f32 %v935, %v956
    %v1007 = vadd.f32 %v936, %v956
    %v1008 = vadd.f32 %v937, %v956
    %v1009 = vadd.f32 %v938, %v956
    %v1010 = vadd.f32 %v939, %v956
    %v1011 = vadd.f32 %v940, %v956
    %v1012 = vadd.f32 %v941, %v956
    %v1013 = vadd.f32 %v942, %v956
    %v1014 = vadd.f32 %v943, %v956
    %v1015 = vadd.f32 %v944, %v956
    %v1016 = vadd.f32 %v945, %v956
    %v1017 = vadd.f32 %v946, %v956
    %v1018 = vadd.f32 %v947, %v956
    %v1019 = vadd.f32 %v948, %v956
    %v1020 = vadd.f32 %v949, %v956
    %v1021 = vadd.f32 %v950, %v956
    %vm1022 = vcmp.ge.f32.partialorder %v958, 0.0
    %vm1023 = vcmp.ge.f32.partialorder %v959, 0.0
    %vm1024 = vcmp.ge.f32.partialorder %v960, 0.0
    %vm1025 = vcmp.ge.f32.partialorder %v961, 0.0
    %vm1026 = vcmp.ge.f32.partialorder %v962, 0.0
    %vm1027 = vcmp.ge.f32.partialorder %v963, 0.0
    %vm1028 = vcmp.ge.f32.partialorder %v964, 0.0
    %vm1029 = vcmp.ge.f32.partialorder %v965, 0.0
    %vm1030 = vcmp.ge.f32.partialorder %v966, 0.0
    %vm1031 = vcmp.ge.f32.partialorder %v967, 0.0
    %vm1032 = vcmp.ge.f32.partialorder %v968, 0.0
    %vm1033 = vcmp.ge.f32.partialorder %v969, 0.0
    %vm1034 = vcmp.ge.f32.partialorder %v970, 0.0
    %vm1035 = vcmp.ge.f32.partialorder %v971, 0.0
    %vm1036 = vcmp.ge.f32.partialorder %v972, 0.0
    %vm1037 = vcmp.ge.f32.partialorder %v973, 0.0
    %vm1038 = vcmp.ge.f32.partialorder %v974, 0.0
    %vm1039 = vcmp.ge.f32.partialorder %v975, 0.0
    %vm1040 = vcmp.ge.f32.partialorder %v976, 0.0
    %vm1041 = vcmp.ge.f32.partialorder %v977, 0.0
    %vm1042 = vcmp.ge.f32.partialorder %v978, 0.0
    %vm1043 = vcmp.ge.f32.partialorder %v979, 0.0
    %vm1044 = vcmp.ge.f32.partialorder %v980, 0.0
    %vm1045 = vcmp.ge.f32.partialorder %v981, 0.0
    %vm1046 = vcmp.ge.f32.partialorder %v982, 0.0
    %vm1047 = vcmp.ge.f32.partialorder %v983, 0.0
    %vm1048 = vcmp.ge.f32.partialorder %v984, 0.0
    %vm1049 = vcmp.ge.f32.partialorder %v985, 0.0
    %vm1050 = vcmp.ge.f32.partialorder %v986, 0.0
    %vm1051 = vcmp.ge.f32.partialorder %v987, 0.0
    %vm1052 = vcmp.ge.f32.partialorder %v988, 0.0
    %vm1053 = vcmp.ge.f32.partialorder %v989, 0.0
    %vm1054 = vcmp.ge.f32.partialorder %v990, 0.0
    %vm1055 = vcmp.ge.f32.partialorder %v991, 0.0
    %vm1056 = vcmp.ge.f32.partialorder %v992, 0.0
    %vm1057 = vcmp.ge.f32.partialorder %v993, 0.0
    %vm1058 = vcmp.ge.f32.partialorder %v994, 0.0
    %vm1059 = vcmp.ge.f32.partialorder %v995, 0.0
    %vm1060 = vcmp.ge.f32.partialorder %v996, 0.0
    %vm1061 = vcmp.ge.f32.partialorder %v997, 0.0
    %vm1062 = vcmp.ge.f32.partialorder %v998, 0.0
    %vm1063 = vcmp.ge.f32.partialorder %v999, 0.0
    %vm1064 = vcmp.ge.f32.partialorder %v1000, 0.0
    %vm1065 = vcmp.ge.f32.partialorder %v1001, 0.0
    %vm1066 = vcmp.ge.f32.partialorder %v1002, 0.0
    %vm1067 = vcmp.ge.f32.partialorder %v1003, 0.0
    %vm1068 = vcmp.ge.f32.partialorder %v1004, 0.0
    %vm1069 = vcmp.ge.f32.partialorder %v1005, 0.0
    %vm1070 = vcmp.ge.f32.partialorder %v1006, 0.0
    %vm1071 = vcmp.ge.f32.partialorder %v1007, 0.0
    %vm1072 = vcmp.ge.f32.partialorder %v1008, 0.0
    %vm1073 = vcmp.ge.f32.partialorder %v1009, 0.0
    %vm1074 = vcmp.ge.f32.partialorder %v1010, 0.0
    %vm1075 = vcmp.ge.f32.partialorder %v1011, 0.0
    %vm1076 = vcmp.ge.f32.partialorder %v1012, 0.0
    %vm1077 = vcmp.ge.f32.partialorder %v1013, 0.0
    %vm1078 = vcmp.ge.f32.partialorder %v1014, 0.0
    %vm1079 = vcmp.ge.f32.partialorder %v1015, 0.0
    %vm1080 = vcmp.ge.f32.partialorder %v1016, 0.0
    %vm1081 = vcmp.ge.f32.partialorder %v1017, 0.0
    %vm1082 = vcmp.ge.f32.partialorder %v1018, 0.0
    %vm1083 = vcmp.ge.f32.partialorder %v1019, 0.0
    %vm1084 = vcmp.ge.f32.partialorder %v1020, 0.0
    %vm1085 = vcmp.ge.f32.partialorder %v1021, 0.0
    %v1086 = vmul.f32 %v958, 0.1
    %v1087 = vmul.f32 %v959, 0.1
    %v1088 = vmul.f32 %v960, 0.1
    %v1089 = vmul.f32 %v961, 0.1
    %v1090 = vmul.f32 %v962, 0.1
    %v1091 = vmul.f32 %v963, 0.1
    %v1092 = vmul.f32 %v964, 0.1
    %v1093 = vmul.f32 %v965, 0.1
    %v1094 = vmul.f32 %v966, 0.1
    %v1095 = vmul.f32 %v967, 0.1
    %v1096 = vmul.f32 %v968, 0.1
    %v1097 = vmul.f32 %v969, 0.1
    %v1098 = vmul.f32 %v970, 0.1
    %v1099 = vmul.f32 %v971, 0.1
    %v1100 = vmul.f32 %v972, 0.1
    %v1101 = vmul.f32 %v973, 0.1
    %v1102 = vmul.f32 %v974, 0.1
    %v1103 = vmul.f32 %v975, 0.1
    %v1104 = vmul.f32 %v976, 0.1
    %v1105 = vmul.f32 %v977, 0.1
    %v1106 = vmul.f32 %v978, 0.1
    %v1107 = vmul.f32 %v979, 0.1
    %v1108 = vmul.f32 %v980, 0.1
    %v1109 = vmul.f32 %v981, 0.1
    %v1110 = vmul.f32 %v982, 0.1
    %v1111 = vmul.f32 %v983, 0.1
    %v1112 = vmul.f32 %v984, 0.1
    %v1113 = vmul.f32 %v985, 0.1
    %v1114 = vmul.f32 %v986, 0.1
    %v1115 = vmul.f32 %v987, 0.1
    %v1116 = vmul.f32 %v988, 0.1
    %v1117 = vmul.f32 %v989, 0.1
    %v1118 = vmul.f32 %v990, 0.1
    %v1119 = vmul.f32 %v991, 0.1
    %v1120 = vmul.f32 %v992, 0.1
    %v1121 = vmul.f32 %v993, 0.1
    %v1122 = vmul.f32 %v994, 0.1
    %v1123 = vmul.f32 %v995, 0.1
    %v1124 = vmul.f32 %v996, 0.1
    %v1125 = vmul.f32 %v997, 0.1
    %v1126 = vmul.f32 %v998, 0.1
    %v1127 = vmul.f32 %v999, 0.1
    %v1128 = vmul.f32 %v1000, 0.1
    %v1129 = vmul.f32 %v1001, 0.1
    %v1130 = vmul.f32 %v1002, 0.1
    %v1131 = vmul.f32 %v1003, 0.1
    %v1132 = vmul.f32 %v1004, 0.1
    %v1133 = vmul.f32 %v1005, 0.1
    %v1134 = vmul.f32 %v1006, 0.1
    %v1135 = vmul.f32 %v1007, 0.1
    %v1136 = vmul.f32 %v1008, 0.1
    %v1137 = vmul.f32 %v1009, 0.1
    %v1138 = vmul.f32 %v1010, 0.1
    %v1139 = vmul.f32 %v1011, 0.1
    %v1140 = vmul.f32 %v1012, 0.1
    %v1141 = vmul.f32 %v1013, 0.1
    %v1142 = vmul.f32 %v1014, 0.1
    %v1143 = vmul.f32 %v1015, 0.1
    %v1144 = vmul.f32 %v1016, 0.1
    %v1145 = vmul.f32 %v1017, 0.1
    %v1146 = vmul.f32 %v1018, 0.1
    %v1147 = vmul.f32 %v1019, 0.1
    %v1148 = vmul.f32 %v1020, 0.1
    %v1149 = vmul.f32 %v1021, 0.1
    %v1150 = vsel %vm1022, %v958, %v1086
    %v1151 = vsel %vm1023, %v959, %v1087
    %v1152 = vsel %vm1024, %v960, %v1088
    %v1153 = vsel %vm1025, %v961, %v1089
    %v1154 = vsel %vm1026, %v962, %v1090
    %v1155 = vsel %vm1027, %v963, %v1091
    %v1156 = vsel %vm1028, %v964, %v1092
    %v1157 = vsel %vm1029, %v965, %v1093
    %v1158 = vsel %vm1030, %v966, %v1094
    %v1159 = vsel %vm1031, %v967, %v1095
    %v1160 = vsel %vm1032, %v968, %v1096
    %v1161 = vsel %vm1033, %v969, %v1097
    %v1162 = vsel %vm1034, %v970, %v1098
    %v1163 = vsel %vm1035, %v971, %v1099
    %v1164 = vsel %vm1036, %v972, %v1100
    %v1165 = vsel %vm1037, %v973, %v1101
    %v1166 = vsel %vm1038, %v974, %v1102
    %v1167 = vsel %vm1039, %v975, %v1103
    %v1168 = vsel %vm1040, %v976, %v1104
    %v1169 = vsel %vm1041, %v977, %v1105
    %v1170 = vsel %vm1042, %v978, %v1106
    %v1171 = vsel %vm1043, %v979, %v1107
    %v1172 = vsel %vm1044, %v980, %v1108
    %v1173 = vsel %vm1045, %v981, %v1109
    %v1174 = vsel %vm1046, %v982, %v1110
    %v1175 = vsel %vm1047, %v983, %v1111
    %v1176 = vsel %vm1048, %v984, %v1112
    %v1177 = vsel %vm1049, %v985, %v1113
    %v1178 = vsel %vm1050, %v986, %v1114
    %v1179 = vsel %vm1051, %v987, %v1115
    %v1180 = vsel %vm1052, %v988, %v1116
    %v1181 = vsel %vm1053, %v989, %v1117
    %v1182 = vsel %vm1054, %v990, %v1118
    %v1183 = vsel %vm1055, %v991, %v1119
    %v1184 = vsel %vm1056, %v992, %v1120
    %v1185 = vsel %vm1057, %v993, %v1121
    %v1186 = vsel %vm1058, %v994, %v1122
    %v1187 = vsel %vm1059, %v995, %v1123
    %v1188 = vsel %vm1060, %v996, %v1124
    %v1189 = vsel %vm1061, %v997, %v1125
    %v1190 = vsel %vm1062, %v998, %v1126
    %v1191 = vsel %vm1063, %v999, %v1127
    %v1192 = vsel %vm1064, %v1000, %v1128
    %v1193 = vsel %vm1065, %v1001, %v1129
    %v1194 = vsel %vm1066, %v1002, %v1130
    %v1195 = vsel %vm1067, %v1003, %v1131
    %v1196 = vsel %vm1068, %v1004, %v1132
    %v1197 = vsel %vm1069, %v1005, %v1133
    %v1198 = vsel %vm1070, %v1006, %v1134
    %v1199 = vsel %vm1071, %v1007, %v1135
    %v1200 = vsel %vm1072, %v1008, %v1136
    %v1201 = vsel %vm1073, %v1009, %v1137
    %v1202 = vsel %vm1074, %v1010, %v1138
    %v1203 = vsel %vm1075, %v1011, %v1139
    %v1204 = vsel %vm1076, %v1012, %v1140
    %v1205 = vsel %vm1077, %v1013, %v1141
    %v1206 = vsel %vm1078, %v1014, %v1142
    %v1207 = vsel %vm1079, %v1015, %v1143
    %v1208 = vsel %vm1080, %v1016, %v1144
    %v1209 = vsel %vm1081, %v1017, %v1145
    %v1210 = vsel %vm1082, %v1018, %v1146
    %v1211 = vsel %vm1083, %v1019, %v1147
    %v1212 = vsel %vm1084, %v1020, %v1148
    %v1213 = vsel %vm1085, %v1021, %v1149
    %1214 = vst [vmem:[%s3] sm:$0xff] %v1150
    %1215 = vst [vmem:[%s3 + $0x8] sm:$0xff] %v1151
    %1216 = vst [vmem:[%s3 + $0x10] sm:$0xff] %v1152
    %1217 = vst [vmem:[%s3 + $0x18] sm:$0xff] %v1153
    %1218 = vst [vmem:[%s3 + $0x20] sm:$0xff] %v1154
    %1219 = vst [vmem:[%s3 + $0x28] sm:$0xff] %v1155
    %1220 = vst [vmem:[%s3 + $0x30] sm:$0xff] %v1156
    %1221 = vst [vmem:[%s3 + $0x38] sm:$0xff] %v1157
    %1222 = vst [vmem:[%s3 + $0x40] sm:$0xff] %v1158
    %1223 = vst [vmem:[%s3 + $0x48] sm:$0xff] %v1159
    %1224 = vst [vmem:[%s3 + $0x50] sm:$0xff] %v1160
    %1225 = vst [vmem:[%s3 + $0x58] sm:$0xff] %v1161
    %1226 = vst [vmem:[%s3 + $0x60] sm:$0xff] %v1162
    %1227 = vst [vmem:[%s3 + $0x68] sm:$0xff] %v1163
    %1228 = vst [vmem:[%s3 + $0x70] sm:$0xff] %v1164
    %1229 = vst [vmem:[%s3 + $0x78] sm:$0xff] %v1165
    %1230 = vst [vmem:[%s3 + $0x80] sm:$0xff] %v1166
    %1231 = vst [vmem:[%s3 + $0x88] sm:$0xff] %v1167
    %1232 = vst [vmem:[%s3 + $0x90] sm:$0xff] %v1168
    %1233 = vst [vmem:[%s3 + $0x98] sm:$0xff] %v1169
    %1234 = vst [vmem:[%s3 + $0xa0] sm:$0xff] %v1170
    %1235 = vst [vmem:[%s3 + $0xa8] sm:$0xff] %v1171
    %1236 = vst [vmem:[%s3 + $0xb0] sm:$0xff] %v1172
    %1237 = vst [vmem:[%s3 + $0xb8] sm:$0xff] %v1173
    %1238 = vst [vmem:[%s3 + $0xc0] sm:$0xff] %v1174
    %1239 = vst [vmem:[%s3 + $0xc8] sm:$0xff] %v1175
    %1240 = vst [vmem:[%s3 + $0xd0] sm:$0xff] %v1176
    %1241 = vst [vmem:[%s3 + $0xd8] sm:$0xff] %v1177
    %1242 = vst [vmem:[%s3 + $0xe0] sm:$0xff] %v1178
    %1243 = vst [vmem:[%s3 + $0xe8] sm:$0xff] %v1179
    %1244 = vst [vmem:[%s3 + $0xf0] sm:$0xff] %v1180
    %1245 = vst [vmem:[%s3 + $0xf8] sm:$0xff] %v1181
    %1246 = vst [vmem:[%s3 + $0x100] sm:$0xff] %v1182
    %1247 = vst [vmem:[%s3 + $0x108] sm:$0xff] %v1183
    %1248 = vst [vmem:[%s3 + $0x110] sm:$0xff] %v1184
    %1249 = vst [vmem:[%s3 + $0x118] sm:$0xff] %v1185
    %1250 = vst [vmem:[%s3 + $0x120] sm:$0xff] %v1186
    %1251 = vst [vmem:[%s3 + $0x128] sm:$0xff] %v1187
    %1252 = vst [vmem:[%s3 + $0x130] sm:$0xff] %v1188
    %1253 = vst [vmem:[%s3 + $0x138] sm:$0xff] %v1189
    %1254 = vst [vmem:[%s3 + $0x140] sm:$0xff] %v1190
    %1255 = vst [vmem:[%s3 + $0x148] sm:$0xff] %v1191
    %1256 = vst [vmem:[%s3 + $0x150] sm:$0xff] %v1192
    %1257 = vst [vmem:[%s3 + $0x158] sm:$0xff] %v1193
    %1258 = vst [vmem:[%s3 + $0x160] sm:$0xff] %v1194
    %1259 = vst [vmem:[%s3 + $0x168] sm:$0xff] %v1195
    %1260 = vst [vmem:[%s3 + $0x170] sm:$0xff] %v1196
    %1261 = vst [vmem:[%s3 + $0x178] sm:$0xff] %v1197
    %1262 = vst [vmem:[%s3 + $0x180] sm:$0xff] %v1198
    %1263 = vst [vmem:[%s3 + $0x188] sm:$0xff] %v1199
    %1264 = vst [vmem:[%s3 + $0x190] sm:$0xff] %v1200
    %1265 = vst [vmem:[%s3 + $0x198] sm:$0xff] %v1201
    %1266 = vst [vmem:[%s3 + $0x1a0] sm:$0xff] %v1202
    %1267 = vst [vmem:[%s3 + $0x1a8] sm:$0xff] %v1203
    %1268 = vst [vmem:[%s3 + $0x1b0] sm:$0xff] %v1204
    %1269 = vst [vmem:[%s3 + $0x1b8] sm:$0xff] %v1205
    %1270 = vst [vmem:[%s3 + $0x1c0] sm:$0xff] %v1206
    %1271 = vst [vmem:[%s3 + $0x1c8] sm:$0xff] %v1207
    %1272 = vst [vmem:[%s3 + $0x1d0] sm:$0xff] %v1208
    %1273 = vst [vmem:[%s3 + $0x1d8] sm:$0xff] %v1209
    %1274 = vst [vmem:[%s3 + $0x1e0] sm:$0xff] %v1210
    %1275 = vst [vmem:[%s3 + $0x1e8] sm:$0xff] %v1211
    %1276 = vst [vmem:[%s3 + $0x1f0] sm:$0xff] %v1212
    %1277 = vst [vmem:[%s3 + $0x1f8] sm:$0xff] %v1213
  $region21: #{discriminator_sngan_forward.7} parent=0 // pred_fallthru
    _
  // Predicated region
  $region22: #{discriminator_sngan_forward.7} parent=0 // pred_check
    _
  $region23: #{discriminator_sngan_forward.7} parent=0 // pred_check_branch
    %1279 = sbr.rel (0) target = $region25
  $region24: #{discriminator_sngan_forward.7} parent=0 // pred_region
    _
  $region25: #{discriminator_sngan_forward.7} parent=0 // pred_fallthru
    _
  // Predicated region
  $region26: #{discriminator_sngan_forward.7} parent=0 // pred_check
    _
  $region27: #{discriminator_sngan_forward.7} parent=0 // pred_check_branch
    %1281 = sbr.rel (0) target = $region29
  $region28: #{discriminator_sngan_forward.7} parent=0 // pred_region
    _
  $region29: #{discriminator_sngan_forward.7} parent=0 // pred_fallthru
    _

// kernel: discriminator_sngan_forward.8
$region0: #{discriminator_sngan_forward.8}
  #allocation0 [shape = 'u32[]', space=smem, size = 0x4, offset = 0x4, fixed_abs, tag = 'smem constant byte address 0x4 - core index']
  #allocation1 [shape = 'u32[144,128]{1,0:T(1,128)}', space=vmem, size = 0x12000, scoped, tag = 'internal scratch']
  %s0 = inlined_call_operand.vmem [shape: bf16[128,1024], index: 0, kind: input, shape index: {}]
  %s1 = inlined_call_operand.vmem [shape: bf16[1024,128], index: 1, kind: input, shape index: {}]
  %s2 = inlined_call_operand.vmem [shape: f32[1,128], index: 2, kind: input, shape index: {}]
  %s3 = inlined_call_operand.vmem [shape: f32[128,128], index: 3, kind: output, shape index: {}]
  %s4 = sld [smem:[#allocation0]]
  $region76: #{discriminator_sngan_forward.8} parent=0
    _
  %s6 = ssub.s32 1, %s4
  %s7 = scalar_select 0, %s6, %s4
  $region1: #{discriminator_sngan_forward.8} parent=0
    #allocation2 [shape = 'u8[262144]{0}', space=vmem, size = 0x40000, scoped, tag = 'input window, operand 0']
    loop: start=0, step=1, limit=4
    $region2: #{discriminator_sngan_forward.8} parent=1 // loop_pre_header
      _
    $region3: #{discriminator_sngan_forward.8} parent=1 // loop_header
      %s9 = sphi 0, %s13
      %p10 = scmp.ge.s32.totalorder %s9, 4
      %s16 = sphi 0, %s35
      %s17 = sphi 0, %s31
      %s18 = sphi 0, %s27
      %s19 = sphi 0, %s16
      %s20 = sphi 0, %s17
      %s21 = sphi 0, %s18
      %s22 = sphi 0, %s19
      %s23 = sphi 0, %s20
      %s24 = sphi 0, %s21
      %s40 = sphi 0, %s42
      %s43 = sphi 0, %s40
      %s44 = sphi 0, %s43
      %s60 = sphi 0, %s44
      %s68 = sphi 0, %s70
      %s71 = sphi 0, %s68
      %s72 = sphi 0, %s71
      %s88 = sphi 0, %s72
      %s94 = sphi 0, %s96
      %s97 = sphi 0, %s94
      %s98 = sphi 0, %s97
      %s114 = sphi 0, %s98
      %s122 = sphi 0, %s124
      %s125 = sphi 0, %s122
      %s126 = sphi 0, %s125
      %s142 = sphi 0, %s126
    $region4: #{discriminator_sngan_forward.8} parent=1 // loop_header_branch
      %12 = sbr.rel (%p10) target = $region8
    $region5: #{discriminator_sngan_forward.8} parent=1 // loop_body
      %s14 = ssub.s32 %s9, 1
      %s15 = ssub.s32 %s9, 2
      %s25 = sadd.s32 1, %s18
      %p26 = scmp.ge.s32.totalorder %s25, 2
      %s27 = scalar_select %p26, 0, %s25
      %s28 = sadd.s32 1, %s17
      %s29 = scalar_select %p26, %s28, %s17
      %p30 = scmp.ge.s32.totalorder %s29, 1
      %s31 = scalar_select %p30, 0, %s29
      %s32 = sadd.s32 1, %s16
      %s33 = scalar_select %p30, %s32, %s16
      %p34 = scmp.ge.s32.totalorder %s33, 1
      %s35 = scalar_select %p34, 0, %s33
      %s36 = ssub.s32 %s16, %s35
      %s37 = ssub.s32 %s18, %s27
      %s38 = sor.u32 %s36, %s37
      %p39 = scmp.eq.s32.totalorder %s38, 0
      %s41 = sadd.s32 %s40, 1
      %s42 = scalar_select %p39, %s40, %s41
      %p45 = pneg %p39
      %p46 = scmp.eq.s32.totalorder %s9, 1
      %p47 = por %p45, %p46
      %p48 = scmp.ne.s32.totalorder %s40, %s43
      %p49 = scmp.eq.s32.totalorder %s9, 0
      %p50 = por %p48, %p49
      %p51 = scmp.ne.s32.totalorder %s40, %s43
      %p52 = scmp.eq.s32.totalorder %s14, 1
      %p53 = por %p51, %p52
      %p54 = scmp.ne.s32.totalorder %s43, %s44
      %p55 = scmp.eq.s32.totalorder %s14, 0
      %p56 = por %p54, %p55
      %p57 = scmp.ne.s32.totalorder %s43, %s44
      %p58 = scmp.eq.s32.totalorder %s15, 1
      %p59 = por %p57, %p58
      %p61 = scmp.ne.s32.totalorder %s44, %s60
      %p62 = scmp.eq.s32.totalorder %s15, 0
      %p63 = por %p61, %p62
      %s64 = ssub.s32 %s18, %s27
      %s65 = ssub.s32 %s17, %s31
      %s66 = sor.u32 %s64, %s65
      %p67 = scmp.eq.s32.totalorder %s66, 0
      %s69 = sadd.s32 %s68, 1
      %s70 = scalar_select %p67, %s68, %s69
      %p73 = pneg %p67
      %p74 = scmp.eq.s32.totalorder %s9, 1
      %p75 = por %p73, %p74
      %p76 = scmp.ne.s32.totalorder %s68, %s71
      %p77 = scmp.eq.s32.totalorder %s9, 0
      %p78 = por %p76, %p77
      %p79 = scmp.ne.s32.totalorder %s68, %s71
      %p80 = scmp.eq.s32.totalorder %s14, 1
      %p81 = por %p79, %p80
      %p82 = scmp.ne.s32.totalorder %s71, %s72
      %p83 = scmp.eq.s32.totalorder %s14, 0
      %p84 = por %p82, %p83
      %p85 = scmp.ne.s32.totalorder %s71, %s72
      %p86 = scmp.eq.s32.totalorder %s15, 1
      %p87 = por %p85, %p86
      %p89 = scmp.ne.s32.totalorder %s72, %s88
      %p90 = scmp.eq.s32.totalorder %s15, 0
      %p91 = por %p89, %p90
      %s92 = ssub.s32 %s17, %s31
      %p93 = scmp.eq.s32.totalorder %s92, 0
      %s95 = sadd.s32 %s94, 1
      %s96 = scalar_select %p93, %s94, %s95
      %p99 = pneg %p93
      %p100 = scmp.eq.s32.totalorder %s9, 1
      %p101 = por %p99, %p100
      %p102 = scmp.ne.s32.totalorder %s94, %s97
      %p103 = scmp.eq.s32.totalorder %s9, 0
      %p104 = por %p102, %p103
      %p105 = scmp.ne.s32.totalorder %s94, %s97
      %p106 = scmp.eq.s32.totalorder %s14, 1
      %p107 = por %p105, %p106
      %p108 = scmp.ne.s32.totalorder %s97, %s98
      %p109 = scmp.eq.s32.totalorder %s14, 0
      %p110 = por %p108, %p109
      %p111 = scmp.ne.s32.totalorder %s97, %s98
      %p112 = scmp.eq.s32.totalorder %s15, 1
      %p113 = por %p111, %p112
      %p115 = scmp.ne.s32.totalorder %s98, %s114
      %p116 = scmp.eq.s32.totalorder %s15, 0
      %p117 = por %p115, %p116
      %s118 = ssub.s32 %s16, %s35
      %s119 = ssub.s32 %s17, %s31
      %s120 = sor.u32 %s118, %s119
      %p121 = scmp.eq.s32.totalorder %s120, 0
      %s123 = sadd.s32 %s122, 1
      %s124 = scalar_select %p121, %s122, %s123
      %p127 = pneg %p121
      %p128 = scmp.eq.s32.totalorder %s9, 1
      %p129 = por %p127, %p128
      %p130 = scmp.ne.s32.totalorder %s122, %s125
      %p131 = scmp.eq.s32.totalorder %s9, 0
      %p132 = por %p130, %p131
      %p133 = scmp.ne.s32.totalorder %s122, %s125
      %p134 = scmp.eq.s32.totalorder %s14, 1
      %p135 = por %p133, %p134
      %p136 = scmp.ne.s32.totalorder %s125, %s126
      %p137 = scmp.eq.s32.totalorder %s14, 0
      %p138 = por %p136, %p137
      %p139 = scmp.ne.s32.totalorder %s125, %s126
      %p140 = scmp.eq.s32.totalorder %s15, 1
      %p141 = por %p139, %p140
      %p143 = scmp.ne.s32.totalorder %s126, %s142
      %p144 = scmp.eq.s32.totalorder %s15, 0
      %p145 = por %p143, %p144
      %p146 = scmp.le.s32.totalorder 1, %s9
      %p147 = scmp.lt.s32.totalorder %s9, 3
      %p148 = pnand %p146, %p147
      %p149 = pneg %p148
      // Predicated region
      $region9: #{discriminator_sngan_forward.8} parent=5 // pred_check
        _
      $region10: #{discriminator_sngan_forward.8} parent=5 // pred_check_branch
        %151 = sbr.rel (%p148) target = $region12
      $region11: #{discriminator_sngan_forward.8} parent=5 // pred_region
        %s152 = ssub.s32 %s9, 1
        // Predicated region
        $region13: #{discriminator_sngan_forward.8} parent=11 // pred_check
          %p153 = pneg %p110
        $region14: #{discriminator_sngan_forward.8} parent=11 // pred_check_branch
          %155 = sbr.rel (%p153) target = $region16
        $region15: #{discriminator_sngan_forward.8} parent=11 // pred_region
          %p156 = scmp.lt.s32.totalorder %s20, 0
          %s157 = scalar_select %p156, %s20, 0
          %s158 = scalar_lea.vmem %s2, %s157
        $region16: #{discriminator_sngan_forward.8} parent=11 // pred_fallthru
          _
      $region12: #{discriminator_sngan_forward.8} parent=5 // pred_fallthru
        _
      %p159 = scmp.lt.s32.totalorder %s9, 2
      // Predicated region
      $region17: #{discriminator_sngan_forward.8} parent=5 // pred_check
        %p160 = pneg %p159
      $region18: #{discriminator_sngan_forward.8} parent=5 // pred_check_branch
        %162 = sbr.rel (%p160) target = $region20
      $region19: #{discriminator_sngan_forward.8} parent=5 // pred_region
        // Predicated region
        $region21: #{discriminator_sngan_forward.8} parent=19 // pred_check
          %p163 = pneg %p50
        $region22: #{discriminator_sngan_forward.8} parent=19 // pred_check_branch
          %165 = sbr.rel (%p163) target = $region24
        $region23: #{discriminator_sngan_forward.8} parent=19 // pred_region
          %s166 = sand.u32 %s40, 1
          %s167 = sand.u32 %s40, 1
          %s168 = smul.addr %s167, 256
          %s169 = scalar_lea.vmem [#allocation2], %s168
          %s170 = smul.u32 16, %s16
          %s171 = smul.u32 4, %s18
          %s172 = smul.addr %s170, 8
          %s173 = sadd.s32 %s171, %s172
          %s174 = smul.addr %s173, 4
          %s175 = scalar_lea.vmem %s0, %s174
          // Predicated region
          $region25: #{discriminator_sngan_forward.8} parent=23 // pred_check
            _
          $region26: #{discriminator_sngan_forward.8} parent=23 // pred_check_branch
            %177 = sbr.rel (0) target = $region28
          $region27: #{discriminator_sngan_forward.8} parent=23 // pred_region
            // Predicated region
            $region29: #{discriminator_sngan_forward.8} parent=27 // pred_check
              _
            $region30: #{discriminator_sngan_forward.8} parent=27 // pred_check_branch
              %179 = sbr.rel (0) target = $region32
            $region31: #{discriminator_sngan_forward.8} parent=27 // pred_region
              loop: start=0, step=1, limit=1
              $region33: #{discriminator_sngan_forward.8} parent=31 // loop_pre_header
                _
              $region34: #{discriminator_sngan_forward.8} parent=31 // loop_header
                %s181 = sphi 0, %s185
                %p182 = scmp.ge.s32.totalorder %s181, 1
                %s186 = sphi %s175, %s175
                %s187 = sphi %s169, %s169
              $region35: #{discriminator_sngan_forward.8} parent=31 // loop_header_branch
                %184 = sbr.rel (%p182) target = $region39
              $region36: #{discriminator_sngan_forward.8} parent=31 // loop_body
                %v188 = vld [vmem:[%s186] sm:$0xff]
                %189 = vst [vmem:[%s187] sm:$0xff] %v188
                %v190 = vld [vmem:[%s186 + $0x8] sm:$0xff]
                %191 = vst [vmem:[%s187 + $0x8] sm:$0xff] %v190
                %v192 = vld [vmem:[%s186 + $0x20] sm:$0xff]
                %193 = vst [vmem:[%s187 + $0x10] sm:$0xff] %v192
                %v194 = vld [vmem:[%s186 + $0x28] sm:$0xff]
                %195 = vst [vmem:[%s187 + $0x18] sm:$0xff] %v194
                %v196 = vld [vmem:[%s186 + $0x40] sm:$0xff]
                %197 = vst [vmem:[%s187 + $0x20] sm:$0xff] %v196
                %v198 = vld [vmem:[%s186 + $0x48] sm:$0xff]
                %199 = vst [vmem:[%s187 + $0x28] sm:$0xff] %v198
                %v200 = vld [vmem:[%s186 + $0x60] sm:$0xff]
                %201 = vst [vmem:[%s187 + $0x30] sm:$0xff] %v200
                %v202 = vld [vmem:[%s186 + $0x68] sm:$0xff]
                %203 = vst [vmem:[%s187 + $0x38] sm:$0xff] %v202
                %v204 = vld [vmem:[%s186 + $0x80] sm:$0xff]
                %205 = vst [vmem:[%s187 + $0x40] sm:$0xff] %v204
                %v206 = vld [vmem:[%s186 + $0x88] sm:$0xff]
                %207 = vst [vmem:[%s187 + $0x48] sm:$0xff] %v206
                %v208 = vld [vmem:[%s186 + $0xa0] sm:$0xff]
                %209 = vst [vmem:[%s187 + $0x50] sm:$0xff] %v208
                %v210 = vld [vmem:[%s186 + $0xa8] sm:$0xff]
                %211 = vst [vmem:[%s187 + $0x58] sm:$0xff] %v210
                %v212 = vld [vmem:[%s186 + $0xc0] sm:$0xff]
                %213 = vst [vmem:[%s187 + $0x60] sm:$0xff] %v212
                %v214 = vld [vmem:[%s186 + $0xc8] sm:$0xff]
                %215 = vst [vmem:[%s187 + $0x68] sm:$0xff] %v214
                %v216 = vld [vmem:[%s186 + $0xe0] sm:$0xff]
                %217 = vst [vmem:[%s187 + $0x70] sm:$0xff] %v216
                %v218 = vld [vmem:[%s186 + $0xe8] sm:$0xff]
                %219 = vst [vmem:[%s187 + $0x78] sm:$0xff] %v218
                %v220 = vld [vmem:[%s186 + $0x100] sm:$0xff]
                %221 = vst [vmem:[%s187 + $0x80] sm:$0xff] %v220
                %v222 = vld [vmem:[%s186 + $0x108] sm:$0xff]
                %223 = vst [vmem:[%s187 + $0x88] sm:$0xff] %v222
                %v224 = vld [vmem:[%s186 + $0x120] sm:$0xff]
                %225 = vst [vmem:[%s187 + $0x90] sm:$0xff] %v224
                %v226 = vld [vmem:[%s186 + $0x128] sm:$0xff]
                %227 = vst [vmem:[%s187 + $0x98] sm:$0xff] %v226
                %v228 = vld [vmem:[%s186 + $0x140] sm:$0xff]
                %229 = vst [vmem:[%s187 + $0xa0] sm:$0xff] %v228
                %v230 = vld [vmem:[%s186 + $0x148] sm:$0xff]
                %231 = vst [vmem:[%s187 + $0xa8] sm:$0xff] %v230
                %v232 = vld [vmem:[%s186 + $0x160] sm:$0xff]
                %233 = vst [vmem:[%s187 + $0xb0] sm:$0xff] %v232
                %v234 = vld [vmem:[%s186 + $0x168] sm:$0xff]
                %235 = vst [vmem:[%s187 + $0xb8] sm:$0xff] %v234
                %v236 = vld [vmem:[%s186 + $0x180] sm:$0xff]
                %237 = vst [vmem:[%s187 + $0xc0] sm:$0xff] %v236
                %v238 = vld [vmem:[%s186 + $0x188] sm:$0xff]
                %239 = vst [vmem:[%s187 + $0xc8] sm:$0xff] %v238
                %v240 = vld [vmem:[%s186 + $0x1a0] sm:$0xff]
                %241 = vst [vmem:[%s187 + $0xd0] sm:$0xff] %v240
                %v242 = vld [vmem:[%s186 + $0x1a8] sm:$0xff]
                %243 = vst [vmem:[%s187 + $0xd8] sm:$0xff] %v242
                %v244 = vld [vmem:[%s186 + $0x1c0] sm:$0xff]
                %245 = vst [vmem:[%s187 + $0xe0] sm:$0xff] %v244
                %v246 = vld [vmem:[%s186 + $0x1c8] sm:$0xff]
                %247 = vst [vmem:[%s187 + $0xe8] sm:$0xff] %v246
                %v248 = vld [vmem:[%s186 + $0x1e0] sm:$0xff]
                %249 = vst [vmem:[%s187 + $0xf0] sm:$0xff] %v248
                %v250 = vld [vmem:[%s186 + $0x1e8] sm:$0xff]
                %251 = vst [vmem:[%s187 + $0xf8] sm:$0xff] %v250
              $region37: #{discriminator_sngan_forward.8} parent=31 // loop_footer
                %s185 = sadd.s32 1, %s181
              $region38: #{discriminator_sngan_forward.8} parent=31 // loop_footer_branch
                %180 = sbr.rel target = $region34
              $region39: #{discriminator_sngan_forward.8} parent=31 // loop_exit
                _
            $region32: #{discriminator_sngan_forward.8} parent=27 // pred_fallthru
              _
            // Predicated region
            $region40: #{discriminator_sngan_forward.8} parent=27 // pred_check
              _
            $region41: #{discriminator_sngan_forward.8} parent=27 // pred_check_branch
              %253 = sbr.rel target = $region43
            $region42: #{discriminator_sngan_forward.8} parent=27 // pred_region
              _
            $region43: #{discriminator_sngan_forward.8} parent=27 // pred_fallthru
              _
          $region28: #{discriminator_sngan_forward.8} parent=23 // pred_fallthru
            _
          %254 = vnop
        $region24: #{discriminator_sngan_forward.8} parent=19 // pred_fallthru
          _
        // Predicated region
        $region44: #{discriminator_sngan_forward.8} parent=19 // pred_check
          %p255 = pneg %p78
        $region45: #{discriminator_sngan_forward.8} parent=19 // pred_check_branch
          %257 = sbr.rel (%p255) target = $region47
        $region46: #{discriminator_sngan_forward.8} parent=19 // pred_region
          %s258 = smul.u32 64, %s18
          %p259 = scmp.lt.s32.totalorder %s258, 127
          %s260 = scalar_select %p259, %s258, 127
          %p261 = scmp.lt.s32.totalorder %s17, 0
          %s262 = scalar_select %p261, %s17, 0
          %s263 = sadd.s32 %s262, %s260
          %s264 = smul.addr %s263, 4
          %s265 = scalar_lea.vmem %s1, %s264
          %s266 = smul.u32 64, %s18
        $region47: #{discriminator_sngan_forward.8} parent=19 // pred_fallthru
          _
      $region20: #{discriminator_sngan_forward.8} parent=5 // pred_fallthru
        _
      %p267 = scmp.le.s32.totalorder 1, %s9
      %p268 = scmp.lt.s32.totalorder %s9, 3
      %p269 = pnand %p267, %p268
      %p270 = pneg %p269
      // Predicated region
      $region48: #{discriminator_sngan_forward.8} parent=5 // pred_check
        _
      $region49: #{discriminator_sngan_forward.8} parent=5 // pred_check_branch
        %272 = sbr.rel (%p269) target = $region51
      $region50: #{discriminator_sngan_forward.8} parent=5 // pred_region
        %s273 = ssub.s32 %s9, 1
        %s274 = sand.u32 %s43, 1
        %s275 = sand.u32 %s43, 1
        %s276 = smul.addr %s275, 256
        %s277 = scalar_lea.vmem [#allocation2], %s276
        // Predicated region
        $region52: #{discriminator_sngan_forward.8} parent=50 // pred_check
          %p278 = pneg %p56
        $region53: #{discriminator_sngan_forward.8} parent=50 // pred_check_branch
          %280 = sbr.rel (%p278) target = $region55
        $region54: #{discriminator_sngan_forward.8} parent=50 // pred_region
          _
        $region55: #{discriminator_sngan_forward.8} parent=50 // pred_fallthru
          _
        %s281 = sand.u32 %s43, 1
        %s282 = sand.u32 %s43, 1
        %s283 = smul.addr %s282, 256
        %s284 = scalar_lea.vmem [#allocation2], %s283
        %p285 = pneg %p56
        %p286 = pneg %p53
        %s287 = smul.u32 64, %s21
        %p288 = scmp.lt.s32.totalorder %s287, 127
        %s289 = scalar_select %p288, %s287, 127
        %p290 = scmp.lt.s32.totalorder %s20, 0
        %s291 = scalar_select %p290, %s20, 0
        %s292 = sadd.s32 %s291, %s289
        %s293 = smul.addr %s292, 4
        %s294 = scalar_lea.vmem %s1, %s293
        %p295 = pneg %p84
        %p296 = pneg %p81
        %p297 = scmp.lt.s32.totalorder %s20, 0
        %s298 = scalar_select %p297, %s20, 0
        %s299 = scalar_lea.vmem %s2, %s298
        %p300 = pneg %p110
        %p301 = pneg %p107
        %p302 = pneg %p138
        %p303 = pneg %p135
        %s304 = smul.u32 16, %s19
        %p305 = scmp.lt.s32.totalorder %s304, 15
        %s306 = scalar_select %p305, %s304, 15
        %p307 = scmp.lt.s32.totalorder %s20, 0
        %s308 = scalar_select %p307, %s20, 0
        %s309 = sadd.s32 %s308, %s306
        %s310 = smul.addr %s309, 8
        %s311 = scalar_lea.vmem %s3, %s310
        %s312 = smul.u32 16, %s19
        %s313 = smul.u32 4, %s21
        %s314 = smul.u32 64, %s21
        %p315 = scmp.lt.s32.totalorder %s314, 127
        %s316 = scalar_select %p315, %s314, 127
        %p317 = scmp.lt.s32.totalorder %s20, 0
        %s318 = scalar_select %p317, %s20, 0
        %s319 = sadd.s32 %s318, %s316
        %s320 = smul.addr %s319, 4
        %s321 = scalar_lea.vmem %s1, %s320
        %s322 = smul.u32 64, %s21
        %p323 = scmp.lt.s32.totalorder %s20, 0
        %s324 = scalar_select %p323, %s20, 0
        %s325 = scalar_lea.vmem %s2, %s324
        %s326 = smul.u32 16, %s19
        %p327 = scmp.lt.s32.totalorder %s326, 15
        %s328 = scalar_select %p327, %s326, 15
        %p329 = scmp.lt.s32.totalorder %s20, 0
        %s330 = scalar_select %p329, %s20, 0
        %s331 = sadd.s32 %s330, %s328
        %s332 = smul.addr %s331, 8
        %s333 = scalar_lea.vmem %s3, %s332
        %s334 = smul.u32 16, %s19
        %p336 = scmp.eq.s32.totalorder %s21, 0
        // Predicated region
        $region56: #{discriminator_sngan_forward.8} parent=50 // pred_check
          %p337 = pneg %p336
        $region57: #{discriminator_sngan_forward.8} parent=50 // pred_check_branch
          %339 = sbr.rel (%p337) target = $region59
        $region58: #{discriminator_sngan_forward.8} parent=50 // pred_region
          %340 = vst [vmem:[%s333] sm:$0xff] 0.0
          %341 = vst [vmem:[%s333 + $0x8] sm:$0xff] 0.0
          %342 = vst [vmem:[%s333 + $0x10] sm:$0xff] 0.0
          %343 = vst [vmem:[%s333 + $0x18] sm:$0xff] 0.0
          %344 = vst [vmem:[%s333 + $0x20] sm:$0xff] 0.0
          %345 = vst [vmem:[%s333 + $0x28] sm:$0xff] 0.0
          %346 = vst [vmem:[%s333 + $0x30] sm:$0xff] 0.0
          %347 = vst [vmem:[%s333 + $0x38] sm:$0xff] 0.0
          %348 = vst [vmem:[%s333 + $0x40] sm:$0xff] 0.0
          %349 = vst [vmem:[%s333 + $0x48] sm:$0xff] 0.0
          %350 = vst [vmem:[%s333 + $0x50] sm:$0xff] 0.0
          %351 = vst [vmem:[%s333 + $0x58] sm:$0xff] 0.0
          %352 = vst [vmem:[%s333 + $0x60] sm:$0xff] 0.0
          %353 = vst [vmem:[%s333 + $0x68] sm:$0xff] 0.0
          %354 = vst [vmem:[%s333 + $0x70] sm:$0xff] 0.0
          %355 = vst [vmem:[%s333 + $0x78] sm:$0xff] 0.0
        $region59: #{discriminator_sngan_forward.8} parent=50 // pred_fallthru
          _
        %v356 = vld [vmem:[%s333] sm:$0xff]
        %v357 = vld [vmem:[%s333 + $0x8] sm:$0xff]
        %v358 = vld [vmem:[%s333 + $0x10] sm:$0xff]
        %v359 = vld [vmem:[%s333 + $0x18] sm:$0xff]
        %v360 = vld [vmem:[%s333 + $0x20] sm:$0xff]
        %v361 = vld [vmem:[%s333 + $0x28] sm:$0xff]
        %v362 = vld [vmem:[%s333 + $0x30] sm:$0xff]
        %v363 = vld [vmem:[%s333 + $0x38] sm:$0xff]
        %v364 = vld [vmem:[%s333 + $0x40] sm:$0xff]
        %v365 = vld [vmem:[%s333 + $0x48] sm:$0xff]
        %v366 = vld [vmem:[%s333 + $0x50] sm:$0xff]
        %v367 = vld [vmem:[%s333 + $0x58] sm:$0xff]
        %v368 = vld [vmem:[%s333 + $0x60] sm:$0xff]
        %v369 = vld [vmem:[%s333 + $0x68] sm:$0xff]
        %v370 = vld [vmem:[%s333 + $0x70] sm:$0xff]
        %v371 = vld [vmem:[%s333 + $0x78] sm:$0xff]
        %v372 = vld [vmem:[%s277] sm:$0xff]
        %v373 = vld [vmem:[%s277 + $0x8] sm:$0xff]
        %v374 = vld [vmem:[%s277 + $0x10] sm:$0xff]
        %v375 = vld [vmem:[%s277 + $0x18] sm:$0xff]
        %v376 = vld [vmem:[%s277 + $0x20] sm:$0xff]
        %v377 = vld [vmem:[%s277 + $0x28] sm:$0xff]
        %v378 = vld [vmem:[%s277 + $0x30] sm:$0xff]
        %v379 = vld [vmem:[%s277 + $0x38] sm:$0xff]
        %v380 = vld [vmem:[%s277 + $0x40] sm:$0xff]
        %v381 = vld [vmem:[%s277 + $0x48] sm:$0xff]
        %v382 = vld [vmem:[%s277 + $0x50] sm:$0xff]
        %v383 = vld [vmem:[%s277 + $0x58] sm:$0xff]
        %v384 = vld [vmem:[%s277 + $0x60] sm:$0xff]
        %v385 = vld [vmem:[%s277 + $0x68] sm:$0xff]
        %v386 = vld [vmem:[%s277 + $0x70] sm:$0xff]
        %v387 = vld [vmem:[%s277 + $0x78] sm:$0xff]
        %v388 = vld [vmem:[%s277 + $0x80] sm:$0xff]
        %v389 = vld [vmem:[%s277 + $0x88] sm:$0xff]
        %v390 = vld [vmem:[%s277 + $0x90] sm:$0xff]
        %v391 = vld [vmem:[%s277 + $0x98] sm:$0xff]
        %v392 = vld [vmem:[%s277 + $0xa0] sm:$0xff]
        %v393 = vld [vmem:[%s277 + $0xa8] sm:$0xff]
        %v394 = vld [vmem:[%s277 + $0xb0] sm:$0xff]
        %v395 = vld [vmem:[%s277 + $0xb8] sm:$0xff]
        %v396 = vld [vmem:[%s277 + $0xc0] sm:$0xff]
        %v397 = vld [vmem:[%s277 + $0xc8] sm:$0xff]
        %v398 = vld [vmem:[%s277 + $0xd0] sm:$0xff]
        %v399 = vld [vmem:[%s277 + $0xd8] sm:$0xff]
        %v400 = vld [vmem:[%s277 + $0xe0] sm:$0xff]
        %v401 = vld [vmem:[%s277 + $0xe8] sm:$0xff]
        %v402 = vld [vmem:[%s277 + $0xf0] sm:$0xff]
        %v403 = vld [vmem:[%s277 + $0xf8] sm:$0xff]
        %v404 = vld [vmem:[%s321] sm:$0xf]
        %v405 = vld [vmem:[%s321 + $0x4] sm:$0xf]
        %v406 = vld [vmem:[%s321 + $0x8] sm:$0xf]
        %v407 = vld [vmem:[%s321 + $0xc] sm:$0xf]
        %v408 = vld [vmem:[%s321 + $0x10] sm:$0xf]
        %v409 = vld [vmem:[%s321 + $0x14] sm:$0xf]
        %v410 = vld [vmem:[%s321 + $0x18] sm:$0xf]
        %v411 = vld [vmem:[%s321 + $0x1c] sm:$0xf]
        %v412 = vld [vmem:[%s321 + $0x20] sm:$0xf]
        %v413 = vld [vmem:[%s321 + $0x24] sm:$0xf]
        %v414 = vld [vmem:[%s321 + $0x28] sm:$0xf]
        %v415 = vld [vmem:[%s321 + $0x2c] sm:$0xf]
        %v416 = vld [vmem:[%s321 + $0x30] sm:$0xf]
        %v417 = vld [vmem:[%s321 + $0x34] sm:$0xf]
        %v418 = vld [vmem:[%s321 + $0x38] sm:$0xf]
        %v419 = vld [vmem:[%s321 + $0x3c] sm:$0xf]
        %v420 = vld [vmem:[%s321 + $0x40] sm:$0xf]
        %v421 = vld [vmem:[%s321 + $0x44] sm:$0xf]
        %v422 = vld [vmem:[%s321 + $0x48] sm:$0xf]
        %v423 = vld [vmem:[%s321 + $0x4c] sm:$0xf]
        %v424 = vld [vmem:[%s321 + $0x50] sm:$0xf]
        %v425 = vld [vmem:[%s321 + $0x54] sm:$0xf]
        %v426 = vld [vmem:[%s321 + $0x58] sm:$0xf]
        %v427 = vld [vmem:[%s321 + $0x5c] sm:$0xf]
        %v428 = vld [vmem:[%s321 + $0x60] sm:$0xf]
        %v429 = vld [vmem:[%s321 + $0x64] sm:$0xf]
        %v430 = vld [vmem:[%s321 + $0x68] sm:$0xf]
        %v431 = vld [vmem:[%s321 + $0x6c] sm:$0xf]
        %v432 = vld [vmem:[%s321 + $0x70] sm:$0xf]
        %v433 = vld [vmem:[%s321 + $0x74] sm:$0xf]
        %v434 = vld [vmem:[%s321 + $0x78] sm:$0xf]
        %v435 = vld [vmem:[%s321 + $0x7c] sm:$0xf]
        %v436 = vld [vmem:[%s321 + $0x80] sm:$0xf]
        %v437 = vld [vmem:[%s321 + $0x84] sm:$0xf]
        %v438 = vld [vmem:[%s321 + $0x88] sm:$0xf]
        %v439 = vld [vmem:[%s321 + $0x8c] sm:$0xf]
        %v440 = vld [vmem:[%s321 + $0x90] sm:$0xf]
        %v441 = vld [vmem:[%s321 + $0x94] sm:$0xf]
        %v442 = vld [vmem:[%s321 + $0x98] sm:$0xf]
        %v443 = vld [vmem:[%s321 + $0x9c] sm:$0xf]
        %v444 = vld [vmem:[%s321 + $0xa0] sm:$0xf]
        %v445 = vld [vmem:[%s321 + $0xa4] sm:$0xf]
        %v446 = vld [vmem:[%s321 + $0xa8] sm:$0xf]
        %v447 = vld [vmem:[%s321 + $0xac] sm:$0xf]
        %v448 = vld [vmem:[%s321 + $0xb0] sm:$0xf]
        %v449 = vld [vmem:[%s321 + $0xb4] sm:$0xf]
        %v450 = vld [vmem:[%s321 + $0xb8] sm:$0xf]
        %v451 = vld [vmem:[%s321 + $0xbc] sm:$0xf]
        %v452 = vld [vmem:[%s321 + $0xc0] sm:$0xf]
        %v453 = vld [vmem:[%s321 + $0xc4] sm:$0xf]
        %v454 = vld [vmem:[%s321 + $0xc8] sm:$0xf]
        %v455 = vld [vmem:[%s321 + $0xcc] sm:$0xf]
        %v456 = vld [vmem:[%s321 + $0xd0] sm:$0xf]
        %v457 = vld [vmem:[%s321 + $0xd4] sm:$0xf]
        %v458 = vld [vmem:[%s321 + $0xd8] sm:$0xf]
        %v459 = vld [vmem:[%s321 + $0xdc] sm:$0xf]
        %v460 = vld [vmem:[%s321 + $0xe0] sm:$0xf]
        %v461 = vld [vmem:[%s321 + $0xe4] sm:$0xf]
        %v462 = vld [vmem:[%s321 + $0xe8] sm:$0xf]
        %v463 = vld [vmem:[%s321 + $0xec] sm:$0xf]
        %v464 = vld [vmem:[%s321 + $0xf0] sm:$0xf]
        %v465 = vld [vmem:[%s321 + $0xf4] sm:$0xf]
        %v466 = vld [vmem:[%s321 + $0xf8] sm:$0xf]
        %v467 = vld [vmem:[%s321 + $0xfc] sm:$0xf]
        %v500 = vunpack.c.l.b16 %v372
        %v501 = vunpack.c.h.b16 %v372
        %v502 = vunpack.c.l.b16 %v373
        %v503 = vunpack.c.h.b16 %v373
        %v504 = vunpack.c.l.b16 %v374
        %v505 = vunpack.c.h.b16 %v374
        %v506 = vunpack.c.l.b16 %v375
        %v507 = vunpack.c.h.b16 %v375
        %v508 = vunpack.c.l.b16 %v376
        %v509 = vunpack.c.h.b16 %v376
        %v510 = vunpack.c.l.b16 %v377
        %v511 = vunpack.c.h.b16 %v377
        %v512 = vunpack.c.l.b16 %v378
        %v513 = vunpack.c.h.b16 %v378
        %v514 = vunpack.c.l.b16 %v379
        %v515 = vunpack.c.h.b16 %v379
        %v516 = vunpack.c.l.b16 %v380
        %v517 = vunpack.c.h.b16 %v380
        %v518 = vunpack.c.l.b16 %v381
        %v519 = vunpack.c.h.b16 %v381
        %v520 = vunpack.c.l.b16 %v382
        %v521 = vunpack.c.h.b16 %v382
        %v522 = vunpack.c.l.b16 %v383
        %v523 = vunpack.c.h.b16 %v383
        %v524 = vunpack.c.l.b16 %v384
        %v525 = vunpack.c.h.b16 %v384
        %v526 = vunpack.c.l.b16 %v385
        %v527 = vunpack.c.h.b16 %v385
        %v528 = vunpack.c.l.b16 %v386
        %v529 = vunpack.c.h.b16 %v386
        %v530 = vunpack.c.l.b16 %v387
        %v531 = vunpack.c.h.b16 %v387
        %v532 = vunpack.c.l.b16 %v388
        %v533 = vunpack.c.h.b16 %v388
        %v534 = vunpack.c.l.b16 %v389
        %v535 = vunpack.c.h.b16 %v389
        %v536 = vunpack.c.l.b16 %v390
        %v537 = vunpack.c.h.b16 %v390
        %v538 = vunpack.c.l.b16 %v391
        %v539 = vunpack.c.h.b16 %v391
        %v540 = vunpack.c.l.b16 %v392
        %v541 = vunpack.c.h.b16 %v392
        %v542 = vunpack.c.l.b16 %v393
        %v543 = vunpack.c.h.b16 %v393
        %v544 = vunpack.c.l.b16 %v394
        %v545 = vunpack.c.h.b16 %v394
        %v546 = vunpack.c.l.b16 %v395
        %v547 = vunpack.c.h.b16 %v395
        %v548 = vunpack.c.l.b16 %v396
        %v549 = vunpack.c.h.b16 %v396
        %v550 = vunpack.c.l.b16 %v397
        %v551 = vunpack.c.h.b16 %v397
        %v552 = vunpack.c.l.b16 %v398
        %v553 = vunpack.c.h.b16 %v398
        %v554 = vunpack.c.l.b16 %v399
        %v555 = vunpack.c.h.b16 %v399
        %v556 = vunpack.c.l.b16 %v400
        %v557 = vunpack.c.h.b16 %v400
        %v558 = vunpack.c.l.b16 %v401
        %v559 = vunpack.c.h.b16 %v401
        %v560 = vunpack.c.l.b16 %v402
        %v561 = vunpack.c.h.b16 %v402
        %v562 = vunpack.c.l.b16 %v403
        %v563 = vunpack.c.h.b16 %v403
        %v564 = vpack.c.b16 %v504, %v500
        %v565 = vpack.c.b16 %v505, %v501
        %v566 = vpack.c.b16 %v506, %v502
        %v567 = vpack.c.b16 %v507, %v503
        %v568 = vpack.c.b16 %v512, %v508
        %v569 = vpack.c.b16 %v513, %v509
        %v570 = vpack.c.b16 %v514, %v510
        %v571 = vpack.c.b16 %v515, %v511
        %v572 = vpack.c.b16 %v520, %v516
        %v573 = vpack.c.b16 %v521, %v517
        %v574 = vpack.c.b16 %v522, %v518
        %v575 = vpack.c.b16 %v523, %v519
        %v576 = vpack.c.b16 %v528, %v524
        %v577 = vpack.c.b16 %v529, %v525
        %v578 = vpack.c.b16 %v530, %v526
        %v579 = vpack.c.b16 %v531, %v527
        %v580 = vpack.c.b16 %v536, %v532
        %v581 = vpack.c.b16 %v537, %v533
        %v582 = vpack.c.b16 %v538, %v534
        %v583 = vpack.c.b16 %v539, %v535
        %v584 = vpack.c.b16 %v544, %v540
        %v585 = vpack.c.b16 %v545, %v541
        %v586 = vpack.c.b16 %v546, %v542
        %v587 = vpack.c.b16 %v547, %v543
        %v588 = vpack.c.b16 %v552, %v548
        %v589 = vpack.c.b16 %v553, %v549
        %v590 = vpack.c.b16 %v554, %v550
        %v591 = vpack.c.b16 %v555, %v551
        %v592 = vpack.c.b16 %v560, %v556
        %v593 = vpack.c.b16 %v561, %v557
        %v594 = vpack.c.b16 %v562, %v558
        %v595 = vpack.c.b16 %v563, %v559
        %v692 = vunpack.c.l.b16 %v404
        %v693 = vunpack.c.l.b16 %v405
        %v694 = vunpack.c.l.b16 %v406
        %v695 = vunpack.c.l.b16 %v407
        %v696 = vunpack.c.l.b16 %v408
        %v697 = vunpack.c.l.b16 %v409
        %v698 = vunpack.c.l.b16 %v410
        %v699 = vunpack.c.l.b16 %v411
        %v700 = vunpack.c.l.b16 %v412
        %v701 = vunpack.c.l.b16 %v413
        %v702 = vunpack.c.l.b16 %v414
        %v703 = vunpack.c.l.b16 %v415
        %v704 = vunpack.c.l.b16 %v416
        %v705 = vunpack.c.l.b16 %v417
        %v706 = vunpack.c.l.b16 %v418
        %v707 = vunpack.c.l.b16 %v419
        %v708 = vunpack.c.l.b16 %v420
        %v709 = vunpack.c.l.b16 %v421
        %v710 = vunpack.c.l.b16 %v422
        %v711 = vunpack.c.l.b16 %v423
        %v712 = vunpack.c.l.b16 %v424
        %v713 = vunpack.c.l.b16 %v425
        %v714 = vunpack.c.l.b16 %v426
        %v715 = vunpack.c.l.b16 %v427
        %v716 = vunpack.c.l.b16 %v428
        %v717 = vunpack.c.l.b16 %v429
        %v718 = vunpack.c.l.b16 %v430
        %v719 = vunpack.c.l.b16 %v431
        %v720 = vunpack.c.l.b16 %v432
        %v721 = vunpack.c.l.b16 %v433
        %v722 = vunpack.c.l.b16 %v434
        %v723 = vunpack.c.l.b16 %v435
        %v724 = vunpack.c.l.b16 %v436
        %v725 = vunpack.c.l.b16 %v437
        %v726 = vunpack.c.l.b16 %v438
        %v727 = vunpack.c.l.b16 %v439
        %v728 = vunpack.c.l.b16 %v440
        %v729 = vunpack.c.l.b16 %v441
        %v730 = vunpack.c.l.b16 %v442
        %v731 = vunpack.c.l.b16 %v443
        %v732 = vunpack.c.l.b16 %v444
        %v733 = vunpack.c.l.b16 %v445
        %v734 = vunpack.c.l.b16 %v446
        %v735 = vunpack.c.l.b16 %v447
        %v736 = vunpack.c.l.b16 %v448
        %v737 = vunpack.c.l.b16 %v449
        %v738 = vunpack.c.l.b16 %v450
        %v739 = vunpack.c.l.b16 %v451
        %v740 = vunpack.c.l.b16 %v452
        %v741 = vunpack.c.l.b16 %v453
        %v742 = vunpack.c.l.b16 %v454
        %v743 = vunpack.c.l.b16 %v455
        %v744 = vunpack.c.l.b16 %v456
        %v745 = vunpack.c.l.b16 %v457
        %v746 = vunpack.c.l.b16 %v458
        %v747 = vunpack.c.l.b16 %v459
        %v748 = vunpack.c.l.b16 %v460
        %v749 = vunpack.c.l.b16 %v461
        %v750 = vunpack.c.l.b16 %v462
        %v751 = vunpack.c.l.b16 %v463
        %v752 = vunpack.c.l.b16 %v464
        %v753 = vunpack.c.l.b16 %v465
        %v754 = vunpack.c.l.b16 %v466
        %v755 = vunpack.c.l.b16 %v467
        %v756 = vpack.c.b16 %v693, %v692
        %v757 = vpack.c.b16 %v695, %v694
        %v758 = vpack.c.b16 %v697, %v696
        %v759 = vpack.c.b16 %v699, %v698
        %v760 = vpack.c.b16 %v701, %v700
        %v761 = vpack.c.b16 %v703, %v702
        %v762 = vpack.c.b16 %v705, %v704
        %v763 = vpack.c.b16 %v707, %v706
        %v764 = vpack.c.b16 %v709, %v708
        %v765 = vpack.c.b16 %v711, %v710
        %v766 = vpack.c.b16 %v713, %v712
        %v767 = vpack.c.b16 %v715, %v714
        %v768 = vpack.c.b16 %v717, %v716
        %v769 = vpack.c.b16 %v719, %v718
        %v770 = vpack.c.b16 %v721, %v720
        %v771 = vpack.c.b16 %v723, %v722
        %v772 = vpack.c.b16 %v725, %v724
        %v773 = vpack.c.b16 %v727, %v726
        %v774 = vpack.c.b16 %v729, %v728
        %v775 = vpack.c.b16 %v731, %v730
        %v776 = vpack.c.b16 %v733, %v732
        %v777 = vpack.c.b16 %v735, %v734
        %v778 = vpack.c.b16 %v737, %v736
        %v779 = vpack.c.b16 %v739, %v738
        %v780 = vpack.c.b16 %v741, %v740
        %v781 = vpack.c.b16 %v743, %v742
        %v782 = vpack.c.b16 %v745, %v744
        %v783 = vpack.c.b16 %v747, %v746
        %v784 = vpack.c.b16 %v749, %v748
        %v785 = vpack.c.b16 %v751, %v750
        %v786 = vpack.c.b16 %v753, %v752
        %v787 = vpack.c.b16 %v755, %v754
        %820 = vmatprep.subr.bf16.mxu0 0
        %821 = vmatpush1.bf16.msra.mxu0 %v756
        %822 = vmatprep.subr.bf16.mxu0 0
        %823 = vmatpush1.bf16.msra.mxu0 %v757
        %824 = vmatprep.subr.bf16.mxu0 0
        %825 = vmatpush1.bf16.msra.mxu0 %v758
        %826 = vmatprep.subr.bf16.mxu0 0
        %827 = vmatpush1.bf16.msra.mxu0 %v759
        %828 = vmatprep.subr.bf16.mxu0 0
        %829 = vmatpush1.bf16.msra.mxu0 %v760
        %830 = vmatprep.subr.bf16.mxu0 0
        %831 = vmatpush1.bf16.msra.mxu0 %v761
        %832 = vmatprep.subr.bf16.mxu0 0
        %833 = vmatpush1.bf16.msra.mxu0 %v762
        %834 = vmatprep.subr.bf16.mxu0 0
        %835 = vmatpush1.bf16.msra.mxu0 %v763
        %836 = vmatprep.subr.bf16.mxu0 0
        %837 = vmatpush1.bf16.msra.mxu0 %v764
        %838 = vmatprep.subr.bf16.mxu0 0
        %839 = vmatpush1.bf16.msra.mxu0 %v765
        %840 = vmatprep.subr.bf16.mxu0 0
        %841 = vmatpush1.bf16.msra.mxu0 %v766
        %842 = vmatprep.subr.bf16.mxu0 0
        %843 = vmatpush1.bf16.msra.mxu0 %v767
        %844 = vmatprep.subr.bf16.mxu0 0
        %845 = vmatpush1.bf16.msra.mxu0 %v768
        %846 = vmatprep.subr.bf16.mxu0 0
        %847 = vmatpush1.bf16.msra.mxu0 %v769
        %848 = vmatprep.subr.bf16.mxu0 0
        %849 = vmatpush1.bf16.msra.mxu0 %v770
        %850 = vmatprep.subr.bf16.mxu0 0
        %851 = vmatpush1.bf16.msra.mxu0 %v771
        %852 = vmatprep.mubr.bf16.mxu0 %v565
        %853 = vmatmul.mubr.bf16.gmra.mrb[0].mxu0 %v564
        %v854 = vpop.f32.mrb[0].mxu0
        %v855 = vadd.f32 0.0, %v854
        %v856 = vpop.f32.mrb[0].mxu0
        %v857 = vpop.f32.mrb[0].mxu0
        %v858 = vadd.f32 0.0, %v857
        %v859 = vpop.f32.mrb[0].mxu0
        %860 = vmatprep.mubr.bf16.mxu0 %v569
        %861 = vmatmul.mubr.bf16.gmra.mrb[0].mxu0 %v568
        %v862 = vpop.f32.mrb[0].mxu0
        %v863 = vadd.f32 0.0, %v862
        %v864 = vpop.f32.mrb[0].mxu0
        %v865 = vpop.f32.mrb[0].mxu0
        %v866 = vadd.f32 0.0, %v865
        %v867 = vpop.f32.mrb[0].mxu0
        %868 = vmatprep.mubr.bf16.mxu0 %v573
        %869 = vmatmul.mubr.bf16.gmra.mrb[0].mxu0 %v572
        %v870 = vpop.f32.mrb[0].mxu0
        %v871 = vadd.f32 0.0, %v870
        %v872 = vpop.f32.mrb[0].mxu0
        %v873 = vpop.f32.mrb[0].mxu0
        %v874 = vadd.f32 0.0, %v873
        %v875 = vpop.f32.mrb[0].mxu0
        %876 = vmatprep.mubr.bf16.mxu0 %v577
        %877 = vmatmul.mubr.bf16.gmra.mrb[0].mxu0 %v576
        %v878 = vpop.f32.mrb[0].mxu0
        %v879 = vadd.f32 0.0, %v878
        %v880 = vpop.f32.mrb[0].mxu0
        %v881 = vpop.f32.mrb[0].mxu0
        %v882 = vadd.f32 0.0, %v881
        %v883 = vpop.f32.mrb[0].mxu0
        %884 = vmatprep.mubr.bf16.mxu0 %v581
        %885 = vmatmul.mubr.bf16.gmra.mrb[0].mxu0 %v580
        %v886 = vpop.f32.mrb[0].mxu0
        %v887 = vadd.f32 0.0, %v886
        %v888 = vpop.f32.mrb[0].mxu0
        %v889 = vpop.f32.mrb[0].mxu0
        %v890 = vadd.f32 0.0, %v889
        %v891 = vpop.f32.mrb[0].mxu0
        %892 = vmatprep.mubr.bf16.mxu0 %v585
        %893 = vmatmul.mubr.bf16.gmra.mrb[0].mxu0 %v584
        %v894 = vpop.f32.mrb[0].mxu0
        %v895 = vadd.f32 0.0, %v894
        %v896 = vpop.f32.mrb[0].mxu0
        %v897 = vpop.f32.mrb[0].mxu0
        %v898 = vadd.f32 0.0, %v897
        %v899 = vpop.f32.mrb[0].mxu0
        %900 = vmatprep.mubr.bf16.mxu0 %v589
        %901 = vmatmul.mubr.bf16.gmra.mrb[0].mxu0 %v588
        %v902 = vpop.f32.mrb[0].mxu0
        %v903 = vadd.f32 0.0, %v902
        %v904 = vpop.f32.mrb[0].mxu0
        %v905 = vpop.f32.mrb[0].mxu0
        %v906 = vadd.f32 0.0, %v905
        %v907 = vpop.f32.mrb[0].mxu0
        %908 = vmatprep.mubr.bf16.mxu0 %v593
        %909 = vmatmul.mubr.bf16.gmra.mrb[0].mxu0 %v592
        %v910 = vpop.f32.mrb[0].mxu0
        %v911 = vadd.f32 0.0, %v910
        %v912 = vpop.f32.mrb[0].mxu0
        %v913 = vpop.f32.mrb[0].mxu0
        %v914 = vadd.f32 0.0, %v913
        %v915 = vpop.f32.mrb[0].mxu0
        %916 = vdwg.mxu0
        %917 = vmatprep.subr.bf16.mxu0 0
        %918 = vmatpush1.bf16.msra.mxu0 %v772
        %919 = vmatprep.subr.bf16.mxu0 0
        %920 = vmatpush1.bf16.msra.mxu0 %v773
        %921 = vmatprep.subr.bf16.mxu0 0
        %922 = vmatpush1.bf16.msra.mxu0 %v774
        %923 = vmatprep.subr.bf16.mxu0 0
        %924 = vmatpush1.bf16.msra.mxu0 %v775
        %925 = vmatprep.subr.bf16.mxu0 0
        %926 = vmatpush1.bf16.msra.mxu0 %v776
        %927 = vmatprep.subr.bf16.mxu0 0
        %928 = vmatpush1.bf16.msra.mxu0 %v777
        %929 = vmatprep.subr.bf16.mxu0 0
        %930 = vmatpush1.bf16.msra.mxu0 %v778
        %931 = vmatprep.subr.bf16.mxu0 0
        %932 = vmatpush1.bf16.msra.mxu0 %v779
        %933 = vmatprep.subr.bf16.mxu0 0
        %934 = vmatpush1.bf16.msra.mxu0 %v780
        %935 = vmatprep.subr.bf16.mxu0 0
        %936 = vmatpush1.bf16.msra.mxu0 %v781
        %937 = vmatprep.subr.bf16.mxu0 0
        %938 = vmatpush1.bf16.msra.mxu0 %v782
        %939 = vmatprep.subr.bf16.mxu0 0
        %940 = vmatpush1.bf16.msra.mxu0 %v783
        %941 = vmatprep.subr.bf16.mxu0 0
        %942 = vmatpush1.bf16.msra.mxu0 %v784
        %943 = vmatprep.subr.bf16.mxu0 0
        %944 = vmatpush1.bf16.msra.mxu0 %v785
        %945 = vmatprep.subr.bf16.mxu0 0
        %946 = vmatpush1.bf16.msra.mxu0 %v786
        %947 = vmatprep.subr.bf16.mxu0 0
        %948 = vmatpush1.bf16.msra.mxu0 %v787
        %949 = vmatprep.mubr.bf16.mxu0 %v567
        %950 = vmatmul.mubr.bf16.gmra.mrb[0].mxu0 %v566
        %v951 = vpop.f32.mrb[0].mxu0
        %v952 = vadd.f32 %v855, %v951
        %v953 = vpop.f32.mrb[0].mxu0
        %v954 = vpop.f32.mrb[0].mxu0
        %v955 = vadd.f32 %v858, %v954
        %v956 = vpop.f32.mrb[0].mxu0
        %957 = vmatprep.mubr.bf16.mxu0 %v571
        %958 = vmatmul.mubr.bf16.gmra.mrb[0].mxu0 %v570
        %v959 = vpop.f32.mrb[0].mxu0
        %v960 = vadd.f32 %v863, %v959
        %v961 = vpop.f32.mrb[0].mxu0
        %v962 = vpop.f32.mrb[0].mxu0
        %v963 = vadd.f32 %v866, %v962
        %v964 = vpop.f32.mrb[0].mxu0
        %965 = vmatprep.mubr.bf16.mxu0 %v575
        %966 = vmatmul.mubr.bf16.gmra.mrb[0].mxu0 %v574
        %v967 = vpop.f32.mrb[0].mxu0
        %v968 = vadd.f32 %v871, %v967
        %v969 = vpop.f32.mrb[0].mxu0
        %v970 = vpop.f32.mrb[0].mxu0
        %v971 = vadd.f32 %v874, %v970
        %v972 = vpop.f32.mrb[0].mxu0
        %973 = vmatprep.mubr.bf16.mxu0 %v579
        %974 = vmatmul.mubr.bf16.gmra.mrb[0].mxu0 %v578
        %v975 = vpop.f32.mrb[0].mxu0
        %v976 = vadd.f32 %v879, %v975
        %v977 = vpop.f32.mrb[0].mxu0
        %v978 = vpop.f32.mrb[0].mxu0
        %v979 = vadd.f32 %v882, %v978
        %v980 = vpop.f32.mrb[0].mxu0
        %981 = vmatprep.mubr.bf16.mxu0 %v583
        %982 = vmatmul.mubr.bf16.gmra.mrb[0].mxu0 %v582
        %v983 = vpop.f32.mrb[0].mxu0
        %v984 = vadd.f32 %v887, %v983
        %v985 = vpop.f32.mrb[0].mxu0
        %v986 = vpop.f32.mrb[0].mxu0
        %v987 = vadd.f32 %v890, %v986
        %v988 = vpop.f32.mrb[0].mxu0
        %989 = vmatprep.mubr.bf16.mxu0 %v587
        %990 = vmatmul.mubr.bf16.gmra.mrb[0].mxu0 %v586
        %v991 = vpop.f32.mrb[0].mxu0
        %v992 = vadd.f32 %v895, %v991
        %v993 = vpop.f32.mrb[0].mxu0
        %v994 = vpop.f32.mrb[0].mxu0
        %v995 = vadd.f32 %v898, %v994
        %v996 = vpop.f32.mrb[0].mxu0
        %997 = vmatprep.mubr.bf16.mxu0 %v591
        %998 = vmatmul.mubr.bf16.gmra.mrb[0].mxu0 %v590
        %v999 = vpop.f32.mrb[0].mxu0
        %v1000 = vadd.f32 %v903, %v999
        %v1001 = vpop.f32.mrb[0].mxu0
        %v1002 = vpop.f32.mrb[0].mxu0
        %v1003 = vadd.f32 %v906, %v1002
        %v1004 = vpop.f32.mrb[0].mxu0
        %1005 = vmatprep.mubr.bf16.mxu0 %v595
        %1006 = vmatmul.mubr.bf16.gmra.mrb[0].mxu0 %v594
        %v1007 = vpop.f32.mrb[0].mxu0
        %v1008 = vadd.f32 %v911, %v1007
        %v1009 = vpop.f32.mrb[0].mxu0
        %v1010 = vpop.f32.mrb[0].mxu0
        %v1011 = vadd.f32 %v914, %v1010
        %v1012 = vpop.f32.mrb[0].mxu0
        %1013 = vdwg.mxu0
        %v1014 = vadd.f32 %v356, %v952
        %v1015 = vadd.f32 %v357, %v955
        %v1016 = vadd.f32 %v358, %v960
        %v1017 = vadd.f32 %v359, %v963
        %v1018 = vadd.f32 %v360, %v968
        %v1019 = vadd.f32 %v361, %v971
        %v1020 = vadd.f32 %v362, %v976
        %v1021 = vadd.f32 %v363, %v979
        %v1022 = vadd.f32 %v364, %v984
        %v1023 = vadd.f32 %v365, %v987
        %v1024 = vadd.f32 %v366, %v992
        %v1025 = vadd.f32 %v367, %v995
        %v1026 = vadd.f32 %v368, %v1000
        %v1027 = vadd.f32 %v369, %v1003
        %v1028 = vadd.f32 %v370, %v1008
        %v1029 = vadd.f32 %v371, %v1011
        %1030 = vst [vmem:[%s333] sm:$0xff] %v1014
        %1031 = vst [vmem:[%s333 + $0x8] sm:$0xff] %v1015
        %1032 = vst [vmem:[%s333 + $0x10] sm:$0xff] %v1016
        %1033 = vst [vmem:[%s333 + $0x18] sm:$0xff] %v1017
        %1034 = vst [vmem:[%s333 + $0x20] sm:$0xff] %v1018
        %1035 = vst [vmem:[%s333 + $0x28] sm:$0xff] %v1019
        %1036 = vst [vmem:[%s333 + $0x30] sm:$0xff] %v1020
        %1037 = vst [vmem:[%s333 + $0x38] sm:$0xff] %v1021
        %1038 = vst [vmem:[%s333 + $0x40] sm:$0xff] %v1022
        %1039 = vst [vmem:[%s333 + $0x48] sm:$0xff] %v1023
        %1040 = vst [vmem:[%s333 + $0x50] sm:$0xff] %v1024
        %1041 = vst [vmem:[%s333 + $0x58] sm:$0xff] %v1025
        %1042 = vst [vmem:[%s333 + $0x60] sm:$0xff] %v1026
        %1043 = vst [vmem:[%s333 + $0x68] sm:$0xff] %v1027
        %1044 = vst [vmem:[%s333 + $0x70] sm:$0xff] %v1028
        %1045 = vst [vmem:[%s333 + $0x78] sm:$0xff] %v1029
        %p1046 = scmp.eq.s32.totalorder %s21, 1
        // Predicated region
        $region60: #{discriminator_sngan_forward.8} parent=50 // pred_check
          %p1047 = pneg %p1046
        $region61: #{discriminator_sngan_forward.8} parent=50 // pred_check_branch
          %1049 = sbr.rel (%p1047) target = $region63
        $region62: #{discriminator_sngan_forward.8} parent=50 // pred_region
          %v1050 = vld [vmem:[%s333] sm:$0xff]
          %v1051 = vld [vmem:[%s333 + $0x8] sm:$0xff]
          %v1052 = vld [vmem:[%s333 + $0x10] sm:$0xff]
          %v1053 = vld [vmem:[%s333 + $0x18] sm:$0xff]
          %v1054 = vld [vmem:[%s333 + $0x20] sm:$0xff]
          %v1055 = vld [vmem:[%s333 + $0x28] sm:$0xff]
          %v1056 = vld [vmem:[%s333 + $0x30] sm:$0xff]
          %v1057 = vld [vmem:[%s333 + $0x38] sm:$0xff]
          %v1058 = vld [vmem:[%s333 + $0x40] sm:$0xff]
          %v1059 = vld [vmem:[%s333 + $0x48] sm:$0xff]
          %v1060 = vld [vmem:[%s333 + $0x50] sm:$0xff]
          %v1061 = vld [vmem:[%s333 + $0x58] sm:$0xff]
          %v1062 = vld [vmem:[%s333 + $0x60] sm:$0xff]
          %v1063 = vld [vmem:[%s333 + $0x68] sm:$0xff]
          %v1064 = vld [vmem:[%s333 + $0x70] sm:$0xff]
          %v1065 = vld [vmem:[%s333 + $0x78] sm:$0xff]
          %v1066 = vld [vmem:[%s325] sm:$0x1]
          %v1068 = vlaneseq
          %v1069 = vshrl.u32 %v1068, 7
          %v1070 = vsub.s32 0, %v1069
          %v1071 = vrot.slane %v1066, %v1070
          %v1073 = vadd.f32 %v1050, %v1071
          %v1074 = vadd.f32 %v1051, %v1071
          %v1075 = vadd.f32 %v1052, %v1071
          %v1076 = vadd.f32 %v1053, %v1071
          %v1077 = vadd.f32 %v1054, %v1071
          %v1078 = vadd.f32 %v1055, %v1071
          %v1079 = vadd.f32 %v1056, %v1071
          %v1080 = vadd.f32 %v1057, %v1071
          %v1081 = vadd.f32 %v1058, %v1071
          %v1082 = vadd.f32 %v1059, %v1071
          %v1083 = vadd.f32 %v1060, %v1071
          %v1084 = vadd.f32 %v1061, %v1071
          %v1085 = vadd.f32 %v1062, %v1071
          %v1086 = vadd.f32 %v1063, %v1071
          %v1087 = vadd.f32 %v1064, %v1071
          %v1088 = vadd.f32 %v1065, %v1071
          %vm1089 = vcmp.ge.f32.partialorder %v1073, 0.0
          %vm1090 = vcmp.ge.f32.partialorder %v1074, 0.0
          %vm1091 = vcmp.ge.f32.partialorder %v1075, 0.0
          %vm1092 = vcmp.ge.f32.partialorder %v1076, 0.0
          %vm1093 = vcmp.ge.f32.partialorder %v1077, 0.0
          %vm1094 = vcmp.ge.f32.partialorder %v1078, 0.0
          %vm1095 = vcmp.ge.f32.partialorder %v1079, 0.0
          %vm1096 = vcmp.ge.f32.partialorder %v1080, 0.0
          %vm1097 = vcmp.ge.f32.partialorder %v1081, 0.0
          %vm1098 = vcmp.ge.f32.partialorder %v1082, 0.0
          %vm1099 = vcmp.ge.f32.partialorder %v1083, 0.0
          %vm1100 = vcmp.ge.f32.partialorder %v1084, 0.0
          %vm1101 = vcmp.ge.f32.partialorder %v1085, 0.0
          %vm1102 = vcmp.ge.f32.partialorder %v1086, 0.0
          %vm1103 = vcmp.ge.f32.partialorder %v1087, 0.0
          %vm1104 = vcmp.ge.f32.partialorder %v1088, 0.0
          %v1105 = vmul.f32 %v1073, 0.1
          %v1106 = vmul.f32 %v1074, 0.1
          %v1107 = vmul.f32 %v1075, 0.1
          %v1108 = vmul.f32 %v1076, 0.1
          %v1109 = vmul.f32 %v1077, 0.1
          %v1110 = vmul.f32 %v1078, 0.1
          %v1111 = vmul.f32 %v1079, 0.1
          %v1112 = vmul.f32 %v1080, 0.1
          %v1113 = vmul.f32 %v1081, 0.1
          %v1114 = vmul.f32 %v1082, 0.1
          %v1115 = vmul.f32 %v1083, 0.1
          %v1116 = vmul.f32 %v1084, 0.1
          %v1117 = vmul.f32 %v1085, 0.1
          %v1118 = vmul.f32 %v1086, 0.1
          %v1119 = vmul.f32 %v1087, 0.1
          %v1120 = vmul.f32 %v1088, 0.1
          %v1121 = vsel %vm1089, %v1073, %v1105
          %v1122 = vsel %vm1090, %v1074, %v1106
          %v1123 = vsel %vm1091, %v1075, %v1107
          %v1124 = vsel %vm1092, %v1076, %v1108
          %v1125 = vsel %vm1093, %v1077, %v1109
          %v1126 = vsel %vm1094, %v1078, %v1110
          %v1127 = vsel %vm1095, %v1079, %v1111
          %v1128 = vsel %vm1096, %v1080, %v1112
          %v1129 = vsel %vm1097, %v1081, %v1113
          %v1130 = vsel %vm1098, %v1082, %v1114
          %v1131 = vsel %vm1099, %v1083, %v1115
          %v1132 = vsel %vm1100, %v1084, %v1116
          %v1133 = vsel %vm1101, %v1085, %v1117
          %v1134 = vsel %vm1102, %v1086, %v1118
          %v1135 = vsel %vm1103, %v1087, %v1119
          %v1136 = vsel %vm1104, %v1088, %v1120
          %1137 = vst [vmem:[%s333] sm:$0xff] %v1121
          %1138 = vst [vmem:[%s333 + $0x8] sm:$0xff] %v1122
          %1139 = vst [vmem:[%s333 + $0x10] sm:$0xff] %v1123
          %1140 = vst [vmem:[%s333 + $0x18] sm:$0xff] %v1124
          %1141 = vst [vmem:[%s333 + $0x20] sm:$0xff] %v1125
          %1142 = vst [vmem:[%s333 + $0x28] sm:$0xff] %v1126
          %1143 = vst [vmem:[%s333 + $0x30] sm:$0xff] %v1127
          %1144 = vst [vmem:[%s333 + $0x38] sm:$0xff] %v1128
          %1145 = vst [vmem:[%s333 + $0x40] sm:$0xff] %v1129
          %1146 = vst [vmem:[%s333 + $0x48] sm:$0xff] %v1130
          %1147 = vst [vmem:[%s333 + $0x50] sm:$0xff] %v1131
          %1148 = vst [vmem:[%s333 + $0x58] sm:$0xff] %v1132
          %1149 = vst [vmem:[%s333 + $0x60] sm:$0xff] %v1133
          %1150 = vst [vmem:[%s333 + $0x68] sm:$0xff] %v1134
          %1151 = vst [vmem:[%s333 + $0x70] sm:$0xff] %v1135
          %1152 = vst [vmem:[%s333 + $0x78] sm:$0xff] %v1136
        $region63: #{discriminator_sngan_forward.8} parent=50 // pred_fallthru
          _
        %s1153 = smul.u32 16, %s19
        %p1154 = scmp.lt.s32.totalorder %s1153, 15
        %s1155 = scalar_select %p1154, %s1153, 15
        %p1156 = scmp.lt.s32.totalorder %s20, 0
        %s1157 = scalar_select %p1156, %s20, 0
        %s1158 = sadd.s32 %s1157, %s1155
        %s1159 = smul.addr %s1158, 8
        %s1160 = scalar_lea.vmem %s3, %s1159
        // Predicated region
        $region64: #{discriminator_sngan_forward.8} parent=50 // pred_check
          %p1161 = pneg %p135
        $region65: #{discriminator_sngan_forward.8} parent=50 // pred_check_branch
          %1163 = sbr.rel (%p1161) target = $region67
        $region66: #{discriminator_sngan_forward.8} parent=50 // pred_region
          %s1164 = smul.u32 16, %s19
        $region67: #{discriminator_sngan_forward.8} parent=50 // pred_fallthru
          _
        // Predicated region
        $region68: #{discriminator_sngan_forward.8} parent=50 // pred_check
          %p1165 = pneg %p135
        $region69: #{discriminator_sngan_forward.8} parent=50 // pred_check_branch
          %1167 = sbr.rel (%p1165) target = $region71
        $region70: #{discriminator_sngan_forward.8} parent=50 // pred_region
          %s1168 = smul.u32 16, %s19
          %p1169 = scmp.lt.s32.totalorder %s1168, 15
          %s1170 = scalar_select %p1169, %s1168, 15
          %p1171 = scmp.lt.s32.totalorder %s20, 0
          %s1172 = scalar_select %p1171, %s20, 0
          %s1173 = sadd.s32 %s1172, %s1170
          %s1174 = smul.addr %s1173, 8
          %s1175 = scalar_lea.vmem %s3, %s1174
        $region71: #{discriminator_sngan_forward.8} parent=50 // pred_fallthru
          _
      $region51: #{discriminator_sngan_forward.8} parent=5 // pred_fallthru
        _
      %p1176 = scmp.le.s32.totalorder 2, %s9
      // Predicated region
      $region72: #{discriminator_sngan_forward.8} parent=5 // pred_check
        %p1177 = pneg %p1176
      $region73: #{discriminator_sngan_forward.8} parent=5 // pred_check_branch
        %1179 = sbr.rel (%p1177) target = $region75
      $region74: #{discriminator_sngan_forward.8} parent=5 // pred_region
        %s1180 = ssub.s32 %s9, 2
      $region75: #{discriminator_sngan_forward.8} parent=5 // pred_fallthru
        _
    $region6: #{discriminator_sngan_forward.8} parent=1 // loop_footer
      %s13 = sadd.s32 1, %s9
    $region7: #{discriminator_sngan_forward.8} parent=1 // loop_footer_branch
      %8 = sbr.rel target = $region3
    $region8: #{discriminator_sngan_forward.8} parent=1 // loop_exit
      _

// kernel: discriminator_sngan_forward.9
$region0: #{discriminator_sngan_forward.9}
  #allocation0 [shape = 'u32[]', space=smem, size = 0x4, offset = 0x4, fixed_abs, tag = 'smem constant byte address 0x4 - core index']
  #allocation1 [shape = 'u32[144,128]{1,0:T(1,128)}', space=vmem, size = 0x12000, scoped, tag = 'internal scratch']
  %s0 = inlined_call_operand.vmem [shape: bf16[128,1152], index: 0, kind: input, shape index: {}]
  %s1 = inlined_call_operand.vmem [shape: bf16[1152,128], index: 1, kind: input, shape index: {}]
  %s2 = inlined_call_operand.vmem [shape: f32[1,128], index: 2, kind: input, shape index: {}]
  %s3 = inlined_call_operand.vmem [shape: f32[128,128], index: 3, kind: output, shape index: {}]
  %s4 = sld [smem:[#allocation0]]
  $region79: #{discriminator_sngan_forward.9} parent=0
    _
  %s6 = ssub.s32 1, %s4
  %s7 = scalar_select 0, %s6, %s4
  $region1: #{discriminator_sngan_forward.9} parent=0
    #allocation2 [shape = 'u8[196608]{0}', space=vmem, size = 0x30000, scoped, tag = 'input window, operand 0']
    loop: start=0, step=1, limit=5
    $region2: #{discriminator_sngan_forward.9} parent=1 // loop_pre_header
      _
    $region3: #{discriminator_sngan_forward.9} parent=1 // loop_header
      %s9 = sphi 0, %s13
      %p10 = scmp.ge.s32.totalorder %s9, 5
      %s16 = sphi 0, %s35
      %s17 = sphi 0, %s31
      %s18 = sphi 0, %s27
      %s19 = sphi 0, %s16
      %s20 = sphi 0, %s17
      %s21 = sphi 0, %s18
      %s22 = sphi 0, %s19
      %s23 = sphi 0, %s20
      %s24 = sphi 0, %s21
      %s40 = sphi 0, %s42
      %s43 = sphi 0, %s40
      %s44 = sphi 0, %s43
      %s60 = sphi 0, %s44
      %s68 = sphi 0, %s70
      %s71 = sphi 0, %s68
      %s72 = sphi 0, %s71
      %s88 = sphi 0, %s72
      %s94 = sphi 0, %s96
      %s97 = sphi 0, %s94
      %s98 = sphi 0, %s97
      %s114 = sphi 0, %s98
      %s122 = sphi 0, %s124
      %s125 = sphi 0, %s122
      %s126 = sphi 0, %s125
      %s142 = sphi 0, %s126
    $region4: #{discriminator_sngan_forward.9} parent=1 // loop_header_branch
      %12 = sbr.rel (%p10) target = $region8
    $region5: #{discriminator_sngan_forward.9} parent=1 // loop_body
      %s14 = ssub.s32 %s9, 1
      %s15 = ssub.s32 %s9, 2
      %s25 = sadd.s32 1, %s18
      %p26 = scmp.ge.s32.totalorder %s25, 3
      %s27 = scalar_select %p26, 0, %s25
      %s28 = sadd.s32 1, %s17
      %s29 = scalar_select %p26, %s28, %s17
      %p30 = scmp.ge.s32.totalorder %s29, 1
      %s31 = scalar_select %p30, 0, %s29
      %s32 = sadd.s32 1, %s16
      %s33 = scalar_select %p30, %s32, %s16
      %p34 = scmp.ge.s32.totalorder %s33, 1
      %s35 = scalar_select %p34, 0, %s33
      %s36 = ssub.s32 %s16, %s35
      %s37 = ssub.s32 %s18, %s27
      %s38 = sor.u32 %s36, %s37
      %p39 = scmp.eq.s32.totalorder %s38, 0
      %s41 = sadd.s32 %s40, 1
      %s42 = scalar_select %p39, %s40, %s41
      %p45 = pneg %p39
      %p46 = scmp.eq.s32.totalorder %s9, 2
      %p47 = por %p45, %p46
      %p48 = scmp.ne.s32.totalorder %s40, %s43
      %p49 = scmp.eq.s32.totalorder %s9, 0
      %p50 = por %p48, %p49
      %p51 = scmp.ne.s32.totalorder %s40, %s43
      %p52 = scmp.eq.s32.totalorder %s14, 2
      %p53 = por %p51, %p52
      %p54 = scmp.ne.s32.totalorder %s43, %s44
      %p55 = scmp.eq.s32.totalorder %s14, 0
      %p56 = por %p54, %p55
      %p57 = scmp.ne.s32.totalorder %s43, %s44
      %p58 = scmp.eq.s32.totalorder %s15, 2
      %p59 = por %p57, %p58
      %p61 = scmp.ne.s32.totalorder %s44, %s60
      %p62 = scmp.eq.s32.totalorder %s15, 0
      %p63 = por %p61, %p62
      %s64 = ssub.s32 %s18, %s27
      %s65 = ssub.s32 %s17, %s31
      %s66 = sor.u32 %s64, %s65
      %p67 = scmp.eq.s32.totalorder %s66, 0
      %s69 = sadd.s32 %s68, 1
      %s70 = scalar_select %p67, %s68, %s69
      %p73 = pneg %p67
      %p74 = scmp.eq.s32.totalorder %s9, 2
      %p75 = por %p73, %p74
      %p76 = scmp.ne.s32.totalorder %s68, %s71
      %p77 = scmp.eq.s32.totalorder %s9, 0
      %p78 = por %p76, %p77
      %p79 = scmp.ne.s32.totalorder %s68, %s71
      %p80 = scmp.eq.s32.totalorder %s14, 2
      %p81 = por %p79, %p80
      %p82 = scmp.ne.s32.totalorder %s71, %s72
      %p83 = scmp.eq.s32.totalorder %s14, 0
      %p84 = por %p82, %p83
      %p85 = scmp.ne.s32.totalorder %s71, %s72
      %p86 = scmp.eq.s32.totalorder %s15, 2
      %p87 = por %p85, %p86
      %p89 = scmp.ne.s32.totalorder %s72, %s88
      %p90 = scmp.eq.s32.totalorder %s15, 0
      %p91 = por %p89, %p90
      %s92 = ssub.s32 %s17, %s31
      %p93 = scmp.eq.s32.totalorder %s92, 0
      %s95 = sadd.s32 %s94, 1
      %s96 = scalar_select %p93, %s94, %s95
      %p99 = pneg %p93
      %p100 = scmp.eq.s32.totalorder %s9, 2
      %p101 = por %p99, %p100
      %p102 = scmp.ne.s32.totalorder %s94, %s97
      %p103 = scmp.eq.s32.totalorder %s9, 0
      %p104 = por %p102, %p103
      %p105 = scmp.ne.s32.totalorder %s94, %s97
      %p106 = scmp.eq.s32.totalorder %s14, 2
      %p107 = por %p105, %p106
      %p108 = scmp.ne.s32.totalorder %s97, %s98
      %p109 = scmp.eq.s32.totalorder %s14, 0
      %p110 = por %p108, %p109
      %p111 = scmp.ne.s32.totalorder %s97, %s98
      %p112 = scmp.eq.s32.totalorder %s15, 2
      %p113 = por %p111, %p112
      %p115 = scmp.ne.s32.totalorder %s98, %s114
      %p116 = scmp.eq.s32.totalorder %s15, 0
      %p117 = por %p115, %p116
      %s118 = ssub.s32 %s16, %s35
      %s119 = ssub.s32 %s17, %s31
      %s120 = sor.u32 %s118, %s119
      %p121 = scmp.eq.s32.totalorder %s120, 0
      %s123 = sadd.s32 %s122, 1
      %s124 = scalar_select %p121, %s122, %s123
      %p127 = pneg %p121
      %p128 = scmp.eq.s32.totalorder %s9, 2
      %p129 = por %p127, %p128
      %p130 = scmp.ne.s32.totalorder %s122, %s125
      %p131 = scmp.eq.s32.totalorder %s9, 0
      %p132 = por %p130, %p131
      %p133 = scmp.ne.s32.totalorder %s122, %s125
      %p134 = scmp.eq.s32.totalorder %s14, 2
      %p135 = por %p133, %p134
      %p136 = scmp.ne.s32.totalorder %s125, %s126
      %p137 = scmp.eq.s32.totalorder %s14, 0
      %p138 = por %p136, %p137
      %p139 = scmp.ne.s32.totalorder %s125, %s126
      %p140 = scmp.eq.s32.totalorder %s15, 2
      %p141 = por %p139, %p140
      %p143 = scmp.ne.s32.totalorder %s126, %s142
      %p144 = scmp.eq.s32.totalorder %s15, 0
      %p145 = por %p143, %p144
      %p146 = scmp.le.s32.totalorder 1, %s9
      %p147 = scmp.lt.s32.totalorder %s9, 4
      %p148 = pnand %p146, %p147
      %p149 = pneg %p148
      // Predicated region
      $region9: #{discriminator_sngan_forward.9} parent=5 // pred_check
        _
      $region10: #{discriminator_sngan_forward.9} parent=5 // pred_check_branch
        %151 = sbr.rel (%p148) target = $region12
      $region11: #{discriminator_sngan_forward.9} parent=5 // pred_region
        %s152 = ssub.s32 %s9, 1
        // Predicated region
        $region13: #{discriminator_sngan_forward.9} parent=11 // pred_check
          %p153 = pneg %p110
        $region14: #{discriminator_sngan_forward.9} parent=11 // pred_check_branch
          %155 = sbr.rel (%p153) target = $region16
        $region15: #{discriminator_sngan_forward.9} parent=11 // pred_region
          %p156 = scmp.lt.s32.totalorder %s20, 0
          %s157 = scalar_select %p156, %s20, 0
          %s158 = scalar_lea.vmem %s2, %s157
        $region16: #{discriminator_sngan_forward.9} parent=11 // pred_fallthru
          _
      $region12: #{discriminator_sngan_forward.9} parent=5 // pred_fallthru
        _
      %p159 = scmp.lt.s32.totalorder %s9, 3
      // Predicated region
      $region17: #{discriminator_sngan_forward.9} parent=5 // pred_check
        %p160 = pneg %p159
      $region18: #{discriminator_sngan_forward.9} parent=5 // pred_check_branch
        %162 = sbr.rel (%p160) target = $region20
      $region19: #{discriminator_sngan_forward.9} parent=5 // pred_region
        // Predicated region
        $region21: #{discriminator_sngan_forward.9} parent=19 // pred_check
          %p163 = pneg %p50
        $region22: #{discriminator_sngan_forward.9} parent=19 // pred_check_branch
          %165 = sbr.rel (%p163) target = $region24
        $region23: #{discriminator_sngan_forward.9} parent=19 // pred_region
          %s166 = sand.u32 %s40, 1
          %s167 = sand.u32 %s40, 1
          %s168 = smul.addr %s167, 192
          %s169 = scalar_lea.vmem [#allocation2], %s168
          %s170 = smul.u32 16, %s16
          %s171 = smul.u32 3, %s18
          %s172 = smul.addr %s170, 9
          %s173 = sadd.s32 %s171, %s172
          %s174 = smul.addr %s173, 4
          %s175 = scalar_lea.vmem %s0, %s174
          // Predicated region
          $region25: #{discriminator_sngan_forward.9} parent=23 // pred_check
            _
          $region26: #{discriminator_sngan_forward.9} parent=23 // pred_check_branch
            %177 = sbr.rel (0) target = $region28
          $region27: #{discriminator_sngan_forward.9} parent=23 // pred_region
            // Predicated region
            $region29: #{discriminator_sngan_forward.9} parent=27 // pred_check
              _
            $region30: #{discriminator_sngan_forward.9} parent=27 // pred_check_branch
              %179 = sbr.rel (0) target = $region32
            $region31: #{discriminator_sngan_forward.9} parent=27 // pred_region
              %s180 = scalar_lea.vmem %s175, 8
              %s181 = scalar_lea.vmem %s169, 8 [#allocation2]
              loop: start=0, step=1, limit=1
              $region33: #{discriminator_sngan_forward.9} parent=31 // loop_pre_header
                _
              $region34: #{discriminator_sngan_forward.9} parent=31 // loop_header
                %s183 = sphi 0, %s187
                %p184 = scmp.ge.s32.totalorder %s183, 1
                %s188 = sphi %s175, %s175
                %s189 = sphi %s169, %s169
              $region35: #{discriminator_sngan_forward.9} parent=31 // loop_header_branch
                %186 = sbr.rel (%p184) target = $region39
              $region36: #{discriminator_sngan_forward.9} parent=31 // loop_body
                %v190 = vld [vmem:[%s188] sm:$0xff]
                %191 = vst [vmem:[%s189] sm:$0xff] %v190
                %v192 = vld [vmem:[%s188 + $0x24] sm:$0xff]
                %193 = vst [vmem:[%s189 + $0xc] sm:$0xff] %v192
                %v194 = vld [vmem:[%s188 + $0x48] sm:$0xff]
                %195 = vst [vmem:[%s189 + $0x18] sm:$0xff] %v194
                %v196 = vld [vmem:[%s188 + $0x6c] sm:$0xff]
                %197 = vst [vmem:[%s189 + $0x24] sm:$0xff] %v196
                %v198 = vld [vmem:[%s188 + $0x90] sm:$0xff]
                %199 = vst [vmem:[%s189 + $0x30] sm:$0xff] %v198
                %v200 = vld [vmem:[%s188 + $0xb4] sm:$0xff]
                %201 = vst [vmem:[%s189 + $0x3c] sm:$0xff] %v200
                %v202 = vld [vmem:[%s188 + $0xd8] sm:$0xff]
                %203 = vst [vmem:[%s189 + $0x48] sm:$0xff] %v202
                %v204 = vld [vmem:[%s188 + $0xfc] sm:$0xff]
                %205 = vst [vmem:[%s189 + $0x54] sm:$0xff] %v204
                %v206 = vld [vmem:[%s188 + $0x120] sm:$0xff]
                %207 = vst [vmem:[%s189 + $0x60] sm:$0xff] %v206
                %v208 = vld [vmem:[%s188 + $0x144] sm:$0xff]
                %209 = vst [vmem:[%s189 + $0x6c] sm:$0xff] %v208
                %v210 = vld [vmem:[%s188 + $0x168] sm:$0xff]
                %211 = vst [vmem:[%s189 + $0x78] sm:$0xff] %v210
                %v212 = vld [vmem:[%s188 + $0x18c] sm:$0xff]
                %213 = vst [vmem:[%s189 + $0x84] sm:$0xff] %v212
                %v214 = vld [vmem:[%s188 + $0x1b0] sm:$0xff]
                %215 = vst [vmem:[%s189 + $0x90] sm:$0xff] %v214
                %v216 = vld [vmem:[%s188 + $0x1d4] sm:$0xff]
                %217 = vst [vmem:[%s189 + $0x9c] sm:$0xff] %v216
                %v218 = vld [vmem:[%s188 + $0x1f8] sm:$0xff]
                %219 = vst [vmem:[%s189 + $0xa8] sm:$0xff] %v218
                %v220 = vld [vmem:[%s188 + $0x21c] sm:$0xff]
                %221 = vst [vmem:[%s189 + $0xb4] sm:$0xff] %v220
              $region37: #{discriminator_sngan_forward.9} parent=31 // loop_footer
                %s187 = sadd.s32 1, %s183
              $region38: #{discriminator_sngan_forward.9} parent=31 // loop_footer_branch
                %182 = sbr.rel target = $region34
              $region39: #{discriminator_sngan_forward.9} parent=31 // loop_exit
                _
              loop: start=0, step=1, limit=1
              $region40: #{discriminator_sngan_forward.9} parent=31 // loop_pre_header
                _
              $region41: #{discriminator_sngan_forward.9} parent=31 // loop_header
                %s224 = sphi 0, %s228
                %p225 = scmp.ge.s32.totalorder %s224, 1
                %s229 = sphi %s180, %s180
                %s230 = sphi %s181, %s181
              $region42: #{discriminator_sngan_forward.9} parent=31 // loop_header_branch
                %227 = sbr.rel (%p225) target = $region46
              $region43: #{discriminator_sngan_forward.9} parent=31 // loop_body
                %v231 = vld [vmem:[%s229] sm:$0xf]
                %232 = vst [vmem:[%s230] sm:$0xf] %v231
                %v233 = vld [vmem:[%s229 + $0x24] sm:$0xf]
                %234 = vst [vmem:[%s230 + $0xc] sm:$0xf] %v233
                %v235 = vld [vmem:[%s229 + $0x48] sm:$0xf]
                %236 = vst [vmem:[%s230 + $0x18] sm:$0xf] %v235
                %v237 = vld [vmem:[%s229 + $0x6c] sm:$0xf]
                %238 = vst [vmem:[%s230 + $0x24] sm:$0xf] %v237
                %v239 = vld [vmem:[%s229 + $0x90] sm:$0xf]
                %240 = vst [vmem:[%s230 + $0x30] sm:$0xf] %v239
                %v241 = vld [vmem:[%s229 + $0xb4] sm:$0xf]
                %242 = vst [vmem:[%s230 + $0x3c] sm:$0xf] %v241
                %v243 = vld [vmem:[%s229 + $0xd8] sm:$0xf]
                %244 = vst [vmem:[%s230 + $0x48] sm:$0xf] %v243
                %v245 = vld [vmem:[%s229 + $0xfc] sm:$0xf]
                %246 = vst [vmem:[%s230 + $0x54] sm:$0xf] %v245
                %v247 = vld [vmem:[%s229 + $0x120] sm:$0xf]
                %248 = vst [vmem:[%s230 + $0x60] sm:$0xf] %v247
                %v249 = vld [vmem:[%s229 + $0x144] sm:$0xf]
                %250 = vst [vmem:[%s230 + $0x6c] sm:$0xf] %v249
                %v251 = vld [vmem:[%s229 + $0x168] sm:$0xf]
                %252 = vst [vmem:[%s230 + $0x78] sm:$0xf] %v251
                %v253 = vld [vmem:[%s229 + $0x18c] sm:$0xf]
                %254 = vst [vmem:[%s230 + $0x84] sm:$0xf] %v253
                %v255 = vld [vmem:[%s229 + $0x1b0] sm:$0xf]
                %256 = vst [vmem:[%s230 + $0x90] sm:$0xf] %v255
                %v257 = vld [vmem:[%s229 + $0x1d4] sm:$0xf]
                %258 = vst [vmem:[%s230 + $0x9c] sm:$0xf] %v257
                %v259 = vld [vmem:[%s229 + $0x1f8] sm:$0xf]
                %260 = vst [vmem:[%s230 + $0xa8] sm:$0xf] %v259
                %v261 = vld [vmem:[%s229 + $0x21c] sm:$0xf]
                %262 = vst [vmem:[%s230 + $0xb4] sm:$0xf] %v261
              $region44: #{discriminator_sngan_forward.9} parent=31 // loop_footer
                %s228 = sadd.s32 1, %s224
              $region45: #{discriminator_sngan_forward.9} parent=31 // loop_footer_branch
                %223 = sbr.rel target = $region41
              $region46: #{discriminator_sngan_forward.9} parent=31 // loop_exit
                _
            $region32: #{discriminator_sngan_forward.9} parent=27 // pred_fallthru
              _
          $region28: #{discriminator_sngan_forward.9} parent=23 // pred_fallthru
            _
          %263 = vnop
        $region24: #{discriminator_sngan_forward.9} parent=19 // pred_fallthru
          _
        // Predicated region
        $region47: #{discriminator_sngan_forward.9} parent=19 // pred_check
          %p264 = pneg %p78
        $region48: #{discriminator_sngan_forward.9} parent=19 // pred_check_branch
          %266 = sbr.rel (%p264) target = $region50
        $region49: #{discriminator_sngan_forward.9} parent=19 // pred_region
          %s267 = smul.u32 48, %s18
          %p268 = scmp.lt.s32.totalorder %s267, 143
          %s269 = scalar_select %p268, %s267, 143
          %p270 = scmp.lt.s32.totalorder %s17, 0
          %s271 = scalar_select %p270, %s17, 0
          %s272 = sadd.s32 %s271, %s269
          %s273 = smul.addr %s272, 4
          %s274 = scalar_lea.vmem %s1, %s273
          %s275 = smul.u32 48, %s18
        $region50: #{discriminator_sngan_forward.9} parent=19 // pred_fallthru
          _
      $region20: #{discriminator_sngan_forward.9} parent=5 // pred_fallthru
        _
      %p276 = scmp.le.s32.totalorder 1, %s9
      %p277 = scmp.lt.s32.totalorder %s9, 4
      %p278 = pnand %p276, %p277
      %p279 = pneg %p278
      // Predicated region
      $region51: #{discriminator_sngan_forward.9} parent=5 // pred_check
        _
      $region52: #{discriminator_sngan_forward.9} parent=5 // pred_check_branch
        %281 = sbr.rel (%p278) target = $region54
      $region53: #{discriminator_sngan_forward.9} parent=5 // pred_region
        %s282 = ssub.s32 %s9, 1
        %s283 = sand.u32 %s43, 1
        %s284 = sand.u32 %s43, 1
        %s285 = smul.addr %s284, 192
        %s286 = scalar_lea.vmem [#allocation2], %s285
        // Predicated region
        $region55: #{discriminator_sngan_forward.9} parent=53 // pred_check
          %p287 = pneg %p56
        $region56: #{discriminator_sngan_forward.9} parent=53 // pred_check_branch
          %289 = sbr.rel (%p287) target = $region58
        $region57: #{discriminator_sngan_forward.9} parent=53 // pred_region
          _
        $region58: #{discriminator_sngan_forward.9} parent=53 // pred_fallthru
          _
        %s290 = sand.u32 %s43, 1
        %s291 = sand.u32 %s43, 1
        %s292 = smul.addr %s291, 192
        %s293 = scalar_lea.vmem [#allocation2], %s292
        %p294 = pneg %p56
        %p295 = pneg %p53
        %s296 = smul.u32 48, %s21
        %p297 = scmp.lt.s32.totalorder %s296, 143
        %s298 = scalar_select %p297, %s296, 143
        %p299 = scmp.lt.s32.totalorder %s20, 0
        %s300 = scalar_select %p299, %s20, 0
        %s301 = sadd.s32 %s300, %s298
        %s302 = smul.addr %s301, 4
        %s303 = scalar_lea.vmem %s1, %s302
        %p304 = pneg %p84
        %p305 = pneg %p81
        %p306 = scmp.lt.s32.totalorder %s20, 0
        %s307 = scalar_select %p306, %s20, 0
        %s308 = scalar_lea.vmem %s2, %s307
        %p309 = pneg %p110
        %p310 = pneg %p107
        %p311 = pneg %p138
        %p312 = pneg %p135
        %s313 = smul.u32 16, %s19
        %p314 = scmp.lt.s32.totalorder %s313, 15
        %s315 = scalar_select %p314, %s313, 15
        %p316 = scmp.lt.s32.totalorder %s20, 0
        %s317 = scalar_select %p316, %s20, 0
        %s318 = sadd.s32 %s317, %s315
        %s319 = smul.addr %s318, 8
        %s320 = scalar_lea.vmem %s3, %s319
        %s321 = smul.u32 16, %s19
        %s322 = smul.u32 3, %s21
        %s323 = smul.u32 48, %s21
        %p324 = scmp.lt.s32.totalorder %s323, 143
        %s325 = scalar_select %p324, %s323, 143
        %p326 = scmp.lt.s32.totalorder %s20, 0
        %s327 = scalar_select %p326, %s20, 0
        %s328 = sadd.s32 %s327, %s325
        %s329 = smul.addr %s328, 4
        %s330 = scalar_lea.vmem %s1, %s329
        %s331 = smul.u32 48, %s21
        %p332 = scmp.lt.s32.totalorder %s20, 0
        %s333 = scalar_select %p332, %s20, 0
        %s334 = scalar_lea.vmem %s2, %s333
        %s335 = smul.u32 16, %s19
        %p336 = scmp.lt.s32.totalorder %s335, 15
        %s337 = scalar_select %p336, %s335, 15
        %p338 = scmp.lt.s32.totalorder %s20, 0
        %s339 = scalar_select %p338, %s20, 0
        %s340 = sadd.s32 %s339, %s337
        %s341 = smul.addr %s340, 8
        %s342 = scalar_lea.vmem %s3, %s341
        %s343 = smul.u32 16, %s19
        %p345 = scmp.eq.s32.totalorder %s21, 0
        // Predicated region
        $region59: #{discriminator_sngan_forward.9} parent=53 // pred_check
          %p346 = pneg %p345
        $region60: #{discriminator_sngan_forward.9} parent=53 // pred_check_branch
          %348 = sbr.rel (%p346) target = $region62
        $region61: #{discriminator_sngan_forward.9} parent=53 // pred_region
          %349 = vst [vmem:[%s342] sm:$0xff] 0.0
          %350 = vst [vmem:[%s342 + $0x8] sm:$0xff] 0.0
          %351 = vst [vmem:[%s342 + $0x10] sm:$0xff] 0.0
          %352 = vst [vmem:[%s342 + $0x18] sm:$0xff] 0.0
          %353 = vst [vmem:[%s342 + $0x20] sm:$0xff] 0.0
          %354 = vst [vmem:[%s342 + $0x28] sm:$0xff] 0.0
          %355 = vst [vmem:[%s342 + $0x30] sm:$0xff] 0.0
          %356 = vst [vmem:[%s342 + $0x38] sm:$0xff] 0.0
          %357 = vst [vmem:[%s342 + $0x40] sm:$0xff] 0.0
          %358 = vst [vmem:[%s342 + $0x48] sm:$0xff] 0.0
          %359 = vst [vmem:[%s342 + $0x50] sm:$0xff] 0.0
          %360 = vst [vmem:[%s342 + $0x58] sm:$0xff] 0.0
          %361 = vst [vmem:[%s342 + $0x60] sm:$0xff] 0.0
          %362 = vst [vmem:[%s342 + $0x68] sm:$0xff] 0.0
          %363 = vst [vmem:[%s342 + $0x70] sm:$0xff] 0.0
          %364 = vst [vmem:[%s342 + $0x78] sm:$0xff] 0.0
        $region62: #{discriminator_sngan_forward.9} parent=53 // pred_fallthru
          _
        %v365 = vld [vmem:[%s342] sm:$0xff]
        %v366 = vld [vmem:[%s342 + $0x8] sm:$0xff]
        %v367 = vld [vmem:[%s342 + $0x10] sm:$0xff]
        %v368 = vld [vmem:[%s342 + $0x18] sm:$0xff]
        %v369 = vld [vmem:[%s342 + $0x20] sm:$0xff]
        %v370 = vld [vmem:[%s342 + $0x28] sm:$0xff]
        %v371 = vld [vmem:[%s342 + $0x30] sm:$0xff]
        %v372 = vld [vmem:[%s342 + $0x38] sm:$0xff]
        %v373 = vld [vmem:[%s342 + $0x40] sm:$0xff]
        %v374 = vld [vmem:[%s342 + $0x48] sm:$0xff]
        %v375 = vld [vmem:[%s342 + $0x50] sm:$0xff]
        %v376 = vld [vmem:[%s342 + $0x58] sm:$0xff]
        %v377 = vld [vmem:[%s342 + $0x60] sm:$0xff]
        %v378 = vld [vmem:[%s342 + $0x68] sm:$0xff]
        %v379 = vld [vmem:[%s342 + $0x70] sm:$0xff]
        %v380 = vld [vmem:[%s342 + $0x78] sm:$0xff]
        %v381 = vld [vmem:[%s286] sm:$0xff]
        %v382 = vld [vmem:[%s286 + $0x8] sm:$0xf]
        %v383 = vld [vmem:[%s286 + $0xc] sm:$0xff]
        %v384 = vld [vmem:[%s286 + $0x14] sm:$0xf]
        %v385 = vld [vmem:[%s286 + $0x18] sm:$0xff]
        %v386 = vld [vmem:[%s286 + $0x20] sm:$0xf]
        %v387 = vld [vmem:[%s286 + $0x24] sm:$0xff]
        %v388 = vld [vmem:[%s286 + $0x2c] sm:$0xf]
        %v389 = vld [vmem:[%s286 + $0x30] sm:$0xff]
        %v390 = vld [vmem:[%s286 + $0x38] sm:$0xf]
        %v391 = vld [vmem:[%s286 + $0x3c] sm:$0xff]
        %v392 = vld [vmem:[%s286 + $0x44] sm:$0xf]
        %v393 = vld [vmem:[%s286 + $0x48] sm:$0xff]
        %v394 = vld [vmem:[%s286 + $0x50] sm:$0xf]
        %v395 = vld [vmem:[%s286 + $0x54] sm:$0xff]
        %v396 = vld [vmem:[%s286 + $0x5c] sm:$0xf]
        %v397 = vld [vmem:[%s286 + $0x60] sm:$0xff]
        %v398 = vld [vmem:[%s286 + $0x68] sm:$0xf]
        %v399 = vld [vmem:[%s286 + $0x6c] sm:$0xff]
        %v400 = vld [vmem:[%s286 + $0x74] sm:$0xf]
        %v401 = vld [vmem:[%s286 + $0x78] sm:$0xff]
        %v402 = vld [vmem:[%s286 + $0x80] sm:$0xf]
        %v403 = vld [vmem:[%s286 + $0x84] sm:$0xff]
        %v404 = vld [vmem:[%s286 + $0x8c] sm:$0xf]
        %v405 = vld [vmem:[%s286 + $0x90] sm:$0xff]
        %v406 = vld [vmem:[%s286 + $0x98] sm:$0xf]
        %v407 = vld [vmem:[%s286 + $0x9c] sm:$0xff]
        %v408 = vld [vmem:[%s286 + $0xa4] sm:$0xf]
        %v409 = vld [vmem:[%s286 + $0xa8] sm:$0xff]
        %v410 = vld [vmem:[%s286 + $0xb0] sm:$0xf]
        %v411 = vld [vmem:[%s286 + $0xb4] sm:$0xff]
        %v412 = vld [vmem:[%s286 + $0xbc] sm:$0xf]
        %v413 = vld [vmem:[%s330] sm:$0xf]
        %v414 = vld [vmem:[%s330 + $0x4] sm:$0xf]
        %v415 = vld [vmem:[%s330 + $0x8] sm:$0xf]
        %v416 = vld [vmem:[%s330 + $0xc] sm:$0xf]
        %v417 = vld [vmem:[%s330 + $0x10] sm:$0xf]
        %v418 = vld [vmem:[%s330 + $0x14] sm:$0xf]
        %v419 = vld [vmem:[%s330 + $0x18] sm:$0xf]
        %v420 = vld [vmem:[%s330 + $0x1c] sm:$0xf]
        %v421 = vld [vmem:[%s330 + $0x20] sm:$0xf]
        %v422 = vld [vmem:[%s330 + $0x24] sm:$0xf]
        %v423 = vld [vmem:[%s330 + $0x28] sm:$0xf]
        %v424 = vld [vmem:[%s330 + $0x2c] sm:$0xf]
        %v425 = vld [vmem:[%s330 + $0x30] sm:$0xf]
        %v426 = vld [vmem:[%s330 + $0x34] sm:$0xf]
        %v427 = vld [vmem:[%s330 + $0x38] sm:$0xf]
        %v428 = vld [vmem:[%s330 + $0x3c] sm:$0xf]
        %v429 = vld [vmem:[%s330 + $0x40] sm:$0xf]
        %v430 = vld [vmem:[%s330 + $0x44] sm:$0xf]
        %v431 = vld [vmem:[%s330 + $0x48] sm:$0xf]
        %v432 = vld [vmem:[%s330 + $0x4c] sm:$0xf]
        %v433 = vld [vmem:[%s330 + $0x50] sm:$0xf]
        %v434 = vld [vmem:[%s330 + $0x54] sm:$0xf]
        %v435 = vld [vmem:[%s330 + $0x58] sm:$0xf]
        %v436 = vld [vmem:[%s330 + $0x5c] sm:$0xf]
        %v437 = vld [vmem:[%s330 + $0x60] sm:$0xf]
        %v438 = vld [vmem:[%s330 + $0x64] sm:$0xf]
        %v439 = vld [vmem:[%s330 + $0x68] sm:$0xf]
        %v440 = vld [vmem:[%s330 + $0x6c] sm:$0xf]
        %v441 = vld [vmem:[%s330 + $0x70] sm:$0xf]
        %v442 = vld [vmem:[%s330 + $0x74] sm:$0xf]
        %v443 = vld [vmem:[%s330 + $0x78] sm:$0xf]
        %v444 = vld [vmem:[%s330 + $0x7c] sm:$0xf]
        %v445 = vld [vmem:[%s330 + $0x80] sm:$0xf]
        %v446 = vld [vmem:[%s330 + $0x84] sm:$0xf]
        %v447 = vld [vmem:[%s330 + $0x88] sm:$0xf]
        %v448 = vld [vmem:[%s330 + $0x8c] sm:$0xf]
        %v449 = vld [vmem:[%s330 + $0x90] sm:$0xf]
        %v450 = vld [vmem:[%s330 + $0x94] sm:$0xf]
        %v451 = vld [vmem:[%s330 + $0x98] sm:$0xf]
        %v452 = vld [vmem:[%s330 + $0x9c] sm:$0xf]
        %v453 = vld [vmem:[%s330 + $0xa0] sm:$0xf]
        %v454 = vld [vmem:[%s330 + $0xa4] sm:$0xf]
        %v455 = vld [vmem:[%s330 + $0xa8] sm:$0xf]
        %v456 = vld [vmem:[%s330 + $0xac] sm:$0xf]
        %v457 = vld [vmem:[%s330 + $0xb0] sm:$0xf]
        %v458 = vld [vmem:[%s330 + $0xb4] sm:$0xf]
        %v459 = vld [vmem:[%s330 + $0xb8] sm:$0xf]
        %v460 = vld [vmem:[%s330 + $0xbc] sm:$0xf]
        %v493 = vunpack.c.l.b16 %v381
        %v494 = vunpack.c.h.b16 %v381
        %v495 = vunpack.c.l.b16 %v382
        %v496 = vunpack.c.l.b16 %v383
        %v497 = vunpack.c.h.b16 %v383
        %v498 = vunpack.c.l.b16 %v384
        %v499 = vunpack.c.l.b16 %v385
        %v500 = vunpack.c.h.b16 %v385
        %v501 = vunpack.c.l.b16 %v386
        %v502 = vunpack.c.l.b16 %v387
        %v503 = vunpack.c.h.b16 %v387
        %v504 = vunpack.c.l.b16 %v388
        %v505 = vunpack.c.l.b16 %v389
        %v506 = vunpack.c.h.b16 %v389
        %v507 = vunpack.c.l.b16 %v390
        %v508 = vunpack.c.l.b16 %v391
        %v509 = vunpack.c.h.b16 %v391
        %v510 = vunpack.c.l.b16 %v392
        %v511 = vunpack.c.l.b16 %v393
        %v512 = vunpack.c.h.b16 %v393
        %v513 = vunpack.c.l.b16 %v394
        %v514 = vunpack.c.l.b16 %v395
        %v515 = vunpack.c.h.b16 %v395
        %v516 = vunpack.c.l.b16 %v396
        %v517 = vunpack.c.l.b16 %v397
        %v518 = vunpack.c.h.b16 %v397
        %v519 = vunpack.c.l.b16 %v398
        %v520 = vunpack.c.l.b16 %v399
        %v521 = vunpack.c.h.b16 %v399
        %v522 = vunpack.c.l.b16 %v400
        %v523 = vunpack.c.l.b16 %v401
        %v524 = vunpack.c.h.b16 %v401
        %v525 = vunpack.c.l.b16 %v402
        %v526 = vunpack.c.l.b16 %v403
        %v527 = vunpack.c.h.b16 %v403
        %v528 = vunpack.c.l.b16 %v404
        %v529 = vunpack.c.l.b16 %v405
        %v530 = vunpack.c.h.b16 %v405
        %v531 = vunpack.c.l.b16 %v406
        %v532 = vunpack.c.l.b16 %v407
        %v533 = vunpack.c.h.b16 %v407
        %v534 = vunpack.c.l.b16 %v408
        %v535 = vunpack.c.l.b16 %v409
        %v536 = vunpack.c.h.b16 %v409
        %v537 = vunpack.c.l.b16 %v410
        %v538 = vunpack.c.l.b16 %v411
        %v539 = vunpack.c.h.b16 %v411
        %v540 = vunpack.c.l.b16 %v412
        %v541 = vpack.c.b16 %v496, %v493
        %v542 = vpack.c.b16 %v497, %v494
        %v543 = vpack.c.b16 %v498, %v495
        %v544 = vpack.c.b16 %v502, %v499
        %v545 = vpack.c.b16 %v503, %v500
        %v546 = vpack.c.b16 %v504, %v501
        %v547 = vpack.c.b16 %v508, %v505
        %v548 = vpack.c.b16 %v509, %v506
        %v549 = vpack.c.b16 %v510, %v507
        %v550 = vpack.c.b16 %v514, %v511
        %v551 = vpack.c.b16 %v515, %v512
        %v552 = vpack.c.b16 %v516, %v513
        %v553 = vpack.c.b16 %v520, %v517
        %v554 = vpack.c.b16 %v521, %v518
        %v555 = vpack.c.b16 %v522, %v519
        %v556 = vpack.c.b16 %v526, %v523
        %v557 = vpack.c.b16 %v527, %v524
        %v558 = vpack.c.b16 %v528, %v525
        %v559 = vpack.c.b16 %v532, %v529
        %v560 = vpack.c.b16 %v533, %v530
        %v561 = vpack.c.b16 %v534, %v531
        %v562 = vpack.c.b16 %v538, %v535
        %v563 = vpack.c.b16 %v539, %v536
        %v564 = vpack.c.b16 %v540, %v537
        %v637 = vunpack.c.l.b16 %v413
        %v638 = vunpack.c.l.b16 %v414
        %v639 = vunpack.c.l.b16 %v415
        %v640 = vunpack.c.l.b16 %v416
        %v641 = vunpack.c.l.b16 %v417
        %v642 = vunpack.c.l.b16 %v418
        %v643 = vunpack.c.l.b16 %v419
        %v644 = vunpack.c.l.b16 %v420
        %v645 = vunpack.c.l.b16 %v421
        %v646 = vunpack.c.l.b16 %v422
        %v647 = vunpack.c.l.b16 %v423
        %v648 = vunpack.c.l.b16 %v424
        %v649 = vunpack.c.l.b16 %v425
        %v650 = vunpack.c.l.b16 %v426
        %v651 = vunpack.c.l.b16 %v427
        %v652 = vunpack.c.l.b16 %v428
        %v653 = vunpack.c.l.b16 %v429
        %v654 = vunpack.c.l.b16 %v430
        %v655 = vunpack.c.l.b16 %v431
        %v656 = vunpack.c.l.b16 %v432
        %v657 = vunpack.c.l.b16 %v433
        %v658 = vunpack.c.l.b16 %v434
        %v659 = vunpack.c.l.b16 %v435
        %v660 = vunpack.c.l.b16 %v436
        %v661 = vunpack.c.l.b16 %v437
        %v662 = vunpack.c.l.b16 %v438
        %v663 = vunpack.c.l.b16 %v439
        %v664 = vunpack.c.l.b16 %v440
        %v665 = vunpack.c.l.b16 %v441
        %v666 = vunpack.c.l.b16 %v442
        %v667 = vunpack.c.l.b16 %v443
        %v668 = vunpack.c.l.b16 %v444
        %v669 = vunpack.c.l.b16 %v445
        %v670 = vunpack.c.l.b16 %v446
        %v671 = vunpack.c.l.b16 %v447
        %v672 = vunpack.c.l.b16 %v448
        %v673 = vunpack.c.l.b16 %v449
        %v674 = vunpack.c.l.b16 %v450
        %v675 = vunpack.c.l.b16 %v451
        %v676 = vunpack.c.l.b16 %v452
        %v677 = vunpack.c.l.b16 %v453
        %v678 = vunpack.c.l.b16 %v454
        %v679 = vunpack.c.l.b16 %v455
        %v680 = vunpack.c.l.b16 %v456
        %v681 = vunpack.c.l.b16 %v457
        %v682 = vunpack.c.l.b16 %v458
        %v683 = vunpack.c.l.b16 %v459
        %v684 = vunpack.c.l.b16 %v460
        %v685 = vpack.c.b16 %v638, %v637
        %v686 = vpack.c.b16 %v640, %v639
        %v687 = vpack.c.b16 %v642, %v641
        %v688 = vpack.c.b16 %v644, %v643
        %v689 = vpack.c.b16 %v646, %v645
        %v690 = vpack.c.b16 %v648, %v647
        %v691 = vpack.c.b16 %v650, %v649
        %v692 = vpack.c.b16 %v652, %v651
        %v693 = vpack.c.b16 %v654, %v653
        %v694 = vpack.c.b16 %v656, %v655
        %v695 = vpack.c.b16 %v658, %v657
        %v696 = vpack.c.b16 %v660, %v659
        %v697 = vpack.c.b16 %v662, %v661
        %v698 = vpack.c.b16 %v664, %v663
        %v699 = vpack.c.b16 %v666, %v665
        %v700 = vpack.c.b16 %v668, %v667
        %v701 = vpack.c.b16 %v670, %v669
        %v702 = vpack.c.b16 %v672, %v671
        %v703 = vpack.c.b16 %v674, %v673
        %v704 = vpack.c.b16 %v676, %v675
        %v705 = vpack.c.b16 %v678, %v677
        %v706 = vpack.c.b16 %v680, %v679
        %v707 = vpack.c.b16 %v682, %v681
        %v708 = vpack.c.b16 %v684, %v683
        %733 = vmatprep.subr.bf16.mxu0 0
        %734 = vmatpush1.bf16.msra.mxu0 %v685
        %735 = vmatprep.subr.bf16.mxu0 0
        %736 = vmatpush1.bf16.msra.mxu0 %v686
        %737 = vmatprep.subr.bf16.mxu0 0
        %738 = vmatpush1.bf16.msra.mxu0 %v687
        %739 = vmatprep.subr.bf16.mxu0 0
        %740 = vmatpush1.bf16.msra.mxu0 %v688
        %741 = vmatprep.subr.bf16.mxu0 0
        %742 = vmatpush1.bf16.msra.mxu0 %v689
        %743 = vmatprep.subr.bf16.mxu0 0
        %744 = vmatpush1.bf16.msra.mxu0 %v690
        %745 = vmatprep.subr.bf16.mxu0 0
        %746 = vmatpush1.bf16.msra.mxu0 %v691
        %747 = vmatprep.subr.bf16.mxu0 0
        %748 = vmatpush1.bf16.msra.mxu0 %v692
        %749 = vmatprep.subr.bf16.mxu0 0
        %750 = vmatpush1.bf16.msra.mxu0 %v693
        %751 = vmatprep.subr.bf16.mxu0 0
        %752 = vmatpush1.bf16.msra.mxu0 %v694
        %753 = vmatprep.subr.bf16.mxu0 0
        %754 = vmatpush1.bf16.msra.mxu0 %v695
        %755 = vmatprep.subr.bf16.mxu0 0
        %756 = vmatpush1.bf16.msra.mxu0 %v696
        %757 = vmatprep.subr.bf16.mxu0 0
        %758 = vmatpush1.bf16.msra.mxu0 %v697
        %759 = vmatprep.subr.bf16.mxu0 0
        %760 = vmatpush1.bf16.msra.mxu0 %v698
        %761 = vmatprep.subr.bf16.mxu0 0
        %762 = vmatpush1.bf16.msra.mxu0 %v699
        %763 = vmatprep.subr.bf16.mxu0 0
        %764 = vmatpush1.bf16.msra.mxu0 %v700
        %765 = vmatprep.mubr.bf16.mxu0 %v542
        %766 = vmatmul.mubr.bf16.gmra.mrb[0].mxu0 %v541
        %v767 = vpop.f32.mrb[0].mxu0
        %v768 = vadd.f32 0.0, %v767
        %v769 = vpop.f32.mrb[0].mxu0
        %v770 = vpop.f32.mrb[0].mxu0
        %v771 = vadd.f32 0.0, %v770
        %v772 = vpop.f32.mrb[0].mxu0
        %773 = vmatprep.mubr.bf16.mxu0 %v545
        %774 = vmatmul.mubr.bf16.gmra.mrb[0].mxu0 %v544
        %v775 = vpop.f32.mrb[0].mxu0
        %v776 = vadd.f32 0.0, %v775
        %v777 = vpop.f32.mrb[0].mxu0
        %v778 = vpop.f32.mrb[0].mxu0
        %v779 = vadd.f32 0.0, %v778
        %v780 = vpop.f32.mrb[0].mxu0
        %781 = vmatprep.mubr.bf16.mxu0 %v548
        %782 = vmatmul.mubr.bf16.gmra.mrb[0].mxu0 %v547
        %v783 = vpop.f32.mrb[0].mxu0
        %v784 = vadd.f32 0.0, %v783
        %v785 = vpop.f32.mrb[0].mxu0
        %v786 = vpop.f32.mrb[0].mxu0
        %v787 = vadd.f32 0.0, %v786
        %v788 = vpop.f32.mrb[0].mxu0
        %789 = vmatprep.mubr.bf16.mxu0 %v551
        %790 = vmatmul.mubr.bf16.gmra.mrb[0].mxu0 %v550
        %v791 = vpop.f32.mrb[0].mxu0
        %v792 = vadd.f32 0.0, %v791
        %v793 = vpop.f32.mrb[0].mxu0
        %v794 = vpop.f32.mrb[0].mxu0
        %v795 = vadd.f32 0.0, %v794
        %v796 = vpop.f32.mrb[0].mxu0
        %797 = vmatprep.mubr.bf16.mxu0 %v554
        %798 = vmatmul.mubr.bf16.gmra.mrb[0].mxu0 %v553
        %v799 = vpop.f32.mrb[0].mxu0
        %v800 = vadd.f32 0.0, %v799
        %v801 = vpop.f32.mrb[0].mxu0
        %v802 = vpop.f32.mrb[0].mxu0
        %v803 = vadd.f32 0.0, %v802
        %v804 = vpop.f32.mrb[0].mxu0
        %805 = vmatprep.mubr.bf16.mxu0 %v557
        %806 = vmatmul.mubr.bf16.gmra.mrb[0].mxu0 %v556
        %v807 = vpop.f32.mrb[0].mxu0
        %v808 = vadd.f32 0.0, %v807
        %v809 = vpop.f32.mrb[0].mxu0
        %v810 = vpop.f32.mrb[0].mxu0
        %v811 = vadd.f32 0.0, %v810
        %v812 = vpop.f32.mrb[0].mxu0
        %813 = vmatprep.mubr.bf16.mxu0 %v560
        %814 = vmatmul.mubr.bf16.gmra.mrb[0].mxu0 %v559
        %v815 = vpop.f32.mrb[0].mxu0
        %v816 = vadd.f32 0.0, %v815
        %v817 = vpop.f32.mrb[0].mxu0
        %v818 = vpop.f32.mrb[0].mxu0
        %v819 = vadd.f32 0.0, %v818
        %v820 = vpop.f32.mrb[0].mxu0
        %821 = vmatprep.mubr.bf16.mxu0 %v563
        %822 = vmatmul.mubr.bf16.gmra.mrb[0].mxu0 %v562
        %v823 = vpop.f32.mrb[0].mxu0
        %v824 = vadd.f32 0.0, %v823
        %v825 = vpop.f32.mrb[0].mxu0
        %v826 = vpop.f32.mrb[0].mxu0
        %v827 = vadd.f32 0.0, %v826
        %v828 = vpop.f32.mrb[0].mxu0
        %829 = vdwg.mxu0
        %830 = vmatprep.subr.bf16.mxu0 0
        %831 = vmatpush1.bf16.msra.mxu0 %v701
        %832 = vmatprep.subr.bf16.mxu0 0
        %833 = vmatpush1.bf16.msra.mxu0 %v702
        %834 = vmatprep.subr.bf16.mxu0 0
        %835 = vmatpush1.bf16.msra.mxu0 %v703
        %836 = vmatprep.subr.bf16.mxu0 0
        %837 = vmatpush1.bf16.msra.mxu0 %v704
        %838 = vmatprep.subr.bf16.mxu0 0
        %839 = vmatpush1.bf16.msra.mxu0 %v705
        %840 = vmatprep.subr.bf16.mxu0 0
        %841 = vmatpush1.bf16.msra.mxu0 %v706
        %842 = vmatprep.subr.bf16.mxu0 0
        %843 = vmatpush1.bf16.msra.mxu0 %v707
        %844 = vmatprep.subr.bf16.mxu0 0
        %845 = vmatpush1.bf16.msra.mxu0 %v708
        %846 = vmatprep.subr.bf16.mxu0 0
        %847 = vmatpush1.bf16.msra.mxu0 0
        %848 = vmatprep.subr.bf16.mxu0 0
        %849 = vmatpush1.bf16.msra.mxu0 0
        %850 = vmatprep.subr.bf16.mxu0 0
        %851 = vmatpush1.bf16.msra.mxu0 0
        %852 = vmatprep.subr.bf16.mxu0 0
        %853 = vmatpush1.bf16.msra.mxu0 0
        %854 = vmatprep.subr.bf16.mxu0 0
        %855 = vmatpush1.bf16.msra.mxu0 0
        %856 = vmatprep.subr.bf16.mxu0 0
        %857 = vmatpush1.bf16.msra.mxu0 0
        %858 = vmatprep.subr.bf16.mxu0 0
        %859 = vmatpush1.bf16.msra.mxu0 0
        %860 = vmatprep.subr.bf16.mxu0 0
        %861 = vmatpush1.bf16.msra.mxu0 0
        %862 = vmatprep.mubr.bf16.mxu0 0
        %863 = vmatmul.mubr.bf16.gmra.mrb[0].mxu0 %v543
        %v864 = vpop.f32.mrb[0].mxu0
        %v865 = vadd.f32 %v768, %v864
        %v866 = vpop.f32.mrb[0].mxu0
        %v867 = vpop.f32.mrb[0].mxu0
        %v868 = vadd.f32 %v771, %v867
        %v869 = vpop.f32.mrb[0].mxu0
        %870 = vmatprep.mubr.bf16.mxu0 0
        %871 = vmatmul.mubr.bf16.gmra.mrb[0].mxu0 %v546
        %v872 = vpop.f32.mrb[0].mxu0
        %v873 = vadd.f32 %v776, %v872
        %v874 = vpop.f32.mrb[0].mxu0
        %v875 = vpop.f32.mrb[0].mxu0
        %v876 = vadd.f32 %v779, %v875
        %v877 = vpop.f32.mrb[0].mxu0
        %878 = vmatprep.mubr.bf16.mxu0 0
        %879 = vmatmul.mubr.bf16.gmra.mrb[0].mxu0 %v549
        %v880 = vpop.f32.mrb[0].mxu0
        %v881 = vadd.f32 %v784, %v880
        %v882 = vpop.f32.mrb[0].mxu0
        %v883 = vpop.f32.mrb[0].mxu0
        %v884 = vadd.f32 %v787, %v883
        %v885 = vpop.f32.mrb[0].mxu0
        %886 = vmatprep.mubr.bf16.mxu0 0
        %887 = vmatmul.mubr.bf16.gmra.mrb[0].mxu0 %v552
        %v888 = vpop.f32.mrb[0].mxu0
        %v889 = vadd.f32 %v792, %v888
        %v890 = vpop.f32.mrb[0].mxu0
        %v891 = vpop.f32.mrb[0].mxu0
        %v892 = vadd.f32 %v795, %v891
        %v893 = vpop.f32.mrb[0].mxu0
        %894 = vmatprep.mubr.bf16.mxu0 0
        %895 = vmatmul.mubr.bf16.gmra.mrb[0].mxu0 %v555
        %v896 = vpop.f32.mrb[0].mxu0
        %v897 = vadd.f32 %v800, %v896
        %v898 = vpop.f32.mrb[0].mxu0
        %v899 = vpop.f32.mrb[0].mxu0
        %v900 = vadd.f32 %v803, %v899
        %v901 = vpop.f32.mrb[0].mxu0
        %902 = vmatprep.mubr.bf16.mxu0 0
        %903 = vmatmul.mubr.bf16.gmra.mrb[0].mxu0 %v558
        %v904 = vpop.f32.mrb[0].mxu0
        %v905 = vadd.f32 %v808, %v904
        %v906 = vpop.f32.mrb[0].mxu0
        %v907 = vpop.f32.mrb[0].mxu0
        %v908 = vadd.f32 %v811, %v907
        %v909 = vpop.f32.mrb[0].mxu0
        %910 = vmatprep.mubr.bf16.mxu0 0
        %911 = vmatmul.mubr.bf16.gmra.mrb[0].mxu0 %v561
        %v912 = vpop.f32.mrb[0].mxu0
        %v913 = vadd.f32 %v816, %v912
        %v914 = vpop.f32.mrb[0].mxu0
        %v915 = vpop.f32.mrb[0].mxu0
        %v916 = vadd.f32 %v819, %v915
        %v917 = vpop.f32.mrb[0].mxu0
        %918 = vmatprep.mubr.bf16.mxu0 0
        %919 = vmatmul.mubr.bf16.gmra.mrb[0].mxu0 %v564
        %v920 = vpop.f32.mrb[0].mxu0
        %v921 = vadd.f32 %v824, %v920
        %v922 = vpop.f32.mrb[0].mxu0
        %v923 = vpop.f32.mrb[0].mxu0
        %v924 = vadd.f32 %v827, %v923
        %v925 = vpop.f32.mrb[0].mxu0
        %926 = vdwg.mxu0
        %v927 = vadd.f32 %v365, %v865
        %v928 = vadd.f32 %v366, %v868
        %v929 = vadd.f32 %v367, %v873
        %v930 = vadd.f32 %v368, %v876
        %v931 = vadd.f32 %v369, %v881
        %v932 = vadd.f32 %v370, %v884
        %v933 = vadd.f32 %v371, %v889
        %v934 = vadd.f32 %v372, %v892
        %v935 = vadd.f32 %v373, %v897
        %v936 = vadd.f32 %v374, %v900
        %v937 = vadd.f32 %v375, %v905
        %v938 = vadd.f32 %v376, %v908
        %v939 = vadd.f32 %v377, %v913
        %v940 = vadd.f32 %v378, %v916
        %v941 = vadd.f32 %v379, %v921
        %v942 = vadd.f32 %v380, %v924
        %943 = vst [vmem:[%s342] sm:$0xff] %v927
        %944 = vst [vmem:[%s342 + $0x8] sm:$0xff] %v928
        %945 = vst [vmem:[%s342 + $0x10] sm:$0xff] %v929
        %946 = vst [vmem:[%s342 + $0x18] sm:$0xff] %v930
        %947 = vst [vmem:[%s342 + $0x20] sm:$0xff] %v931
        %948 = vst [vmem:[%s342 + $0x28] sm:$0xff] %v932
        %949 = vst [vmem:[%s342 + $0x30] sm:$0xff] %v933
        %950 = vst [vmem:[%s342 + $0x38] sm:$0xff] %v934
        %951 = vst [vmem:[%s342 + $0x40] sm:$0xff] %v935
        %952 = vst [vmem:[%s342 + $0x48] sm:$0xff] %v936
        %953 = vst [vmem:[%s342 + $0x50] sm:$0xff] %v937
        %954 = vst [vmem:[%s342 + $0x58] sm:$0xff] %v938
        %955 = vst [vmem:[%s342 + $0x60] sm:$0xff] %v939
        %956 = vst [vmem:[%s342 + $0x68] sm:$0xff] %v940
        %957 = vst [vmem:[%s342 + $0x70] sm:$0xff] %v941
        %958 = vst [vmem:[%s342 + $0x78] sm:$0xff] %v942
        %p959 = scmp.eq.s32.totalorder %s21, 2
        // Predicated region
        $region63: #{discriminator_sngan_forward.9} parent=53 // pred_check
          %p960 = pneg %p959
        $region64: #{discriminator_sngan_forward.9} parent=53 // pred_check_branch
          %962 = sbr.rel (%p960) target = $region66
        $region65: #{discriminator_sngan_forward.9} parent=53 // pred_region
          %v963 = vld [vmem:[%s342] sm:$0xff]
          %v964 = vld [vmem:[%s342 + $0x8] sm:$0xff]
          %v965 = vld [vmem:[%s342 + $0x10] sm:$0xff]
          %v966 = vld [vmem:[%s342 + $0x18] sm:$0xff]
          %v967 = vld [vmem:[%s342 + $0x20] sm:$0xff]
          %v968 = vld [vmem:[%s342 + $0x28] sm:$0xff]
          %v969 = vld [vmem:[%s342 + $0x30] sm:$0xff]
          %v970 = vld [vmem:[%s342 + $0x38] sm:$0xff]
          %v971 = vld [vmem:[%s342 + $0x40] sm:$0xff]
          %v972 = vld [vmem:[%s342 + $0x48] sm:$0xff]
          %v973 = vld [vmem:[%s342 + $0x50] sm:$0xff]
          %v974 = vld [vmem:[%s342 + $0x58] sm:$0xff]
          %v975 = vld [vmem:[%s342 + $0x60] sm:$0xff]
          %v976 = vld [vmem:[%s342 + $0x68] sm:$0xff]
          %v977 = vld [vmem:[%s342 + $0x70] sm:$0xff]
          %v978 = vld [vmem:[%s342 + $0x78] sm:$0xff]
          %v979 = vld [vmem:[%s334] sm:$0x1]
          %v981 = vlaneseq
          %v982 = vshrl.u32 %v981, 7
          %v983 = vsub.s32 0, %v982
          %v984 = vrot.slane %v979, %v983
          %v986 = vadd.f32 %v963, %v984
          %v987 = vadd.f32 %v964, %v984
          %v988 = vadd.f32 %v965, %v984
          %v989 = vadd.f32 %v966, %v984
          %v990 = vadd.f32 %v967, %v984
          %v991 = vadd.f32 %v968, %v984
          %v992 = vadd.f32 %v969, %v984
          %v993 = vadd.f32 %v970, %v984
          %v994 = vadd.f32 %v971, %v984
          %v995 = vadd.f32 %v972, %v984
          %v996 = vadd.f32 %v973, %v984
          %v997 = vadd.f32 %v974, %v984
          %v998 = vadd.f32 %v975, %v984
          %v999 = vadd.f32 %v976, %v984
          %v1000 = vadd.f32 %v977, %v984
          %v1001 = vadd.f32 %v978, %v984
          %vm1002 = vcmp.ge.f32.partialorder %v986, 0.0
          %vm1003 = vcmp.ge.f32.partialorder %v987, 0.0
          %vm1004 = vcmp.ge.f32.partialorder %v988, 0.0
          %vm1005 = vcmp.ge.f32.partialorder %v989, 0.0
          %vm1006 = vcmp.ge.f32.partialorder %v990, 0.0
          %vm1007 = vcmp.ge.f32.partialorder %v991, 0.0
          %vm1008 = vcmp.ge.f32.partialorder %v992, 0.0
          %vm1009 = vcmp.ge.f32.partialorder %v993, 0.0
          %vm1010 = vcmp.ge.f32.partialorder %v994, 0.0
          %vm1011 = vcmp.ge.f32.partialorder %v995, 0.0
          %vm1012 = vcmp.ge.f32.partialorder %v996, 0.0
          %vm1013 = vcmp.ge.f32.partialorder %v997, 0.0
          %vm1014 = vcmp.ge.f32.partialorder %v998, 0.0
          %vm1015 = vcmp.ge.f32.partialorder %v999, 0.0
          %vm1016 = vcmp.ge.f32.partialorder %v1000, 0.0
          %vm1017 = vcmp.ge.f32.partialorder %v1001, 0.0
          %v1018 = vmul.f32 %v986, 0.1
          %v1019 = vmul.f32 %v987, 0.1
          %v1020 = vmul.f32 %v988, 0.1
          %v1021 = vmul.f32 %v989, 0.1
          %v1022 = vmul.f32 %v990, 0.1
          %v1023 = vmul.f32 %v991, 0.1
          %v1024 = vmul.f32 %v992, 0.1
          %v1025 = vmul.f32 %v993, 0.1
          %v1026 = vmul.f32 %v994, 0.1
          %v1027 = vmul.f32 %v995, 0.1
          %v1028 = vmul.f32 %v996, 0.1
          %v1029 = vmul.f32 %v997, 0.1
          %v1030 = vmul.f32 %v998, 0.1
          %v1031 = vmul.f32 %v999, 0.1
          %v1032 = vmul.f32 %v1000, 0.1
          %v1033 = vmul.f32 %v1001, 0.1
          %v1034 = vsel %vm1002, %v986, %v1018
          %v1035 = vsel %vm1003, %v987, %v1019
          %v1036 = vsel %vm1004, %v988, %v1020
          %v1037 = vsel %vm1005, %v989, %v1021
          %v1038 = vsel %vm1006, %v990, %v1022
          %v1039 = vsel %vm1007, %v991, %v1023
          %v1040 = vsel %vm1008, %v992, %v1024
          %v1041 = vsel %vm1009, %v993, %v1025
          %v1042 = vsel %vm1010, %v994, %v1026
          %v1043 = vsel %vm1011, %v995, %v1027
          %v1044 = vsel %vm1012, %v996, %v1028
          %v1045 = vsel %vm1013, %v997, %v1029
          %v1046 = vsel %vm1014, %v998, %v1030
          %v1047 = vsel %vm1015, %v999, %v1031
          %v1048 = vsel %vm1016, %v1000, %v1032
          %v1049 = vsel %vm1017, %v1001, %v1033
          %1050 = vst [vmem:[%s342] sm:$0xff] %v1034
          %1051 = vst [vmem:[%s342 + $0x8] sm:$0xff] %v1035
          %1052 = vst [vmem:[%s342 + $0x10] sm:$0xff] %v1036
          %1053 = vst [vmem:[%s342 + $0x18] sm:$0xff] %v1037
          %1054 = vst [vmem:[%s342 + $0x20] sm:$0xff] %v1038
          %1055 = vst [vmem:[%s342 + $0x28] sm:$0xff] %v1039
          %1056 = vst [vmem:[%s342 + $0x30] sm:$0xff] %v1040
          %1057 = vst [vmem:[%s342 + $0x38] sm:$0xff] %v1041
          %1058 = vst [vmem:[%s342 + $0x40] sm:$0xff] %v1042
          %1059 = vst [vmem:[%s342 + $0x48] sm:$0xff] %v1043
          %1060 = vst [vmem:[%s342 + $0x50] sm:$0xff] %v1044
          %1061 = vst [vmem:[%s342 + $0x58] sm:$0xff] %v1045
          %1062 = vst [vmem:[%s342 + $0x60] sm:$0xff] %v1046
          %1063 = vst [vmem:[%s342 + $0x68] sm:$0xff] %v1047
          %1064 = vst [vmem:[%s342 + $0x70] sm:$0xff] %v1048
          %1065 = vst [vmem:[%s342 + $0x78] sm:$0xff] %v1049
        $region66: #{discriminator_sngan_forward.9} parent=53 // pred_fallthru
          _
        %s1066 = smul.u32 16, %s19
        %p1067 = scmp.lt.s32.totalorder %s1066, 15
        %s1068 = scalar_select %p1067, %s1066, 15
        %p1069 = scmp.lt.s32.totalorder %s20, 0
        %s1070 = scalar_select %p1069, %s20, 0
        %s1071 = sadd.s32 %s1070, %s1068
        %s1072 = smul.addr %s1071, 8
        %s1073 = scalar_lea.vmem %s3, %s1072
        // Predicated region
        $region67: #{discriminator_sngan_forward.9} parent=53 // pred_check
          %p1074 = pneg %p135
        $region68: #{discriminator_sngan_forward.9} parent=53 // pred_check_branch
          %1076 = sbr.rel (%p1074) target = $region70
        $region69: #{discriminator_sngan_forward.9} parent=53 // pred_region
          %s1077 = smul.u32 16, %s19
        $region70: #{discriminator_sngan_forward.9} parent=53 // pred_fallthru
          _
        // Predicated region
        $region71: #{discriminator_sngan_forward.9} parent=53 // pred_check
          %p1078 = pneg %p135
        $region72: #{discriminator_sngan_forward.9} parent=53 // pred_check_branch
          %1080 = sbr.rel (%p1078) target = $region74
        $region73: #{discriminator_sngan_forward.9} parent=53 // pred_region
          %s1081 = smul.u32 16, %s19
          %p1082 = scmp.lt.s32.totalorder %s1081, 15
          %s1083 = scalar_select %p1082, %s1081, 15
          %p1084 = scmp.lt.s32.totalorder %s20, 0
          %s1085 = scalar_select %p1084, %s20, 0
          %s1086 = sadd.s32 %s1085, %s1083
          %s1087 = smul.addr %s1086, 8
          %s1088 = scalar_lea.vmem %s3, %s1087
        $region74: #{discriminator_sngan_forward.9} parent=53 // pred_fallthru
          _
      $region54: #{discriminator_sngan_forward.9} parent=5 // pred_fallthru
        _
      %p1089 = scmp.le.s32.totalorder 2, %s9
      // Predicated region
      $region75: #{discriminator_sngan_forward.9} parent=5 // pred_check
        %p1090 = pneg %p1089
      $region76: #{discriminator_sngan_forward.9} parent=5 // pred_check_branch
        %1092 = sbr.rel (%p1090) target = $region78
      $region77: #{discriminator_sngan_forward.9} parent=5 // pred_region
        %s1093 = ssub.s32 %s9, 2
      $region78: #{discriminator_sngan_forward.9} parent=5 // pred_fallthru
        _
    $region6: #{discriminator_sngan_forward.9} parent=1 // loop_footer
      %s13 = sadd.s32 1, %s9
    $region7: #{discriminator_sngan_forward.9} parent=1 // loop_footer_branch
      %8 = sbr.rel target = $region3
    $region8: #{discriminator_sngan_forward.9} parent=1 // loop_exit
      _

// kernel: discriminator_sngan_forward.10
$region0: #{discriminator_sngan_forward.10}
  #allocation0 [shape = 'u32[]', space=smem, size = 0x4, offset = 0x4, fixed_abs, tag = 'smem constant byte address 0x4 - core index']
  #allocation1 [shape = 'u32[144,128]{1,0:T(1,128)}', space=vmem, size = 0x12000, scoped, tag = 'internal scratch']
  %s0 = inlined_call_operand.vmem [shape: bf16[32,2048], index: 0, kind: input, shape index: {}]
  %s1 = inlined_call_operand.vmem [shape: bf16[2048,256], index: 1, kind: input, shape index: {}]
  %s2 = inlined_call_operand.vmem [shape: f32[1,256], index: 2, kind: input, shape index: {}]
  %s3 = inlined_call_operand.vmem [shape: f32[32,256], index: 3, kind: output, shape index: {}]
  %s4 = sld [smem:[#allocation0]]
  $region76: #{discriminator_sngan_forward.10} parent=0
    _
  %s6 = ssub.s32 1, %s4
  %s7 = scalar_select 0, %s6, %s4
  $region1: #{discriminator_sngan_forward.10} parent=0
    #allocation2 [shape = 'u8[65536]{0}', space=vmem, size = 0x10000, scoped, tag = 'input window, operand 0']
    loop: start=0, step=1, limit=6
    $region2: #{discriminator_sngan_forward.10} parent=1 // loop_pre_header
      _
    $region3: #{discriminator_sngan_forward.10} parent=1 // loop_header
      %s9 = sphi 0, %s13
      %p10 = scmp.ge.s32.totalorder %s9, 6
      %s16 = sphi 0, %s35
      %s17 = sphi 0, %s31
      %s18 = sphi 0, %s27
      %s19 = sphi 0, %s16
      %s20 = sphi 0, %s17
      %s21 = sphi 0, %s18
      %s22 = sphi 0, %s19
      %s23 = sphi 0, %s20
      %s24 = sphi 0, %s21
      %s40 = sphi 0, %s42
      %s43 = sphi 0, %s40
      %s44 = sphi 0, %s43
      %s60 = sphi 0, %s44
      %s68 = sphi 0, %s70
      %s71 = sphi 0, %s68
      %s72 = sphi 0, %s71
      %s88 = sphi 0, %s72
      %s94 = sphi 0, %s96
      %s97 = sphi 0, %s94
      %s98 = sphi 0, %s97
      %s114 = sphi 0, %s98
      %s122 = sphi 0, %s124
      %s125 = sphi 0, %s122
      %s126 = sphi 0, %s125
      %s142 = sphi 0, %s126
    $region4: #{discriminator_sngan_forward.10} parent=1 // loop_header_branch
      %12 = sbr.rel (%p10) target = $region8
    $region5: #{discriminator_sngan_forward.10} parent=1 // loop_body
      %s14 = ssub.s32 %s9, 1
      %s15 = ssub.s32 %s9, 2
      %s25 = sadd.s32 1, %s18
      %p26 = scmp.ge.s32.totalorder %s25, 4
      %s27 = scalar_select %p26, 0, %s25
      %s28 = sadd.s32 1, %s17
      %s29 = scalar_select %p26, %s28, %s17
      %p30 = scmp.ge.s32.totalorder %s29, 1
      %s31 = scalar_select %p30, 0, %s29
      %s32 = sadd.s32 1, %s16
      %s33 = scalar_select %p30, %s32, %s16
      %p34 = scmp.ge.s32.totalorder %s33, 1
      %s35 = scalar_select %p34, 0, %s33
      %s36 = ssub.s32 %s16, %s35
      %s37 = ssub.s32 %s18, %s27
      %s38 = sor.u32 %s36, %s37
      %p39 = scmp.eq.s32.totalorder %s38, 0
      %s41 = sadd.s32 %s40, 1
      %s42 = scalar_select %p39, %s40, %s41
      %p45 = pneg %p39
      %p46 = scmp.eq.s32.totalorder %s9, 3
      %p47 = por %p45, %p46
      %p48 = scmp.ne.s32.totalorder %s40, %s43
      %p49 = scmp.eq.s32.totalorder %s9, 0
      %p50 = por %p48, %p49
      %p51 = scmp.ne.s32.totalorder %s40, %s43
      %p52 = scmp.eq.s32.totalorder %s14, 3
      %p53 = por %p51, %p52
      %p54 = scmp.ne.s32.totalorder %s43, %s44
      %p55 = scmp.eq.s32.totalorder %s14, 0
      %p56 = por %p54, %p55
      %p57 = scmp.ne.s32.totalorder %s43, %s44
      %p58 = scmp.eq.s32.totalorder %s15, 3
      %p59 = por %p57, %p58
      %p61 = scmp.ne.s32.totalorder %s44, %s60
      %p62 = scmp.eq.s32.totalorder %s15, 0
      %p63 = por %p61, %p62
      %s64 = ssub.s32 %s18, %s27
      %s65 = ssub.s32 %s17, %s31
      %s66 = sor.u32 %s64, %s65
      %p67 = scmp.eq.s32.totalorder %s66, 0
      %s69 = sadd.s32 %s68, 1
      %s70 = scalar_select %p67, %s68, %s69
      %p73 = pneg %p67
      %p74 = scmp.eq.s32.totalorder %s9, 3
      %p75 = por %p73, %p74
      %p76 = scmp.ne.s32.totalorder %s68, %s71
      %p77 = scmp.eq.s32.totalorder %s9, 0
      %p78 = por %p76, %p77
      %p79 = scmp.ne.s32.totalorder %s68, %s71
      %p80 = scmp.eq.s32.totalorder %s14, 3
      %p81 = por %p79, %p80
      %p82 = scmp.ne.s32.totalorder %s71, %s72
      %p83 = scmp.eq.s32.totalorder %s14, 0
      %p84 = por %p82, %p83
      %p85 = scmp.ne.s32.totalorder %s71, %s72
      %p86 = scmp.eq.s32.totalorder %s15, 3
      %p87 = por %p85, %p86
      %p89 = scmp.ne.s32.totalorder %s72, %s88
      %p90 = scmp.eq.s32.totalorder %s15, 0
      %p91 = por %p89, %p90
      %s92 = ssub.s32 %s17, %s31
      %p93 = scmp.eq.s32.totalorder %s92, 0
      %s95 = sadd.s32 %s94, 1
      %s96 = scalar_select %p93, %s94, %s95
      %p99 = pneg %p93
      %p100 = scmp.eq.s32.totalorder %s9, 3
      %p101 = por %p99, %p100
      %p102 = scmp.ne.s32.totalorder %s94, %s97
      %p103 = scmp.eq.s32.totalorder %s9, 0
      %p104 = por %p102, %p103
      %p105 = scmp.ne.s32.totalorder %s94, %s97
      %p106 = scmp.eq.s32.totalorder %s14, 3
      %p107 = por %p105, %p106
      %p108 = scmp.ne.s32.totalorder %s97, %s98
      %p109 = scmp.eq.s32.totalorder %s14, 0
      %p110 = por %p108, %p109
      %p111 = scmp.ne.s32.totalorder %s97, %s98
      %p112 = scmp.eq.s32.totalorder %s15, 3
      %p113 = por %p111, %p112
      %p115 = scmp.ne.s32.totalorder %s98, %s114
      %p116 = scmp.eq.s32.totalorder %s15, 0
      %p117 = por %p115, %p116
      %s118 = ssub.s32 %s16, %s35
      %s119 = ssub.s32 %s17, %s31
      %s120 = sor.u32 %s118, %s119
      %p121 = scmp.eq.s32.totalorder %s120, 0
      %s123 = sadd.s32 %s122, 1
      %s124 = scalar_select %p121, %s122, %s123
      %p127 = pneg %p121
      %p128 = scmp.eq.s32.totalorder %s9, 3
      %p129 = por %p127, %p128
      %p130 = scmp.ne.s32.totalorder %s122, %s125
      %p131 = scmp.eq.s32.totalorder %s9, 0
      %p132 = por %p130, %p131
      %p133 = scmp.ne.s32.totalorder %s122, %s125
      %p134 = scmp.eq.s32.totalorder %s14, 3
      %p135 = por %p133, %p134
      %p136 = scmp.ne.s32.totalorder %s125, %s126
      %p137 = scmp.eq.s32.totalorder %s14, 0
      %p138 = por %p136, %p137
      %p139 = scmp.ne.s32.totalorder %s125, %s126
      %p140 = scmp.eq.s32.totalorder %s15, 3
      %p141 = por %p139, %p140
      %p143 = scmp.ne.s32.totalorder %s126, %s142
      %p144 = scmp.eq.s32.totalorder %s15, 0
      %p145 = por %p143, %p144
      %p146 = scmp.le.s32.totalorder 1, %s9
      %p147 = scmp.lt.s32.totalorder %s9, 5
      %p148 = pnand %p146, %p147
      %p149 = pneg %p148
      // Predicated region
      $region9: #{discriminator_sngan_forward.10} parent=5 // pred_check
        _
      $region10: #{discriminator_sngan_forward.10} parent=5 // pred_check_branch
        %151 = sbr.rel (%p148) target = $region12
      $region11: #{discriminator_sngan_forward.10} parent=5 // pred_region
        %s152 = ssub.s32 %s9, 1
        // Predicated region
        $region13: #{discriminator_sngan_forward.10} parent=11 // pred_check
          %p153 = pneg %p110
        $region14: #{discriminator_sngan_forward.10} parent=11 // pred_check_branch
          %155 = sbr.rel (%p153) target = $region16
        $region15: #{discriminator_sngan_forward.10} parent=11 // pred_region
          %s156 = smul.u32 2, %s20
          %p157 = scmp.lt.s32.totalorder %s156, 1
          %s158 = scalar_select %p157, %s156, 1
          %s159 = scalar_lea.vmem %s2, %s158
          %s160 = smul.u32 2, %s20
        $region16: #{discriminator_sngan_forward.10} parent=11 // pred_fallthru
          _
      $region12: #{discriminator_sngan_forward.10} parent=5 // pred_fallthru
        _
      %p161 = scmp.lt.s32.totalorder %s9, 4
      // Predicated region
      $region17: #{discriminator_sngan_forward.10} parent=5 // pred_check
        %p162 = pneg %p161
      $region18: #{discriminator_sngan_forward.10} parent=5 // pred_check_branch
        %164 = sbr.rel (%p162) target = $region20
      $region19: #{discriminator_sngan_forward.10} parent=5 // pred_region
        // Predicated region
        $region21: #{discriminator_sngan_forward.10} parent=19 // pred_check
          %p165 = pneg %p50
        $region22: #{discriminator_sngan_forward.10} parent=19 // pred_check_branch
          %167 = sbr.rel (%p165) target = $region24
        $region23: #{discriminator_sngan_forward.10} parent=19 // pred_region
          %s168 = sand.u32 %s40, 1
          %s169 = sand.u32 %s40, 1
          %s170 = smul.addr %s169, 64
          %s171 = scalar_lea.vmem [#allocation2], %s170
          %s172 = smul.u32 4, %s16
          %s173 = smul.u32 4, %s18
          %s174 = smul.addr %s172, 16
          %s175 = sadd.s32 %s173, %s174
          %s176 = smul.addr %s175, 4
          %s177 = scalar_lea.vmem %s0, %s176
          // Predicated region
          $region25: #{discriminator_sngan_forward.10} parent=23 // pred_check
            _
          $region26: #{discriminator_sngan_forward.10} parent=23 // pred_check_branch
            %179 = sbr.rel (0) target = $region28
          $region27: #{discriminator_sngan_forward.10} parent=23 // pred_region
            // Predicated region
            $region29: #{discriminator_sngan_forward.10} parent=27 // pred_check
              _
            $region30: #{discriminator_sngan_forward.10} parent=27 // pred_check_branch
              %181 = sbr.rel (0) target = $region32
            $region31: #{discriminator_sngan_forward.10} parent=27 // pred_region
              loop: start=0, step=1, limit=1
              $region33: #{discriminator_sngan_forward.10} parent=31 // loop_pre_header
                _
              $region34: #{discriminator_sngan_forward.10} parent=31 // loop_header
                %s183 = sphi 0, %s187
                %p184 = scmp.ge.s32.totalorder %s183, 1
                %s188 = sphi %s177, %s177
                %s189 = sphi %s171, %s171
              $region35: #{discriminator_sngan_forward.10} parent=31 // loop_header_branch
                %186 = sbr.rel (%p184) target = $region39
              $region36: #{discriminator_sngan_forward.10} parent=31 // loop_body
                %v190 = vld [vmem:[%s188] sm:$0xff]
                %191 = vst [vmem:[%s189] sm:$0xff] %v190
                %v192 = vld [vmem:[%s188 + $0x8] sm:$0xff]
                %193 = vst [vmem:[%s189 + $0x8] sm:$0xff] %v192
                %v194 = vld [vmem:[%s188 + $0x40] sm:$0xff]
                %195 = vst [vmem:[%s189 + $0x10] sm:$0xff] %v194
                %v196 = vld [vmem:[%s188 + $0x48] sm:$0xff]
                %197 = vst [vmem:[%s189 + $0x18] sm:$0xff] %v196
                %v198 = vld [vmem:[%s188 + $0x80] sm:$0xff]
                %199 = vst [vmem:[%s189 + $0x20] sm:$0xff] %v198
                %v200 = vld [vmem:[%s188 + $0x88] sm:$0xff]
                %201 = vst [vmem:[%s189 + $0x28] sm:$0xff] %v200
                %v202 = vld [vmem:[%s188 + $0xc0] sm:$0xff]
                %203 = vst [vmem:[%s189 + $0x30] sm:$0xff] %v202
                %v204 = vld [vmem:[%s188 + $0xc8] sm:$0xff]
                %205 = vst [vmem:[%s189 + $0x38] sm:$0xff] %v204
              $region37: #{discriminator_sngan_forward.10} parent=31 // loop_footer
                %s187 = sadd.s32 1, %s183
              $region38: #{discriminator_sngan_forward.10} parent=31 // loop_footer_branch
                %182 = sbr.rel target = $region34
              $region39: #{discriminator_sngan_forward.10} parent=31 // loop_exit
                _
            $region32: #{discriminator_sngan_forward.10} parent=27 // pred_fallthru
              _
            // Predicated region
            $region40: #{discriminator_sngan_forward.10} parent=27 // pred_check
              _
            $region41: #{discriminator_sngan_forward.10} parent=27 // pred_check_branch
              %207 = sbr.rel target = $region43
            $region42: #{discriminator_sngan_forward.10} parent=27 // pred_region
              _
            $region43: #{discriminator_sngan_forward.10} parent=27 // pred_fallthru
              _
          $region28: #{discriminator_sngan_forward.10} parent=23 // pred_fallthru
            _
          %208 = vnop
        $region24: #{discriminator_sngan_forward.10} parent=19 // pred_fallthru
          _
        // Predicated region
        $region44: #{discriminator_sngan_forward.10} parent=19 // pred_check
          %p209 = pneg %p78
        $region45: #{discriminator_sngan_forward.10} parent=19 // pred_check_branch
          %211 = sbr.rel (%p209) target = $region47
        $region46: #{discriminator_sngan_forward.10} parent=19 // pred_region
          %s212 = smul.u32 64, %s18
          %s213 = smul.u32 2, %s17
          %p214 = scmp.lt.s32.totalorder %s212, 255
          %s215 = scalar_select %p214, %s212, 255
          %p216 = scmp.lt.s32.totalorder %s213, 1
          %s217 = scalar_select %p216, %s213, 1
          %s218 = smul.addr %s215, 2
          %s219 = sadd.s32 %s217, %s218
          %s220 = smul.addr %s219, 4
          %s221 = scalar_lea.vmem %s1, %s220
          %s222 = smul.u32 64, %s18
          %s223 = smul.u32 2, %s17
        $region47: #{discriminator_sngan_forward.10} parent=19 // pred_fallthru
          _
      $region20: #{discriminator_sngan_forward.10} parent=5 // pred_fallthru
        _
      %p224 = scmp.le.s32.totalorder 1, %s9
      %p225 = scmp.lt.s32.totalorder %s9, 5
      %p226 = pnand %p224, %p225
      %p227 = pneg %p226
      // Predicated region
      $region48: #{discriminator_sngan_forward.10} parent=5 // pred_check
        _
      $region49: #{discriminator_sngan_forward.10} parent=5 // pred_check_branch
        %229 = sbr.rel (%p226) target = $region51
      $region50: #{discriminator_sngan_forward.10} parent=5 // pred_region
        %s230 = ssub.s32 %s9, 1
        %s231 = sand.u32 %s43, 1
        %s232 = sand.u32 %s43, 1
        %s233 = smul.addr %s232, 64
        %s234 = scalar_lea.vmem [#allocation2], %s233
        // Predicated region
        $region52: #{discriminator_sngan_forward.10} parent=50 // pred_check
          %p235 = pneg %p56
        $region53: #{discriminator_sngan_forward.10} parent=50 // pred_check_branch
          %237 = sbr.rel (%p235) target = $region55
        $region54: #{discriminator_sngan_forward.10} parent=50 // pred_region
          _
        $region55: #{discriminator_sngan_forward.10} parent=50 // pred_fallthru
          _
        %s238 = sand.u32 %s43, 1
        %s239 = sand.u32 %s43, 1
        %s240 = smul.addr %s239, 64
        %s241 = scalar_lea.vmem [#allocation2], %s240
        %p242 = pneg %p56
        %p243 = pneg %p53
        %s244 = smul.u32 64, %s21
        %s245 = smul.u32 2, %s20
        %p246 = scmp.lt.s32.totalorder %s244, 255
        %s247 = scalar_select %p246, %s244, 255
        %p248 = scmp.lt.s32.totalorder %s245, 1
        %s249 = scalar_select %p248, %s245, 1
        %s250 = smul.addr %s247, 2
        %s251 = sadd.s32 %s249, %s250
        %s252 = smul.addr %s251, 4
        %s253 = scalar_lea.vmem %s1, %s252
        %p254 = pneg %p84
        %p255 = pneg %p81
        %s256 = smul.u32 2, %s20
        %p257 = scmp.lt.s32.totalorder %s256, 1
        %s258 = scalar_select %p257, %s256, 1
        %s259 = scalar_lea.vmem %s2, %s258
        %p260 = pneg %p110
        %p261 = pneg %p107
        %p262 = pneg %p138
        %p263 = pneg %p135
        %s264 = smul.u32 4, %s19
        %s265 = smul.u32 2, %s20
        %p266 = scmp.lt.s32.totalorder %s264, 3
        %s267 = scalar_select %p266, %s264, 3
        %p268 = scmp.lt.s32.totalorder %s265, 1
        %s269 = scalar_select %p268, %s265, 1
        %s270 = smul.addr %s267, 2
        %s271 = sadd.s32 %s269, %s270
        %s272 = smul.addr %s271, 8
        %s273 = scalar_lea.vmem %s3, %s272
        %s274 = smul.u32 4, %s19
        %s275 = smul.u32 4, %s21
        %s276 = smul.u32 64, %s21
        %s277 = smul.u32 2, %s20
        %p278 = scmp.lt.s32.totalorder %s276, 255
        %s279 = scalar_select %p278, %s276, 255
        %p280 = scmp.lt.s32.totalorder %s277, 1
        %s281 = scalar_select %p280, %s277, 1
        %s282 = smul.addr %s279, 2
        %s283 = sadd.s32 %s281, %s282
        %s284 = smul.addr %s283, 4
        %s285 = scalar_lea.vmem %s1, %s284
        %s286 = smul.u32 64, %s21
        %s287 = smul.u32 2, %s20
        %s288 = smul.u32 2, %s20
        %p289 = scmp.lt.s32.totalorder %s288, 1
        %s290 = scalar_select %p289, %s288, 1
        %s291 = scalar_lea.vmem %s2, %s290
        %s292 = smul.u32 2, %s20
        %s293 = smul.u32 4, %s19
        %s294 = smul.u32 2, %s20
        %p295 = scmp.lt.s32.totalorder %s293, 3
        %s296 = scalar_select %p295, %s293, 3
        %p297 = scmp.lt.s32.totalorder %s294, 1
        %s298 = scalar_select %p297, %s294, 1
        %s299 = smul.addr %s296, 2
        %s300 = sadd.s32 %s298, %s299
        %s301 = smul.addr %s300, 8
        %s302 = scalar_lea.vmem %s3, %s301
        %s303 = smul.u32 4, %s19
        %s304 = smul.u32 2, %s20
        %p305 = scmp.eq.s32.totalorder %s21, 0
        // Predicated region
        $region56: #{discriminator_sngan_forward.10} parent=50 // pred_check
          %p306 = pneg %p305
        $region57: #{discriminator_sngan_forward.10} parent=50 // pred_check_branch
          %308 = sbr.rel (%p306) target = $region59
        $region58: #{discriminator_sngan_forward.10} parent=50 // pred_region
          %309 = vst [vmem:[%s302] sm:$0xff] 0.0
          %310 = vst [vmem:[%s302 + $0x8] sm:$0xff] 0.0
          %311 = vst [vmem:[%s302 + $0x10] sm:$0xff] 0.0
          %312 = vst [vmem:[%s302 + $0x18] sm:$0xff] 0.0
          %313 = vst [vmem:[%s302 + $0x20] sm:$0xff] 0.0
          %314 = vst [vmem:[%s302 + $0x28] sm:$0xff] 0.0
          %315 = vst [vmem:[%s302 + $0x30] sm:$0xff] 0.0
          %316 = vst [vmem:[%s302 + $0x38] sm:$0xff] 0.0
        $region59: #{discriminator_sngan_forward.10} parent=50 // pred_fallthru
          _
        %v317 = vld [vmem:[%s302] sm:$0xff]
        %v318 = vld [vmem:[%s302 + $0x8] sm:$0xff]
        %v319 = vld [vmem:[%s302 + $0x10] sm:$0xff]
        %v320 = vld [vmem:[%s302 + $0x18] sm:$0xff]
        %v321 = vld [vmem:[%s302 + $0x20] sm:$0xff]
        %v322 = vld [vmem:[%s302 + $0x28] sm:$0xff]
        %v323 = vld [vmem:[%s302 + $0x30] sm:$0xff]
        %v324 = vld [vmem:[%s302 + $0x38] sm:$0xff]
        %v325 = vld [vmem:[%s234] sm:$0xff]
        %v326 = vld [vmem:[%s234 + $0x8] sm:$0xff]
        %v327 = vld [vmem:[%s234 + $0x10] sm:$0xff]
        %v328 = vld [vmem:[%s234 + $0x18] sm:$0xff]
        %v329 = vld [vmem:[%s234 + $0x20] sm:$0xff]
        %v330 = vld [vmem:[%s234 + $0x28] sm:$0xff]
        %v331 = vld [vmem:[%s234 + $0x30] sm:$0xff]
        %v332 = vld [vmem:[%s234 + $0x38] sm:$0xff]
        %v333 = vld [vmem:[%s285] sm:$0xff]
        %v334 = vld [vmem:[%s285 + $0x8] sm:$0xff]
        %v335 = vld [vmem:[%s285 + $0x10] sm:$0xff]
        %v336 = vld [vmem:[%s285 + $0x18] sm:$0xff]
        %v337 = vld [vmem:[%s285 + $0x20] sm:$0xff]
        %v338 = vld [vmem:[%s285 + $0x28] sm:$0xff]
        %v339 = vld [vmem:[%s285 + $0x30] sm:$0xff]
        %v340 = vld [vmem:[%s285 + $0x38] sm:$0xff]
        %v341 = vld [vmem:[%s285 + $0x40] sm:$0xff]
        %v342 = vld [vmem:[%s285 + $0x48] sm:$0xff]
        %v343 = vld [vmem:[%s285 + $0x50] sm:$0xff]
        %v344 = vld [vmem:[%s285 + $0x58] sm:$0xff]
        %v345 = vld [vmem:[%s285 + $0x60] sm:$0xff]
        %v346 = vld [vmem:[%s285 + $0x68] sm:$0xff]
        %v347 = vld [vmem:[%s285 + $0x70] sm:$0xff]
        %v348 = vld [vmem:[%s285 + $0x78] sm:$0xff]
        %v349 = vld [vmem:[%s285 + $0x80] sm:$0xff]
        %v350 = vld [vmem:[%s285 + $0x88] sm:$0xff]
        %v351 = vld [vmem:[%s285 + $0x90] sm:$0xff]
        %v352 = vld [vmem:[%s285 + $0x98] sm:$0xff]
        %v353 = vld [vmem:[%s285 + $0xa0] sm:$0xff]
        %v354 = vld [vmem:[%s285 + $0xa8] sm:$0xff]
        %v355 = vld [vmem:[%s285 + $0xb0] sm:$0xff]
        %v356 = vld [vmem:[%s285 + $0xb8] sm:$0xff]
        %v357 = vld [vmem:[%s285 + $0xc0] sm:$0xff]
        %v358 = vld [vmem:[%s285 + $0xc8] sm:$0xff]
        %v359 = vld [vmem:[%s285 + $0xd0] sm:$0xff]
        %v360 = vld [vmem:[%s285 + $0xd8] sm:$0xff]
        %v361 = vld [vmem:[%s285 + $0xe0] sm:$0xff]
        %v362 = vld [vmem:[%s285 + $0xe8] sm:$0xff]
        %v363 = vld [vmem:[%s285 + $0xf0] sm:$0xff]
        %v364 = vld [vmem:[%s285 + $0xf8] sm:$0xff]
        %v365 = vld [vmem:[%s285 + $0x100] sm:$0xff]
        %v366 = vld [vmem:[%s285 + $0x108] sm:$0xff]
        %v367 = vld [vmem:[%s285 + $0x110] sm:$0xff]
        %v368 = vld [vmem:[%s285 + $0x118] sm:$0xff]
        %v369 = vld [vmem:[%s285 + $0x120] sm:$0xff]
        %v370 = vld [vmem:[%s285 + $0x128] sm:$0xff]
        %v371 = vld [vmem:[%s285 + $0x130] sm:$0xff]
        %v372 = vld [vmem:[%s285 + $0x138] sm:$0xff]
        %v373 = vld [vmem:[%s285 + $0x140] sm:$0xff]
        %v374 = vld [vmem:[%s285 + $0x148] sm:$0xff]
        %v375 = vld [vmem:[%s285 + $0x150] sm:$0xff]
        %v376 = vld [vmem:[%s285 + $0x158] sm:$0xff]
        %v377 = vld [vmem:[%s285 + $0x160] sm:$0xff]
        %v378 = vld [vmem:[%s285 + $0x168] sm:$0xff]
        %v379 = vld [vmem:[%s285 + $0x170] sm:$0xff]
        %v380 = vld [vmem:[%s285 + $0x178] sm:$0xff]
        %v381 = vld [vmem:[%s285 + $0x180] sm:$0xff]
        %v382 = vld [vmem:[%s285 + $0x188] sm:$0xff]
        %v383 = vld [vmem:[%s285 + $0x190] sm:$0xff]
        %v384 = vld [vmem:[%s285 + $0x198] sm:$0xff]
        %v385 = vld [vmem:[%s285 + $0x1a0] sm:$0xff]
        %v386 = vld [vmem:[%s285 + $0x1a8] sm:$0xff]
        %v387 = vld [vmem:[%s285 + $0x1b0] sm:$0xff]
        %v388 = vld [vmem:[%s285 + $0x1b8] sm:$0xff]
        %v389 = vld [vmem:[%s285 + $0x1c0] sm:$0xff]
        %v390 = vld [vmem:[%s285 + $0x1c8] sm:$0xff]
        %v391 = vld [vmem:[%s285 + $0x1d0] sm:$0xff]
        %v392 = vld [vmem:[%s285 + $0x1d8] sm:$0xff]
        %v393 = vld [vmem:[%s285 + $0x1e0] sm:$0xff]
        %v394 = vld [vmem:[%s285 + $0x1e8] sm:$0xff]
        %v395 = vld [vmem:[%s285 + $0x1f0] sm:$0xff]
        %v396 = vld [vmem:[%s285 + $0x1f8] sm:$0xff]
        %v405 = vunpack.c.l.b16 %v325
        %v406 = vunpack.c.h.b16 %v325
        %v407 = vunpack.c.l.b16 %v326
        %v408 = vunpack.c.h.b16 %v326
        %v409 = vunpack.c.l.b16 %v327
        %v410 = vunpack.c.h.b16 %v327
        %v411 = vunpack.c.l.b16 %v328
        %v412 = vunpack.c.h.b16 %v328
        %v413 = vunpack.c.l.b16 %v329
        %v414 = vunpack.c.h.b16 %v329
        %v415 = vunpack.c.l.b16 %v330
        %v416 = vunpack.c.h.b16 %v330
        %v417 = vunpack.c.l.b16 %v331
        %v418 = vunpack.c.h.b16 %v331
        %v419 = vunpack.c.l.b16 %v332
        %v420 = vunpack.c.h.b16 %v332
        %v421 = vpack.c.b16 %v409, %v405
        %v422 = vpack.c.b16 %v410, %v406
        %v423 = vpack.c.b16 %v411, %v407
        %v424 = vpack.c.b16 %v412, %v408
        %v425 = vpack.c.b16 %v417, %v413
        %v426 = vpack.c.b16 %v418, %v414
        %v427 = vpack.c.b16 %v419, %v415
        %v428 = vpack.c.b16 %v420, %v416
        %v501 = vunpack.c.l.b16 %v333
        %v502 = vunpack.c.h.b16 %v333
        %v503 = vunpack.c.l.b16 %v334
        %v504 = vunpack.c.h.b16 %v334
        %v505 = vunpack.c.l.b16 %v335
        %v506 = vunpack.c.h.b16 %v335
        %v507 = vunpack.c.l.b16 %v336
        %v508 = vunpack.c.h.b16 %v336
        %v509 = vunpack.c.l.b16 %v337
        %v510 = vunpack.c.h.b16 %v337
        %v511 = vunpack.c.l.b16 %v338
        %v512 = vunpack.c.h.b16 %v338
        %v513 = vunpack.c.l.b16 %v339
        %v514 = vunpack.c.h.b16 %v339
        %v515 = vunpack.c.l.b16 %v340
        %v516 = vunpack.c.h.b16 %v340
        %v517 = vunpack.c.l.b16 %v341
        %v518 = vunpack.c.h.b16 %v341
        %v519 = vunpack.c.l.b16 %v342
        %v520 = vunpack.c.h.b16 %v342
        %v521 = vunpack.c.l.b16 %v343
        %v522 = vunpack.c.h.b16 %v343
        %v523 = vunpack.c.l.b16 %v344
        %v524 = vunpack.c.h.b16 %v344
        %v525 = vunpack.c.l.b16 %v345
        %v526 = vunpack.c.h.b16 %v345
        %v527 = vunpack.c.l.b16 %v346
        %v528 = vunpack.c.h.b16 %v346
        %v529 = vunpack.c.l.b16 %v347
        %v530 = vunpack.c.h.b16 %v347
        %v531 = vunpack.c.l.b16 %v348
        %v532 = vunpack.c.h.b16 %v348
        %v533 = vunpack.c.l.b16 %v349
        %v534 = vunpack.c.h.b16 %v349
        %v535 = vunpack.c.l.b16 %v350
        %v536 = vunpack.c.h.b16 %v350
        %v537 = vunpack.c.l.b16 %v351
        %v538 = vunpack.c.h.b16 %v351
        %v539 = vunpack.c.l.b16 %v352
        %v540 = vunpack.c.h.b16 %v352
        %v541 = vunpack.c.l.b16 %v353
        %v542 = vunpack.c.h.b16 %v353
        %v543 = vunpack.c.l.b16 %v354
        %v544 = vunpack.c.h.b16 %v354
        %v545 = vunpack.c.l.b16 %v355
        %v546 = vunpack.c.h.b16 %v355
        %v547 = vunpack.c.l.b16 %v356
        %v548 = vunpack.c.h.b16 %v356
        %v549 = vunpack.c.l.b16 %v357
        %v550 = vunpack.c.h.b16 %v357
        %v551 = vunpack.c.l.b16 %v358
        %v552 = vunpack.c.h.b16 %v358
        %v553 = vunpack.c.l.b16 %v359
        %v554 = vunpack.c.h.b16 %v359
        %v555 = vunpack.c.l.b16 %v360
        %v556 = vunpack.c.h.b16 %v360
        %v557 = vunpack.c.l.b16 %v361
        %v558 = vunpack.c.h.b16 %v361
        %v559 = vunpack.c.l.b16 %v362
        %v560 = vunpack.c.h.b16 %v362
        %v561 = vunpack.c.l.b16 %v363
        %v562 = vunpack.c.h.b16 %v363
        %v563 = vunpack.c.l.b16 %v364
        %v564 = vunpack.c.h.b16 %v364
        %v565 = vunpack.c.l.b16 %v365
        %v566 = vunpack.c.h.b16 %v365
        %v567 = vunpack.c.l.b16 %v366
        %v568 = vunpack.c.h.b16 %v366
        %v569 = vunpack.c.l.b16 %v367
        %v570 = vunpack.c.h.b16 %v367
        %v571 = vunpack.c.l.b16 %v368
        %v572 = vunpack.c.h.b16 %v368
        %v573 = vunpack.c.l.b16 %v369
        %v574 = vunpack.c.h.b16 %v369
        %v575 = vunpack.c.l.b16 %v370
        %v576 = vunpack.c.h.b16 %v370
        %v577 = vunpack.c.l.b16 %v371
        %v578 = vunpack.c.h.b16 %v371
        %v579 = vunpack.c.l.b16 %v372
        %v580 = vunpack.c.h.b16 %v372
        %v581 = vunpack.c.l.b16 %v373
        %v582 = vunpack.c.h.b16 %v373
        %v583 = vunpack.c.l.b16 %v374
        %v584 = vunpack.c.h.b16 %v374
        %v585 = vunpack.c.l.b16 %v375
        %v586 = vunpack.c.h.b16 %v375
        %v587 = vunpack.c.l.b16 %v376
        %v588 = vunpack.c.h.b16 %v376
        %v589 = vunpack.c.l.b16 %v377
        %v590 = vunpack.c.h.b16 %v377
        %v591 = vunpack.c.l.b16 %v378
        %v592 = vunpack.c.h.b16 %v378
        %v593 = vunpack.c.l.b16 %v379
        %v594 = vunpack.c.h.b16 %v379
        %v595 = vunpack.c.l.b16 %v380
        %v596 = vunpack.c.h.b16 %v380
        %v597 = vunpack.c.l.b16 %v381
        %v598 = vunpack.c.h.b16 %v381
        %v599 = vunpack.c.l.b16 %v382
        %v600 = vunpack.c.h.b16 %v382
        %v601 = vunpack.c.l.b16 %v383
        %v602 = vunpack.c.h.b16 %v383
        %v603 = vunpack.c.l.b16 %v384
        %v604 = vunpack.c.h.b16 %v384
        %v605 = vunpack.c.l.b16 %v385
        %v606 = vunpack.c.h.b16 %v385
        %v607 = vunpack.c.l.b16 %v386
        %v608 = vunpack.c.h.b16 %v386
        %v609 = vunpack.c.l.b16 %v387
        %v610 = vunpack.c.h.b16 %v387
        %v611 = vunpack.c.l.b16 %v388
        %v612 = vunpack.c.h.b16 %v388
        %v613 = vunpack.c.l.b16 %v389
        %v614 = vunpack.c.h.b16 %v389
        %v615 = vunpack.c.l.b16 %v390
        %v616 = vunpack.c.h.b16 %v390
        %v617 = vunpack.c.l.b16 %v391
        %v618 = vunpack.c.h.b16 %v391
        %v619 = vunpack.c.l.b16 %v392
        %v620 = vunpack.c.h.b16 %v392
        %v621 = vunpack.c.l.b16 %v393
        %v622 = vunpack.c.h.b16 %v393
        %v623 = vunpack.c.l.b16 %v394
        %v624 = vunpack.c.h.b16 %v394
        %v625 = vunpack.c.l.b16 %v395
        %v626 = vunpack.c.h.b16 %v395
        %v627 = vunpack.c.l.b16 %v396
        %v628 = vunpack.c.h.b16 %v396
        %v629 = vpack.c.b16 %v503, %v501
        %v630 = vpack.c.b16 %v504, %v502
        %v631 = vpack.c.b16 %v507, %v505
        %v632 = vpack.c.b16 %v508, %v506
        %v633 = vpack.c.b16 %v511, %v509
        %v634 = vpack.c.b16 %v512, %v510
        %v635 = vpack.c.b16 %v515, %v513
        %v636 = vpack.c.b16 %v516, %v514
        %v637 = vpack.c.b16 %v519, %v517
        %v638 = vpack.c.b16 %v520, %v518
        %v639 = vpack.c.b16 %v523, %v521
        %v640 = vpack.c.b16 %v524, %v522
        %v641 = vpack.c.b16 %v527, %v525
        %v642 = vpack.c.b16 %v528, %v526
        %v643 = vpack.c.b16 %v531, %v529
        %v644 = vpack.c.b16 %v532, %v530
        %v645 = vpack.c.b16 %v535, %v533
        %v646 = vpack.c.b16 %v536, %v534
        %v647 = vpack.c.b16 %v539, %v537
        %v648 = vpack.c.b16 %v540, %v538
        %v649 = vpack.c.b16 %v543, %v541
        %v650 = vpack.c.b16 %v544, %v542
        %v651 = vpack.c.b16 %v547, %v545
        %v652 = vpack.c.b16 %v548, %v546
        %v653 = vpack.c.b16 %v551, %v549
        %v654 = vpack.c.b16 %v552, %v550
        %v655 = vpack.c.b16 %v555, %v553
        %v656 = vpack.c.b16 %v556, %v554
        %v657 = vpack.c.b16 %v559, %v557
        %v658 = vpack.c.b16 %v560, %v558
        %v659 = vpack.c.b16 %v563, %v561
        %v660 = vpack.c.b16 %v564, %v562
        %v661 = vpack.c.b16 %v567, %v565
        %v662 = vpack.c.b16 %v568, %v566
        %v663 = vpack.c.b16 %v571, %v569
        %v664 = vpack.c.b16 %v572, %v570
        %v665 = vpack.c.b16 %v575, %v573
        %v666 = vpack.c.b16 %v576, %v574
        %v667 = vpack.c.b16 %v579, %v577
        %v668 = vpack.c.b16 %v580, %v578
        %v669 = vpack.c.b16 %v583, %v581
        %v670 = vpack.c.b16 %v584, %v582
        %v671 = vpack.c.b16 %v587, %v585
        %v672 = vpack.c.b16 %v588, %v586
        %v673 = vpack.c.b16 %v591, %v589
        %v674 = vpack.c.b16 %v592, %v590
        %v675 = vpack.c.b16 %v595, %v593
        %v676 = vpack.c.b16 %v596, %v594
        %v677 = vpack.c.b16 %v599, %v597
        %v678 = vpack.c.b16 %v600, %v598
        %v679 = vpack.c.b16 %v603, %v601
        %v680 = vpack.c.b16 %v604, %v602
        %v681 = vpack.c.b16 %v607, %v605
        %v682 = vpack.c.b16 %v608, %v606
        %v683 = vpack.c.b16 %v611, %v609
        %v684 = vpack.c.b16 %v612, %v610
        %v685 = vpack.c.b16 %v615, %v613
        %v686 = vpack.c.b16 %v616, %v614
        %v687 = vpack.c.b16 %v619, %v617
        %v688 = vpack.c.b16 %v620, %v618
        %v689 = vpack.c.b16 %v623, %v621
        %v690 = vpack.c.b16 %v624, %v622
        %v691 = vpack.c.b16 %v627, %v625
        %v692 = vpack.c.b16 %v628, %v626
        %757 = vmatprep.subr.bf16.mxu0 %v630
        %758 = vmatpush1.bf16.msra.mxu0 %v629
        %759 = vmatprep.subr.bf16.mxu0 %v632
        %760 = vmatpush1.bf16.msra.mxu0 %v631
        %761 = vmatprep.subr.bf16.mxu0 %v634
        %762 = vmatpush1.bf16.msra.mxu0 %v633
        %763 = vmatprep.subr.bf16.mxu0 %v636
        %764 = vmatpush1.bf16.msra.mxu0 %v635
        %765 = vmatprep.subr.bf16.mxu0 %v638
        %766 = vmatpush1.bf16.msra.mxu0 %v637
        %767 = vmatprep.subr.bf16.mxu0 %v640
        %768 = vmatpush1.bf16.msra.mxu0 %v639
        %769 = vmatprep.subr.bf16.mxu0 %v642
        %770 = vmatpush1.bf16.msra.mxu0 %v641
        %771 = vmatprep.subr.bf16.mxu0 %v644
        %772 = vmatpush1.bf16.msra.mxu0 %v643
        %773 = vmatprep.subr.bf16.mxu0 %v646
        %774 = vmatpush1.bf16.msra.mxu0 %v645
        %775 = vmatprep.subr.bf16.mxu0 %v648
        %776 = vmatpush1.bf16.msra.mxu0 %v647
        %777 = vmatprep.subr.bf16.mxu0 %v650
        %778 = vmatpush1.bf16.msra.mxu0 %v649
        %779 = vmatprep.subr.bf16.mxu0 %v652
        %780 = vmatpush1.bf16.msra.mxu0 %v651
        %781 = vmatprep.subr.bf16.mxu0 %v654
        %782 = vmatpush1.bf16.msra.mxu0 %v653
        %783 = vmatprep.subr.bf16.mxu0 %v656
        %784 = vmatpush1.bf16.msra.mxu0 %v655
        %785 = vmatprep.subr.bf16.mxu0 %v658
        %786 = vmatpush1.bf16.msra.mxu0 %v657
        %787 = vmatprep.subr.bf16.mxu0 %v660
        %788 = vmatpush1.bf16.msra.mxu0 %v659
        %789 = vmatprep.mubr.bf16.mxu0 %v422
        %790 = vmatmul.mubr.bf16.gmra.mrb[0].mxu0 %v421
        %v791 = vpop.f32.mrb[0].mxu0
        %v792 = vadd.f32 0.0, %v791
        %v793 = vpop.f32.mrb[0].mxu0
        %v794 = vadd.f32 0.0, %v793
        %v795 = vpop.f32.mrb[0].mxu0
        %v796 = vadd.f32 0.0, %v795
        %v797 = vpop.f32.mrb[0].mxu0
        %v798 = vadd.f32 0.0, %v797
        %799 = vmatprep.mubr.bf16.mxu0 %v426
        %800 = vmatmul.mubr.bf16.gmra.mrb[0].mxu0 %v425
        %v801 = vpop.f32.mrb[0].mxu0
        %v802 = vadd.f32 0.0, %v801
        %v803 = vpop.f32.mrb[0].mxu0
        %v804 = vadd.f32 0.0, %v803
        %v805 = vpop.f32.mrb[0].mxu0
        %v806 = vadd.f32 0.0, %v805
        %v807 = vpop.f32.mrb[0].mxu0
        %v808 = vadd.f32 0.0, %v807
        %809 = vdwg.mxu0
        %810 = vmatprep.subr.bf16.mxu0 %v662
        %811 = vmatpush1.bf16.msra.mxu0 %v661
        %812 = vmatprep.subr.bf16.mxu0 %v664
        %813 = vmatpush1.bf16.msra.mxu0 %v663
        %814 = vmatprep.subr.bf16.mxu0 %v666
        %815 = vmatpush1.bf16.msra.mxu0 %v665
        %816 = vmatprep.subr.bf16.mxu0 %v668
        %817 = vmatpush1.bf16.msra.mxu0 %v667
        %818 = vmatprep.subr.bf16.mxu0 %v670
        %819 = vmatpush1.bf16.msra.mxu0 %v669
        %820 = vmatprep.subr.bf16.mxu0 %v672
        %821 = vmatpush1.bf16.msra.mxu0 %v671
        %822 = vmatprep.subr.bf16.mxu0 %v674
        %823 = vmatpush1.bf16.msra.mxu0 %v673
        %824 = vmatprep.subr.bf16.mxu0 %v676
        %825 = vmatpush1.bf16.msra.mxu0 %v675
        %826 = vmatprep.subr.bf16.mxu0 %v678
        %827 = vmatpush1.bf16.msra.mxu0 %v677
        %828 = vmatprep.subr.bf16.mxu0 %v680
        %829 = vmatpush1.bf16.msra.mxu0 %v679
        %830 = vmatprep.subr.bf16.mxu0 %v682
        %831 = vmatpush1.bf16.msra.mxu0 %v681
        %832 = vmatprep.subr.bf16.mxu0 %v684
        %833 = vmatpush1.bf16.msra.mxu0 %v683
        %834 = vmatprep.subr.bf16.mxu0 %v686
        %835 = vmatpush1.bf16.msra.mxu0 %v685
        %836 = vmatprep.subr.bf16.mxu0 %v688
        %837 = vmatpush1.bf16.msra.mxu0 %v687
        %838 = vmatprep.subr.bf16.mxu0 %v690
        %839 = vmatpush1.bf16.msra.mxu0 %v689
        %840 = vmatprep.subr.bf16.mxu0 %v692
        %841 = vmatpush1.bf16.msra.mxu0 %v691
        %842 = vmatprep.mubr.bf16.mxu0 %v424
        %843 = vmatmul.mubr.bf16.gmra.mrb[0].mxu0 %v423
        %v844 = vpop.f32.mrb[0].mxu0
        %v845 = vadd.f32 %v792, %v844
        %v846 = vpop.f32.mrb[0].mxu0
        %v847 = vadd.f32 %v794, %v846
        %v848 = vpop.f32.mrb[0].mxu0
        %v849 = vadd.f32 %v796, %v848
        %v850 = vpop.f32.mrb[0].mxu0
        %v851 = vadd.f32 %v798, %v850
        %852 = vmatprep.mubr.bf16.mxu0 %v428
        %853 = vmatmul.mubr.bf16.gmra.mrb[0].mxu0 %v427
        %v854 = vpop.f32.mrb[0].mxu0
        %v855 = vadd.f32 %v802, %v854
        %v856 = vpop.f32.mrb[0].mxu0
        %v857 = vadd.f32 %v804, %v856
        %v858 = vpop.f32.mrb[0].mxu0
        %v859 = vadd.f32 %v806, %v858
        %v860 = vpop.f32.mrb[0].mxu0
        %v861 = vadd.f32 %v808, %v860
        %862 = vdwg.mxu0
        %v863 = vadd.f32 %v317, %v845
        %v864 = vadd.f32 %v318, %v847
        %v865 = vadd.f32 %v319, %v849
        %v866 = vadd.f32 %v320, %v851
        %v867 = vadd.f32 %v321, %v855
        %v868 = vadd.f32 %v322, %v857
        %v869 = vadd.f32 %v323, %v859
        %v870 = vadd.f32 %v324, %v861
        %871 = vst [vmem:[%s302] sm:$0xff] %v863
        %872 = vst [vmem:[%s302 + $0x8] sm:$0xff] %v864
        %873 = vst [vmem:[%s302 + $0x10] sm:$0xff] %v865
        %874 = vst [vmem:[%s302 + $0x18] sm:$0xff] %v866
        %875 = vst [vmem:[%s302 + $0x20] sm:$0xff] %v867
        %876 = vst [vmem:[%s302 + $0x28] sm:$0xff] %v868
        %877 = vst [vmem:[%s302 + $0x30] sm:$0xff] %v869
        %878 = vst [vmem:[%s302 + $0x38] sm:$0xff] %v870
        %p879 = scmp.eq.s32.totalorder %s21, 3
        // Predicated region
        $region60: #{discriminator_sngan_forward.10} parent=50 // pred_check
          %p880 = pneg %p879
        $region61: #{discriminator_sngan_forward.10} parent=50 // pred_check_branch
          %882 = sbr.rel (%p880) target = $region63
        $region62: #{discriminator_sngan_forward.10} parent=50 // pred_region
          %v883 = vld [vmem:[%s302] sm:$0xff]
          %v884 = vld [vmem:[%s302 + $0x8] sm:$0xff]
          %v885 = vld [vmem:[%s302 + $0x10] sm:$0xff]
          %v886 = vld [vmem:[%s302 + $0x18] sm:$0xff]
          %v887 = vld [vmem:[%s302 + $0x20] sm:$0xff]
          %v888 = vld [vmem:[%s302 + $0x28] sm:$0xff]
          %v889 = vld [vmem:[%s302 + $0x30] sm:$0xff]
          %v890 = vld [vmem:[%s302 + $0x38] sm:$0xff]
          %v891 = vld [vmem:[%s291] sm:$0x3]
          %v893 = vlaneseq
          %v894 = vshrl.u32 %v893, 7
          %v895 = vsub.s32 0, %v894
          %v896 = vrot.slane %v891, %v895
          %v897 = vlaneseq
          %v898 = vshrl.u32 %v897, 7
          %v899 = vsub.s32 1, %v898
          %v900 = vrot.slane %v891, %v899
          %v903 = vadd.f32 %v883, %v896
          %v904 = vadd.f32 %v884, %v900
          %v905 = vadd.f32 %v885, %v896
          %v906 = vadd.f32 %v886, %v900
          %v907 = vadd.f32 %v887, %v896
          %v908 = vadd.f32 %v888, %v900
          %v909 = vadd.f32 %v889, %v896
          %v910 = vadd.f32 %v890, %v900
          %vm911 = vcmp.ge.f32.partialorder %v903, 0.0
          %vm912 = vcmp.ge.f32.partialorder %v904, 0.0
          %vm913 = vcmp.ge.f32.partialorder %v905, 0.0
          %vm914 = vcmp.ge.f32.partialorder %v906, 0.0
          %vm915 = vcmp.ge.f32.partialorder %v907, 0.0
          %vm916 = vcmp.ge.f32.partialorder %v908, 0.0
          %vm917 = vcmp.ge.f32.partialorder %v909, 0.0
          %vm918 = vcmp.ge.f32.partialorder %v910, 0.0
          %v919 = vmul.f32 %v903, 0.1
          %v920 = vmul.f32 %v904, 0.1
          %v921 = vmul.f32 %v905, 0.1
          %v922 = vmul.f32 %v906, 0.1
          %v923 = vmul.f32 %v907, 0.1
          %v924 = vmul.f32 %v908, 0.1
          %v925 = vmul.f32 %v909, 0.1
          %v926 = vmul.f32 %v910, 0.1
          %v927 = vsel %vm911, %v903, %v919
          %v928 = vsel %vm912, %v904, %v920
          %v929 = vsel %vm913, %v905, %v921
          %v930 = vsel %vm914, %v906, %v922
          %v931 = vsel %vm915, %v907, %v923
          %v932 = vsel %vm916, %v908, %v924
          %v933 = vsel %vm917, %v909, %v925
          %v934 = vsel %vm918, %v910, %v926
          %935 = vst [vmem:[%s302] sm:$0xff] %v927
          %936 = vst [vmem:[%s302 + $0x8] sm:$0xff] %v928
          %937 = vst [vmem:[%s302 + $0x10] sm:$0xff] %v929
          %938 = vst [vmem:[%s302 + $0x18] sm:$0xff] %v930
          %939 = vst [vmem:[%s302 + $0x20] sm:$0xff] %v931
          %940 = vst [vmem:[%s302 + $0x28] sm:$0xff] %v932
          %941 = vst [vmem:[%s302 + $0x30] sm:$0xff] %v933
          %942 = vst [vmem:[%s302 + $0x38] sm:$0xff] %v934
        $region63: #{discriminator_sngan_forward.10} parent=50 // pred_fallthru
          _
        %s943 = smul.u32 4, %s19
        %s944 = smul.u32 2, %s20
        %p945 = scmp.lt.s32.totalorder %s943, 3
        %s946 = scalar_select %p945, %s943, 3
        %p947 = scmp.lt.s32.totalorder %s944, 1
        %s948 = scalar_select %p947, %s944, 1
        %s949 = smul.addr %s946, 2
        %s950 = sadd.s32 %s948, %s949
        %s951 = smul.addr %s950, 8
        %s952 = scalar_lea.vmem %s3, %s951
        // Predicated region
        $region64: #{discriminator_sngan_forward.10} parent=50 // pred_check
          %p953 = pneg %p135
        $region65: #{discriminator_sngan_forward.10} parent=50 // pred_check_branch
          %955 = sbr.rel (%p953) target = $region67
        $region66: #{discriminator_sngan_forward.10} parent=50 // pred_region
          %s956 = smul.u32 4, %s19
          %s957 = smul.u32 2, %s20
        $region67: #{discriminator_sngan_forward.10} parent=50 // pred_fallthru
          _
        // Predicated region
        $region68: #{discriminator_sngan_forward.10} parent=50 // pred_check
          %p958 = pneg %p135
        $region69: #{discriminator_sngan_forward.10} parent=50 // pred_check_branch
          %960 = sbr.rel (%p958) target = $region71
        $region70: #{discriminator_sngan_forward.10} parent=50 // pred_region
          %s961 = smul.u32 4, %s19
          %s962 = smul.u32 2, %s20
          %p963 = scmp.lt.s32.totalorder %s961, 3
          %s964 = scalar_select %p963, %s961, 3
          %p965 = scmp.lt.s32.totalorder %s962, 1
          %s966 = scalar_select %p965, %s962, 1
          %s967 = smul.addr %s964, 2
          %s968 = sadd.s32 %s966, %s967
          %s969 = smul.addr %s968, 8
          %s970 = scalar_lea.vmem %s3, %s969
        $region71: #{discriminator_sngan_forward.10} parent=50 // pred_fallthru
          _
      $region51: #{discriminator_sngan_forward.10} parent=5 // pred_fallthru
        _
      %p971 = scmp.le.s32.totalorder 2, %s9
      // Predicated region
      $region72: #{discriminator_sngan_forward.10} parent=5 // pred_check
        %p972 = pneg %p971
      $region73: #{discriminator_sngan_forward.10} parent=5 // pred_check_branch
        %974 = sbr.rel (%p972) target = $region75
      $region74: #{discriminator_sngan_forward.10} parent=5 // pred_region
        %s975 = ssub.s32 %s9, 2
      $region75: #{discriminator_sngan_forward.10} parent=5 // pred_fallthru
        _
    $region6: #{discriminator_sngan_forward.10} parent=1 // loop_footer
      %s13 = sadd.s32 1, %s9
    $region7: #{discriminator_sngan_forward.10} parent=1 // loop_footer_branch
      %8 = sbr.rel target = $region3
    $region8: #{discriminator_sngan_forward.10} parent=1 // loop_exit
      _

// kernel: discriminator_sngan_forward.11
$region0: #{discriminator_sngan_forward.11}
  #allocation0 [shape = 'u32[]', space=smem, size = 0x4, offset = 0x4, fixed_abs, tag = 'smem constant byte address 0x4 - core index']
  #allocation1 [shape = 'u32[144,128]{1,0:T(1,128)}', space=vmem, size = 0x12000, scoped, tag = 'internal scratch']
  %s0 = inlined_call_operand.vmem [shape: bf16[32,2304], index: 0, kind: input, shape index: {}]
  %s1 = inlined_call_operand.vmem [shape: bf16[2304,256], index: 1, kind: input, shape index: {}]
  %s2 = inlined_call_operand.vmem [shape: f32[1,256], index: 2, kind: input, shape index: {}]
  %s3 = inlined_call_operand.vmem [shape: f32[32,256], index: 3, kind: output, shape index: {}]
  %s4 = sld [smem:[#allocation0]]
  $region79: #{discriminator_sngan_forward.11} parent=0
    _
  %s6 = ssub.s32 1, %s4
  %s7 = scalar_select 0, %s6, %s4
  $region1: #{discriminator_sngan_forward.11} parent=0
    #allocation2 [shape = 'u8[49152]{0}', space=vmem, size = 0xc000, scoped, tag = 'input window, operand 0']
    loop: start=0, step=1, limit=8
    $region2: #{discriminator_sngan_forward.11} parent=1 // loop_pre_header
      _
    $region3: #{discriminator_sngan_forward.11} parent=1 // loop_header
      %s9 = sphi 0, %s13
      %p10 = scmp.ge.s32.totalorder %s9, 8
      %s16 = sphi 0, %s35
      %s17 = sphi 0, %s31
      %s18 = sphi 0, %s27
      %s19 = sphi 0, %s16
      %s20 = sphi 0, %s17
      %s21 = sphi 0, %s18
      %s22 = sphi 0, %s19
      %s23 = sphi 0, %s20
      %s24 = sphi 0, %s21
      %s40 = sphi 0, %s42
      %s43 = sphi 0, %s40
      %s44 = sphi 0, %s43
      %s60 = sphi 0, %s44
      %s68 = sphi 0, %s70
      %s71 = sphi 0, %s68
      %s72 = sphi 0, %s71
      %s88 = sphi 0, %s72
      %s94 = sphi 0, %s96
      %s97 = sphi 0, %s94
      %s98 = sphi 0, %s97
      %s114 = sphi 0, %s98
      %s122 = sphi 0, %s124
      %s125 = sphi 0, %s122
      %s126 = sphi 0, %s125
      %s142 = sphi 0, %s126
    $region4: #{discriminator_sngan_forward.11} parent=1 // loop_header_branch
      %12 = sbr.rel (%p10) target = $region8
    $region5: #{discriminator_sngan_forward.11} parent=1 // loop_body
      %s14 = ssub.s32 %s9, 1
      %s15 = ssub.s32 %s9, 2
      %s25 = sadd.s32 1, %s18
      %p26 = scmp.ge.s32.totalorder %s25, 6
      %s27 = scalar_select %p26, 0, %s25
      %s28 = sadd.s32 1, %s17
      %s29 = scalar_select %p26, %s28, %s17
      %p30 = scmp.ge.s32.totalorder %s29, 1
      %s31 = scalar_select %p30, 0, %s29
      %s32 = sadd.s32 1, %s16
      %s33 = scalar_select %p30, %s32, %s16
      %p34 = scmp.ge.s32.totalorder %s33, 1
      %s35 = scalar_select %p34, 0, %s33
      %s36 = ssub.s32 %s16, %s35
      %s37 = ssub.s32 %s18, %s27
      %s38 = sor.u32 %s36, %s37
      %p39 = scmp.eq.s32.totalorder %s38, 0
      %s41 = sadd.s32 %s40, 1
      %s42 = scalar_select %p39, %s40, %s41
      %p45 = pneg %p39
      %p46 = scmp.eq.s32.totalorder %s9, 5
      %p47 = por %p45, %p46
      %p48 = scmp.ne.s32.totalorder %s40, %s43
      %p49 = scmp.eq.s32.totalorder %s9, 0
      %p50 = por %p48, %p49
      %p51 = scmp.ne.s32.totalorder %s40, %s43
      %p52 = scmp.eq.s32.totalorder %s14, 5
      %p53 = por %p51, %p52
      %p54 = scmp.ne.s32.totalorder %s43, %s44
      %p55 = scmp.eq.s32.totalorder %s14, 0
      %p56 = por %p54, %p55
      %p57 = scmp.ne.s32.totalorder %s43, %s44
      %p58 = scmp.eq.s32.totalorder %s15, 5
      %p59 = por %p57, %p58
      %p61 = scmp.ne.s32.totalorder %s44, %s60
      %p62 = scmp.eq.s32.totalorder %s15, 0
      %p63 = por %p61, %p62
      %s64 = ssub.s32 %s18, %s27
      %s65 = ssub.s32 %s17, %s31
      %s66 = sor.u32 %s64, %s65
      %p67 = scmp.eq.s32.totalorder %s66, 0
      %s69 = sadd.s32 %s68, 1
      %s70 = scalar_select %p67, %s68, %s69
      %p73 = pneg %p67
      %p74 = scmp.eq.s32.totalorder %s9, 5
      %p75 = por %p73, %p74
      %p76 = scmp.ne.s32.totalorder %s68, %s71
      %p77 = scmp.eq.s32.totalorder %s9, 0
      %p78 = por %p76, %p77
      %p79 = scmp.ne.s32.totalorder %s68, %s71
      %p80 = scmp.eq.s32.totalorder %s14, 5
      %p81 = por %p79, %p80
      %p82 = scmp.ne.s32.totalorder %s71, %s72
      %p83 = scmp.eq.s32.totalorder %s14, 0
      %p84 = por %p82, %p83
      %p85 = scmp.ne.s32.totalorder %s71, %s72
      %p86 = scmp.eq.s32.totalorder %s15, 5
      %p87 = por %p85, %p86
      %p89 = scmp.ne.s32.totalorder %s72, %s88
      %p90 = scmp.eq.s32.totalorder %s15, 0
      %p91 = por %p89, %p90
      %s92 = ssub.s32 %s17, %s31
      %p93 = scmp.eq.s32.totalorder %s92, 0
      %s95 = sadd.s32 %s94, 1
      %s96 = scalar_select %p93, %s94, %s95
      %p99 = pneg %p93
      %p100 = scmp.eq.s32.totalorder %s9, 5
      %p101 = por %p99, %p100
      %p102 = scmp.ne.s32.totalorder %s94, %s97
      %p103 = scmp.eq.s32.totalorder %s9, 0
      %p104 = por %p102, %p103
      %p105 = scmp.ne.s32.totalorder %s94, %s97
      %p106 = scmp.eq.s32.totalorder %s14, 5
      %p107 = por %p105, %p106
      %p108 = scmp.ne.s32.totalorder %s97, %s98
      %p109 = scmp.eq.s32.totalorder %s14, 0
      %p110 = por %p108, %p109
      %p111 = scmp.ne.s32.totalorder %s97, %s98
      %p112 = scmp.eq.s32.totalorder %s15, 5
      %p113 = por %p111, %p112
      %p115 = scmp.ne.s32.totalorder %s98, %s114
      %p116 = scmp.eq.s32.totalorder %s15, 0
      %p117 = por %p115, %p116
      %s118 = ssub.s32 %s16, %s35
      %s119 = ssub.s32 %s17, %s31
      %s120 = sor.u32 %s118, %s119
      %p121 = scmp.eq.s32.totalorder %s120, 0
      %s123 = sadd.s32 %s122, 1
      %s124 = scalar_select %p121, %s122, %s123
      %p127 = pneg %p121
      %p128 = scmp.eq.s32.totalorder %s9, 5
      %p129 = por %p127, %p128
      %p130 = scmp.ne.s32.totalorder %s122, %s125
      %p131 = scmp.eq.s32.totalorder %s9, 0
      %p132 = por %p130, %p131
      %p133 = scmp.ne.s32.totalorder %s122, %s125
      %p134 = scmp.eq.s32.totalorder %s14, 5
      %p135 = por %p133, %p134
      %p136 = scmp.ne.s32.totalorder %s125, %s126
      %p137 = scmp.eq.s32.totalorder %s14, 0
      %p138 = por %p136, %p137
      %p139 = scmp.ne.s32.totalorder %s125, %s126
      %p140 = scmp.eq.s32.totalorder %s15, 5
      %p141 = por %p139, %p140
      %p143 = scmp.ne.s32.totalorder %s126, %s142
      %p144 = scmp.eq.s32.totalorder %s15, 0
      %p145 = por %p143, %p144
      %p146 = scmp.le.s32.totalorder 1, %s9
      %p147 = scmp.lt.s32.totalorder %s9, 7
      %p148 = pnand %p146, %p147
      %p149 = pneg %p148
      // Predicated region
      $region9: #{discriminator_sngan_forward.11} parent=5 // pred_check
        _
      $region10: #{discriminator_sngan_forward.11} parent=5 // pred_check_branch
        %151 = sbr.rel (%p148) target = $region12
      $region11: #{discriminator_sngan_forward.11} parent=5 // pred_region
        %s152 = ssub.s32 %s9, 1
        // Predicated region
        $region13: #{discriminator_sngan_forward.11} parent=11 // pred_check
          %p153 = pneg %p110
        $region14: #{discriminator_sngan_forward.11} parent=11 // pred_check_branch
          %155 = sbr.rel (%p153) target = $region16
        $region15: #{discriminator_sngan_forward.11} parent=11 // pred_region
          %s156 = smul.u32 2, %s20
          %p157 = scmp.lt.s32.totalorder %s156, 1
          %s158 = scalar_select %p157, %s156, 1
          %s159 = scalar_lea.vmem %s2, %s158
          %s160 = smul.u32 2, %s20
        $region16: #{discriminator_sngan_forward.11} parent=11 // pred_fallthru
          _
      $region12: #{discriminator_sngan_forward.11} parent=5 // pred_fallthru
        _
      %p161 = scmp.lt.s32.totalorder %s9, 6
      // Predicated region
      $region17: #{discriminator_sngan_forward.11} parent=5 // pred_check
        %p162 = pneg %p161
      $region18: #{discriminator_sngan_forward.11} parent=5 // pred_check_branch
        %164 = sbr.rel (%p162) target = $region20
      $region19: #{discriminator_sngan_forward.11} parent=5 // pred_region
        // Predicated region
        $region21: #{discriminator_sngan_forward.11} parent=19 // pred_check
          %p165 = pneg %p50
        $region22: #{discriminator_sngan_forward.11} parent=19 // pred_check_branch
          %167 = sbr.rel (%p165) target = $region24
        $region23: #{discriminator_sngan_forward.11} parent=19 // pred_region
          %s168 = sand.u32 %s40, 1
          %s169 = sand.u32 %s40, 1
          %s170 = smul.addr %s169, 48
          %s171 = scalar_lea.vmem [#allocation2], %s170
          %s172 = smul.u32 4, %s16
          %s173 = smul.u32 3, %s18
          %s174 = smul.addr %s172, 18
          %s175 = sadd.s32 %s173, %s174
          %s176 = smul.addr %s175, 4
          %s177 = scalar_lea.vmem %s0, %s176
          // Predicated region
          $region25: #{discriminator_sngan_forward.11} parent=23 // pred_check
            _
          $region26: #{discriminator_sngan_forward.11} parent=23 // pred_check_branch
            %179 = sbr.rel (0) target = $region28
          $region27: #{discriminator_sngan_forward.11} parent=23 // pred_region
            // Predicated region
            $region29: #{discriminator_sngan_forward.11} parent=27 // pred_check
              _
            $region30: #{discriminator_sngan_forward.11} parent=27 // pred_check_branch
              %181 = sbr.rel (0) target = $region32
            $region31: #{discriminator_sngan_forward.11} parent=27 // pred_region
              %s182 = scalar_lea.vmem %s177, 8
              %s183 = scalar_lea.vmem %s171, 8 [#allocation2]
              loop: start=0, step=1, limit=1
              $region33: #{discriminator_sngan_forward.11} parent=31 // loop_pre_header
                _
              $region34: #{discriminator_sngan_forward.11} parent=31 // loop_header
                %s185 = sphi 0, %s189
                %p186 = scmp.ge.s32.totalorder %s185, 1
                %s190 = sphi %s177, %s177
                %s191 = sphi %s171, %s171
              $region35: #{discriminator_sngan_forward.11} parent=31 // loop_header_branch
                %188 = sbr.rel (%p186) target = $region39
              $region36: #{discriminator_sngan_forward.11} parent=31 // loop_body
                %v192 = vld [vmem:[%s190] sm:$0xff]
                %193 = vst [vmem:[%s191] sm:$0xff] %v192
                %v194 = vld [vmem:[%s190 + $0x48] sm:$0xff]
                %195 = vst [vmem:[%s191 + $0xc] sm:$0xff] %v194
                %v196 = vld [vmem:[%s190 + $0x90] sm:$0xff]
                %197 = vst [vmem:[%s191 + $0x18] sm:$0xff] %v196
                %v198 = vld [vmem:[%s190 + $0xd8] sm:$0xff]
                %199 = vst [vmem:[%s191 + $0x24] sm:$0xff] %v198
              $region37: #{discriminator_sngan_forward.11} parent=31 // loop_footer
                %s189 = sadd.s32 1, %s185
              $region38: #{discriminator_sngan_forward.11} parent=31 // loop_footer_branch
                %184 = sbr.rel target = $region34
              $region39: #{discriminator_sngan_forward.11} parent=31 // loop_exit
                _
              loop: start=0, step=1, limit=1
              $region40: #{discriminator_sngan_forward.11} parent=31 // loop_pre_header
                _
              $region41: #{discriminator_sngan_forward.11} parent=31 // loop_header
                %s202 = sphi 0, %s206
                %p203 = scmp.ge.s32.totalorder %s202, 1
                %s207 = sphi %s182, %s182
                %s208 = sphi %s183, %s183
              $region42: #{discriminator_sngan_forward.11} parent=31 // loop_header_branch
                %205 = sbr.rel (%p203) target = $region46
              $region43: #{discriminator_sngan_forward.11} parent=31 // loop_body
                %v209 = vld [vmem:[%s207] sm:$0xf]
                %210 = vst [vmem:[%s208] sm:$0xf] %v209
                %v211 = vld [vmem:[%s207 + $0x48] sm:$0xf]
                %212 = vst [vmem:[%s208 + $0xc] sm:$0xf] %v211
                %v213 = vld [vmem:[%s207 + $0x90] sm:$0xf]
                %214 = vst [vmem:[%s208 + $0x18] sm:$0xf] %v213
                %v215 = vld [vmem:[%s207 + $0xd8] sm:$0xf]
                %216 = vst [vmem:[%s208 + $0x24] sm:$0xf] %v215
              $region44: #{discriminator_sngan_forward.11} parent=31 // loop_footer
                %s206 = sadd.s32 1, %s202
              $region45: #{discriminator_sngan_forward.11} parent=31 // loop_footer_branch
                %201 = sbr.rel target = $region41
              $region46: #{discriminator_sngan_forward.11} parent=31 // loop_exit
                _
            $region32: #{discriminator_sngan_forward.11} parent=27 // pred_fallthru
              _
          $region28: #{discriminator_sngan_forward.11} parent=23 // pred_fallthru
            _
          %217 = vnop
        $region24: #{discriminator_sngan_forward.11} parent=19 // pred_fallthru
          _
        // Predicated region
        $region47: #{discriminator_sngan_forward.11} parent=19 // pred_check
          %p218 = pneg %p78
        $region48: #{discriminator_sngan_forward.11} parent=19 // pred_check_branch
          %220 = sbr.rel (%p218) target = $region50
        $region49: #{discriminator_sngan_forward.11} parent=19 // pred_region
          %s221 = smul.u32 48, %s18
          %s222 = smul.u32 2, %s17
          %p223 = scmp.lt.s32.totalorder %s221, 287
          %s224 = scalar_select %p223, %s221, 287
          %p225 = scmp.lt.s32.totalorder %s222, 1
          %s226 = scalar_select %p225, %s222, 1
          %s227 = smul.addr %s224, 2
          %s228 = sadd.s32 %s226, %s227
          %s229 = smul.addr %s228, 4
          %s230 = scalar_lea.vmem %s1, %s229
          %s231 = smul.u32 48, %s18
          %s232 = smul.u32 2, %s17
        $region50: #{discriminator_sngan_forward.11} parent=19 // pred_fallthru
          _
      $region20: #{discriminator_sngan_forward.11} parent=5 // pred_fallthru
        _
      %p233 = scmp.le.s32.totalorder 1, %s9
      %p234 = scmp.lt.s32.totalorder %s9, 7
      %p235 = pnand %p233, %p234
      %p236 = pneg %p235
      // Predicated region
      $region51: #{discriminator_sngan_forward.11} parent=5 // pred_check
        _
      $region52: #{discriminator_sngan_forward.11} parent=5 // pred_check_branch
        %238 = sbr.rel (%p235) target = $region54
      $region53: #{discriminator_sngan_forward.11} parent=5 // pred_region
        %s239 = ssub.s32 %s9, 1
        %s240 = sand.u32 %s43, 1
        %s241 = sand.u32 %s43, 1
        %s242 = smul.addr %s241, 48
        %s243 = scalar_lea.vmem [#allocation2], %s242
        // Predicated region
        $region55: #{discriminator_sngan_forward.11} parent=53 // pred_check
          %p244 = pneg %p56
        $region56: #{discriminator_sngan_forward.11} parent=53 // pred_check_branch
          %246 = sbr.rel (%p244) target = $region58
        $region57: #{discriminator_sngan_forward.11} parent=53 // pred_region
          _
        $region58: #{discriminator_sngan_forward.11} parent=53 // pred_fallthru
          _
        %s247 = sand.u32 %s43, 1
        %s248 = sand.u32 %s43, 1
        %s249 = smul.addr %s248, 48
        %s250 = scalar_lea.vmem [#allocation2], %s249
        %p251 = pneg %p56
        %p252 = pneg %p53
        %s253 = smul.u32 48, %s21
        %s254 = smul.u32 2, %s20
        %p255 = scmp.lt.s32.totalorder %s253, 287
        %s256 = scalar_select %p255, %s253, 287
        %p257 = scmp.lt.s32.totalorder %s254, 1
        %s258 = scalar_select %p257, %s254, 1
        %s259 = smul.addr %s256, 2
        %s260 = sadd.s32 %s258, %s259
        %s261 = smul.addr %s260, 4
        %s262 = scalar_lea.vmem %s1, %s261
        %p263 = pneg %p84
        %p264 = pneg %p81
        %s265 = smul.u32 2, %s20
        %p266 = scmp.lt.s32.totalorder %s265, 1
        %s267 = scalar_select %p266, %s265, 1
        %s268 = scalar_lea.vmem %s2, %s267
        %p269 = pneg %p110
        %p270 = pneg %p107
        %p271 = pneg %p138
        %p272 = pneg %p135
        %s273 = smul.u32 4, %s19
        %s274 = smul.u32 2, %s20
        %p275 = scmp.lt.s32.totalorder %s273, 3
        %s276 = scalar_select %p275, %s273, 3
        %p277 = scmp.lt.s32.totalorder %s274, 1
        %s278 = scalar_select %p277, %s274, 1
        %s279 = smul.addr %s276, 2
        %s280 = sadd.s32 %s278, %s279
        %s281 = smul.addr %s280, 8
        %s282 = scalar_lea.vmem %s3, %s281
        %s283 = smul.u32 4, %s19
        %s284 = smul.u32 3, %s21
        %s285 = smul.u32 48, %s21
        %s286 = smul.u32 2, %s20
        %p287 = scmp.lt.s32.totalorder %s285, 287
        %s288 = scalar_select %p287, %s285, 287
        %p289 = scmp.lt.s32.totalorder %s286, 1
        %s290 = scalar_select %p289, %s286, 1
        %s291 = smul.addr %s288, 2
        %s292 = sadd.s32 %s290, %s291
        %s293 = smul.addr %s292, 4
        %s294 = scalar_lea.vmem %s1, %s293
        %s295 = smul.u32 48, %s21
        %s296 = smul.u32 2, %s20
        %s297 = smul.u32 2, %s20
        %p298 = scmp.lt.s32.totalorder %s297, 1
        %s299 = scalar_select %p298, %s297, 1
        %s300 = scalar_lea.vmem %s2, %s299
        %s301 = smul.u32 2, %s20
        %s302 = smul.u32 4, %s19
        %s303 = smul.u32 2, %s20
        %p304 = scmp.lt.s32.totalorder %s302, 3
        %s305 = scalar_select %p304, %s302, 3
        %p306 = scmp.lt.s32.totalorder %s303, 1
        %s307 = scalar_select %p306, %s303, 1
        %s308 = smul.addr %s305, 2
        %s309 = sadd.s32 %s307, %s308
        %s310 = smul.addr %s309, 8
        %s311 = scalar_lea.vmem %s3, %s310
        %s312 = smul.u32 4, %s19
        %s313 = smul.u32 2, %s20
        %p315 = scmp.eq.s32.totalorder %s21, 0
        // Predicated region
        $region59: #{discriminator_sngan_forward.11} parent=53 // pred_check
          %p316 = pneg %p315
        $region60: #{discriminator_sngan_forward.11} parent=53 // pred_check_branch
          %318 = sbr.rel (%p316) target = $region62
        $region61: #{discriminator_sngan_forward.11} parent=53 // pred_region
          %319 = vst [vmem:[%s311] sm:$0xff] 0.0
          %320 = vst [vmem:[%s311 + $0x8] sm:$0xff] 0.0
          %321 = vst [vmem:[%s311 + $0x10] sm:$0xff] 0.0
          %322 = vst [vmem:[%s311 + $0x18] sm:$0xff] 0.0
          %323 = vst [vmem:[%s311 + $0x20] sm:$0xff] 0.0
          %324 = vst [vmem:[%s311 + $0x28] sm:$0xff] 0.0
          %325 = vst [vmem:[%s311 + $0x30] sm:$0xff] 0.0
          %326 = vst [vmem:[%s311 + $0x38] sm:$0xff] 0.0
        $region62: #{discriminator_sngan_forward.11} parent=53 // pred_fallthru
          _
        %v327 = vld [vmem:[%s311] sm:$0xff]
        %v328 = vld [vmem:[%s311 + $0x8] sm:$0xff]
        %v329 = vld [vmem:[%s311 + $0x10] sm:$0xff]
        %v330 = vld [vmem:[%s311 + $0x18] sm:$0xff]
        %v331 = vld [vmem:[%s311 + $0x20] sm:$0xff]
        %v332 = vld [vmem:[%s311 + $0x28] sm:$0xff]
        %v333 = vld [vmem:[%s311 + $0x30] sm:$0xff]
        %v334 = vld [vmem:[%s311 + $0x38] sm:$0xff]
        %v335 = vld [vmem:[%s243] sm:$0xff]
        %v336 = vld [vmem:[%s243 + $0x8] sm:$0xf]
        %v337 = vld [vmem:[%s243 + $0xc] sm:$0xff]
        %v338 = vld [vmem:[%s243 + $0x14] sm:$0xf]
        %v339 = vld [vmem:[%s243 + $0x18] sm:$0xff]
        %v340 = vld [vmem:[%s243 + $0x20] sm:$0xf]
        %v341 = vld [vmem:[%s243 + $0x24] sm:$0xff]
        %v342 = vld [vmem:[%s243 + $0x2c] sm:$0xf]
        %v343 = vld [vmem:[%s294] sm:$0xff]
        %v344 = vld [vmem:[%s294 + $0x8] sm:$0xff]
        %v345 = vld [vmem:[%s294 + $0x10] sm:$0xff]
        %v346 = vld [vmem:[%s294 + $0x18] sm:$0xff]
        %v347 = vld [vmem:[%s294 + $0x20] sm:$0xff]
        %v348 = vld [vmem:[%s294 + $0x28] sm:$0xff]
        %v349 = vld [vmem:[%s294 + $0x30] sm:$0xff]
        %v350 = vld [vmem:[%s294 + $0x38] sm:$0xff]
        %v351 = vld [vmem:[%s294 + $0x40] sm:$0xff]
        %v352 = vld [vmem:[%s294 + $0x48] sm:$0xff]
        %v353 = vld [vmem:[%s294 + $0x50] sm:$0xff]
        %v354 = vld [vmem:[%s294 + $0x58] sm:$0xff]
        %v355 = vld [vmem:[%s294 + $0x60] sm:$0xff]
        %v356 = vld [vmem:[%s294 + $0x68] sm:$0xff]
        %v357 = vld [vmem:[%s294 + $0x70] sm:$0xff]
        %v358 = vld [vmem:[%s294 + $0x78] sm:$0xff]
        %v359 = vld [vmem:[%s294 + $0x80] sm:$0xff]
        %v360 = vld [vmem:[%s294 + $0x88] sm:$0xff]
        %v361 = vld [vmem:[%s294 + $0x90] sm:$0xff]
        %v362 = vld [vmem:[%s294 + $0x98] sm:$0xff]
        %v363 = vld [vmem:[%s294 + $0xa0] sm:$0xff]
        %v364 = vld [vmem:[%s294 + $0xa8] sm:$0xff]
        %v365 = vld [vmem:[%s294 + $0xb0] sm:$0xff]
        %v366 = vld [vmem:[%s294 + $0xb8] sm:$0xff]
        %v367 = vld [vmem:[%s294 + $0xc0] sm:$0xff]
        %v368 = vld [vmem:[%s294 + $0xc8] sm:$0xff]
        %v369 = vld [vmem:[%s294 + $0xd0] sm:$0xff]
        %v370 = vld [vmem:[%s294 + $0xd8] sm:$0xff]
        %v371 = vld [vmem:[%s294 + $0xe0] sm:$0xff]
        %v372 = vld [vmem:[%s294 + $0xe8] sm:$0xff]
        %v373 = vld [vmem:[%s294 + $0xf0] sm:$0xff]
        %v374 = vld [vmem:[%s294 + $0xf8] sm:$0xff]
        %v375 = vld [vmem:[%s294 + $0x100] sm:$0xff]
        %v376 = vld [vmem:[%s294 + $0x108] sm:$0xff]
        %v377 = vld [vmem:[%s294 + $0x110] sm:$0xff]
        %v378 = vld [vmem:[%s294 + $0x118] sm:$0xff]
        %v379 = vld [vmem:[%s294 + $0x120] sm:$0xff]
        %v380 = vld [vmem:[%s294 + $0x128] sm:$0xff]
        %v381 = vld [vmem:[%s294 + $0x130] sm:$0xff]
        %v382 = vld [vmem:[%s294 + $0x138] sm:$0xff]
        %v383 = vld [vmem:[%s294 + $0x140] sm:$0xff]
        %v384 = vld [vmem:[%s294 + $0x148] sm:$0xff]
        %v385 = vld [vmem:[%s294 + $0x150] sm:$0xff]
        %v386 = vld [vmem:[%s294 + $0x158] sm:$0xff]
        %v387 = vld [vmem:[%s294 + $0x160] sm:$0xff]
        %v388 = vld [vmem:[%s294 + $0x168] sm:$0xff]
        %v389 = vld [vmem:[%s294 + $0x170] sm:$0xff]
        %v390 = vld [vmem:[%s294 + $0x178] sm:$0xff]
        %v399 = vunpack.c.l.b16 %v335
        %v400 = vunpack.c.h.b16 %v335
        %v401 = vunpack.c.l.b16 %v336
        %v402 = vunpack.c.l.b16 %v337
        %v403 = vunpack.c.h.b16 %v337
        %v404 = vunpack.c.l.b16 %v338
        %v405 = vunpack.c.l.b16 %v339
        %v406 = vunpack.c.h.b16 %v339
        %v407 = vunpack.c.l.b16 %v340
        %v408 = vunpack.c.l.b16 %v341
        %v409 = vunpack.c.h.b16 %v341
        %v410 = vunpack.c.l.b16 %v342
        %v411 = vpack.c.b16 %v402, %v399
        %v412 = vpack.c.b16 %v403, %v400
        %v413 = vpack.c.b16 %v404, %v401
        %v414 = vpack.c.b16 %v408, %v405
        %v415 = vpack.c.b16 %v409, %v406
        %v416 = vpack.c.b16 %v410, %v407
        %v471 = vunpack.c.l.b16 %v343
        %v472 = vunpack.c.h.b16 %v343
        %v473 = vunpack.c.l.b16 %v344
        %v474 = vunpack.c.h.b16 %v344
        %v475 = vunpack.c.l.b16 %v345
        %v476 = vunpack.c.h.b16 %v345
        %v477 = vunpack.c.l.b16 %v346
        %v478 = vunpack.c.h.b16 %v346
        %v479 = vunpack.c.l.b16 %v347
        %v480 = vunpack.c.h.b16 %v347
        %v481 = vunpack.c.l.b16 %v348
        %v482 = vunpack.c.h.b16 %v348
        %v483 = vunpack.c.l.b16 %v349
        %v484 = vunpack.c.h.b16 %v349
        %v485 = vunpack.c.l.b16 %v350
        %v486 = vunpack.c.h.b16 %v350
        %v487 = vunpack.c.l.b16 %v351
        %v488 = vunpack.c.h.b16 %v351
        %v489 = vunpack.c.l.b16 %v352
        %v490 = vunpack.c.h.b16 %v352
        %v491 = vunpack.c.l.b16 %v353
        %v492 = vunpack.c.h.b16 %v353
        %v493 = vunpack.c.l.b16 %v354
        %v494 = vunpack.c.h.b16 %v354
        %v495 = vunpack.c.l.b16 %v355
        %v496 = vunpack.c.h.b16 %v355
        %v497 = vunpack.c.l.b16 %v356
        %v498 = vunpack.c.h.b16 %v356
        %v499 = vunpack.c.l.b16 %v357
        %v500 = vunpack.c.h.b16 %v357
        %v501 = vunpack.c.l.b16 %v358
        %v502 = vunpack.c.h.b16 %v358
        %v503 = vunpack.c.l.b16 %v359
        %v504 = vunpack.c.h.b16 %v359
        %v505 = vunpack.c.l.b16 %v360
        %v506 = vunpack.c.h.b16 %v360
        %v507 = vunpack.c.l.b16 %v361
        %v508 = vunpack.c.h.b16 %v361
        %v509 = vunpack.c.l.b16 %v362
        %v510 = vunpack.c.h.b16 %v362
        %v511 = vunpack.c.l.b16 %v363
        %v512 = vunpack.c.h.b16 %v363
        %v513 = vunpack.c.l.b16 %v364
        %v514 = vunpack.c.h.b16 %v364
        %v515 = vunpack.c.l.b16 %v365
        %v516 = vunpack.c.h.b16 %v365
        %v517 = vunpack.c.l.b16 %v366
        %v518 = vunpack.c.h.b16 %v366
        %v519 = vunpack.c.l.b16 %v367
        %v520 = vunpack.c.h.b16 %v367
        %v521 = vunpack.c.l.b16 %v368
        %v522 = vunpack.c.h.b16 %v368
        %v523 = vunpack.c.l.b16 %v369
        %v524 = vunpack.c.h.b16 %v369
        %v525 = vunpack.c.l.b16 %v370
        %v526 = vunpack.c.h.b16 %v370
        %v527 = vunpack.c.l.b16 %v371
        %v528 = vunpack.c.h.b16 %v371
        %v529 = vunpack.c.l.b16 %v372
        %v530 = vunpack.c.h.b16 %v372
        %v531 = vunpack.c.l.b16 %v373
        %v532 = vunpack.c.h.b16 %v373
        %v533 = vunpack.c.l.b16 %v374
        %v534 = vunpack.c.h.b16 %v374
        %v535 = vunpack.c.l.b16 %v375
        %v536 = vunpack.c.h.b16 %v375
        %v537 = vunpack.c.l.b16 %v376
        %v538 = vunpack.c.h.b16 %v376
        %v539 = vunpack.c.l.b16 %v377
        %v540 = vunpack.c.h.b16 %v377
        %v541 = vunpack.c.l.b16 %v378
        %v542 = vunpack.c.h.b16 %v378
        %v543 = vunpack.c.l.b16 %v379
        %v544 = vunpack.c.h.b16 %v379
        %v545 = vunpack.c.l.b16 %v380
        %v546 = vunpack.c.h.b16 %v380
        %v547 = vunpack.c.l.b16 %v381
        %v548 = vunpack.c.h.b16 %v381
        %v549 = vunpack.c.l.b16 %v382
        %v550 = vunpack.c.h.b16 %v382
        %v551 = vunpack.c.l.b16 %v383
        %v552 = vunpack.c.h.b16 %v383
        %v553 = vunpack.c.l.b16 %v384
        %v554 = vunpack.c.h.b16 %v384
        %v555 = vunpack.c.l.b16 %v385
        %v556 = vunpack.c.h.b16 %v385
        %v557 = vunpack.c.l.b16 %v386
        %v558 = vunpack.c.h.b16 %v386
        %v559 = vunpack.c.l.b16 %v387
        %v560 = vunpack.c.h.b16 %v387
        %v561 = vunpack.c.l.b16 %v388
        %v562 = vunpack.c.h.b16 %v388
        %v563 = vunpack.c.l.b16 %v389
        %v564 = vunpack.c.h.b16 %v389
        %v565 = vunpack.c.l.b16 %v390
        %v566 = vunpack.c.h.b16 %v390
        %v567 = vpack.c.b16 %v473, %v471
        %v568 = vpack.c.b16 %v474, %v472
        %v569 = vpack.c.b16 %v477, %v475
        %v570 = vpack.c.b16 %v478, %v476
        %v571 = vpack.c.b16 %v481, %v479
        %v572 = vpack.c.b16 %v482, %v480
        %v573 = vpack.c.b16 %v485, %v483
        %v574 = vpack.c.b16 %v486, %v484
        %v575 = vpack.c.b16 %v489, %v487
        %v576 = vpack.c.b16 %v490, %v488
        %v577 = vpack.c.b16 %v493, %v491
        %v578 = vpack.c.b16 %v494, %v492
        %v579 = vpack.c.b16 %v497, %v495
        %v580 = vpack.c.b16 %v498, %v496
        %v581 = vpack.c.b16 %v501, %v499
        %v582 = vpack.c.b16 %v502, %v500
        %v583 = vpack.c.b16 %v505, %v503
        %v584 = vpack.c.b16 %v506, %v504
        %v585 = vpack.c.b16 %v509, %v507
        %v586 = vpack.c.b16 %v510, %v508
        %v587 = vpack.c.b16 %v513, %v511
        %v588 = vpack.c.b16 %v514, %v512
        %v589 = vpack.c.b16 %v517, %v515
        %v590 = vpack.c.b16 %v518, %v516
        %v591 = vpack.c.b16 %v521, %v519
        %v592 = vpack.c.b16 %v522, %v520
        %v593 = vpack.c.b16 %v525, %v523
        %v594 = vpack.c.b16 %v526, %v524
        %v595 = vpack.c.b16 %v529, %v527
        %v596 = vpack.c.b16 %v530, %v528
        %v597 = vpack.c.b16 %v533, %v531
        %v598 = vpack.c.b16 %v534, %v532
        %v599 = vpack.c.b16 %v537, %v535
        %v600 = vpack.c.b16 %v538, %v536
        %v601 = vpack.c.b16 %v541, %v539
        %v602 = vpack.c.b16 %v542, %v540
        %v603 = vpack.c.b16 %v545, %v543
        %v604 = vpack.c.b16 %v546, %v544
        %v605 = vpack.c.b16 %v549, %v547
        %v606 = vpack.c.b16 %v550, %v548
        %v607 = vpack.c.b16 %v553, %v551
        %v608 = vpack.c.b16 %v554, %v552
        %v609 = vpack.c.b16 %v557, %v555
        %v610 = vpack.c.b16 %v558, %v556
        %v611 = vpack.c.b16 %v561, %v559
        %v612 = vpack.c.b16 %v562, %v560
        %v613 = vpack.c.b16 %v565, %v563
        %v614 = vpack.c.b16 %v566, %v564
        %663 = vmatprep.subr.bf16.mxu0 %v568
        %664 = vmatpush1.bf16.msra.mxu0 %v567
        %665 = vmatprep.subr.bf16.mxu0 %v570
        %666 = vmatpush1.bf16.msra.mxu0 %v569
        %667 = vmatprep.subr.bf16.mxu0 %v572
        %668 = vmatpush1.bf16.msra.mxu0 %v571
        %669 = vmatprep.subr.bf16.mxu0 %v574
        %670 = vmatpush1.bf16.msra.mxu0 %v573
        %671 = vmatprep.subr.bf16.mxu0 %v576
        %672 = vmatpush1.bf16.msra.mxu0 %v575
        %673 = vmatprep.subr.bf16.mxu0 %v578
        %674 = vmatpush1.bf16.msra.mxu0 %v577
        %675 = vmatprep.subr.bf16.mxu0 %v580
        %676 = vmatpush1.bf16.msra.mxu0 %v579
        %677 = vmatprep.subr.bf16.mxu0 %v582
        %678 = vmatpush1.bf16.msra.mxu0 %v581
        %679 = vmatprep.subr.bf16.mxu0 %v584
        %680 = vmatpush1.bf16.msra.mxu0 %v583
        %681 = vmatprep.subr.bf16.mxu0 %v586
        %682 = vmatpush1.bf16.msra.mxu0 %v585
        %683 = vmatprep.subr.bf16.mxu0 %v588
        %684 = vmatpush1.bf16.msra.mxu0 %v587
        %685 = vmatprep.subr.bf16.mxu0 %v590
        %686 = vmatpush1.bf16.msra.mxu0 %v589
        %687 = vmatprep.subr.bf16.mxu0 %v592
        %688 = vmatpush1.bf16.msra.mxu0 %v591
        %689 = vmatprep.subr.bf16.mxu0 %v594
        %690 = vmatpush1.bf16.msra.mxu0 %v593
        %691 = vmatprep.subr.bf16.mxu0 %v596
        %692 = vmatpush1.bf16.msra.mxu0 %v595
        %693 = vmatprep.subr.bf16.mxu0 %v598
        %694 = vmatpush1.bf16.msra.mxu0 %v597
        %695 = vmatprep.mubr.bf16.mxu0 %v412
        %696 = vmatmul.mubr.bf16.gmra.mrb[0].mxu0 %v411
        %v697 = vpop.f32.mrb[0].mxu0
        %v698 = vadd.f32 0.0, %v697
        %v699 = vpop.f32.mrb[0].mxu0
        %v700 = vadd.f32 0.0, %v699
        %v701 = vpop.f32.mrb[0].mxu0
        %v702 = vadd.f32 0.0, %v701
        %v703 = vpop.f32.mrb[0].mxu0
        %v704 = vadd.f32 0.0, %v703
        %705 = vmatprep.mubr.bf16.mxu0 %v415
        %706 = vmatmul.mubr.bf16.gmra.mrb[0].mxu0 %v414
        %v707 = vpop.f32.mrb[0].mxu0
        %v708 = vadd.f32 0.0, %v707
        %v709 = vpop.f32.mrb[0].mxu0
        %v710 = vadd.f32 0.0, %v709
        %v711 = vpop.f32.mrb[0].mxu0
        %v712 = vadd.f32 0.0, %v711
        %v713 = vpop.f32.mrb[0].mxu0
        %v714 = vadd.f32 0.0, %v713
        %715 = vdwg.mxu0
        %716 = vmatprep.subr.bf16.mxu0 %v600
        %717 = vmatpush1.bf16.msra.mxu0 %v599
        %718 = vmatprep.subr.bf16.mxu0 %v602
        %719 = vmatpush1.bf16.msra.mxu0 %v601
        %720 = vmatprep.subr.bf16.mxu0 %v604
        %721 = vmatpush1.bf16.msra.mxu0 %v603
        %722 = vmatprep.subr.bf16.mxu0 %v606
        %723 = vmatpush1.bf16.msra.mxu0 %v605
        %724 = vmatprep.subr.bf16.mxu0 %v608
        %725 = vmatpush1.bf16.msra.mxu0 %v607
        %726 = vmatprep.subr.bf16.mxu0 %v610
        %727 = vmatpush1.bf16.msra.mxu0 %v609
        %728 = vmatprep.subr.bf16.mxu0 %v612
        %729 = vmatpush1.bf16.msra.mxu0 %v611
        %730 = vmatprep.subr.bf16.mxu0 %v614
        %731 = vmatpush1.bf16.msra.mxu0 %v613
        %732 = vmatprep.subr.bf16.mxu0 0
        %733 = vmatpush1.bf16.msra.mxu0 0
        %734 = vmatprep.subr.bf16.mxu0 0
        %735 = vmatpush1.bf16.msra.mxu0 0
        %736 = vmatprep.subr.bf16.mxu0 0
        %737 = vmatpush1.bf16.msra.mxu0 0
        %738 = vmatprep.subr.bf16.mxu0 0
        %739 = vmatpush1.bf16.msra.mxu0 0
        %740 = vmatprep.subr.bf16.mxu0 0
        %741 = vmatpush1.bf16.msra.mxu0 0
        %742 = vmatprep.subr.bf16.mxu0 0
        %743 = vmatpush1.bf16.msra.mxu0 0
        %744 = vmatprep.subr.bf16.mxu0 0
        %745 = vmatpush1.bf16.msra.mxu0 0
        %746 = vmatprep.subr.bf16.mxu0 0
        %747 = vmatpush1.bf16.msra.mxu0 0
        %748 = vmatprep.mubr.bf16.mxu0 0
        %749 = vmatmul.mubr.bf16.gmra.mrb[0].mxu0 %v413
        %v750 = vpop.f32.mrb[0].mxu0
        %v751 = vadd.f32 %v698, %v750
        %v752 = vpop.f32.mrb[0].mxu0
        %v753 = vadd.f32 %v700, %v752
        %v754 = vpop.f32.mrb[0].mxu0
        %v755 = vadd.f32 %v702, %v754
        %v756 = vpop.f32.mrb[0].mxu0
        %v757 = vadd.f32 %v704, %v756
        %758 = vmatprep.mubr.bf16.mxu0 0
        %759 = vmatmul.mubr.bf16.gmra.mrb[0].mxu0 %v416
        %v760 = vpop.f32.mrb[0].mxu0
        %v761 = vadd.f32 %v708, %v760
        %v762 = vpop.f32.mrb[0].mxu0
        %v763 = vadd.f32 %v710, %v762
        %v764 = vpop.f32.mrb[0].mxu0
        %v765 = vadd.f32 %v712, %v764
        %v766 = vpop.f32.mrb[0].mxu0
        %v767 = vadd.f32 %v714, %v766
        %768 = vdwg.mxu0
        %v769 = vadd.f32 %v327, %v751
        %v770 = vadd.f32 %v328, %v753
        %v771 = vadd.f32 %v329, %v755
        %v772 = vadd.f32 %v330, %v757
        %v773 = vadd.f32 %v331, %v761
        %v774 = vadd.f32 %v332, %v763
        %v775 = vadd.f32 %v333, %v765
        %v776 = vadd.f32 %v334, %v767
        %777 = vst [vmem:[%s311] sm:$0xff] %v769
        %778 = vst [vmem:[%s311 + $0x8] sm:$0xff] %v770
        %779 = vst [vmem:[%s311 + $0x10] sm:$0xff] %v771
        %780 = vst [vmem:[%s311 + $0x18] sm:$0xff] %v772
        %781 = vst [vmem:[%s311 + $0x20] sm:$0xff] %v773
        %782 = vst [vmem:[%s311 + $0x28] sm:$0xff] %v774
        %783 = vst [vmem:[%s311 + $0x30] sm:$0xff] %v775
        %784 = vst [vmem:[%s311 + $0x38] sm:$0xff] %v776
        %p785 = scmp.eq.s32.totalorder %s21, 5
        // Predicated region
        $region63: #{discriminator_sngan_forward.11} parent=53 // pred_check
          %p786 = pneg %p785
        $region64: #{discriminator_sngan_forward.11} parent=53 // pred_check_branch
          %788 = sbr.rel (%p786) target = $region66
        $region65: #{discriminator_sngan_forward.11} parent=53 // pred_region
          %v789 = vld [vmem:[%s311] sm:$0xff]
          %v790 = vld [vmem:[%s311 + $0x8] sm:$0xff]
          %v791 = vld [vmem:[%s311 + $0x10] sm:$0xff]
          %v792 = vld [vmem:[%s311 + $0x18] sm:$0xff]
          %v793 = vld [vmem:[%s311 + $0x20] sm:$0xff]
          %v794 = vld [vmem:[%s311 + $0x28] sm:$0xff]
          %v795 = vld [vmem:[%s311 + $0x30] sm:$0xff]
          %v796 = vld [vmem:[%s311 + $0x38] sm:$0xff]
          %v797 = vld [vmem:[%s300] sm:$0x3]
          %v799 = vlaneseq
          %v800 = vshrl.u32 %v799, 7
          %v801 = vsub.s32 0, %v800
          %v802 = vrot.slane %v797, %v801
          %v803 = vlaneseq
          %v804 = vshrl.u32 %v803, 7
          %v805 = vsub.s32 1, %v804
          %v806 = vrot.slane %v797, %v805
          %v809 = vadd.f32 %v789, %v802
          %v810 = vadd.f32 %v790, %v806
          %v811 = vadd.f32 %v791, %v802
          %v812 = vadd.f32 %v792, %v806
          %v813 = vadd.f32 %v793, %v802
          %v814 = vadd.f32 %v794, %v806
          %v815 = vadd.f32 %v795, %v802
          %v816 = vadd.f32 %v796, %v806
          %vm817 = vcmp.ge.f32.partialorder %v809, 0.0
          %vm818 = vcmp.ge.f32.partialorder %v810, 0.0
          %vm819 = vcmp.ge.f32.partialorder %v811, 0.0
          %vm820 = vcmp.ge.f32.partialorder %v812, 0.0
          %vm821 = vcmp.ge.f32.partialorder %v813, 0.0
          %vm822 = vcmp.ge.f32.partialorder %v814, 0.0
          %vm823 = vcmp.ge.f32.partialorder %v815, 0.0
          %vm824 = vcmp.ge.f32.partialorder %v816, 0.0
          %v825 = vmul.f32 %v809, 0.1
          %v826 = vmul.f32 %v810, 0.1
          %v827 = vmul.f32 %v811, 0.1
          %v828 = vmul.f32 %v812, 0.1
          %v829 = vmul.f32 %v813, 0.1
          %v830 = vmul.f32 %v814, 0.1
          %v831 = vmul.f32 %v815, 0.1
          %v832 = vmul.f32 %v816, 0.1
          %v833 = vsel %vm817, %v809, %v825
          %v834 = vsel %vm818, %v810, %v826
          %v835 = vsel %vm819, %v811, %v827
          %v836 = vsel %vm820, %v812, %v828
          %v837 = vsel %vm821, %v813, %v829
          %v838 = vsel %vm822, %v814, %v830
          %v839 = vsel %vm823, %v815, %v831
          %v840 = vsel %vm824, %v816, %v832
          %841 = vst [vmem:[%s311] sm:$0xff] %v833
          %842 = vst [vmem:[%s311 + $0x8] sm:$0xff] %v834
          %843 = vst [vmem:[%s311 + $0x10] sm:$0xff] %v835
          %844 = vst [vmem:[%s311 + $0x18] sm:$0xff] %v836
          %845 = vst [vmem:[%s311 + $0x20] sm:$0xff] %v837
          %846 = vst [vmem:[%s311 + $0x28] sm:$0xff] %v838
          %847 = vst [vmem:[%s311 + $0x30] sm:$0xff] %v839
          %848 = vst [vmem:[%s311 + $0x38] sm:$0xff] %v840
        $region66: #{discriminator_sngan_forward.11} parent=53 // pred_fallthru
          _
        %s849 = smul.u32 4, %s19
        %s850 = smul.u32 2, %s20
        %p851 = scmp.lt.s32.totalorder %s849, 3
        %s852 = scalar_select %p851, %s849, 3
        %p853 = scmp.lt.s32.totalorder %s850, 1
        %s854 = scalar_select %p853, %s850, 1
        %s855 = smul.addr %s852, 2
        %s856 = sadd.s32 %s854, %s855
        %s857 = smul.addr %s856, 8
        %s858 = scalar_lea.vmem %s3, %s857
        // Predicated region
        $region67: #{discriminator_sngan_forward.11} parent=53 // pred_check
          %p859 = pneg %p135
        $region68: #{discriminator_sngan_forward.11} parent=53 // pred_check_branch
          %861 = sbr.rel (%p859) target = $region70
        $region69: #{discriminator_sngan_forward.11} parent=53 // pred_region
          %s862 = smul.u32 4, %s19
          %s863 = smul.u32 2, %s20
        $region70: #{discriminator_sngan_forward.11} parent=53 // pred_fallthru
          _
        // Predicated region
        $region71: #{discriminator_sngan_forward.11} parent=53 // pred_check
          %p864 = pneg %p135
        $region72: #{discriminator_sngan_forward.11} parent=53 // pred_check_branch
          %866 = sbr.rel (%p864) target = $region74
        $region73: #{discriminator_sngan_forward.11} parent=53 // pred_region
          %s867 = smul.u32 4, %s19
          %s868 = smul.u32 2, %s20
          %p869 = scmp.lt.s32.totalorder %s867, 3
          %s870 = scalar_select %p869, %s867, 3
          %p871 = scmp.lt.s32.totalorder %s868, 1
          %s872 = scalar_select %p871, %s868, 1
          %s873 = smul.addr %s870, 2
          %s874 = sadd.s32 %s872, %s873
          %s875 = smul.addr %s874, 8
          %s876 = scalar_lea.vmem %s3, %s875
        $region74: #{discriminator_sngan_forward.11} parent=53 // pred_fallthru
          _
      $region54: #{discriminator_sngan_forward.11} parent=5 // pred_fallthru
        _
      %p877 = scmp.le.s32.totalorder 2, %s9
      // Predicated region
      $region75: #{discriminator_sngan_forward.11} parent=5 // pred_check
        %p878 = pneg %p877
      $region76: #{discriminator_sngan_forward.11} parent=5 // pred_check_branch
        %880 = sbr.rel (%p878) target = $region78
      $region77: #{discriminator_sngan_forward.11} parent=5 // pred_region
        %s881 = ssub.s32 %s9, 2
      $region78: #{discriminator_sngan_forward.11} parent=5 // pred_fallthru
        _
    $region6: #{discriminator_sngan_forward.11} parent=1 // loop_footer
      %s13 = sadd.s32 1, %s9
    $region7: #{discriminator_sngan_forward.11} parent=1 // loop_footer_branch
      %8 = sbr.rel target = $region3
    $region8: #{discriminator_sngan_forward.11} parent=1 // loop_exit
      _

// kernel: discriminator_sngan_forward.12
$region0: #{discriminator_sngan_forward.12}
  #allocation0 [shape = 'u32[]', space=smem, size = 0x4, offset = 0x4, fixed_abs, tag = 'smem constant byte address 0x4 - core index']
  #allocation1 [shape = 'u32[144,128]{1,0:T(1,128)}', space=vmem, size = 0x12000, scoped, tag = 'internal scratch']
  %s0 = inlined_call_operand.vmem [shape: bf16[16,4096], index: 0, kind: input, shape index: {}]
  %s1 = inlined_call_operand.vmem [shape: bf16[4096,512], index: 1, kind: input, shape index: {}]
  %s2 = inlined_call_operand.vmem [shape: f32[1,512], index: 2, kind: input, shape index: {}]
  %s3 = inlined_call_operand.vmem [shape: f32[16,512], index: 3, kind: output, shape index: {}]
  %s4 = sld [smem:[#allocation0]]
  $region133: #{discriminator_sngan_forward.12} parent=0
    _
  %s6 = ssub.s32 1, %s4
  %s7 = scalar_select 0, %s6, %s4
  $region1: #{discriminator_sngan_forward.12} parent=0
    #allocation2 [shape = 'u8[32768]{0}', space=vmem, size = 0x8000, scoped, tag = 'input window, operand 0']
    #allocation3 [shape = 'u8[524288]{0}', space=vmem, size = 0x80000, scoped, tag = 'input window, operand 1']
    #allocation4 [shape = 'u8[32768]{0}', space=vmem, size = 0x8000, scoped, tag = 'output window, operand 0']
    loop: start=0, step=1, limit=18
    $region2: #{discriminator_sngan_forward.12} parent=1 // loop_pre_header
      _
    $region3: #{discriminator_sngan_forward.12} parent=1 // loop_header
      %s9 = sphi 0, %s13
      %p10 = scmp.ge.s32.totalorder %s9, 18
      %s16 = sphi 0, %s35
      %s17 = sphi 0, %s31
      %s18 = sphi 0, %s27
      %s19 = sphi 0, %s16
      %s20 = sphi 0, %s17
      %s21 = sphi 0, %s18
      %s22 = sphi 0, %s19
      %s23 = sphi 0, %s20
      %s24 = sphi 0, %s21
      %s40 = sphi 0, %s42
      %s43 = sphi 0, %s40
      %s44 = sphi 0, %s43
      %s60 = sphi 0, %s44
      %s68 = sphi 0, %s70
      %s71 = sphi 0, %s68
      %s72 = sphi 0, %s71
      %s88 = sphi 0, %s72
      %s94 = sphi 0, %s96
      %s97 = sphi 0, %s94
      %s98 = sphi 0, %s97
      %s114 = sphi 0, %s98
      %s122 = sphi 0, %s124
      %s125 = sphi 0, %s122
      %s126 = sphi 0, %s125
      %s142 = sphi 0, %s126
    $region4: #{discriminator_sngan_forward.12} parent=1 // loop_header_branch
      %12 = sbr.rel (%p10) target = $region8
    $region5: #{discriminator_sngan_forward.12} parent=1 // loop_body
      %s14 = ssub.s32 %s9, 1
      %s15 = ssub.s32 %s9, 2
      %s25 = sadd.s32 1, %s18
      %p26 = scmp.ge.s32.totalorder %s25, 8
      %s27 = scalar_select %p26, 0, %s25
      %s28 = sadd.s32 1, %s17
      %s29 = scalar_select %p26, %s28, %s17
      %p30 = scmp.ge.s32.totalorder %s29, 2
      %s31 = scalar_select %p30, 0, %s29
      %s32 = sadd.s32 1, %s16
      %s33 = scalar_select %p30, %s32, %s16
      %p34 = scmp.ge.s32.totalorder %s33, 1
      %s35 = scalar_select %p34, 0, %s33
      %s36 = ssub.s32 %s16, %s35
      %s37 = ssub.s32 %s18, %s27
      %s38 = sor.u32 %s36, %s37
      %p39 = scmp.eq.s32.totalorder %s38, 0
      %s41 = sadd.s32 %s40, 1
      %s42 = scalar_select %p39, %s40, %s41
      %p45 = pneg %p39
      %p46 = scmp.eq.s32.totalorder %s9, 15
      %p47 = por %p45, %p46
      %p48 = scmp.ne.s32.totalorder %s40, %s43
      %p49 = scmp.eq.s32.totalorder %s9, 0
      %p50 = por %p48, %p49
      %p51 = scmp.ne.s32.totalorder %s40, %s43
      %p52 = scmp.eq.s32.totalorder %s14, 15
      %p53 = por %p51, %p52
      %p54 = scmp.ne.s32.totalorder %s43, %s44
      %p55 = scmp.eq.s32.totalorder %s14, 0
      %p56 = por %p54, %p55
      %p57 = scmp.ne.s32.totalorder %s43, %s44
      %p58 = scmp.eq.s32.totalorder %s15, 15
      %p59 = por %p57, %p58
      %p61 = scmp.ne.s32.totalorder %s44, %s60
      %p62 = scmp.eq.s32.totalorder %s15, 0
      %p63 = por %p61, %p62
      %s64 = ssub.s32 %s18, %s27
      %s65 = ssub.s32 %s17, %s31
      %s66 = sor.u32 %s64, %s65
      %p67 = scmp.eq.s32.totalorder %s66, 0
      %s69 = sadd.s32 %s68, 1
      %s70 = scalar_select %p67, %s68, %s69
      %p73 = pneg %p67
      %p74 = scmp.eq.s32.totalorder %s9, 15
      %p75 = por %p73, %p74
      %p76 = scmp.ne.s32.totalorder %s68, %s71
      %p77 = scmp.eq.s32.totalorder %s9, 0
      %p78 = por %p76, %p77
      %p79 = scmp.ne.s32.totalorder %s68, %s71
      %p80 = scmp.eq.s32.totalorder %s14, 15
      %p81 = por %p79, %p80
      %p82 = scmp.ne.s32.totalorder %s71, %s72
      %p83 = scmp.eq.s32.totalorder %s14, 0
      %p84 = por %p82, %p83
      %p85 = scmp.ne.s32.totalorder %s71, %s72
      %p86 = scmp.eq.s32.totalorder %s15, 15
      %p87 = por %p85, %p86
      %p89 = scmp.ne.s32.totalorder %s72, %s88
      %p90 = scmp.eq.s32.totalorder %s15, 0
      %p91 = por %p89, %p90
      %s92 = ssub.s32 %s17, %s31
      %p93 = scmp.eq.s32.totalorder %s92, 0
      %s95 = sadd.s32 %s94, 1
      %s96 = scalar_select %p93, %s94, %s95
      %p99 = pneg %p93
      %p100 = scmp.eq.s32.totalorder %s9, 15
      %p101 = por %p99, %p100
      %p102 = scmp.ne.s32.totalorder %s94, %s97
      %p103 = scmp.eq.s32.totalorder %s9, 0
      %p104 = por %p102, %p103
      %p105 = scmp.ne.s32.totalorder %s94, %s97
      %p106 = scmp.eq.s32.totalorder %s14, 15
      %p107 = por %p105, %p106
      %p108 = scmp.ne.s32.totalorder %s97, %s98
      %p109 = scmp.eq.s32.totalorder %s14, 0
      %p110 = por %p108, %p109
      %p111 = scmp.ne.s32.totalorder %s97, %s98
      %p112 = scmp.eq.s32.totalorder %s15, 15
      %p113 = por %p111, %p112
      %p115 = scmp.ne.s32.totalorder %s98, %s114
      %p116 = scmp.eq.s32.totalorder %s15, 0
      %p117 = por %p115, %p116
      %s118 = ssub.s32 %s16, %s35
      %s119 = ssub.s32 %s17, %s31
      %s120 = sor.u32 %s118, %s119
      %p121 = scmp.eq.s32.totalorder %s120, 0
      %s123 = sadd.s32 %s122, 1
      %s124 = scalar_select %p121, %s122, %s123
      %p127 = pneg %p121
      %p128 = scmp.eq.s32.totalorder %s9, 15
      %p129 = por %p127, %p128
      %p130 = scmp.ne.s32.totalorder %s122, %s125
      %p131 = scmp.eq.s32.totalorder %s9, 0
      %p132 = por %p130, %p131
      %p133 = scmp.ne.s32.totalorder %s122, %s125
      %p134 = scmp.eq.s32.totalorder %s14, 15
      %p135 = por %p133, %p134
      %p136 = scmp.ne.s32.totalorder %s125, %s126
      %p137 = scmp.eq.s32.totalorder %s14, 0
      %p138 = por %p136, %p137
      %p139 = scmp.ne.s32.totalorder %s125, %s126
      %p140 = scmp.eq.s32.totalorder %s15, 15
      %p141 = por %p139, %p140
      %p143 = scmp.ne.s32.totalorder %s126, %s142
      %p144 = scmp.eq.s32.totalorder %s15, 0
      %p145 = por %p143, %p144
      %p146 = scmp.le.s32.totalorder 1, %s9
      %p147 = scmp.lt.s32.totalorder %s9, 17
      %p148 = pnand %p146, %p147
      %p149 = pneg %p148
      // Predicated region
      $region9: #{discriminator_sngan_forward.12} parent=5 // pred_check
        _
      $region10: #{discriminator_sngan_forward.12} parent=5 // pred_check_branch
        %151 = sbr.rel (%p148) target = $region12
      $region11: #{discriminator_sngan_forward.12} parent=5 // pred_region
        %s152 = ssub.s32 %s9, 1
      $region12: #{discriminator_sngan_forward.12} parent=5 // pred_fallthru
        _
      %p153 = scmp.lt.s32.totalorder %s9, 16
      // Predicated region
      $region13: #{discriminator_sngan_forward.12} parent=5 // pred_check
        %p154 = pneg %p153
      $region14: #{discriminator_sngan_forward.12} parent=5 // pred_check_branch
        %156 = sbr.rel (%p154) target = $region16
      $region15: #{discriminator_sngan_forward.12} parent=5 // pred_region
        // Predicated region
        $region17: #{discriminator_sngan_forward.12} parent=15 // pred_check
          %p157 = pneg %p50
        $region18: #{discriminator_sngan_forward.12} parent=15 // pred_check_branch
          %159 = sbr.rel (%p157) target = $region20
        $region19: #{discriminator_sngan_forward.12} parent=15 // pred_region
          %s160 = sand.u32 %s40, 1
          %s161 = sand.u32 %s40, 1
          %s162 = smul.addr %s161, 32
          %s163 = scalar_lea.vmem [#allocation2], %s162
          %s164 = smul.u32 2, %s16
          %s165 = smul.u32 4, %s18
          %s166 = smul.addr %s164, 32
          %s167 = sadd.s32 %s165, %s166
          %s168 = smul.addr %s167, 4
          %s169 = scalar_lea.vmem %s0, %s168
          // Predicated region
          $region21: #{discriminator_sngan_forward.12} parent=19 // pred_check
            _
          $region22: #{discriminator_sngan_forward.12} parent=19 // pred_check_branch
            %171 = sbr.rel (0) target = $region24
          $region23: #{discriminator_sngan_forward.12} parent=19 // pred_region
            // Predicated region
            $region25: #{discriminator_sngan_forward.12} parent=23 // pred_check
              _
            $region26: #{discriminator_sngan_forward.12} parent=23 // pred_check_branch
              %173 = sbr.rel (0) target = $region28
            $region27: #{discriminator_sngan_forward.12} parent=23 // pred_region
              loop: start=0, step=1, limit=1
              $region29: #{discriminator_sngan_forward.12} parent=27 // loop_pre_header
                _
              $region30: #{discriminator_sngan_forward.12} parent=27 // loop_header
                %s175 = sphi 0, %s179
                %p176 = scmp.ge.s32.totalorder %s175, 1
                %s180 = sphi %s169, %s169
                %s181 = sphi %s163, %s163
              $region31: #{discriminator_sngan_forward.12} parent=27 // loop_header_branch
                %178 = sbr.rel (%p176) target = $region35
              $region32: #{discriminator_sngan_forward.12} parent=27 // loop_body
                %v182 = vld [vmem:[%s180] sm:$0xff]
                %183 = vst [vmem:[%s181] sm:$0xff] %v182
                %v184 = vld [vmem:[%s180 + $0x8] sm:$0xff]
                %185 = vst [vmem:[%s181 + $0x8] sm:$0xff] %v184
                %v186 = vld [vmem:[%s180 + $0x80] sm:$0xff]
                %187 = vst [vmem:[%s181 + $0x10] sm:$0xff] %v186
                %v188 = vld [vmem:[%s180 + $0x88] sm:$0xff]
                %189 = vst [vmem:[%s181 + $0x18] sm:$0xff] %v188
              $region33: #{discriminator_sngan_forward.12} parent=27 // loop_footer
                %s179 = sadd.s32 1, %s175
              $region34: #{discriminator_sngan_forward.12} parent=27 // loop_footer_branch
                %174 = sbr.rel target = $region30
              $region35: #{discriminator_sngan_forward.12} parent=27 // loop_exit
                _
            $region28: #{discriminator_sngan_forward.12} parent=23 // pred_fallthru
              _
            // Predicated region
            $region36: #{discriminator_sngan_forward.12} parent=23 // pred_check
              _
            $region37: #{discriminator_sngan_forward.12} parent=23 // pred_check_branch
              %191 = sbr.rel target = $region39
            $region38: #{discriminator_sngan_forward.12} parent=23 // pred_region
              _
            $region39: #{discriminator_sngan_forward.12} parent=23 // pred_fallthru
              _
          $region24: #{discriminator_sngan_forward.12} parent=19 // pred_fallthru
            _
          %192 = vnop
        $region20: #{discriminator_sngan_forward.12} parent=15 // pred_fallthru
          _
        // Predicated region
        $region40: #{discriminator_sngan_forward.12} parent=15 // pred_check
          %p193 = pneg %p78
        $region41: #{discriminator_sngan_forward.12} parent=15 // pred_check_branch
          %195 = sbr.rel (%p193) target = $region43
        $region42: #{discriminator_sngan_forward.12} parent=15 // pred_region
          %s196 = sand.u32 %s68, 1
          %s197 = sand.u32 %s68, 1
          %s198 = smul.addr %s197, 512
          %s199 = scalar_lea.vmem [#allocation3], %s198
          %s200 = smul.u32 64, %s18
          %s201 = smul.u32 2, %s17
          %s202 = smul.addr %s200, 4
          %s203 = sadd.s32 %s201, %s202
          %s204 = smul.addr %s203, 4
          %s205 = scalar_lea.vmem %s1, %s204
          // Predicated region
          $region44: #{discriminator_sngan_forward.12} parent=42 // pred_check
            _
          $region45: #{discriminator_sngan_forward.12} parent=42 // pred_check_branch
            %207 = sbr.rel (0) target = $region47
          $region46: #{discriminator_sngan_forward.12} parent=42 // pred_region
            // Predicated region
            $region48: #{discriminator_sngan_forward.12} parent=46 // pred_check
              _
            $region49: #{discriminator_sngan_forward.12} parent=46 // pred_check_branch
              %209 = sbr.rel (0) target = $region51
            $region50: #{discriminator_sngan_forward.12} parent=46 // pred_region
              // Predicated region
              $region63: #{discriminator_sngan_forward.12} parent=50 // pred_check
                _
              $region64: #{discriminator_sngan_forward.12} parent=50 // pred_check_branch
                %350 = sbr.rel (0) target = $region66
              $region65: #{discriminator_sngan_forward.12} parent=50 // pred_region
                loop: start=0, step=1, limit=1
                $region67: #{discriminator_sngan_forward.12} parent=65 // loop_pre_header
                  _
                $region68: #{discriminator_sngan_forward.12} parent=65 // loop_header
                  %s352 = sphi 0, %s356
                  %p353 = scmp.ge.s32.totalorder %s352, 1
                  %s357 = sphi %s205, %s205
                  %s358 = sphi %s199, %s199
                $region69: #{discriminator_sngan_forward.12} parent=65 // loop_header_branch
                  %355 = sbr.rel (%p353) target = $region73
                $region70: #{discriminator_sngan_forward.12} parent=65 // loop_body
                  %v359 = vld [vmem:[%s357] sm:$0xff]
                  %360 = vst [vmem:[%s358] sm:$0xff] %v359
                  %v361 = vld [vmem:[%s357 + $0x10] sm:$0xff]
                  %362 = vst [vmem:[%s358 + $0x8] sm:$0xff] %v361
                  %v363 = vld [vmem:[%s357 + $0x20] sm:$0xff]
                  %364 = vst [vmem:[%s358 + $0x10] sm:$0xff] %v363
                  %v365 = vld [vmem:[%s357 + $0x30] sm:$0xff]
                  %366 = vst [vmem:[%s358 + $0x18] sm:$0xff] %v365
                  %v367 = vld [vmem:[%s357 + $0x40] sm:$0xff]
                  %368 = vst [vmem:[%s358 + $0x20] sm:$0xff] %v367
                  %v369 = vld [vmem:[%s357 + $0x50] sm:$0xff]
                  %370 = vst [vmem:[%s358 + $0x28] sm:$0xff] %v369
                  %v371 = vld [vmem:[%s357 + $0x60] sm:$0xff]
                  %372 = vst [vmem:[%s358 + $0x30] sm:$0xff] %v371
                  %v373 = vld [vmem:[%s357 + $0x70] sm:$0xff]
                  %374 = vst [vmem:[%s358 + $0x38] sm:$0xff] %v373
                  %v375 = vld [vmem:[%s357 + $0x80] sm:$0xff]
                  %376 = vst [vmem:[%s358 + $0x40] sm:$0xff] %v375
                  %v377 = vld [vmem:[%s357 + $0x90] sm:$0xff]
                  %378 = vst [vmem:[%s358 + $0x48] sm:$0xff] %v377
                  %v379 = vld [vmem:[%s357 + $0xa0] sm:$0xff]
                  %380 = vst [vmem:[%s358 + $0x50] sm:$0xff] %v379
                  %v381 = vld [vmem:[%s357 + $0xb0] sm:$0xff]
                  %382 = vst [vmem:[%s358 + $0x58] sm:$0xff] %v381
                  %v383 = vld [vmem:[%s357 + $0xc0] sm:$0xff]
                  %384 = vst [vmem:[%s358 + $0x60] sm:$0xff] %v383
                  %v385 = vld [vmem:[%s357 + $0xd0] sm:$0xff]
                  %386 = vst [vmem:[%s358 + $0x68] sm:$0xff] %v385
                  %v387 = vld [vmem:[%s357 + $0xe0] sm:$0xff]
                  %388 = vst [vmem:[%s358 + $0x70] sm:$0xff] %v387
                  %v389 = vld [vmem:[%s357 + $0xf0] sm:$0xff]
                  %390 = vst [vmem:[%s358 + $0x78] sm:$0xff] %v389
                  %v391 = vld [vmem:[%s357 + $0x100] sm:$0xff]
                  %392 = vst [vmem:[%s358 + $0x80] sm:$0xff] %v391
                  %v393 = vld [vmem:[%s357 + $0x110] sm:$0xff]
                  %394 = vst [vmem:[%s358 + $0x88] sm:$0xff] %v393
                  %v395 = vld [vmem:[%s357 + $0x120] sm:$0xff]
                  %396 = vst [vmem:[%s358 + $0x90] sm:$0xff] %v395
                  %v397 = vld [vmem:[%s357 + $0x130] sm:$0xff]
                  %398 = vst [vmem:[%s358 + $0x98] sm:$0xff] %v397
                  %v399 = vld [vmem:[%s357 + $0x140] sm:$0xff]
                  %400 = vst [vmem:[%s358 + $0xa0] sm:$0xff] %v399
                  %v401 = vld [vmem:[%s357 + $0x150] sm:$0xff]
                  %402 = vst [vmem:[%s358 + $0xa8] sm:$0xff] %v401
                  %v403 = vld [vmem:[%s357 + $0x160] sm:$0xff]
                  %404 = vst [vmem:[%s358 + $0xb0] sm:$0xff] %v403
                  %v405 = vld [vmem:[%s357 + $0x170] sm:$0xff]
                  %406 = vst [vmem:[%s358 + $0xb8] sm:$0xff] %v405
                  %v407 = vld [vmem:[%s357 + $0x180] sm:$0xff]
                  %408 = vst [vmem:[%s358 + $0xc0] sm:$0xff] %v407
                  %v409 = vld [vmem:[%s357 + $0x190] sm:$0xff]
                  %410 = vst [vmem:[%s358 + $0xc8] sm:$0xff] %v409
                  %v411 = vld [vmem:[%s357 + $0x1a0] sm:$0xff]
                  %412 = vst [vmem:[%s358 + $0xd0] sm:$0xff] %v411
                  %v413 = vld [vmem:[%s357 + $0x1b0] sm:$0xff]
                  %414 = vst [vmem:[%s358 + $0xd8] sm:$0xff] %v413
                  %v415 = vld [vmem:[%s357 + $0x1c0] sm:$0xff]
                  %416 = vst [vmem:[%s358 + $0xe0] sm:$0xff] %v415
                  %v417 = vld [vmem:[%s357 + $0x1d0] sm:$0xff]
                  %418 = vst [vmem:[%s358 + $0xe8] sm:$0xff] %v417
                  %v419 = vld [vmem:[%s357 + $0x1e0] sm:$0xff]
                  %420 = vst [vmem:[%s358 + $0xf0] sm:$0xff] %v419
                  %v421 = vld [vmem:[%s357 + $0x1f0] sm:$0xff]
                  %422 = vst [vmem:[%s358 + $0xf8] sm:$0xff] %v421
                  %v423 = vld [vmem:[%s357 + $0x200] sm:$0xff]
                  %424 = vst [vmem:[%s358 + $0x100] sm:$0xff] %v423
                  %v425 = vld [vmem:[%s357 + $0x210] sm:$0xff]
                  %426 = vst [vmem:[%s358 + $0x108] sm:$0xff] %v425
                  %v427 = vld [vmem:[%s357 + $0x220] sm:$0xff]
                  %428 = vst [vmem:[%s358 + $0x110] sm:$0xff] %v427
                  %v429 = vld [vmem:[%s357 + $0x230] sm:$0xff]
                  %430 = vst [vmem:[%s358 + $0x118] sm:$0xff] %v429
                  %v431 = vld [vmem:[%s357 + $0x240] sm:$0xff]
                  %432 = vst [vmem:[%s358 + $0x120] sm:$0xff] %v431
                  %v433 = vld [vmem:[%s357 + $0x250] sm:$0xff]
                  %434 = vst [vmem:[%s358 + $0x128] sm:$0xff] %v433
                  %v435 = vld [vmem:[%s357 + $0x260] sm:$0xff]
                  %436 = vst [vmem:[%s358 + $0x130] sm:$0xff] %v435
                  %v437 = vld [vmem:[%s357 + $0x270] sm:$0xff]
                  %438 = vst [vmem:[%s358 + $0x138] sm:$0xff] %v437
                  %v439 = vld [vmem:[%s357 + $0x280] sm:$0xff]
                  %440 = vst [vmem:[%s358 + $0x140] sm:$0xff] %v439
                  %v441 = vld [vmem:[%s357 + $0x290] sm:$0xff]
                  %442 = vst [vmem:[%s358 + $0x148] sm:$0xff] %v441
                  %v443 = vld [vmem:[%s357 + $0x2a0] sm:$0xff]
                  %444 = vst [vmem:[%s358 + $0x150] sm:$0xff] %v443
                  %v445 = vld [vmem:[%s357 + $0x2b0] sm:$0xff]
                  %446 = vst [vmem:[%s358 + $0x158] sm:$0xff] %v445
                  %v447 = vld [vmem:[%s357 + $0x2c0] sm:$0xff]
                  %448 = vst [vmem:[%s358 + $0x160] sm:$0xff] %v447
                  %v449 = vld [vmem:[%s357 + $0x2d0] sm:$0xff]
                  %450 = vst [vmem:[%s358 + $0x168] sm:$0xff] %v449
                  %v451 = vld [vmem:[%s357 + $0x2e0] sm:$0xff]
                  %452 = vst [vmem:[%s358 + $0x170] sm:$0xff] %v451
                  %v453 = vld [vmem:[%s357 + $0x2f0] sm:$0xff]
                  %454 = vst [vmem:[%s358 + $0x178] sm:$0xff] %v453
                  %v455 = vld [vmem:[%s357 + $0x300] sm:$0xff]
                  %456 = vst [vmem:[%s358 + $0x180] sm:$0xff] %v455
                  %v457 = vld [vmem:[%s357 + $0x310] sm:$0xff]
                  %458 = vst [vmem:[%s358 + $0x188] sm:$0xff] %v457
                  %v459 = vld [vmem:[%s357 + $0x320] sm:$0xff]
                  %460 = vst [vmem:[%s358 + $0x190] sm:$0xff] %v459
                  %v461 = vld [vmem:[%s357 + $0x330] sm:$0xff]
                  %462 = vst [vmem:[%s358 + $0x198] sm:$0xff] %v461
                  %v463 = vld [vmem:[%s357 + $0x340] sm:$0xff]
                  %464 = vst [vmem:[%s358 + $0x1a0] sm:$0xff] %v463
                  %v465 = vld [vmem:[%s357 + $0x350] sm:$0xff]
                  %466 = vst [vmem:[%s358 + $0x1a8] sm:$0xff] %v465
                  %v467 = vld [vmem:[%s357 + $0x360] sm:$0xff]
                  %468 = vst [vmem:[%s358 + $0x1b0] sm:$0xff] %v467
                  %v469 = vld [vmem:[%s357 + $0x370] sm:$0xff]
                  %470 = vst [vmem:[%s358 + $0x1b8] sm:$0xff] %v469
                  %v471 = vld [vmem:[%s357 + $0x380] sm:$0xff]
                  %472 = vst [vmem:[%s358 + $0x1c0] sm:$0xff] %v471
                  %v473 = vld [vmem:[%s357 + $0x390] sm:$0xff]
                  %474 = vst [vmem:[%s358 + $0x1c8] sm:$0xff] %v473
                  %v475 = vld [vmem:[%s357 + $0x3a0] sm:$0xff]
                  %476 = vst [vmem:[%s358 + $0x1d0] sm:$0xff] %v475
                  %v477 = vld [vmem:[%s357 + $0x3b0] sm:$0xff]
                  %478 = vst [vmem:[%s358 + $0x1d8] sm:$0xff] %v477
                  %v479 = vld [vmem:[%s357 + $0x3c0] sm:$0xff]
                  %480 = vst [vmem:[%s358 + $0x1e0] sm:$0xff] %v479
                  %v481 = vld [vmem:[%s357 + $0x3d0] sm:$0xff]
                  %482 = vst [vmem:[%s358 + $0x1e8] sm:$0xff] %v481
                  %v483 = vld [vmem:[%s357 + $0x3e0] sm:$0xff]
                  %484 = vst [vmem:[%s358 + $0x1f0] sm:$0xff] %v483
                  %v485 = vld [vmem:[%s357 + $0x3f0] sm:$0xff]
                  %486 = vst [vmem:[%s358 + $0x1f8] sm:$0xff] %v485
                $region71: #{discriminator_sngan_forward.12} parent=65 // loop_footer
                  %s356 = sadd.s32 1, %s352
                $region72: #{discriminator_sngan_forward.12} parent=65 // loop_footer_branch
                  %351 = sbr.rel target = $region68
                $region73: #{discriminator_sngan_forward.12} parent=65 // loop_exit
                  _
              $region66: #{discriminator_sngan_forward.12} parent=50 // pred_fallthru
                _
              // Predicated region
              $region74: #{discriminator_sngan_forward.12} parent=50 // pred_check
                _
              $region75: #{discriminator_sngan_forward.12} parent=50 // pred_check_branch
                %488 = sbr.rel target = $region77
              $region76: #{discriminator_sngan_forward.12} parent=50 // pred_region
                _
              $region77: #{discriminator_sngan_forward.12} parent=50 // pred_fallthru
                _
            $region51: #{discriminator_sngan_forward.12} parent=46 // pred_fallthru
              _
            // Predicated region
            $region52: #{discriminator_sngan_forward.12} parent=46 // pred_check
              _
            $region53: #{discriminator_sngan_forward.12} parent=46 // pred_check_branch
              %211 = sbr.rel target = $region55
            $region54: #{discriminator_sngan_forward.12} parent=46 // pred_region
              loop: start=0, step=1, limit=1
              $region56: #{discriminator_sngan_forward.12} parent=54 // loop_pre_header
                _
              $region57: #{discriminator_sngan_forward.12} parent=54 // loop_header
                %s214 = sphi 0, %s218
                %p215 = scmp.ge.s32.totalorder %s214, 1
                %s219 = sphi %s205, %s205
                %s220 = sphi %s199, %s199
              $region58: #{discriminator_sngan_forward.12} parent=54 // loop_header_branch
                %217 = sbr.rel (%p215) target = $region62
              $region59: #{discriminator_sngan_forward.12} parent=54 // loop_body
                %v221 = vld [vmem:[%s219] sm:$0xff]
                %222 = vst [vmem:[%s220] sm:$0xff] %v221
                %v223 = vld [vmem:[%s219 + $0x10] sm:$0xff]
                %224 = vst [vmem:[%s220 + $0x8] sm:$0xff] %v223
                %v225 = vld [vmem:[%s219 + $0x20] sm:$0xff]
                %226 = vst [vmem:[%s220 + $0x10] sm:$0xff] %v225
                %v227 = vld [vmem:[%s219 + $0x30] sm:$0xff]
                %228 = vst [vmem:[%s220 + $0x18] sm:$0xff] %v227
                %v229 = vld [vmem:[%s219 + $0x40] sm:$0xff]
                %230 = vst [vmem:[%s220 + $0x20] sm:$0xff] %v229
                %v231 = vld [vmem:[%s219 + $0x50] sm:$0xff]
                %232 = vst [vmem:[%s220 + $0x28] sm:$0xff] %v231
                %v233 = vld [vmem:[%s219 + $0x60] sm:$0xff]
                %234 = vst [vmem:[%s220 + $0x30] sm:$0xff] %v233
                %v235 = vld [vmem:[%s219 + $0x70] sm:$0xff]
                %236 = vst [vmem:[%s220 + $0x38] sm:$0xff] %v235
                %v237 = vld [vmem:[%s219 + $0x80] sm:$0xff]
                %238 = vst [vmem:[%s220 + $0x40] sm:$0xff] %v237
                %v239 = vld [vmem:[%s219 + $0x90] sm:$0xff]
                %240 = vst [vmem:[%s220 + $0x48] sm:$0xff] %v239
                %v241 = vld [vmem:[%s219 + $0xa0] sm:$0xff]
                %242 = vst [vmem:[%s220 + $0x50] sm:$0xff] %v241
                %v243 = vld [vmem:[%s219 + $0xb0] sm:$0xff]
                %244 = vst [vmem:[%s220 + $0x58] sm:$0xff] %v243
                %v245 = vld [vmem:[%s219 + $0xc0] sm:$0xff]
                %246 = vst [vmem:[%s220 + $0x60] sm:$0xff] %v245
                %v247 = vld [vmem:[%s219 + $0xd0] sm:$0xff]
                %248 = vst [vmem:[%s220 + $0x68] sm:$0xff] %v247
                %v249 = vld [vmem:[%s219 + $0xe0] sm:$0xff]
                %250 = vst [vmem:[%s220 + $0x70] sm:$0xff] %v249
                %v251 = vld [vmem:[%s219 + $0xf0] sm:$0xff]
                %252 = vst [vmem:[%s220 + $0x78] sm:$0xff] %v251
                %v253 = vld [vmem:[%s219 + $0x100] sm:$0xff]
                %254 = vst [vmem:[%s220 + $0x80] sm:$0xff] %v253
                %v255 = vld [vmem:[%s219 + $0x110] sm:$0xff]
                %256 = vst [vmem:[%s220 + $0x88] sm:$0xff] %v255
                %v257 = vld [vmem:[%s219 + $0x120] sm:$0xff]
                %258 = vst [vmem:[%s220 + $0x90] sm:$0xff] %v257
                %v259 = vld [vmem:[%s219 + $0x130] sm:$0xff]
                %260 = vst [vmem:[%s220 + $0x98] sm:$0xff] %v259
                %v261 = vld [vmem:[%s219 + $0x140] sm:$0xff]
                %262 = vst [vmem:[%s220 + $0xa0] sm:$0xff] %v261
                %v263 = vld [vmem:[%s219 + $0x150] sm:$0xff]
                %264 = vst [vmem:[%s220 + $0xa8] sm:$0xff] %v263
                %v265 = vld [vmem:[%s219 + $0x160] sm:$0xff]
                %266 = vst [vmem:[%s220 + $0xb0] sm:$0xff] %v265
                %v267 = vld [vmem:[%s219 + $0x170] sm:$0xff]
                %268 = vst [vmem:[%s220 + $0xb8] sm:$0xff] %v267
                %v269 = vld [vmem:[%s219 + $0x180] sm:$0xff]
                %270 = vst [vmem:[%s220 + $0xc0] sm:$0xff] %v269
                %v271 = vld [vmem:[%s219 + $0x190] sm:$0xff]
                %272 = vst [vmem:[%s220 + $0xc8] sm:$0xff] %v271
                %v273 = vld [vmem:[%s219 + $0x1a0] sm:$0xff]
                %274 = vst [vmem:[%s220 + $0xd0] sm:$0xff] %v273
                %v275 = vld [vmem:[%s219 + $0x1b0] sm:$0xff]
                %276 = vst [vmem:[%s220 + $0xd8] sm:$0xff] %v275
                %v277 = vld [vmem:[%s219 + $0x1c0] sm:$0xff]
                %278 = vst [vmem:[%s220 + $0xe0] sm:$0xff] %v277
                %v279 = vld [vmem:[%s219 + $0x1d0] sm:$0xff]
                %280 = vst [vmem:[%s220 + $0xe8] sm:$0xff] %v279
                %v281 = vld [vmem:[%s219 + $0x1e0] sm:$0xff]
                %282 = vst [vmem:[%s220 + $0xf0] sm:$0xff] %v281
                %v283 = vld [vmem:[%s219 + $0x1f0] sm:$0xff]
                %284 = vst [vmem:[%s220 + $0xf8] sm:$0xff] %v283
                %v285 = vld [vmem:[%s219 + $0x200] sm:$0xff]
                %286 = vst [vmem:[%s220 + $0x100] sm:$0xff] %v285
                %v287 = vld [vmem:[%s219 + $0x210] sm:$0xff]
                %288 = vst [vmem:[%s220 + $0x108] sm:$0xff] %v287
                %v289 = vld [vmem:[%s219 + $0x220] sm:$0xff]
                %290 = vst [vmem:[%s220 + $0x110] sm:$0xff] %v289
                %v291 = vld [vmem:[%s219 + $0x230] sm:$0xff]
                %292 = vst [vmem:[%s220 + $0x118] sm:$0xff] %v291
                %v293 = vld [vmem:[%s219 + $0x240] sm:$0xff]
                %294 = vst [vmem:[%s220 + $0x120] sm:$0xff] %v293
                %v295 = vld [vmem:[%s219 + $0x250] sm:$0xff]
                %296 = vst [vmem:[%s220 + $0x128] sm:$0xff] %v295
                %v297 = vld [vmem:[%s219 + $0x260] sm:$0xff]
                %298 = vst [vmem:[%s220 + $0x130] sm:$0xff] %v297
                %v299 = vld [vmem:[%s219 + $0x270] sm:$0xff]
                %300 = vst [vmem:[%s220 + $0x138] sm:$0xff] %v299
                %v301 = vld [vmem:[%s219 + $0x280] sm:$0xff]
                %302 = vst [vmem:[%s220 + $0x140] sm:$0xff] %v301
                %v303 = vld [vmem:[%s219 + $0x290] sm:$0xff]
                %304 = vst [vmem:[%s220 + $0x148] sm:$0xff] %v303
                %v305 = vld [vmem:[%s219 + $0x2a0] sm:$0xff]
                %306 = vst [vmem:[%s220 + $0x150] sm:$0xff] %v305
                %v307 = vld [vmem:[%s219 + $0x2b0] sm:$0xff]
                %308 = vst [vmem:[%s220 + $0x158] sm:$0xff] %v307
                %v309 = vld [vmem:[%s219 + $0x2c0] sm:$0xff]
                %310 = vst [vmem:[%s220 + $0x160] sm:$0xff] %v309
                %v311 = vld [vmem:[%s219 + $0x2d0] sm:$0xff]
                %312 = vst [vmem:[%s220 + $0x168] sm:$0xff] %v311
                %v313 = vld [vmem:[%s219 + $0x2e0] sm:$0xff]
                %314 = vst [vmem:[%s220 + $0x170] sm:$0xff] %v313
                %v315 = vld [vmem:[%s219 + $0x2f0] sm:$0xff]
                %316 = vst [vmem:[%s220 + $0x178] sm:$0xff] %v315
                %v317 = vld [vmem:[%s219 + $0x300] sm:$0xff]
                %318 = vst [vmem:[%s220 + $0x180] sm:$0xff] %v317
                %v319 = vld [vmem:[%s219 + $0x310] sm:$0xff]
                %320 = vst [vmem:[%s220 + $0x188] sm:$0xff] %v319
                %v321 = vld [vmem:[%s219 + $0x320] sm:$0xff]
                %322 = vst [vmem:[%s220 + $0x190] sm:$0xff] %v321
                %v323 = vld [vmem:[%s219 + $0x330] sm:$0xff]
                %324 = vst [vmem:[%s220 + $0x198] sm:$0xff] %v323
                %v325 = vld [vmem:[%s219 + $0x340] sm:$0xff]
                %326 = vst [vmem:[%s220 + $0x1a0] sm:$0xff] %v325
                %v327 = vld [vmem:[%s219 + $0x350] sm:$0xff]
                %328 = vst [vmem:[%s220 + $0x1a8] sm:$0xff] %v327
                %v329 = vld [vmem:[%s219 + $0x360] sm:$0xff]
                %330 = vst [vmem:[%s220 + $0x1b0] sm:$0xff] %v329
                %v331 = vld [vmem:[%s219 + $0x370] sm:$0xff]
                %332 = vst [vmem:[%s220 + $0x1b8] sm:$0xff] %v331
                %v333 = vld [vmem:[%s219 + $0x380] sm:$0xff]
                %334 = vst [vmem:[%s220 + $0x1c0] sm:$0xff] %v333
                %v335 = vld [vmem:[%s219 + $0x390] sm:$0xff]
                %336 = vst [vmem:[%s220 + $0x1c8] sm:$0xff] %v335
                %v337 = vld [vmem:[%s219 + $0x3a0] sm:$0xff]
                %338 = vst [vmem:[%s220 + $0x1d0] sm:$0xff] %v337
                %v339 = vld [vmem:[%s219 + $0x3b0] sm:$0xff]
                %340 = vst [vmem:[%s220 + $0x1d8] sm:$0xff] %v339
                %v341 = vld [vmem:[%s219 + $0x3c0] sm:$0xff]
                %342 = vst [vmem:[%s220 + $0x1e0] sm:$0xff] %v341
                %v343 = vld [vmem:[%s219 + $0x3d0] sm:$0xff]
                %344 = vst [vmem:[%s220 + $0x1e8] sm:$0xff] %v343
                %v345 = vld [vmem:[%s219 + $0x3e0] sm:$0xff]
                %346 = vst [vmem:[%s220 + $0x1f0] sm:$0xff] %v345
                %v347 = vld [vmem:[%s219 + $0x3f0] sm:$0xff]
                %348 = vst [vmem:[%s220 + $0x1f8] sm:$0xff] %v347
              $region60: #{discriminator_sngan_forward.12} parent=54 // loop_footer
                %s218 = sadd.s32 1, %s214
              $region61: #{discriminator_sngan_forward.12} parent=54 // loop_footer_branch
                %213 = sbr.rel target = $region57
              $region62: #{discriminator_sngan_forward.12} parent=54 // loop_exit
                _
            $region55: #{discriminator_sngan_forward.12} parent=46 // pred_fallthru
              _
          $region47: #{discriminator_sngan_forward.12} parent=42 // pred_fallthru
            _
          %489 = vnop
        $region43: #{discriminator_sngan_forward.12} parent=15 // pred_fallthru
          _
        // Predicated region
        $region78: #{discriminator_sngan_forward.12} parent=15 // pred_check
          %p490 = pneg %p104
        $region79: #{discriminator_sngan_forward.12} parent=15 // pred_check_branch
          %492 = sbr.rel (%p490) target = $region81
        $region80: #{discriminator_sngan_forward.12} parent=15 // pred_region
          %s493 = smul.u32 2, %s17
          %p494 = scmp.lt.s32.totalorder %s493, 3
          %s495 = scalar_select %p494, %s493, 3
          %s496 = scalar_lea.vmem %s2, %s495
          %s497 = smul.u32 2, %s17
        $region81: #{discriminator_sngan_forward.12} parent=15 // pred_fallthru
          _
      $region16: #{discriminator_sngan_forward.12} parent=5 // pred_fallthru
        _
      %p498 = scmp.le.s32.totalorder 1, %s9
      %p499 = scmp.lt.s32.totalorder %s9, 17
      %p500 = pnand %p498, %p499
      %p501 = pneg %p500
      // Predicated region
      $region82: #{discriminator_sngan_forward.12} parent=5 // pred_check
        _
      $region83: #{discriminator_sngan_forward.12} parent=5 // pred_check_branch
        %503 = sbr.rel (%p500) target = $region85
      $region84: #{discriminator_sngan_forward.12} parent=5 // pred_region
        %s504 = ssub.s32 %s9, 1
        %s505 = sand.u32 %s43, 1
        %s506 = sand.u32 %s43, 1
        %s507 = smul.addr %s506, 32
        %s508 = scalar_lea.vmem [#allocation2], %s507
        // Predicated region
        $region86: #{discriminator_sngan_forward.12} parent=84 // pred_check
          %p509 = pneg %p56
        $region87: #{discriminator_sngan_forward.12} parent=84 // pred_check_branch
          %511 = sbr.rel (%p509) target = $region89
        $region88: #{discriminator_sngan_forward.12} parent=84 // pred_region
          _
        $region89: #{discriminator_sngan_forward.12} parent=84 // pred_fallthru
          _
        %s512 = sand.u32 %s71, 1
        %s513 = sand.u32 %s71, 1
        %s514 = smul.addr %s513, 512
        %s515 = scalar_lea.vmem [#allocation3], %s514
        // Predicated region
        $region90: #{discriminator_sngan_forward.12} parent=84 // pred_check
          %p516 = pneg %p84
        $region91: #{discriminator_sngan_forward.12} parent=84 // pred_check_branch
          %518 = sbr.rel (%p516) target = $region93
        $region92: #{discriminator_sngan_forward.12} parent=84 // pred_region
          _
        $region93: #{discriminator_sngan_forward.12} parent=84 // pred_fallthru
          _
        %s519 = sand.u32 %s43, 1
        %s520 = sand.u32 %s43, 1
        %s521 = smul.addr %s520, 32
        %s522 = scalar_lea.vmem [#allocation2], %s521
        %p523 = pneg %p56
        %p524 = pneg %p53
        %s525 = sand.u32 %s71, 1
        %s526 = sand.u32 %s71, 1
        %s527 = smul.addr %s526, 512
        %s528 = scalar_lea.vmem [#allocation3], %s527
        %p529 = pneg %p84
        %p530 = pneg %p81
        %s531 = smul.u32 2, %s20
        %p532 = scmp.lt.s32.totalorder %s531, 3
        %s533 = scalar_select %p532, %s531, 3
        %s534 = scalar_lea.vmem %s2, %s533
        %p535 = pneg %p110
        %p536 = pneg %p107
        %p537 = pneg %p138
        %p538 = pneg %p135
        %s539 = sand.u32 %s125, 1
        %s540 = sand.u32 %s125, 1
        %s541 = smul.addr %s540, 32
        %s542 = scalar_lea.vmem [#allocation4], %s541
        %s543 = smul.u32 2, %s19
        %s544 = smul.u32 4, %s21
        %s545 = smul.u32 64, %s21
        %s546 = smul.u32 2, %s20
        %s547 = smul.u32 2, %s20
        %p548 = scmp.lt.s32.totalorder %s547, 3
        %s549 = scalar_select %p548, %s547, 3
        %s550 = scalar_lea.vmem %s2, %s549
        %s551 = smul.u32 2, %s20
        %s552 = smul.u32 2, %s19
        %s553 = smul.u32 2, %s20
        %p554 = scmp.eq.s32.totalorder %s21, 0
        // Predicated region
        $region94: #{discriminator_sngan_forward.12} parent=84 // pred_check
          %p555 = pneg %p554
        $region95: #{discriminator_sngan_forward.12} parent=84 // pred_check_branch
          %557 = sbr.rel (%p555) target = $region97
        $region96: #{discriminator_sngan_forward.12} parent=84 // pred_region
          %558 = vst [vmem:[%s542] sm:$0xff] 0.0
          %559 = vst [vmem:[%s542 + $0x8] sm:$0xff] 0.0
          %560 = vst [vmem:[%s542 + $0x10] sm:$0xff] 0.0
          %561 = vst [vmem:[%s542 + $0x18] sm:$0xff] 0.0
        $region97: #{discriminator_sngan_forward.12} parent=84 // pred_fallthru
          _
        %v562 = vld [vmem:[%s542] sm:$0xff]
        %v563 = vld [vmem:[%s542 + $0x8] sm:$0xff]
        %v564 = vld [vmem:[%s542 + $0x10] sm:$0xff]
        %v565 = vld [vmem:[%s542 + $0x18] sm:$0xff]
        %v566 = vld [vmem:[%s508] sm:$0xff]
        %v567 = vld [vmem:[%s508 + $0x8] sm:$0xff]
        %v568 = vld [vmem:[%s508 + $0x10] sm:$0xff]
        %v569 = vld [vmem:[%s508 + $0x18] sm:$0xff]
        %v570 = vld [vmem:[%s515] sm:$0xff]
        %v571 = vld [vmem:[%s515 + $0x8] sm:$0xff]
        %v572 = vld [vmem:[%s515 + $0x10] sm:$0xff]
        %v573 = vld [vmem:[%s515 + $0x18] sm:$0xff]
        %v574 = vld [vmem:[%s515 + $0x20] sm:$0xff]
        %v575 = vld [vmem:[%s515 + $0x28] sm:$0xff]
        %v576 = vld [vmem:[%s515 + $0x30] sm:$0xff]
        %v577 = vld [vmem:[%s515 + $0x38] sm:$0xff]
        %v578 = vld [vmem:[%s515 + $0x40] sm:$0xff]
        %v579 = vld [vmem:[%s515 + $0x48] sm:$0xff]
        %v580 = vld [vmem:[%s515 + $0x50] sm:$0xff]
        %v581 = vld [vmem:[%s515 + $0x58] sm:$0xff]
        %v582 = vld [vmem:[%s515 + $0x60] sm:$0xff]
        %v583 = vld [vmem:[%s515 + $0x68] sm:$0xff]
        %v584 = vld [vmem:[%s515 + $0x70] sm:$0xff]
        %v585 = vld [vmem:[%s515 + $0x78] sm:$0xff]
        %v586 = vld [vmem:[%s515 + $0x80] sm:$0xff]
        %v587 = vld [vmem:[%s515 + $0x88] sm:$0xff]
        %v588 = vld [vmem:[%s515 + $0x90] sm:$0xff]
        %v589 = vld [vmem:[%s515 + $0x98] sm:$0xff]
        %v590 = vld [vmem:[%s515 + $0xa0] sm:$0xff]
        %v591 = vld [vmem:[%s515 + $0xa8] sm:$0xff]
        %v592 = vld [vmem:[%s515 + $0xb0] sm:$0xff]
        %v593 = vld [vmem:[%s515 + $0xb8] sm:$0xff]
        %v594 = vld [vmem:[%s515 + $0xc0] sm:$0xff]
        %v595 = vld [vmem:[%s515 + $0xc8] sm:$0xff]
        %v596 = vld [vmem:[%s515 + $0xd0] sm:$0xff]
        %v597 = vld [vmem:[%s515 + $0xd8] sm:$0xff]
        %v598 = vld [vmem:[%s515 + $0xe0] sm:$0xff]
        %v599 = vld [vmem:[%s515 + $0xe8] sm:$0xff]
        %v600 = vld [vmem:[%s515 + $0xf0] sm:$0xff]
        %v601 = vld [vmem:[%s515 + $0xf8] sm:$0xff]
        %v602 = vld [vmem:[%s515 + $0x100] sm:$0xff]
        %v603 = vld [vmem:[%s515 + $0x108] sm:$0xff]
        %v604 = vld [vmem:[%s515 + $0x110] sm:$0xff]
        %v605 = vld [vmem:[%s515 + $0x118] sm:$0xff]
        %v606 = vld [vmem:[%s515 + $0x120] sm:$0xff]
        %v607 = vld [vmem:[%s515 + $0x128] sm:$0xff]
        %v608 = vld [vmem:[%s515 + $0x130] sm:$0xff]
        %v609 = vld [vmem:[%s515 + $0x138] sm:$0xff]
        %v610 = vld [vmem:[%s515 + $0x140] sm:$0xff]
        %v611 = vld [vmem:[%s515 + $0x148] sm:$0xff]
        %v612 = vld [vmem:[%s515 + $0x150] sm:$0xff]
        %v613 = vld [vmem:[%s515 + $0x158] sm:$0xff]
        %v614 = vld [vmem:[%s515 + $0x160] sm:$0xff]
        %v615 = vld [vmem:[%s515 + $0x168] sm:$0xff]
        %v616 = vld [vmem:[%s515 + $0x170] sm:$0xff]
        %v617 = vld [vmem:[%s515 + $0x178] sm:$0xff]
        %v618 = vld [vmem:[%s515 + $0x180] sm:$0xff]
        %v619 = vld [vmem:[%s515 + $0x188] sm:$0xff]
        %v620 = vld [vmem:[%s515 + $0x190] sm:$0xff]
        %v621 = vld [vmem:[%s515 + $0x198] sm:$0xff]
        %v622 = vld [vmem:[%s515 + $0x1a0] sm:$0xff]
        %v623 = vld [vmem:[%s515 + $0x1a8] sm:$0xff]
        %v624 = vld [vmem:[%s515 + $0x1b0] sm:$0xff]
        %v625 = vld [vmem:[%s515 + $0x1b8] sm:$0xff]
        %v626 = vld [vmem:[%s515 + $0x1c0] sm:$0xff]
        %v627 = vld [vmem:[%s515 + $0x1c8] sm:$0xff]
        %v628 = vld [vmem:[%s515 + $0x1d0] sm:$0xff]
        %v629 = vld [vmem:[%s515 + $0x1d8] sm:$0xff]
        %v630 = vld [vmem:[%s515 + $0x1e0] sm:$0xff]
        %v631 = vld [vmem:[%s515 + $0x1e8] sm:$0xff]
        %v632 = vld [vmem:[%s515 + $0x1f0] sm:$0xff]
        %v633 = vld [vmem:[%s515 + $0x1f8] sm:$0xff]
        %v638 = vunpack.c.l.b16 %v566
        %v639 = vunpack.c.h.b16 %v566
        %v640 = vunpack.c.l.b16 %v567
        %v641 = vunpack.c.h.b16 %v567
        %v642 = vunpack.c.l.b16 %v568
        %v643 = vunpack.c.h.b16 %v568
        %v644 = vunpack.c.l.b16 %v569
        %v645 = vunpack.c.h.b16 %v569
        %v646 = vpack.c.b16 %v642, %v638
        %v647 = vpack.c.b16 %v643, %v639
        %v648 = vpack.c.b16 %v644, %v640
        %v649 = vpack.c.b16 %v645, %v641
        %v718 = vunpack.c.l.b16 %v570
        %v719 = vunpack.c.h.b16 %v570
        %v720 = vunpack.c.l.b16 %v571
        %v721 = vunpack.c.h.b16 %v571
        %v722 = vunpack.c.l.b16 %v572
        %v723 = vunpack.c.h.b16 %v572
        %v724 = vunpack.c.l.b16 %v573
        %v725 = vunpack.c.h.b16 %v573
        %v726 = vunpack.c.l.b16 %v574
        %v727 = vunpack.c.h.b16 %v574
        %v728 = vunpack.c.l.b16 %v575
        %v729 = vunpack.c.h.b16 %v575
        %v730 = vunpack.c.l.b16 %v576
        %v731 = vunpack.c.h.b16 %v576
        %v732 = vunpack.c.l.b16 %v577
        %v733 = vunpack.c.h.b16 %v577
        %v734 = vunpack.c.l.b16 %v578
        %v735 = vunpack.c.h.b16 %v578
        %v736 = vunpack.c.l.b16 %v579
        %v737 = vunpack.c.h.b16 %v579
        %v738 = vunpack.c.l.b16 %v580
        %v739 = vunpack.c.h.b16 %v580
        %v740 = vunpack.c.l.b16 %v581
        %v741 = vunpack.c.h.b16 %v581
        %v742 = vunpack.c.l.b16 %v582
        %v743 = vunpack.c.h.b16 %v582
        %v744 = vunpack.c.l.b16 %v583
        %v745 = vunpack.c.h.b16 %v583
        %v746 = vunpack.c.l.b16 %v584
        %v747 = vunpack.c.h.b16 %v584
        %v748 = vunpack.c.l.b16 %v585
        %v749 = vunpack.c.h.b16 %v585
        %v750 = vunpack.c.l.b16 %v586
        %v751 = vunpack.c.h.b16 %v586
        %v752 = vunpack.c.l.b16 %v587
        %v753 = vunpack.c.h.b16 %v587
        %v754 = vunpack.c.l.b16 %v588
        %v755 = vunpack.c.h.b16 %v588
        %v756 = vunpack.c.l.b16 %v589
        %v757 = vunpack.c.h.b16 %v589
        %v758 = vunpack.c.l.b16 %v590
        %v759 = vunpack.c.h.b16 %v590
        %v760 = vunpack.c.l.b16 %v591
        %v761 = vunpack.c.h.b16 %v591
        %v762 = vunpack.c.l.b16 %v592
        %v763 = vunpack.c.h.b16 %v592
        %v764 = vunpack.c.l.b16 %v593
        %v765 = vunpack.c.h.b16 %v593
        %v766 = vunpack.c.l.b16 %v594
        %v767 = vunpack.c.h.b16 %v594
        %v768 = vunpack.c.l.b16 %v595
        %v769 = vunpack.c.h.b16 %v595
        %v770 = vunpack.c.l.b16 %v596
        %v771 = vunpack.c.h.b16 %v596
        %v772 = vunpack.c.l.b16 %v597
        %v773 = vunpack.c.h.b16 %v597
        %v774 = vunpack.c.l.b16 %v598
        %v775 = vunpack.c.h.b16 %v598
        %v776 = vunpack.c.l.b16 %v599
        %v777 = vunpack.c.h.b16 %v599
        %v778 = vunpack.c.l.b16 %v600
        %v779 = vunpack.c.h.b16 %v600
        %v780 = vunpack.c.l.b16 %v601
        %v781 = vunpack.c.h.b16 %v601
        %v782 = vunpack.c.l.b16 %v602
        %v783 = vunpack.c.h.b16 %v602
        %v784 = vunpack.c.l.b16 %v603
        %v785 = vunpack.c.h.b16 %v603
        %v786 = vunpack.c.l.b16 %v604
        %v787 = vunpack.c.h.b16 %v604
        %v788 = vunpack.c.l.b16 %v605
        %v789 = vunpack.c.h.b16 %v605
        %v790 = vunpack.c.l.b16 %v606
        %v791 = vunpack.c.h.b16 %v606
        %v792 = vunpack.c.l.b16 %v607
        %v793 = vunpack.c.h.b16 %v607
        %v794 = vunpack.c.l.b16 %v608
        %v795 = vunpack.c.h.b16 %v608
        %v796 = vunpack.c.l.b16 %v609
        %v797 = vunpack.c.h.b16 %v609
        %v798 = vunpack.c.l.b16 %v610
        %v799 = vunpack.c.h.b16 %v610
        %v800 = vunpack.c.l.b16 %v611
        %v801 = vunpack.c.h.b16 %v611
        %v802 = vunpack.c.l.b16 %v612
        %v803 = vunpack.c.h.b16 %v612
        %v804 = vunpack.c.l.b16 %v613
        %v805 = vunpack.c.h.b16 %v613
        %v806 = vunpack.c.l.b16 %v614
        %v807 = vunpack.c.h.b16 %v614
        %v808 = vunpack.c.l.b16 %v615
        %v809 = vunpack.c.h.b16 %v615
        %v810 = vunpack.c.l.b16 %v616
        %v811 = vunpack.c.h.b16 %v616
        %v812 = vunpack.c.l.b16 %v617
        %v813 = vunpack.c.h.b16 %v617
        %v814 = vunpack.c.l.b16 %v618
        %v815 = vunpack.c.h.b16 %v618
        %v816 = vunpack.c.l.b16 %v619
        %v817 = vunpack.c.h.b16 %v619
        %v818 = vunpack.c.l.b16 %v620
        %v819 = vunpack.c.h.b16 %v620
        %v820 = vunpack.c.l.b16 %v621
        %v821 = vunpack.c.h.b16 %v621
        %v822 = vunpack.c.l.b16 %v622
        %v823 = vunpack.c.h.b16 %v622
        %v824 = vunpack.c.l.b16 %v623
        %v825 = vunpack.c.h.b16 %v623
        %v826 = vunpack.c.l.b16 %v624
        %v827 = vunpack.c.h.b16 %v624
        %v828 = vunpack.c.l.b16 %v625
        %v829 = vunpack.c.h.b16 %v625
        %v830 = vunpack.c.l.b16 %v626
        %v831 = vunpack.c.h.b16 %v626
        %v832 = vunpack.c.l.b16 %v627
        %v833 = vunpack.c.h.b16 %v627
        %v834 = vunpack.c.l.b16 %v628
        %v835 = vunpack.c.h.b16 %v628
        %v836 = vunpack.c.l.b16 %v629
        %v837 = vunpack.c.h.b16 %v629
        %v838 = vunpack.c.l.b16 %v630
        %v839 = vunpack.c.h.b16 %v630
        %v840 = vunpack.c.l.b16 %v631
        %v841 = vunpack.c.h.b16 %v631
        %v842 = vunpack.c.l.b16 %v632
        %v843 = vunpack.c.h.b16 %v632
        %v844 = vunpack.c.l.b16 %v633
        %v845 = vunpack.c.h.b16 %v633
        %v846 = vpack.c.b16 %v720, %v718
        %v847 = vpack.c.b16 %v721, %v719
        %v848 = vpack.c.b16 %v724, %v722
        %v849 = vpack.c.b16 %v725, %v723
        %v850 = vpack.c.b16 %v728, %v726
        %v851 = vpack.c.b16 %v729, %v727
        %v852 = vpack.c.b16 %v732, %v730
        %v853 = vpack.c.b16 %v733, %v731
        %v854 = vpack.c.b16 %v736, %v734
        %v855 = vpack.c.b16 %v737, %v735
        %v856 = vpack.c.b16 %v740, %v738
        %v857 = vpack.c.b16 %v741, %v739
        %v858 = vpack.c.b16 %v744, %v742
        %v859 = vpack.c.b16 %v745, %v743
        %v860 = vpack.c.b16 %v748, %v746
        %v861 = vpack.c.b16 %v749, %v747
        %v862 = vpack.c.b16 %v752, %v750
        %v863 = vpack.c.b16 %v753, %v751
        %v864 = vpack.c.b16 %v756, %v754
        %v865 = vpack.c.b16 %v757, %v755
        %v866 = vpack.c.b16 %v760, %v758
        %v867 = vpack.c.b16 %v761, %v759
        %v868 = vpack.c.b16 %v764, %v762
        %v869 = vpack.c.b16 %v765, %v763
        %v870 = vpack.c.b16 %v768, %v766
        %v871 = vpack.c.b16 %v769, %v767
        %v872 = vpack.c.b16 %v772, %v770
        %v873 = vpack.c.b16 %v773, %v771
        %v874 = vpack.c.b16 %v776, %v774
        %v875 = vpack.c.b16 %v777, %v775
        %v876 = vpack.c.b16 %v780, %v778
        %v877 = vpack.c.b16 %v781, %v779
        %v878 = vpack.c.b16 %v784, %v782
        %v879 = vpack.c.b16 %v785, %v783
        %v880 = vpack.c.b16 %v788, %v786
        %v881 = vpack.c.b16 %v789, %v787
        %v882 = vpack.c.b16 %v792, %v790
        %v883 = vpack.c.b16 %v793, %v791
        %v884 = vpack.c.b16 %v796, %v794
        %v885 = vpack.c.b16 %v797, %v795
        %v886 = vpack.c.b16 %v800, %v798
        %v887 = vpack.c.b16 %v801, %v799
        %v888 = vpack.c.b16 %v804, %v802
        %v889 = vpack.c.b16 %v805, %v803
        %v890 = vpack.c.b16 %v808, %v806
        %v891 = vpack.c.b16 %v809, %v807
        %v892 = vpack.c.b16 %v812, %v810
        %v893 = vpack.c.b16 %v813, %v811
        %v894 = vpack.c.b16 %v816, %v814
        %v895 = vpack.c.b16 %v817, %v815
        %v896 = vpack.c.b16 %v820, %v818
        %v897 = vpack.c.b16 %v821, %v819
        %v898 = vpack.c.b16 %v824, %v822
        %v899 = vpack.c.b16 %v825, %v823
        %v900 = vpack.c.b16 %v828, %v826
        %v901 = vpack.c.b16 %v829, %v827
        %v902 = vpack.c.b16 %v832, %v830
        %v903 = vpack.c.b16 %v833, %v831
        %v904 = vpack.c.b16 %v836, %v834
        %v905 = vpack.c.b16 %v837, %v835
        %v906 = vpack.c.b16 %v840, %v838
        %v907 = vpack.c.b16 %v841, %v839
        %v908 = vpack.c.b16 %v844, %v842
        %v909 = vpack.c.b16 %v845, %v843
        %974 = vmatprep.subr.bf16.mxu0 %v847
        %975 = vmatpush1.bf16.msra.mxu0 %v846
        %976 = vmatprep.subr.bf16.mxu0 %v849
        %977 = vmatpush1.bf16.msra.mxu0 %v848
        %978 = vmatprep.subr.bf16.mxu0 %v851
        %979 = vmatpush1.bf16.msra.mxu0 %v850
        %980 = vmatprep.subr.bf16.mxu0 %v853
        %981 = vmatpush1.bf16.msra.mxu0 %v852
        %982 = vmatprep.subr.bf16.mxu0 %v855
        %983 = vmatpush1.bf16.msra.mxu0 %v854
        %984 = vmatprep.subr.bf16.mxu0 %v857
        %985 = vmatpush1.bf16.msra.mxu0 %v856
        %986 = vmatprep.subr.bf16.mxu0 %v859
        %987 = vmatpush1.bf16.msra.mxu0 %v858
        %988 = vmatprep.subr.bf16.mxu0 %v861
        %989 = vmatpush1.bf16.msra.mxu0 %v860
        %990 = vmatprep.subr.bf16.mxu0 %v863
        %991 = vmatpush1.bf16.msra.mxu0 %v862
        %992 = vmatprep.subr.bf16.mxu0 %v865
        %993 = vmatpush1.bf16.msra.mxu0 %v864
        %994 = vmatprep.subr.bf16.mxu0 %v867
        %995 = vmatpush1.bf16.msra.mxu0 %v866
        %996 = vmatprep.subr.bf16.mxu0 %v869
        %997 = vmatpush1.bf16.msra.mxu0 %v868
        %998 = vmatprep.subr.bf16.mxu0 %v871
        %999 = vmatpush1.bf16.msra.mxu0 %v870
        %1000 = vmatprep.subr.bf16.mxu0 %v873
        %1001 = vmatpush1.bf16.msra.mxu0 %v872
        %1002 = vmatprep.subr.bf16.mxu0 %v875
        %1003 = vmatpush1.bf16.msra.mxu0 %v874
        %1004 = vmatprep.subr.bf16.mxu0 %v877
        %1005 = vmatpush1.bf16.msra.mxu0 %v876
        %1006 = vmatprep.mubr.bf16.mxu0 %v647
        %1007 = vmatmul.mubr.bf16.gmra.mrb[0].mxu0 %v646
        %v1008 = vpop.f32.mrb[0].mxu0
        %v1009 = vadd.f32 0.0, %v1008
        %v1010 = vpop.f32.mrb[0].mxu0
        %v1011 = vadd.f32 0.0, %v1010
        %v1012 = vpop.f32.mrb[0].mxu0
        %v1013 = vadd.f32 0.0, %v1012
        %v1014 = vpop.f32.mrb[0].mxu0
        %v1015 = vadd.f32 0.0, %v1014
        %1016 = vdwg.mxu0
        %1017 = vmatprep.subr.bf16.mxu0 %v879
        %1018 = vmatpush1.bf16.msra.mxu0 %v878
        %1019 = vmatprep.subr.bf16.mxu0 %v881
        %1020 = vmatpush1.bf16.msra.mxu0 %v880
        %1021 = vmatprep.subr.bf16.mxu0 %v883
        %1022 = vmatpush1.bf16.msra.mxu0 %v882
        %1023 = vmatprep.subr.bf16.mxu0 %v885
        %1024 = vmatpush1.bf16.msra.mxu0 %v884
        %1025 = vmatprep.subr.bf16.mxu0 %v887
        %1026 = vmatpush1.bf16.msra.mxu0 %v886
        %1027 = vmatprep.subr.bf16.mxu0 %v889
        %1028 = vmatpush1.bf16.msra.mxu0 %v888
        %1029 = vmatprep.subr.bf16.mxu0 %v891
        %1030 = vmatpush1.bf16.msra.mxu0 %v890
        %1031 = vmatprep.subr.bf16.mxu0 %v893
        %1032 = vmatpush1.bf16.msra.mxu0 %v892
        %1033 = vmatprep.subr.bf16.mxu0 %v895
        %1034 = vmatpush1.bf16.msra.mxu0 %v894
        %1035 = vmatprep.subr.bf16.mxu0 %v897
        %1036 = vmatpush1.bf16.msra.mxu0 %v896
        %1037 = vmatprep.subr.bf16.mxu0 %v899
        %1038 = vmatpush1.bf16.msra.mxu0 %v898
        %1039 = vmatprep.subr.bf16.mxu0 %v901
        %1040 = vmatpush1.bf16.msra.mxu0 %v900
        %1041 = vmatprep.subr.bf16.mxu0 %v903
        %1042 = vmatpush1.bf16.msra.mxu0 %v902
        %1043 = vmatprep.subr.bf16.mxu0 %v905
        %1044 = vmatpush1.bf16.msra.mxu0 %v904
        %1045 = vmatprep.subr.bf16.mxu0 %v907
        %1046 = vmatpush1.bf16.msra.mxu0 %v906
        %1047 = vmatprep.subr.bf16.mxu0 %v909
        %1048 = vmatpush1.bf16.msra.mxu0 %v908
        %1049 = vmatprep.mubr.bf16.mxu0 %v649
        %1050 = vmatmul.mubr.bf16.gmra.mrb[0].mxu0 %v648
        %v1051 = vpop.f32.mrb[0].mxu0
        %v1052 = vadd.f32 %v1009, %v1051
        %v1053 = vpop.f32.mrb[0].mxu0
        %v1054 = vadd.f32 %v1011, %v1053
        %v1055 = vpop.f32.mrb[0].mxu0
        %v1056 = vadd.f32 %v1013, %v1055
        %v1057 = vpop.f32.mrb[0].mxu0
        %v1058 = vadd.f32 %v1015, %v1057
        %1059 = vdwg.mxu0
        %v1060 = vadd.f32 %v562, %v1052
        %v1061 = vadd.f32 %v563, %v1054
        %v1062 = vadd.f32 %v564, %v1056
        %v1063 = vadd.f32 %v565, %v1058
        %1064 = vst [vmem:[%s542] sm:$0xff] %v1060
        %1065 = vst [vmem:[%s542 + $0x8] sm:$0xff] %v1061
        %1066 = vst [vmem:[%s542 + $0x10] sm:$0xff] %v1062
        %1067 = vst [vmem:[%s542 + $0x18] sm:$0xff] %v1063
        %p1068 = scmp.eq.s32.totalorder %s21, 7
        // Predicated region
        $region98: #{discriminator_sngan_forward.12} parent=84 // pred_check
          %p1069 = pneg %p1068
        $region99: #{discriminator_sngan_forward.12} parent=84 // pred_check_branch
          %1071 = sbr.rel (%p1069) target = $region101
        $region100: #{discriminator_sngan_forward.12} parent=84 // pred_region
          %v1072 = vld [vmem:[%s542] sm:$0xff]
          %v1073 = vld [vmem:[%s542 + $0x8] sm:$0xff]
          %v1074 = vld [vmem:[%s542 + $0x10] sm:$0xff]
          %v1075 = vld [vmem:[%s542 + $0x18] sm:$0xff]
          %v1076 = vld [vmem:[%s550] sm:$0x3]
          %v1078 = vlaneseq
          %v1079 = vshrl.u32 %v1078, 7
          %v1080 = vsub.s32 0, %v1079
          %v1081 = vrot.slane %v1076, %v1080
          %v1082 = vlaneseq
          %v1083 = vshrl.u32 %v1082, 7
          %v1084 = vsub.s32 1, %v1083
          %v1085 = vrot.slane %v1076, %v1084
          %v1088 = vadd.f32 %v1072, %v1081
          %v1089 = vadd.f32 %v1073, %v1085
          %v1090 = vadd.f32 %v1074, %v1081
          %v1091 = vadd.f32 %v1075, %v1085
          %vm1092 = vcmp.ge.f32.partialorder %v1088, 0.0
          %vm1093 = vcmp.ge.f32.partialorder %v1089, 0.0
          %vm1094 = vcmp.ge.f32.partialorder %v1090, 0.0
          %vm1095 = vcmp.ge.f32.partialorder %v1091, 0.0
          %v1096 = vmul.f32 %v1088, 0.1
          %v1097 = vmul.f32 %v1089, 0.1
          %v1098 = vmul.f32 %v1090, 0.1
          %v1099 = vmul.f32 %v1091, 0.1
          %v1100 = vsel %vm1092, %v1088, %v1096
          %v1101 = vsel %vm1093, %v1089, %v1097
          %v1102 = vsel %vm1094, %v1090, %v1098
          %v1103 = vsel %vm1095, %v1091, %v1099
          %1104 = vst [vmem:[%s542] sm:$0xff] %v1100
          %1105 = vst [vmem:[%s542 + $0x8] sm:$0xff] %v1101
          %1106 = vst [vmem:[%s542 + $0x10] sm:$0xff] %v1102
          %1107 = vst [vmem:[%s542 + $0x18] sm:$0xff] %v1103
        $region101: #{discriminator_sngan_forward.12} parent=84 // pred_fallthru
          _
        %s1108 = sand.u32 %s125, 1
        %s1109 = sand.u32 %s125, 1
        %s1110 = smul.addr %s1109, 32
        %s1111 = scalar_lea.vmem [#allocation4], %s1110
        // Predicated region
        $region102: #{discriminator_sngan_forward.12} parent=84 // pred_check
          %p1112 = pneg %p135
        $region103: #{discriminator_sngan_forward.12} parent=84 // pred_check_branch
          %1114 = sbr.rel (%p1112) target = $region105
        $region104: #{discriminator_sngan_forward.12} parent=84 // pred_region
          %s1115 = smul.u32 2, %s19
          %s1116 = smul.u32 2, %s20
          %s1117 = smul.addr %s1115, 4
          %s1118 = sadd.s32 %s1116, %s1117
          %s1119 = smul.addr %s1118, 8
          %s1120 = scalar_lea.vmem %s3, %s1119
          // Predicated region
          $region106: #{discriminator_sngan_forward.12} parent=104 // pred_check
            _
          $region107: #{discriminator_sngan_forward.12} parent=104 // pred_check_branch
            %1122 = sbr.rel (0) target = $region109
          $region108: #{discriminator_sngan_forward.12} parent=104 // pred_region
            // Predicated region
            $region110: #{discriminator_sngan_forward.12} parent=108 // pred_check
              _
            $region111: #{discriminator_sngan_forward.12} parent=108 // pred_check_branch
              %1124 = sbr.rel (0) target = $region113
            $region112: #{discriminator_sngan_forward.12} parent=108 // pred_region
              loop: start=0, step=1, limit=1
              $region114: #{discriminator_sngan_forward.12} parent=112 // loop_pre_header
                _
              $region115: #{discriminator_sngan_forward.12} parent=112 // loop_header
                %s1126 = sphi 0, %s1130
                %p1127 = scmp.ge.s32.totalorder %s1126, 1
                %s1131 = sphi %s1111, %s1111
                %s1132 = sphi %s1120, %s1120
              $region116: #{discriminator_sngan_forward.12} parent=112 // loop_header_branch
                %1129 = sbr.rel (%p1127) target = $region120
              $region117: #{discriminator_sngan_forward.12} parent=112 // loop_body
                %v1133 = vld [vmem:[%s1131] sm:$0xff]
                %1134 = vst [vmem:[%s1132] sm:$0xff] %v1133
                %v1135 = vld [vmem:[%s1131 + $0x8] sm:$0xff]
                %1136 = vst [vmem:[%s1132 + $0x8] sm:$0xff] %v1135
                %v1137 = vld [vmem:[%s1131 + $0x10] sm:$0xff]
                %1138 = vst [vmem:[%s1132 + $0x20] sm:$0xff] %v1137
                %v1139 = vld [vmem:[%s1131 + $0x18] sm:$0xff]
                %1140 = vst [vmem:[%s1132 + $0x28] sm:$0xff] %v1139
              $region118: #{discriminator_sngan_forward.12} parent=112 // loop_footer
                %s1130 = sadd.s32 1, %s1126
              $region119: #{discriminator_sngan_forward.12} parent=112 // loop_footer_branch
                %1125 = sbr.rel target = $region115
              $region120: #{discriminator_sngan_forward.12} parent=112 // loop_exit
                _
            $region113: #{discriminator_sngan_forward.12} parent=108 // pred_fallthru
              _
            // Predicated region
            $region121: #{discriminator_sngan_forward.12} parent=108 // pred_check
              _
            $region122: #{discriminator_sngan_forward.12} parent=108 // pred_check_branch
              %1142 = sbr.rel target = $region124
            $region123: #{discriminator_sngan_forward.12} parent=108 // pred_region
              _
            $region124: #{discriminator_sngan_forward.12} parent=108 // pred_fallthru
              _
          $region109: #{discriminator_sngan_forward.12} parent=104 // pred_fallthru
            _
          %1143 = vnop
        $region105: #{discriminator_sngan_forward.12} parent=84 // pred_fallthru
          _
      $region85: #{discriminator_sngan_forward.12} parent=5 // pred_fallthru
        _
      %p1144 = scmp.le.s32.totalorder 2, %s9
      // Predicated region
      $region125: #{discriminator_sngan_forward.12} parent=5 // pred_check
        %p1145 = pneg %p1144
      $region126: #{discriminator_sngan_forward.12} parent=5 // pred_check_branch
        %1147 = sbr.rel (%p1145) target = $region128
      $region127: #{discriminator_sngan_forward.12} parent=5 // pred_region
        %s1148 = ssub.s32 %s9, 2
        // Predicated region
        $region129: #{discriminator_sngan_forward.12} parent=127 // pred_check
          %p1149 = pneg %p141
        $region130: #{discriminator_sngan_forward.12} parent=127 // pred_check_branch
          %1151 = sbr.rel (%p1149) target = $region132
        $region131: #{discriminator_sngan_forward.12} parent=127 // pred_region
          %s1152 = sand.u32 %s126, 1
          %s1153 = sand.u32 %s126, 1
          %s1154 = smul.addr %s1153, 32
          %s1155 = scalar_lea.vmem [#allocation4], %s1154
        $region132: #{discriminator_sngan_forward.12} parent=127 // pred_fallthru
          _
      $region128: #{discriminator_sngan_forward.12} parent=5 // pred_fallthru
        _
    $region6: #{discriminator_sngan_forward.12} parent=1 // loop_footer
      %s13 = sadd.s32 1, %s9
    $region7: #{discriminator_sngan_forward.12} parent=1 // loop_footer_branch
      %8 = sbr.rel target = $region3
    $region8: #{discriminator_sngan_forward.12} parent=1 // loop_exit
      _

// kernel: discriminator_sngan_forward.13
$region0: #{discriminator_sngan_forward.13}
  #allocation0 [shape = 'u32[]', space=smem, size = 0x4, offset = 0x4, fixed_abs, tag = 'smem constant byte address 0x4 - core index']
  #allocation1 [shape = 'u32[144,128]{1,0:T(1,128)}', space=vmem, size = 0x12000, scoped, tag = 'internal scratch']
  %s0 = inlined_call_operand.vmem [shape: bf16[16,4608], index: 0, kind: input, shape index: {}]
  %s1 = inlined_call_operand.vmem [shape: bf16[4608,512], index: 1, kind: input, shape index: {}]
  %s2 = inlined_call_operand.vmem [shape: f32[1,512], index: 2, kind: input, shape index: {}]
  %s3 = inlined_call_operand.vmem [shape: f32[16,512], index: 3, kind: output, shape index: {}]
  %s4 = sld [smem:[#allocation0]]
  $region133: #{discriminator_sngan_forward.13} parent=0
    _
  %s6 = ssub.s32 1, %s4
  %s7 = scalar_select 0, %s6, %s4
  $region1: #{discriminator_sngan_forward.13} parent=0
    #allocation2 [shape = 'u8[32768]{0}', space=vmem, size = 0x8000, scoped, tag = 'input window, operand 0']
    #allocation3 [shape = 'u8[524288]{0}', space=vmem, size = 0x80000, scoped, tag = 'input window, operand 1']
    #allocation4 [shape = 'u8[32768]{0}', space=vmem, size = 0x8000, scoped, tag = 'output window, operand 0']
    loop: start=0, step=1, limit=20
    $region2: #{discriminator_sngan_forward.13} parent=1 // loop_pre_header
      _
    $region3: #{discriminator_sngan_forward.13} parent=1 // loop_header
      %s9 = sphi 0, %s13
      %p10 = scmp.ge.s32.totalorder %s9, 20
      %s16 = sphi 0, %s35
      %s17 = sphi 0, %s31
      %s18 = sphi 0, %s27
      %s19 = sphi 0, %s16
      %s20 = sphi 0, %s17
      %s21 = sphi 0, %s18
      %s22 = sphi 0, %s19
      %s23 = sphi 0, %s20
      %s24 = sphi 0, %s21
      %s40 = sphi 0, %s42
      %s43 = sphi 0, %s40
      %s44 = sphi 0, %s43
      %s60 = sphi 0, %s44
      %s68 = sphi 0, %s70
      %s71 = sphi 0, %s68
      %s72 = sphi 0, %s71
      %s88 = sphi 0, %s72
      %s94 = sphi 0, %s96
      %s97 = sphi 0, %s94
      %s98 = sphi 0, %s97
      %s114 = sphi 0, %s98
      %s122 = sphi 0, %s124
      %s125 = sphi 0, %s122
      %s126 = sphi 0, %s125
      %s142 = sphi 0, %s126
    $region4: #{discriminator_sngan_forward.13} parent=1 // loop_header_branch
      %12 = sbr.rel (%p10) target = $region8
    $region5: #{discriminator_sngan_forward.13} parent=1 // loop_body
      %s14 = ssub.s32 %s9, 1
      %s15 = ssub.s32 %s9, 2
      %s25 = sadd.s32 1, %s18
      %p26 = scmp.ge.s32.totalorder %s25, 9
      %s27 = scalar_select %p26, 0, %s25
      %s28 = sadd.s32 1, %s17
      %s29 = scalar_select %p26, %s28, %s17
      %p30 = scmp.ge.s32.totalorder %s29, 2
      %s31 = scalar_select %p30, 0, %s29
      %s32 = sadd.s32 1, %s16
      %s33 = scalar_select %p30, %s32, %s16
      %p34 = scmp.ge.s32.totalorder %s33, 1
      %s35 = scalar_select %p34, 0, %s33
      %s36 = ssub.s32 %s16, %s35
      %s37 = ssub.s32 %s18, %s27
      %s38 = sor.u32 %s36, %s37
      %p39 = scmp.eq.s32.totalorder %s38, 0
      %s41 = sadd.s32 %s40, 1
      %s42 = scalar_select %p39, %s40, %s41
      %p45 = pneg %p39
      %p46 = scmp.eq.s32.totalorder %s9, 17
      %p47 = por %p45, %p46
      %p48 = scmp.ne.s32.totalorder %s40, %s43
      %p49 = scmp.eq.s32.totalorder %s9, 0
      %p50 = por %p48, %p49
      %p51 = scmp.ne.s32.totalorder %s40, %s43
      %p52 = scmp.eq.s32.totalorder %s14, 17
      %p53 = por %p51, %p52
      %p54 = scmp.ne.s32.totalorder %s43, %s44
      %p55 = scmp.eq.s32.totalorder %s14, 0
      %p56 = por %p54, %p55
      %p57 = scmp.ne.s32.totalorder %s43, %s44
      %p58 = scmp.eq.s32.totalorder %s15, 17
      %p59 = por %p57, %p58
      %p61 = scmp.ne.s32.totalorder %s44, %s60
      %p62 = scmp.eq.s32.totalorder %s15, 0
      %p63 = por %p61, %p62
      %s64 = ssub.s32 %s18, %s27
      %s65 = ssub.s32 %s17, %s31
      %s66 = sor.u32 %s64, %s65
      %p67 = scmp.eq.s32.totalorder %s66, 0
      %s69 = sadd.s32 %s68, 1
      %s70 = scalar_select %p67, %s68, %s69
      %p73 = pneg %p67
      %p74 = scmp.eq.s32.totalorder %s9, 17
      %p75 = por %p73, %p74
      %p76 = scmp.ne.s32.totalorder %s68, %s71
      %p77 = scmp.eq.s32.totalorder %s9, 0
      %p78 = por %p76, %p77
      %p79 = scmp.ne.s32.totalorder %s68, %s71
      %p80 = scmp.eq.s32.totalorder %s14, 17
      %p81 = por %p79, %p80
      %p82 = scmp.ne.s32.totalorder %s71, %s72
      %p83 = scmp.eq.s32.totalorder %s14, 0
      %p84 = por %p82, %p83
      %p85 = scmp.ne.s32.totalorder %s71, %s72
      %p86 = scmp.eq.s32.totalorder %s15, 17
      %p87 = por %p85, %p86
      %p89 = scmp.ne.s32.totalorder %s72, %s88
      %p90 = scmp.eq.s32.totalorder %s15, 0
      %p91 = por %p89, %p90
      %s92 = ssub.s32 %s17, %s31
      %p93 = scmp.eq.s32.totalorder %s92, 0
      %s95 = sadd.s32 %s94, 1
      %s96 = scalar_select %p93, %s94, %s95
      %p99 = pneg %p93
      %p100 = scmp.eq.s32.totalorder %s9, 17
      %p101 = por %p99, %p100
      %p102 = scmp.ne.s32.totalorder %s94, %s97
      %p103 = scmp.eq.s32.totalorder %s9, 0
      %p104 = por %p102, %p103
      %p105 = scmp.ne.s32.totalorder %s94, %s97
      %p106 = scmp.eq.s32.totalorder %s14, 17
      %p107 = por %p105, %p106
      %p108 = scmp.ne.s32.totalorder %s97, %s98
      %p109 = scmp.eq.s32.totalorder %s14, 0
      %p110 = por %p108, %p109
      %p111 = scmp.ne.s32.totalorder %s97, %s98
      %p112 = scmp.eq.s32.totalorder %s15, 17
      %p113 = por %p111, %p112
      %p115 = scmp.ne.s32.totalorder %s98, %s114
      %p116 = scmp.eq.s32.totalorder %s15, 0
      %p117 = por %p115, %p116
      %s118 = ssub.s32 %s16, %s35
      %s119 = ssub.s32 %s17, %s31
      %s120 = sor.u32 %s118, %s119
      %p121 = scmp.eq.s32.totalorder %s120, 0
      %s123 = sadd.s32 %s122, 1
      %s124 = scalar_select %p121, %s122, %s123
      %p127 = pneg %p121
      %p128 = scmp.eq.s32.totalorder %s9, 17
      %p129 = por %p127, %p128
      %p130 = scmp.ne.s32.totalorder %s122, %s125
      %p131 = scmp.eq.s32.totalorder %s9, 0
      %p132 = por %p130, %p131
      %p133 = scmp.ne.s32.totalorder %s122, %s125
      %p134 = scmp.eq.s32.totalorder %s14, 17
      %p135 = por %p133, %p134
      %p136 = scmp.ne.s32.totalorder %s125, %s126
      %p137 = scmp.eq.s32.totalorder %s14, 0
      %p138 = por %p136, %p137
      %p139 = scmp.ne.s32.totalorder %s125, %s126
      %p140 = scmp.eq.s32.totalorder %s15, 17
      %p141 = por %p139, %p140
      %p143 = scmp.ne.s32.totalorder %s126, %s142
      %p144 = scmp.eq.s32.totalorder %s15, 0
      %p145 = por %p143, %p144
      %p146 = scmp.le.s32.totalorder 1, %s9
      %p147 = scmp.lt.s32.totalorder %s9, 19
      %p148 = pnand %p146, %p147
      %p149 = pneg %p148
      // Predicated region
      $region9: #{discriminator_sngan_forward.13} parent=5 // pred_check
        _
      $region10: #{discriminator_sngan_forward.13} parent=5 // pred_check_branch
        %151 = sbr.rel (%p148) target = $region12
      $region11: #{discriminator_sngan_forward.13} parent=5 // pred_region
        %s152 = ssub.s32 %s9, 1
      $region12: #{discriminator_sngan_forward.13} parent=5 // pred_fallthru
        _
      %p153 = scmp.lt.s32.totalorder %s9, 18
      // Predicated region
      $region13: #{discriminator_sngan_forward.13} parent=5 // pred_check
        %p154 = pneg %p153
      $region14: #{discriminator_sngan_forward.13} parent=5 // pred_check_branch
        %156 = sbr.rel (%p154) target = $region16
      $region15: #{discriminator_sngan_forward.13} parent=5 // pred_region
        // Predicated region
        $region17: #{discriminator_sngan_forward.13} parent=15 // pred_check
          %p157 = pneg %p50
        $region18: #{discriminator_sngan_forward.13} parent=15 // pred_check_branch
          %159 = sbr.rel (%p157) target = $region20
        $region19: #{discriminator_sngan_forward.13} parent=15 // pred_region
          %s160 = sand.u32 %s40, 1
          %s161 = sand.u32 %s40, 1
          %s162 = smul.addr %s161, 32
          %s163 = scalar_lea.vmem [#allocation2], %s162
          %s164 = smul.u32 2, %s16
          %s165 = smul.u32 4, %s18
          %s166 = smul.addr %s164, 36
          %s167 = sadd.s32 %s165, %s166
          %s168 = smul.addr %s167, 4
          %s169 = scalar_lea.vmem %s0, %s168
          // Predicated region
          $region21: #{discriminator_sngan_forward.13} parent=19 // pred_check
            _
          $region22: #{discriminator_sngan_forward.13} parent=19 // pred_check_branch
            %171 = sbr.rel (0) target = $region24
          $region23: #{discriminator_sngan_forward.13} parent=19 // pred_region
            // Predicated region
            $region25: #{discriminator_sngan_forward.13} parent=23 // pred_check
              _
            $region26: #{discriminator_sngan_forward.13} parent=23 // pred_check_branch
              %173 = sbr.rel (0) target = $region28
            $region27: #{discriminator_sngan_forward.13} parent=23 // pred_region
              loop: start=0, step=1, limit=1
              $region29: #{discriminator_sngan_forward.13} parent=27 // loop_pre_header
                _
              $region30: #{discriminator_sngan_forward.13} parent=27 // loop_header
                %s175 = sphi 0, %s179
                %p176 = scmp.ge.s32.totalorder %s175, 1
                %s180 = sphi %s169, %s169
                %s181 = sphi %s163, %s163
              $region31: #{discriminator_sngan_forward.13} parent=27 // loop_header_branch
                %178 = sbr.rel (%p176) target = $region35
              $region32: #{discriminator_sngan_forward.13} parent=27 // loop_body
                %v182 = vld [vmem:[%s180] sm:$0xff]
                %183 = vst [vmem:[%s181] sm:$0xff] %v182
                %v184 = vld [vmem:[%s180 + $0x8] sm:$0xff]
                %185 = vst [vmem:[%s181 + $0x8] sm:$0xff] %v184
                %v186 = vld [vmem:[%s180 + $0x90] sm:$0xff]
                %187 = vst [vmem:[%s181 + $0x10] sm:$0xff] %v186
                %v188 = vld [vmem:[%s180 + $0x98] sm:$0xff]
                %189 = vst [vmem:[%s181 + $0x18] sm:$0xff] %v188
              $region33: #{discriminator_sngan_forward.13} parent=27 // loop_footer
                %s179 = sadd.s32 1, %s175
              $region34: #{discriminator_sngan_forward.13} parent=27 // loop_footer_branch
                %174 = sbr.rel target = $region30
              $region35: #{discriminator_sngan_forward.13} parent=27 // loop_exit
                _
            $region28: #{discriminator_sngan_forward.13} parent=23 // pred_fallthru
              _
            // Predicated region
            $region36: #{discriminator_sngan_forward.13} parent=23 // pred_check
              _
            $region37: #{discriminator_sngan_forward.13} parent=23 // pred_check_branch
              %191 = sbr.rel target = $region39
            $region38: #{discriminator_sngan_forward.13} parent=23 // pred_region
              _
            $region39: #{discriminator_sngan_forward.13} parent=23 // pred_fallthru
              _
          $region24: #{discriminator_sngan_forward.13} parent=19 // pred_fallthru
            _
          %192 = vnop
        $region20: #{discriminator_sngan_forward.13} parent=15 // pred_fallthru
          _
        // Predicated region
        $region40: #{discriminator_sngan_forward.13} parent=15 // pred_check
          %p193 = pneg %p78
        $region41: #{discriminator_sngan_forward.13} parent=15 // pred_check_branch
          %195 = sbr.rel (%p193) target = $region43
        $region42: #{discriminator_sngan_forward.13} parent=15 // pred_region
          %s196 = sand.u32 %s68, 1
          %s197 = sand.u32 %s68, 1
          %s198 = smul.addr %s197, 512
          %s199 = scalar_lea.vmem [#allocation3], %s198
          %s200 = smul.u32 64, %s18
          %s201 = smul.u32 2, %s17
          %s202 = smul.addr %s200, 4
          %s203 = sadd.s32 %s201, %s202
          %s204 = smul.addr %s203, 4
          %s205 = scalar_lea.vmem %s1, %s204
          // Predicated region
          $region44: #{discriminator_sngan_forward.13} parent=42 // pred_check
            _
          $region45: #{discriminator_sngan_forward.13} parent=42 // pred_check_branch
            %207 = sbr.rel (0) target = $region47
          $region46: #{discriminator_sngan_forward.13} parent=42 // pred_region
            // Predicated region
            $region48: #{discriminator_sngan_forward.13} parent=46 // pred_check
              _
            $region49: #{discriminator_sngan_forward.13} parent=46 // pred_check_branch
              %209 = sbr.rel (0) target = $region51
            $region50: #{discriminator_sngan_forward.13} parent=46 // pred_region
              // Predicated region
              $region63: #{discriminator_sngan_forward.13} parent=50 // pred_check
                _
              $region64: #{discriminator_sngan_forward.13} parent=50 // pred_check_branch
                %350 = sbr.rel (0) target = $region66
              $region65: #{discriminator_sngan_forward.13} parent=50 // pred_region
                loop: start=0, step=1, limit=1
                $region67: #{discriminator_sngan_forward.13} parent=65 // loop_pre_header
                  _
                $region68: #{discriminator_sngan_forward.13} parent=65 // loop_header
                  %s352 = sphi 0, %s356
                  %p353 = scmp.ge.s32.totalorder %s352, 1
                  %s357 = sphi %s205, %s205
                  %s358 = sphi %s199, %s199
                $region69: #{discriminator_sngan_forward.13} parent=65 // loop_header_branch
                  %355 = sbr.rel (%p353) target = $region73
                $region70: #{discriminator_sngan_forward.13} parent=65 // loop_body
                  %v359 = vld [vmem:[%s357] sm:$0xff]
                  %360 = vst [vmem:[%s358] sm:$0xff] %v359
                  %v361 = vld [vmem:[%s357 + $0x10] sm:$0xff]
                  %362 = vst [vmem:[%s358 + $0x8] sm:$0xff] %v361
                  %v363 = vld [vmem:[%s357 + $0x20] sm:$0xff]
                  %364 = vst [vmem:[%s358 + $0x10] sm:$0xff] %v363
                  %v365 = vld [vmem:[%s357 + $0x30] sm:$0xff]
                  %366 = vst [vmem:[%s358 + $0x18] sm:$0xff] %v365
                  %v367 = vld [vmem:[%s357 + $0x40] sm:$0xff]
                  %368 = vst [vmem:[%s358 + $0x20] sm:$0xff] %v367
                  %v369 = vld [vmem:[%s357 + $0x50] sm:$0xff]
                  %370 = vst [vmem:[%s358 + $0x28] sm:$0xff] %v369
                  %v371 = vld [vmem:[%s357 + $0x60] sm:$0xff]
                  %372 = vst [vmem:[%s358 + $0x30] sm:$0xff] %v371
                  %v373 = vld [vmem:[%s357 + $0x70] sm:$0xff]
                  %374 = vst [vmem:[%s358 + $0x38] sm:$0xff] %v373
                  %v375 = vld [vmem:[%s357 + $0x80] sm:$0xff]
                  %376 = vst [vmem:[%s358 + $0x40] sm:$0xff] %v375
                  %v377 = vld [vmem:[%s357 + $0x90] sm:$0xff]
                  %378 = vst [vmem:[%s358 + $0x48] sm:$0xff] %v377
                  %v379 = vld [vmem:[%s357 + $0xa0] sm:$0xff]
                  %380 = vst [vmem:[%s358 + $0x50] sm:$0xff] %v379
                  %v381 = vld [vmem:[%s357 + $0xb0] sm:$0xff]
                  %382 = vst [vmem:[%s358 + $0x58] sm:$0xff] %v381
                  %v383 = vld [vmem:[%s357 + $0xc0] sm:$0xff]
                  %384 = vst [vmem:[%s358 + $0x60] sm:$0xff] %v383
                  %v385 = vld [vmem:[%s357 + $0xd0] sm:$0xff]
                  %386 = vst [vmem:[%s358 + $0x68] sm:$0xff] %v385
                  %v387 = vld [vmem:[%s357 + $0xe0] sm:$0xff]
                  %388 = vst [vmem:[%s358 + $0x70] sm:$0xff] %v387
                  %v389 = vld [vmem:[%s357 + $0xf0] sm:$0xff]
                  %390 = vst [vmem:[%s358 + $0x78] sm:$0xff] %v389
                  %v391 = vld [vmem:[%s357 + $0x100] sm:$0xff]
                  %392 = vst [vmem:[%s358 + $0x80] sm:$0xff] %v391
                  %v393 = vld [vmem:[%s357 + $0x110] sm:$0xff]
                  %394 = vst [vmem:[%s358 + $0x88] sm:$0xff] %v393
                  %v395 = vld [vmem:[%s357 + $0x120] sm:$0xff]
                  %396 = vst [vmem:[%s358 + $0x90] sm:$0xff] %v395
                  %v397 = vld [vmem:[%s357 + $0x130] sm:$0xff]
                  %398 = vst [vmem:[%s358 + $0x98] sm:$0xff] %v397
                  %v399 = vld [vmem:[%s357 + $0x140] sm:$0xff]
                  %400 = vst [vmem:[%s358 + $0xa0] sm:$0xff] %v399
                  %v401 = vld [vmem:[%s357 + $0x150] sm:$0xff]
                  %402 = vst [vmem:[%s358 + $0xa8] sm:$0xff] %v401
                  %v403 = vld [vmem:[%s357 + $0x160] sm:$0xff]
                  %404 = vst [vmem:[%s358 + $0xb0] sm:$0xff] %v403
                  %v405 = vld [vmem:[%s357 + $0x170] sm:$0xff]
                  %406 = vst [vmem:[%s358 + $0xb8] sm:$0xff] %v405
                  %v407 = vld [vmem:[%s357 + $0x180] sm:$0xff]
                  %408 = vst [vmem:[%s358 + $0xc0] sm:$0xff] %v407
                  %v409 = vld [vmem:[%s357 + $0x190] sm:$0xff]
                  %410 = vst [vmem:[%s358 + $0xc8] sm:$0xff] %v409
                  %v411 = vld [vmem:[%s357 + $0x1a0] sm:$0xff]
                  %412 = vst [vmem:[%s358 + $0xd0] sm:$0xff] %v411
                  %v413 = vld [vmem:[%s357 + $0x1b0] sm:$0xff]
                  %414 = vst [vmem:[%s358 + $0xd8] sm:$0xff] %v413
                  %v415 = vld [vmem:[%s357 + $0x1c0] sm:$0xff]
                  %416 = vst [vmem:[%s358 + $0xe0] sm:$0xff] %v415
                  %v417 = vld [vmem:[%s357 + $0x1d0] sm:$0xff]
                  %418 = vst [vmem:[%s358 + $0xe8] sm:$0xff] %v417
                  %v419 = vld [vmem:[%s357 + $0x1e0] sm:$0xff]
                  %420 = vst [vmem:[%s358 + $0xf0] sm:$0xff] %v419
                  %v421 = vld [vmem:[%s357 + $0x1f0] sm:$0xff]
                  %422 = vst [vmem:[%s358 + $0xf8] sm:$0xff] %v421
                  %v423 = vld [vmem:[%s357 + $0x200] sm:$0xff]
                  %424 = vst [vmem:[%s358 + $0x100] sm:$0xff] %v423
                  %v425 = vld [vmem:[%s357 + $0x210] sm:$0xff]
                  %426 = vst [vmem:[%s358 + $0x108] sm:$0xff] %v425
                  %v427 = vld [vmem:[%s357 + $0x220] sm:$0xff]
                  %428 = vst [vmem:[%s358 + $0x110] sm:$0xff] %v427
                  %v429 = vld [vmem:[%s357 + $0x230] sm:$0xff]
                  %430 = vst [vmem:[%s358 + $0x118] sm:$0xff] %v429
                  %v431 = vld [vmem:[%s357 + $0x240] sm:$0xff]
                  %432 = vst [vmem:[%s358 + $0x120] sm:$0xff] %v431
                  %v433 = vld [vmem:[%s357 + $0x250] sm:$0xff]
                  %434 = vst [vmem:[%s358 + $0x128] sm:$0xff] %v433
                  %v435 = vld [vmem:[%s357 + $0x260] sm:$0xff]
                  %436 = vst [vmem:[%s358 + $0x130] sm:$0xff] %v435
                  %v437 = vld [vmem:[%s357 + $0x270] sm:$0xff]
                  %438 = vst [vmem:[%s358 + $0x138] sm:$0xff] %v437
                  %v439 = vld [vmem:[%s357 + $0x280] sm:$0xff]
                  %440 = vst [vmem:[%s358 + $0x140] sm:$0xff] %v439
                  %v441 = vld [vmem:[%s357 + $0x290] sm:$0xff]
                  %442 = vst [vmem:[%s358 + $0x148] sm:$0xff] %v441
                  %v443 = vld [vmem:[%s357 + $0x2a0] sm:$0xff]
                  %444 = vst [vmem:[%s358 + $0x150] sm:$0xff] %v443
                  %v445 = vld [vmem:[%s357 + $0x2b0] sm:$0xff]
                  %446 = vst [vmem:[%s358 + $0x158] sm:$0xff] %v445
                  %v447 = vld [vmem:[%s357 + $0x2c0] sm:$0xff]
                  %448 = vst [vmem:[%s358 + $0x160] sm:$0xff] %v447
                  %v449 = vld [vmem:[%s357 + $0x2d0] sm:$0xff]
                  %450 = vst [vmem:[%s358 + $0x168] sm:$0xff] %v449
                  %v451 = vld [vmem:[%s357 + $0x2e0] sm:$0xff]
                  %452 = vst [vmem:[%s358 + $0x170] sm:$0xff] %v451
                  %v453 = vld [vmem:[%s357 + $0x2f0] sm:$0xff]
                  %454 = vst [vmem:[%s358 + $0x178] sm:$0xff] %v453
                  %v455 = vld [vmem:[%s357 + $0x300] sm:$0xff]
                  %456 = vst [vmem:[%s358 + $0x180] sm:$0xff] %v455
                  %v457 = vld [vmem:[%s357 + $0x310] sm:$0xff]
                  %458 = vst [vmem:[%s358 + $0x188] sm:$0xff] %v457
                  %v459 = vld [vmem:[%s357 + $0x320] sm:$0xff]
                  %460 = vst [vmem:[%s358 + $0x190] sm:$0xff] %v459
                  %v461 = vld [vmem:[%s357 + $0x330] sm:$0xff]
                  %462 = vst [vmem:[%s358 + $0x198] sm:$0xff] %v461
                  %v463 = vld [vmem:[%s357 + $0x340] sm:$0xff]
                  %464 = vst [vmem:[%s358 + $0x1a0] sm:$0xff] %v463
                  %v465 = vld [vmem:[%s357 + $0x350] sm:$0xff]
                  %466 = vst [vmem:[%s358 + $0x1a8] sm:$0xff] %v465
                  %v467 = vld [vmem:[%s357 + $0x360] sm:$0xff]
                  %468 = vst [vmem:[%s358 + $0x1b0] sm:$0xff] %v467
                  %v469 = vld [vmem:[%s357 + $0x370] sm:$0xff]
                  %470 = vst [vmem:[%s358 + $0x1b8] sm:$0xff] %v469
                  %v471 = vld [vmem:[%s357 + $0x380] sm:$0xff]
                  %472 = vst [vmem:[%s358 + $0x1c0] sm:$0xff] %v471
                  %v473 = vld [vmem:[%s357 + $0x390] sm:$0xff]
                  %474 = vst [vmem:[%s358 + $0x1c8] sm:$0xff] %v473
                  %v475 = vld [vmem:[%s357 + $0x3a0] sm:$0xff]
                  %476 = vst [vmem:[%s358 + $0x1d0] sm:$0xff] %v475
                  %v477 = vld [vmem:[%s357 + $0x3b0] sm:$0xff]
                  %478 = vst [vmem:[%s358 + $0x1d8] sm:$0xff] %v477
                  %v479 = vld [vmem:[%s357 + $0x3c0] sm:$0xff]
                  %480 = vst [vmem:[%s358 + $0x1e0] sm:$0xff] %v479
                  %v481 = vld [vmem:[%s357 + $0x3d0] sm:$0xff]
                  %482 = vst [vmem:[%s358 + $0x1e8] sm:$0xff] %v481
                  %v483 = vld [vmem:[%s357 + $0x3e0] sm:$0xff]
                  %484 = vst [vmem:[%s358 + $0x1f0] sm:$0xff] %v483
                  %v485 = vld [vmem:[%s357 + $0x3f0] sm:$0xff]
                  %486 = vst [vmem:[%s358 + $0x1f8] sm:$0xff] %v485
                $region71: #{discriminator_sngan_forward.13} parent=65 // loop_footer
                  %s356 = sadd.s32 1, %s352
                $region72: #{discriminator_sngan_forward.13} parent=65 // loop_footer_branch
                  %351 = sbr.rel target = $region68
                $region73: #{discriminator_sngan_forward.13} parent=65 // loop_exit
                  _
              $region66: #{discriminator_sngan_forward.13} parent=50 // pred_fallthru
                _
              // Predicated region
              $region74: #{discriminator_sngan_forward.13} parent=50 // pred_check
                _
              $region75: #{discriminator_sngan_forward.13} parent=50 // pred_check_branch
                %488 = sbr.rel target = $region77
              $region76: #{discriminator_sngan_forward.13} parent=50 // pred_region
                _
              $region77: #{discriminator_sngan_forward.13} parent=50 // pred_fallthru
                _
            $region51: #{discriminator_sngan_forward.13} parent=46 // pred_fallthru
              _
            // Predicated region
            $region52: #{discriminator_sngan_forward.13} parent=46 // pred_check
              _
            $region53: #{discriminator_sngan_forward.13} parent=46 // pred_check_branch
              %211 = sbr.rel target = $region55
            $region54: #{discriminator_sngan_forward.13} parent=46 // pred_region
              loop: start=0, step=1, limit=1
              $region56: #{discriminator_sngan_forward.13} parent=54 // loop_pre_header
                _
              $region57: #{discriminator_sngan_forward.13} parent=54 // loop_header
                %s214 = sphi 0, %s218
                %p215 = scmp.ge.s32.totalorder %s214, 1
                %s219 = sphi %s205, %s205
                %s220 = sphi %s199, %s199
              $region58: #{discriminator_sngan_forward.13} parent=54 // loop_header_branch
                %217 = sbr.rel (%p215) target = $region62
              $region59: #{discriminator_sngan_forward.13} parent=54 // loop_body
                %v221 = vld [vmem:[%s219] sm:$0xff]
                %222 = vst [vmem:[%s220] sm:$0xff] %v221
                %v223 = vld [vmem:[%s219 + $0x10] sm:$0xff]
                %224 = vst [vmem:[%s220 + $0x8] sm:$0xff] %v223
                %v225 = vld [vmem:[%s219 + $0x20] sm:$0xff]
                %226 = vst [vmem:[%s220 + $0x10] sm:$0xff] %v225
                %v227 = vld [vmem:[%s219 + $0x30] sm:$0xff]
                %228 = vst [vmem:[%s220 + $0x18] sm:$0xff] %v227
                %v229 = vld [vmem:[%s219 + $0x40] sm:$0xff]
                %230 = vst [vmem:[%s220 + $0x20] sm:$0xff] %v229
                %v231 = vld [vmem:[%s219 + $0x50] sm:$0xff]
                %232 = vst [vmem:[%s220 + $0x28] sm:$0xff] %v231
                %v233 = vld [vmem:[%s219 + $0x60] sm:$0xff]
                %234 = vst [vmem:[%s220 + $0x30] sm:$0xff] %v233
                %v235 = vld [vmem:[%s219 + $0x70] sm:$0xff]
                %236 = vst [vmem:[%s220 + $0x38] sm:$0xff] %v235
                %v237 = vld [vmem:[%s219 + $0x80] sm:$0xff]
                %238 = vst [vmem:[%s220 + $0x40] sm:$0xff] %v237
                %v239 = vld [vmem:[%s219 + $0x90] sm:$0xff]
                %240 = vst [vmem:[%s220 + $0x48] sm:$0xff] %v239
                %v241 = vld [vmem:[%s219 + $0xa0] sm:$0xff]
                %242 = vst [vmem:[%s220 + $0x50] sm:$0xff] %v241
                %v243 = vld [vmem:[%s219 + $0xb0] sm:$0xff]
                %244 = vst [vmem:[%s220 + $0x58] sm:$0xff] %v243
                %v245 = vld [vmem:[%s219 + $0xc0] sm:$0xff]
                %246 = vst [vmem:[%s220 + $0x60] sm:$0xff] %v245
                %v247 = vld [vmem:[%s219 + $0xd0] sm:$0xff]
                %248 = vst [vmem:[%s220 + $0x68] sm:$0xff] %v247
                %v249 = vld [vmem:[%s219 + $0xe0] sm:$0xff]
                %250 = vst [vmem:[%s220 + $0x70] sm:$0xff] %v249
                %v251 = vld [vmem:[%s219 + $0xf0] sm:$0xff]
                %252 = vst [vmem:[%s220 + $0x78] sm:$0xff] %v251
                %v253 = vld [vmem:[%s219 + $0x100] sm:$0xff]
                %254 = vst [vmem:[%s220 + $0x80] sm:$0xff] %v253
                %v255 = vld [vmem:[%s219 + $0x110] sm:$0xff]
                %256 = vst [vmem:[%s220 + $0x88] sm:$0xff] %v255
                %v257 = vld [vmem:[%s219 + $0x120] sm:$0xff]
                %258 = vst [vmem:[%s220 + $0x90] sm:$0xff] %v257
                %v259 = vld [vmem:[%s219 + $0x130] sm:$0xff]
                %260 = vst [vmem:[%s220 + $0x98] sm:$0xff] %v259
                %v261 = vld [vmem:[%s219 + $0x140] sm:$0xff]
                %262 = vst [vmem:[%s220 + $0xa0] sm:$0xff] %v261
                %v263 = vld [vmem:[%s219 + $0x150] sm:$0xff]
                %264 = vst [vmem:[%s220 + $0xa8] sm:$0xff] %v263
                %v265 = vld [vmem:[%s219 + $0x160] sm:$0xff]
                %266 = vst [vmem:[%s220 + $0xb0] sm:$0xff] %v265
                %v267 = vld [vmem:[%s219 + $0x170] sm:$0xff]
                %268 = vst [vmem:[%s220 + $0xb8] sm:$0xff] %v267
                %v269 = vld [vmem:[%s219 + $0x180] sm:$0xff]
                %270 = vst [vmem:[%s220 + $0xc0] sm:$0xff] %v269
                %v271 = vld [vmem:[%s219 + $0x190] sm:$0xff]
                %272 = vst [vmem:[%s220 + $0xc8] sm:$0xff] %v271
                %v273 = vld [vmem:[%s219 + $0x1a0] sm:$0xff]
                %274 = vst [vmem:[%s220 + $0xd0] sm:$0xff] %v273
                %v275 = vld [vmem:[%s219 + $0x1b0] sm:$0xff]
                %276 = vst [vmem:[%s220 + $0xd8] sm:$0xff] %v275
                %v277 = vld [vmem:[%s219 + $0x1c0] sm:$0xff]
                %278 = vst [vmem:[%s220 + $0xe0] sm:$0xff] %v277
                %v279 = vld [vmem:[%s219 + $0x1d0] sm:$0xff]
                %280 = vst [vmem:[%s220 + $0xe8] sm:$0xff] %v279
                %v281 = vld [vmem:[%s219 + $0x1e0] sm:$0xff]
                %282 = vst [vmem:[%s220 + $0xf0] sm:$0xff] %v281
                %v283 = vld [vmem:[%s219 + $0x1f0] sm:$0xff]
                %284 = vst [vmem:[%s220 + $0xf8] sm:$0xff] %v283
                %v285 = vld [vmem:[%s219 + $0x200] sm:$0xff]
                %286 = vst [vmem:[%s220 + $0x100] sm:$0xff] %v285
                %v287 = vld [vmem:[%s219 + $0x210] sm:$0xff]
                %288 = vst [vmem:[%s220 + $0x108] sm:$0xff] %v287
                %v289 = vld [vmem:[%s219 + $0x220] sm:$0xff]
                %290 = vst [vmem:[%s220 + $0x110] sm:$0xff] %v289
                %v291 = vld [vmem:[%s219 + $0x230] sm:$0xff]
                %292 = vst [vmem:[%s220 + $0x118] sm:$0xff] %v291
                %v293 = vld [vmem:[%s219 + $0x240] sm:$0xff]
                %294 = vst [vmem:[%s220 + $0x120] sm:$0xff] %v293
                %v295 = vld [vmem:[%s219 + $0x250] sm:$0xff]
                %296 = vst [vmem:[%s220 + $0x128] sm:$0xff] %v295
                %v297 = vld [vmem:[%s219 + $0x260] sm:$0xff]
                %298 = vst [vmem:[%s220 + $0x130] sm:$0xff] %v297
                %v299 = vld [vmem:[%s219 + $0x270] sm:$0xff]
                %300 = vst [vmem:[%s220 + $0x138] sm:$0xff] %v299
                %v301 = vld [vmem:[%s219 + $0x280] sm:$0xff]
                %302 = vst [vmem:[%s220 + $0x140] sm:$0xff] %v301
                %v303 = vld [vmem:[%s219 + $0x290] sm:$0xff]
                %304 = vst [vmem:[%s220 + $0x148] sm:$0xff] %v303
                %v305 = vld [vmem:[%s219 + $0x2a0] sm:$0xff]
                %306 = vst [vmem:[%s220 + $0x150] sm:$0xff] %v305
                %v307 = vld [vmem:[%s219 + $0x2b0] sm:$0xff]
                %308 = vst [vmem:[%s220 + $0x158] sm:$0xff] %v307
                %v309 = vld [vmem:[%s219 + $0x2c0] sm:$0xff]
                %310 = vst [vmem:[%s220 + $0x160] sm:$0xff] %v309
                %v311 = vld [vmem:[%s219 + $0x2d0] sm:$0xff]
                %312 = vst [vmem:[%s220 + $0x168] sm:$0xff] %v311
                %v313 = vld [vmem:[%s219 + $0x2e0] sm:$0xff]
                %314 = vst [vmem:[%s220 + $0x170] sm:$0xff] %v313
                %v315 = vld [vmem:[%s219 + $0x2f0] sm:$0xff]
                %316 = vst [vmem:[%s220 + $0x178] sm:$0xff] %v315
                %v317 = vld [vmem:[%s219 + $0x300] sm:$0xff]
                %318 = vst [vmem:[%s220 + $0x180] sm:$0xff] %v317
                %v319 = vld [vmem:[%s219 + $0x310] sm:$0xff]
                %320 = vst [vmem:[%s220 + $0x188] sm:$0xff] %v319
                %v321 = vld [vmem:[%s219 + $0x320] sm:$0xff]
                %322 = vst [vmem:[%s220 + $0x190] sm:$0xff] %v321
                %v323 = vld [vmem:[%s219 + $0x330] sm:$0xff]
                %324 = vst [vmem:[%s220 + $0x198] sm:$0xff] %v323
                %v325 = vld [vmem:[%s219 + $0x340] sm:$0xff]
                %326 = vst [vmem:[%s220 + $0x1a0] sm:$0xff] %v325
                %v327 = vld [vmem:[%s219 + $0x350] sm:$0xff]
                %328 = vst [vmem:[%s220 + $0x1a8] sm:$0xff] %v327
                %v329 = vld [vmem:[%s219 + $0x360] sm:$0xff]
                %330 = vst [vmem:[%s220 + $0x1b0] sm:$0xff] %v329
                %v331 = vld [vmem:[%s219 + $0x370] sm:$0xff]
                %332 = vst [vmem:[%s220 + $0x1b8] sm:$0xff] %v331
                %v333 = vld [vmem:[%s219 + $0x380] sm:$0xff]
                %334 = vst [vmem:[%s220 + $0x1c0] sm:$0xff] %v333
                %v335 = vld [vmem:[%s219 + $0x390] sm:$0xff]
                %336 = vst [vmem:[%s220 + $0x1c8] sm:$0xff] %v335
                %v337 = vld [vmem:[%s219 + $0x3a0] sm:$0xff]
                %338 = vst [vmem:[%s220 + $0x1d0] sm:$0xff] %v337
                %v339 = vld [vmem:[%s219 + $0x3b0] sm:$0xff]
                %340 = vst [vmem:[%s220 + $0x1d8] sm:$0xff] %v339
                %v341 = vld [vmem:[%s219 + $0x3c0] sm:$0xff]
                %342 = vst [vmem:[%s220 + $0x1e0] sm:$0xff] %v341
                %v343 = vld [vmem:[%s219 + $0x3d0] sm:$0xff]
                %344 = vst [vmem:[%s220 + $0x1e8] sm:$0xff] %v343
                %v345 = vld [vmem:[%s219 + $0x3e0] sm:$0xff]
                %346 = vst [vmem:[%s220 + $0x1f0] sm:$0xff] %v345
                %v347 = vld [vmem:[%s219 + $0x3f0] sm:$0xff]
                %348 = vst [vmem:[%s220 + $0x1f8] sm:$0xff] %v347
              $region60: #{discriminator_sngan_forward.13} parent=54 // loop_footer
                %s218 = sadd.s32 1, %s214
              $region61: #{discriminator_sngan_forward.13} parent=54 // loop_footer_branch
                %213 = sbr.rel target = $region57
              $region62: #{discriminator_sngan_forward.13} parent=54 // loop_exit
                _
            $region55: #{discriminator_sngan_forward.13} parent=46 // pred_fallthru
              _
          $region47: #{discriminator_sngan_forward.13} parent=42 // pred_fallthru
            _
          %489 = vnop
        $region43: #{discriminator_sngan_forward.13} parent=15 // pred_fallthru
          _
        // Predicated region
        $region78: #{discriminator_sngan_forward.13} parent=15 // pred_check
          %p490 = pneg %p104
        $region79: #{discriminator_sngan_forward.13} parent=15 // pred_check_branch
          %492 = sbr.rel (%p490) target = $region81
        $region80: #{discriminator_sngan_forward.13} parent=15 // pred_region
          %s493 = smul.u32 2, %s17
          %p494 = scmp.lt.s32.totalorder %s493, 3
          %s495 = scalar_select %p494, %s493, 3
          %s496 = scalar_lea.vmem %s2, %s495
          %s497 = smul.u32 2, %s17
        $region81: #{discriminator_sngan_forward.13} parent=15 // pred_fallthru
          _
      $region16: #{discriminator_sngan_forward.13} parent=5 // pred_fallthru
        _
      %p498 = scmp.le.s32.totalorder 1, %s9
      %p499 = scmp.lt.s32.totalorder %s9, 19
      %p500 = pnand %p498, %p499
      %p501 = pneg %p500
      // Predicated region
      $region82: #{discriminator_sngan_forward.13} parent=5 // pred_check
        _
      $region83: #{discriminator_sngan_forward.13} parent=5 // pred_check_branch
        %503 = sbr.rel (%p500) target = $region85
      $region84: #{discriminator_sngan_forward.13} parent=5 // pred_region
        %s504 = ssub.s32 %s9, 1
        %s505 = sand.u32 %s43, 1
        %s506 = sand.u32 %s43, 1
        %s507 = smul.addr %s506, 32
        %s508 = scalar_lea.vmem [#allocation2], %s507
        // Predicated region
        $region86: #{discriminator_sngan_forward.13} parent=84 // pred_check
          %p509 = pneg %p56
        $region87: #{discriminator_sngan_forward.13} parent=84 // pred_check_branch
          %511 = sbr.rel (%p509) target = $region89
        $region88: #{discriminator_sngan_forward.13} parent=84 // pred_region
          _
        $region89: #{discriminator_sngan_forward.13} parent=84 // pred_fallthru
          _
        %s512 = sand.u32 %s71, 1
        %s513 = sand.u32 %s71, 1
        %s514 = smul.addr %s513, 512
        %s515 = scalar_lea.vmem [#allocation3], %s514
        // Predicated region
        $region90: #{discriminator_sngan_forward.13} parent=84 // pred_check
          %p516 = pneg %p84
        $region91: #{discriminator_sngan_forward.13} parent=84 // pred_check_branch
          %518 = sbr.rel (%p516) target = $region93
        $region92: #{discriminator_sngan_forward.13} parent=84 // pred_region
          _
        $region93: #{discriminator_sngan_forward.13} parent=84 // pred_fallthru
          _
        %s519 = sand.u32 %s43, 1
        %s520 = sand.u32 %s43, 1
        %s521 = smul.addr %s520, 32
        %s522 = scalar_lea.vmem [#allocation2], %s521
        %p523 = pneg %p56
        %p524 = pneg %p53
        %s525 = sand.u32 %s71, 1
        %s526 = sand.u32 %s71, 1
        %s527 = smul.addr %s526, 512
        %s528 = scalar_lea.vmem [#allocation3], %s527
        %p529 = pneg %p84
        %p530 = pneg %p81
        %s531 = smul.u32 2, %s20
        %p532 = scmp.lt.s32.totalorder %s531, 3
        %s533 = scalar_select %p532, %s531, 3
        %s534 = scalar_lea.vmem %s2, %s533
        %p535 = pneg %p110
        %p536 = pneg %p107
        %p537 = pneg %p138
        %p538 = pneg %p135
        %s539 = sand.u32 %s125, 1
        %s540 = sand.u32 %s125, 1
        %s541 = smul.addr %s540, 32
        %s542 = scalar_lea.vmem [#allocation4], %s541
        %s543 = smul.u32 2, %s19
        %s544 = smul.u32 4, %s21
        %s545 = smul.u32 64, %s21
        %s546 = smul.u32 2, %s20
        %s547 = smul.u32 2, %s20
        %p548 = scmp.lt.s32.totalorder %s547, 3
        %s549 = scalar_select %p548, %s547, 3
        %s550 = scalar_lea.vmem %s2, %s549
        %s551 = smul.u32 2, %s20
        %s552 = smul.u32 2, %s19
        %s553 = smul.u32 2, %s20
        %p554 = scmp.eq.s32.totalorder %s21, 0
        // Predicated region
        $region94: #{discriminator_sngan_forward.13} parent=84 // pred_check
          %p555 = pneg %p554
        $region95: #{discriminator_sngan_forward.13} parent=84 // pred_check_branch
          %557 = sbr.rel (%p555) target = $region97
        $region96: #{discriminator_sngan_forward.13} parent=84 // pred_region
          %558 = vst [vmem:[%s542] sm:$0xff] 0.0
          %559 = vst [vmem:[%s542 + $0x8] sm:$0xff] 0.0
          %560 = vst [vmem:[%s542 + $0x10] sm:$0xff] 0.0
          %561 = vst [vmem:[%s542 + $0x18] sm:$0xff] 0.0
        $region97: #{discriminator_sngan_forward.13} parent=84 // pred_fallthru
          _
        %v562 = vld [vmem:[%s542] sm:$0xff]
        %v563 = vld [vmem:[%s542 + $0x8] sm:$0xff]
        %v564 = vld [vmem:[%s542 + $0x10] sm:$0xff]
        %v565 = vld [vmem:[%s542 + $0x18] sm:$0xff]
        %v566 = vld [vmem:[%s508] sm:$0xff]
        %v567 = vld [vmem:[%s508 + $0x8] sm:$0xff]
        %v568 = vld [vmem:[%s508 + $0x10] sm:$0xff]
        %v569 = vld [vmem:[%s508 + $0x18] sm:$0xff]
        %v570 = vld [vmem:[%s515] sm:$0xff]
        %v571 = vld [vmem:[%s515 + $0x8] sm:$0xff]
        %v572 = vld [vmem:[%s515 + $0x10] sm:$0xff]
        %v573 = vld [vmem:[%s515 + $0x18] sm:$0xff]
        %v574 = vld [vmem:[%s515 + $0x20] sm:$0xff]
        %v575 = vld [vmem:[%s515 + $0x28] sm:$0xff]
        %v576 = vld [vmem:[%s515 + $0x30] sm:$0xff]
        %v577 = vld [vmem:[%s515 + $0x38] sm:$0xff]
        %v578 = vld [vmem:[%s515 + $0x40] sm:$0xff]
        %v579 = vld [vmem:[%s515 + $0x48] sm:$0xff]
        %v580 = vld [vmem:[%s515 + $0x50] sm:$0xff]
        %v581 = vld [vmem:[%s515 + $0x58] sm:$0xff]
        %v582 = vld [vmem:[%s515 + $0x60] sm:$0xff]
        %v583 = vld [vmem:[%s515 + $0x68] sm:$0xff]
        %v584 = vld [vmem:[%s515 + $0x70] sm:$0xff]
        %v585 = vld [vmem:[%s515 + $0x78] sm:$0xff]
        %v586 = vld [vmem:[%s515 + $0x80] sm:$0xff]
        %v587 = vld [vmem:[%s515 + $0x88] sm:$0xff]
        %v588 = vld [vmem:[%s515 + $0x90] sm:$0xff]
        %v589 = vld [vmem:[%s515 + $0x98] sm:$0xff]
        %v590 = vld [vmem:[%s515 + $0xa0] sm:$0xff]
        %v591 = vld [vmem:[%s515 + $0xa8] sm:$0xff]
        %v592 = vld [vmem:[%s515 + $0xb0] sm:$0xff]
        %v593 = vld [vmem:[%s515 + $0xb8] sm:$0xff]
        %v594 = vld [vmem:[%s515 + $0xc0] sm:$0xff]
        %v595 = vld [vmem:[%s515 + $0xc8] sm:$0xff]
        %v596 = vld [vmem:[%s515 + $0xd0] sm:$0xff]
        %v597 = vld [vmem:[%s515 + $0xd8] sm:$0xff]
        %v598 = vld [vmem:[%s515 + $0xe0] sm:$0xff]
        %v599 = vld [vmem:[%s515 + $0xe8] sm:$0xff]
        %v600 = vld [vmem:[%s515 + $0xf0] sm:$0xff]
        %v601 = vld [vmem:[%s515 + $0xf8] sm:$0xff]
        %v602 = vld [vmem:[%s515 + $0x100] sm:$0xff]
        %v603 = vld [vmem:[%s515 + $0x108] sm:$0xff]
        %v604 = vld [vmem:[%s515 + $0x110] sm:$0xff]
        %v605 = vld [vmem:[%s515 + $0x118] sm:$0xff]
        %v606 = vld [vmem:[%s515 + $0x120] sm:$0xff]
        %v607 = vld [vmem:[%s515 + $0x128] sm:$0xff]
        %v608 = vld [vmem:[%s515 + $0x130] sm:$0xff]
        %v609 = vld [vmem:[%s515 + $0x138] sm:$0xff]
        %v610 = vld [vmem:[%s515 + $0x140] sm:$0xff]
        %v611 = vld [vmem:[%s515 + $0x148] sm:$0xff]
        %v612 = vld [vmem:[%s515 + $0x150] sm:$0xff]
        %v613 = vld [vmem:[%s515 + $0x158] sm:$0xff]
        %v614 = vld [vmem:[%s515 + $0x160] sm:$0xff]
        %v615 = vld [vmem:[%s515 + $0x168] sm:$0xff]
        %v616 = vld [vmem:[%s515 + $0x170] sm:$0xff]
        %v617 = vld [vmem:[%s515 + $0x178] sm:$0xff]
        %v618 = vld [vmem:[%s515 + $0x180] sm:$0xff]
        %v619 = vld [vmem:[%s515 + $0x188] sm:$0xff]
        %v620 = vld [vmem:[%s515 + $0x190] sm:$0xff]
        %v621 = vld [vmem:[%s515 + $0x198] sm:$0xff]
        %v622 = vld [vmem:[%s515 + $0x1a0] sm:$0xff]
        %v623 = vld [vmem:[%s515 + $0x1a8] sm:$0xff]
        %v624 = vld [vmem:[%s515 + $0x1b0] sm:$0xff]
        %v625 = vld [vmem:[%s515 + $0x1b8] sm:$0xff]
        %v626 = vld [vmem:[%s515 + $0x1c0] sm:$0xff]
        %v627 = vld [vmem:[%s515 + $0x1c8] sm:$0xff]
        %v628 = vld [vmem:[%s515 + $0x1d0] sm:$0xff]
        %v629 = vld [vmem:[%s515 + $0x1d8] sm:$0xff]
        %v630 = vld [vmem:[%s515 + $0x1e0] sm:$0xff]
        %v631 = vld [vmem:[%s515 + $0x1e8] sm:$0xff]
        %v632 = vld [vmem:[%s515 + $0x1f0] sm:$0xff]
        %v633 = vld [vmem:[%s515 + $0x1f8] sm:$0xff]
        %v638 = vunpack.c.l.b16 %v566
        %v639 = vunpack.c.h.b16 %v566
        %v640 = vunpack.c.l.b16 %v567
        %v641 = vunpack.c.h.b16 %v567
        %v642 = vunpack.c.l.b16 %v568
        %v643 = vunpack.c.h.b16 %v568
        %v644 = vunpack.c.l.b16 %v569
        %v645 = vunpack.c.h.b16 %v569
        %v646 = vpack.c.b16 %v642, %v638
        %v647 = vpack.c.b16 %v643, %v639
        %v648 = vpack.c.b16 %v644, %v640
        %v649 = vpack.c.b16 %v645, %v641
        %v718 = vunpack.c.l.b16 %v570
        %v719 = vunpack.c.h.b16 %v570
        %v720 = vunpack.c.l.b16 %v571
        %v721 = vunpack.c.h.b16 %v571
        %v722 = vunpack.c.l.b16 %v572
        %v723 = vunpack.c.h.b16 %v572
        %v724 = vunpack.c.l.b16 %v573
        %v725 = vunpack.c.h.b16 %v573
        %v726 = vunpack.c.l.b16 %v574
        %v727 = vunpack.c.h.b16 %v574
        %v728 = vunpack.c.l.b16 %v575
        %v729 = vunpack.c.h.b16 %v575
        %v730 = vunpack.c.l.b16 %v576
        %v731 = vunpack.c.h.b16 %v576
        %v732 = vunpack.c.l.b16 %v577
        %v733 = vunpack.c.h.b16 %v577
        %v734 = vunpack.c.l.b16 %v578
        %v735 = vunpack.c.h.b16 %v578
        %v736 = vunpack.c.l.b16 %v579
        %v737 = vunpack.c.h.b16 %v579
        %v738 = vunpack.c.l.b16 %v580
        %v739 = vunpack.c.h.b16 %v580
        %v740 = vunpack.c.l.b16 %v581
        %v741 = vunpack.c.h.b16 %v581
        %v742 = vunpack.c.l.b16 %v582
        %v743 = vunpack.c.h.b16 %v582
        %v744 = vunpack.c.l.b16 %v583
        %v745 = vunpack.c.h.b16 %v583
        %v746 = vunpack.c.l.b16 %v584
        %v747 = vunpack.c.h.b16 %v584
        %v748 = vunpack.c.l.b16 %v585
        %v749 = vunpack.c.h.b16 %v585
        %v750 = vunpack.c.l.b16 %v586
        %v751 = vunpack.c.h.b16 %v586
        %v752 = vunpack.c.l.b16 %v587
        %v753 = vunpack.c.h.b16 %v587
        %v754 = vunpack.c.l.b16 %v588
        %v755 = vunpack.c.h.b16 %v588
        %v756 = vunpack.c.l.b16 %v589
        %v757 = vunpack.c.h.b16 %v589
        %v758 = vunpack.c.l.b16 %v590
        %v759 = vunpack.c.h.b16 %v590
        %v760 = vunpack.c.l.b16 %v591
        %v761 = vunpack.c.h.b16 %v591
        %v762 = vunpack.c.l.b16 %v592
        %v763 = vunpack.c.h.b16 %v592
        %v764 = vunpack.c.l.b16 %v593
        %v765 = vunpack.c.h.b16 %v593
        %v766 = vunpack.c.l.b16 %v594
        %v767 = vunpack.c.h.b16 %v594
        %v768 = vunpack.c.l.b16 %v595
        %v769 = vunpack.c.h.b16 %v595
        %v770 = vunpack.c.l.b16 %v596
        %v771 = vunpack.c.h.b16 %v596
        %v772 = vunpack.c.l.b16 %v597
        %v773 = vunpack.c.h.b16 %v597
        %v774 = vunpack.c.l.b16 %v598
        %v775 = vunpack.c.h.b16 %v598
        %v776 = vunpack.c.l.b16 %v599
        %v777 = vunpack.c.h.b16 %v599
        %v778 = vunpack.c.l.b16 %v600
        %v779 = vunpack.c.h.b16 %v600
        %v780 = vunpack.c.l.b16 %v601
        %v781 = vunpack.c.h.b16 %v601
        %v782 = vunpack.c.l.b16 %v602
        %v783 = vunpack.c.h.b16 %v602
        %v784 = vunpack.c.l.b16 %v603
        %v785 = vunpack.c.h.b16 %v603
        %v786 = vunpack.c.l.b16 %v604
        %v787 = vunpack.c.h.b16 %v604
        %v788 = vunpack.c.l.b16 %v605
        %v789 = vunpack.c.h.b16 %v605
        %v790 = vunpack.c.l.b16 %v606
        %v791 = vunpack.c.h.b16 %v606
        %v792 = vunpack.c.l.b16 %v607
        %v793 = vunpack.c.h.b16 %v607
        %v794 = vunpack.c.l.b16 %v608
        %v795 = vunpack.c.h.b16 %v608
        %v796 = vunpack.c.l.b16 %v609
        %v797 = vunpack.c.h.b16 %v609
        %v798 = vunpack.c.l.b16 %v610
        %v799 = vunpack.c.h.b16 %v610
        %v800 = vunpack.c.l.b16 %v611
        %v801 = vunpack.c.h.b16 %v611
        %v802 = vunpack.c.l.b16 %v612
        %v803 = vunpack.c.h.b16 %v612
        %v804 = vunpack.c.l.b16 %v613
        %v805 = vunpack.c.h.b16 %v613
        %v806 = vunpack.c.l.b16 %v614
        %v807 = vunpack.c.h.b16 %v614
        %v808 = vunpack.c.l.b16 %v615
        %v809 = vunpack.c.h.b16 %v615
        %v810 = vunpack.c.l.b16 %v616
        %v811 = vunpack.c.h.b16 %v616
        %v812 = vunpack.c.l.b16 %v617
        %v813 = vunpack.c.h.b16 %v617
        %v814 = vunpack.c.l.b16 %v618
        %v815 = vunpack.c.h.b16 %v618
        %v816 = vunpack.c.l.b16 %v619
        %v817 = vunpack.c.h.b16 %v619
        %v818 = vunpack.c.l.b16 %v620
        %v819 = vunpack.c.h.b16 %v620
        %v820 = vunpack.c.l.b16 %v621
        %v821 = vunpack.c.h.b16 %v621
        %v822 = vunpack.c.l.b16 %v622
        %v823 = vunpack.c.h.b16 %v622
        %v824 = vunpack.c.l.b16 %v623
        %v825 = vunpack.c.h.b16 %v623
        %v826 = vunpack.c.l.b16 %v624
        %v827 = vunpack.c.h.b16 %v624
        %v828 = vunpack.c.l.b16 %v625
        %v829 = vunpack.c.h.b16 %v625
        %v830 = vunpack.c.l.b16 %v626
        %v831 = vunpack.c.h.b16 %v626
        %v832 = vunpack.c.l.b16 %v627
        %v833 = vunpack.c.h.b16 %v627
        %v834 = vunpack.c.l.b16 %v628
        %v835 = vunpack.c.h.b16 %v628
        %v836 = vunpack.c.l.b16 %v629
        %v837 = vunpack.c.h.b16 %v629
        %v838 = vunpack.c.l.b16 %v630
        %v839 = vunpack.c.h.b16 %v630
        %v840 = vunpack.c.l.b16 %v631
        %v841 = vunpack.c.h.b16 %v631
        %v842 = vunpack.c.l.b16 %v632
        %v843 = vunpack.c.h.b16 %v632
        %v844 = vunpack.c.l.b16 %v633
        %v845 = vunpack.c.h.b16 %v633
        %v846 = vpack.c.b16 %v720, %v718
        %v847 = vpack.c.b16 %v721, %v719
        %v848 = vpack.c.b16 %v724, %v722
        %v849 = vpack.c.b16 %v725, %v723
        %v850 = vpack.c.b16 %v728, %v726
        %v851 = vpack.c.b16 %v729, %v727
        %v852 = vpack.c.b16 %v732, %v730
        %v853 = vpack.c.b16 %v733, %v731
        %v854 = vpack.c.b16 %v736, %v734
        %v855 = vpack.c.b16 %v737, %v735
        %v856 = vpack.c.b16 %v740, %v738
        %v857 = vpack.c.b16 %v741, %v739
        %v858 = vpack.c.b16 %v744, %v742
        %v859 = vpack.c.b16 %v745, %v743
        %v860 = vpack.c.b16 %v748, %v746
        %v861 = vpack.c.b16 %v749, %v747
        %v862 = vpack.c.b16 %v752, %v750
        %v863 = vpack.c.b16 %v753, %v751
        %v864 = vpack.c.b16 %v756, %v754
        %v865 = vpack.c.b16 %v757, %v755
        %v866 = vpack.c.b16 %v760, %v758
        %v867 = vpack.c.b16 %v761, %v759
        %v868 = vpack.c.b16 %v764, %v762
        %v869 = vpack.c.b16 %v765, %v763
        %v870 = vpack.c.b16 %v768, %v766
        %v871 = vpack.c.b16 %v769, %v767
        %v872 = vpack.c.b16 %v772, %v770
        %v873 = vpack.c.b16 %v773, %v771
        %v874 = vpack.c.b16 %v776, %v774
        %v875 = vpack.c.b16 %v777, %v775
        %v876 = vpack.c.b16 %v780, %v778
        %v877 = vpack.c.b16 %v781, %v779
        %v878 = vpack.c.b16 %v784, %v782
        %v879 = vpack.c.b16 %v785, %v783
        %v880 = vpack.c.b16 %v788, %v786
        %v881 = vpack.c.b16 %v789, %v787
        %v882 = vpack.c.b16 %v792, %v790
        %v883 = vpack.c.b16 %v793, %v791
        %v884 = vpack.c.b16 %v796, %v794
        %v885 = vpack.c.b16 %v797, %v795
        %v886 = vpack.c.b16 %v800, %v798
        %v887 = vpack.c.b16 %v801, %v799
        %v888 = vpack.c.b16 %v804, %v802
        %v889 = vpack.c.b16 %v805, %v803
        %v890 = vpack.c.b16 %v808, %v806
        %v891 = vpack.c.b16 %v809, %v807
        %v892 = vpack.c.b16 %v812, %v810
        %v893 = vpack.c.b16 %v813, %v811
        %v894 = vpack.c.b16 %v816, %v814
        %v895 = vpack.c.b16 %v817, %v815
        %v896 = vpack.c.b16 %v820, %v818
        %v897 = vpack.c.b16 %v821, %v819
        %v898 = vpack.c.b16 %v824, %v822
        %v899 = vpack.c.b16 %v825, %v823
        %v900 = vpack.c.b16 %v828, %v826
        %v901 = vpack.c.b16 %v829, %v827
        %v902 = vpack.c.b16 %v832, %v830
        %v903 = vpack.c.b16 %v833, %v831
        %v904 = vpack.c.b16 %v836, %v834
        %v905 = vpack.c.b16 %v837, %v835
        %v906 = vpack.c.b16 %v840, %v838
        %v907 = vpack.c.b16 %v841, %v839
        %v908 = vpack.c.b16 %v844, %v842
        %v909 = vpack.c.b16 %v845, %v843
        %974 = vmatprep.subr.bf16.mxu0 %v847
        %975 = vmatpush1.bf16.msra.mxu0 %v846
        %976 = vmatprep.subr.bf16.mxu0 %v849
        %977 = vmatpush1.bf16.msra.mxu0 %v848
        %978 = vmatprep.subr.bf16.mxu0 %v851
        %979 = vmatpush1.bf16.msra.mxu0 %v850
        %980 = vmatprep.subr.bf16.mxu0 %v853
        %981 = vmatpush1.bf16.msra.mxu0 %v852
        %982 = vmatprep.subr.bf16.mxu0 %v855
        %983 = vmatpush1.bf16.msra.mxu0 %v854
        %984 = vmatprep.subr.bf16.mxu0 %v857
        %985 = vmatpush1.bf16.msra.mxu0 %v856
        %986 = vmatprep.subr.bf16.mxu0 %v859
        %987 = vmatpush1.bf16.msra.mxu0 %v858
        %988 = vmatprep.subr.bf16.mxu0 %v861
        %989 = vmatpush1.bf16.msra.mxu0 %v860
        %990 = vmatprep.subr.bf16.mxu0 %v863
        %991 = vmatpush1.bf16.msra.mxu0 %v862
        %992 = vmatprep.subr.bf16.mxu0 %v865
        %993 = vmatpush1.bf16.msra.mxu0 %v864
        %994 = vmatprep.subr.bf16.mxu0 %v867
        %995 = vmatpush1.bf16.msra.mxu0 %v866
        %996 = vmatprep.subr.bf16.mxu0 %v869
        %997 = vmatpush1.bf16.msra.mxu0 %v868
        %998 = vmatprep.subr.bf16.mxu0 %v871
        %999 = vmatpush1.bf16.msra.mxu0 %v870
        %1000 = vmatprep.subr.bf16.mxu0 %v873
        %1001 = vmatpush1.bf16.msra.mxu0 %v872
        %1002 = vmatprep.subr.bf16.mxu0 %v875
        %1003 = vmatpush1.bf16.msra.mxu0 %v874
        %1004 = vmatprep.subr.bf16.mxu0 %v877
        %1005 = vmatpush1.bf16.msra.mxu0 %v876
        %1006 = vmatprep.mubr.bf16.mxu0 %v647
        %1007 = vmatmul.mubr.bf16.gmra.mrb[0].mxu0 %v646
        %v1008 = vpop.f32.mrb[0].mxu0
        %v1009 = vadd.f32 0.0, %v1008
        %v1010 = vpop.f32.mrb[0].mxu0
        %v1011 = vadd.f32 0.0, %v1010
        %v1012 = vpop.f32.mrb[0].mxu0
        %v1013 = vadd.f32 0.0, %v1012
        %v1014 = vpop.f32.mrb[0].mxu0
        %v1015 = vadd.f32 0.0, %v1014
        %1016 = vdwg.mxu0
        %1017 = vmatprep.subr.bf16.mxu0 %v879
        %1018 = vmatpush1.bf16.msra.mxu0 %v878
        %1019 = vmatprep.subr.bf16.mxu0 %v881
        %1020 = vmatpush1.bf16.msra.mxu0 %v880
        %1021 = vmatprep.subr.bf16.mxu0 %v883
        %1022 = vmatpush1.bf16.msra.mxu0 %v882
        %1023 = vmatprep.subr.bf16.mxu0 %v885
        %1024 = vmatpush1.bf16.msra.mxu0 %v884
        %1025 = vmatprep.subr.bf16.mxu0 %v887
        %1026 = vmatpush1.bf16.msra.mxu0 %v886
        %1027 = vmatprep.subr.bf16.mxu0 %v889
        %1028 = vmatpush1.bf16.msra.mxu0 %v888
        %1029 = vmatprep.subr.bf16.mxu0 %v891
        %1030 = vmatpush1.bf16.msra.mxu0 %v890
        %1031 = vmatprep.subr.bf16.mxu0 %v893
        %1032 = vmatpush1.bf16.msra.mxu0 %v892
        %1033 = vmatprep.subr.bf16.mxu0 %v895
        %1034 = vmatpush1.bf16.msra.mxu0 %v894
        %1035 = vmatprep.subr.bf16.mxu0 %v897
        %1036 = vmatpush1.bf16.msra.mxu0 %v896
        %1037 = vmatprep.subr.bf16.mxu0 %v899
        %1038 = vmatpush1.bf16.msra.mxu0 %v898
        %1039 = vmatprep.subr.bf16.mxu0 %v901
        %1040 = vmatpush1.bf16.msra.mxu0 %v900
        %1041 = vmatprep.subr.bf16.mxu0 %v903
        %1042 = vmatpush1.bf16.msra.mxu0 %v902
        %1043 = vmatprep.subr.bf16.mxu0 %v905
        %1044 = vmatpush1.bf16.msra.mxu0 %v904
        %1045 = vmatprep.subr.bf16.mxu0 %v907
        %1046 = vmatpush1.bf16.msra.mxu0 %v906
        %1047 = vmatprep.subr.bf16.mxu0 %v909
        %1048 = vmatpush1.bf16.msra.mxu0 %v908
        %1049 = vmatprep.mubr.bf16.mxu0 %v649
        %1050 = vmatmul.mubr.bf16.gmra.mrb[0].mxu0 %v648
        %v1051 = vpop.f32.mrb[0].mxu0
        %v1052 = vadd.f32 %v1009, %v1051
        %v1053 = vpop.f32.mrb[0].mxu0
        %v1054 = vadd.f32 %v1011, %v1053
        %v1055 = vpop.f32.mrb[0].mxu0
        %v1056 = vadd.f32 %v1013, %v1055
        %v1057 = vpop.f32.mrb[0].mxu0
        %v1058 = vadd.f32 %v1015, %v1057
        %1059 = vdwg.mxu0
        %v1060 = vadd.f32 %v562, %v1052
        %v1061 = vadd.f32 %v563, %v1054
        %v1062 = vadd.f32 %v564, %v1056
        %v1063 = vadd.f32 %v565, %v1058
        %1064 = vst [vmem:[%s542] sm:$0xff] %v1060
        %1065 = vst [vmem:[%s542 + $0x8] sm:$0xff] %v1061
        %1066 = vst [vmem:[%s542 + $0x10] sm:$0xff] %v1062
        %1067 = vst [vmem:[%s542 + $0x18] sm:$0xff] %v1063
        %p1068 = scmp.eq.s32.totalorder %s21, 8
        // Predicated region
        $region98: #{discriminator_sngan_forward.13} parent=84 // pred_check
          %p1069 = pneg %p1068
        $region99: #{discriminator_sngan_forward.13} parent=84 // pred_check_branch
          %1071 = sbr.rel (%p1069) target = $region101
        $region100: #{discriminator_sngan_forward.13} parent=84 // pred_region
          %v1072 = vld [vmem:[%s542] sm:$0xff]
          %v1073 = vld [vmem:[%s542 + $0x8] sm:$0xff]
          %v1074 = vld [vmem:[%s542 + $0x10] sm:$0xff]
          %v1075 = vld [vmem:[%s542 + $0x18] sm:$0xff]
          %v1076 = vld [vmem:[%s550] sm:$0x3]
          %v1078 = vlaneseq
          %v1079 = vshrl.u32 %v1078, 7
          %v1080 = vsub.s32 0, %v1079
          %v1081 = vrot.slane %v1076, %v1080
          %v1082 = vlaneseq
          %v1083 = vshrl.u32 %v1082, 7
          %v1084 = vsub.s32 1, %v1083
          %v1085 = vrot.slane %v1076, %v1084
          %v1088 = vadd.f32 %v1072, %v1081
          %v1089 = vadd.f32 %v1073, %v1085
          %v1090 = vadd.f32 %v1074, %v1081
          %v1091 = vadd.f32 %v1075, %v1085
          %vm1092 = vcmp.ge.f32.partialorder %v1088, 0.0
          %vm1093 = vcmp.ge.f32.partialorder %v1089, 0.0
          %vm1094 = vcmp.ge.f32.partialorder %v1090, 0.0
          %vm1095 = vcmp.ge.f32.partialorder %v1091, 0.0
          %v1096 = vmul.f32 %v1088, 0.1
          %v1097 = vmul.f32 %v1089, 0.1
          %v1098 = vmul.f32 %v1090, 0.1
          %v1099 = vmul.f32 %v1091, 0.1
          %v1100 = vsel %vm1092, %v1088, %v1096
          %v1101 = vsel %vm1093, %v1089, %v1097
          %v1102 = vsel %vm1094, %v1090, %v1098
          %v1103 = vsel %vm1095, %v1091, %v1099
          %1104 = vst [vmem:[%s542] sm:$0xff] %v1100
          %1105 = vst [vmem:[%s542 + $0x8] sm:$0xff] %v1101
          %1106 = vst [vmem:[%s542 + $0x10] sm:$0xff] %v1102
          %1107 = vst [vmem:[%s542 + $0x18] sm:$0xff] %v1103
        $region101: #{discriminator_sngan_forward.13} parent=84 // pred_fallthru
          _
        %s1108 = sand.u32 %s125, 1
        %s1109 = sand.u32 %s125, 1
        %s1110 = smul.addr %s1109, 32
        %s1111 = scalar_lea.vmem [#allocation4], %s1110
        // Predicated region
        $region102: #{discriminator_sngan_forward.13} parent=84 // pred_check
          %p1112 = pneg %p135
        $region103: #{discriminator_sngan_forward.13} parent=84 // pred_check_branch
          %1114 = sbr.rel (%p1112) target = $region105
        $region104: #{discriminator_sngan_forward.13} parent=84 // pred_region
          %s1115 = smul.u32 2, %s19
          %s1116 = smul.u32 2, %s20
          %s1117 = smul.addr %s1115, 4
          %s1118 = sadd.s32 %s1116, %s1117
          %s1119 = smul.addr %s1118, 8
          %s1120 = scalar_lea.vmem %s3, %s1119
          // Predicated region
          $region106: #{discriminator_sngan_forward.13} parent=104 // pred_check
            _
          $region107: #{discriminator_sngan_forward.13} parent=104 // pred_check_branch
            %1122 = sbr.rel (0) target = $region109
          $region108: #{discriminator_sngan_forward.13} parent=104 // pred_region
            // Predicated region
            $region110: #{discriminator_sngan_forward.13} parent=108 // pred_check
              _
            $region111: #{discriminator_sngan_forward.13} parent=108 // pred_check_branch
              %1124 = sbr.rel (0) target = $region113
            $region112: #{discriminator_sngan_forward.13} parent=108 // pred_region
              loop: start=0, step=1, limit=1
              $region114: #{discriminator_sngan_forward.13} parent=112 // loop_pre_header
                _
              $region115: #{discriminator_sngan_forward.13} parent=112 // loop_header
                %s1126 = sphi 0, %s1130
                %p1127 = scmp.ge.s32.totalorder %s1126, 1
                %s1131 = sphi %s1111, %s1111
                %s1132 = sphi %s1120, %s1120
              $region116: #{discriminator_sngan_forward.13} parent=112 // loop_header_branch
                %1129 = sbr.rel (%p1127) target = $region120
              $region117: #{discriminator_sngan_forward.13} parent=112 // loop_body
                %v1133 = vld [vmem:[%s1131] sm:$0xff]
                %1134 = vst [vmem:[%s1132] sm:$0xff] %v1133
                %v1135 = vld [vmem:[%s1131 + $0x8] sm:$0xff]
                %1136 = vst [vmem:[%s1132 + $0x8] sm:$0xff] %v1135
                %v1137 = vld [vmem:[%s1131 + $0x10] sm:$0xff]
                %1138 = vst [vmem:[%s1132 + $0x20] sm:$0xff] %v1137
                %v1139 = vld [vmem:[%s1131 + $0x18] sm:$0xff]
                %1140 = vst [vmem:[%s1132 + $0x28] sm:$0xff] %v1139
              $region118: #{discriminator_sngan_forward.13} parent=112 // loop_footer
                %s1130 = sadd.s32 1, %s1126
              $region119: #{discriminator_sngan_forward.13} parent=112 // loop_footer_branch
                %1125 = sbr.rel target = $region115
              $region120: #{discriminator_sngan_forward.13} parent=112 // loop_exit
                _
            $region113: #{discriminator_sngan_forward.13} parent=108 // pred_fallthru
              _
            // Predicated region
            $region121: #{discriminator_sngan_forward.13} parent=108 // pred_check
              _
            $region122: #{discriminator_sngan_forward.13} parent=108 // pred_check_branch
              %1142 = sbr.rel target = $region124
            $region123: #{discriminator_sngan_forward.13} parent=108 // pred_region
              _
            $region124: #{discriminator_sngan_forward.13} parent=108 // pred_fallthru
              _
          $region109: #{discriminator_sngan_forward.13} parent=104 // pred_fallthru
            _
          %1143 = vnop
        $region105: #{discriminator_sngan_forward.13} parent=84 // pred_fallthru
          _
      $region85: #{discriminator_sngan_forward.13} parent=5 // pred_fallthru
        _
      %p1144 = scmp.le.s32.totalorder 2, %s9
      // Predicated region
      $region125: #{discriminator_sngan_forward.13} parent=5 // pred_check
        %p1145 = pneg %p1144
      $region126: #{discriminator_sngan_forward.13} parent=5 // pred_check_branch
        %1147 = sbr.rel (%p1145) target = $region128
      $region127: #{discriminator_sngan_forward.13} parent=5 // pred_region
        %s1148 = ssub.s32 %s9, 2
        // Predicated region
        $region129: #{discriminator_sngan_forward.13} parent=127 // pred_check
          %p1149 = pneg %p141
        $region130: #{discriminator_sngan_forward.13} parent=127 // pred_check_branch
          %1151 = sbr.rel (%p1149) target = $region132
        $region131: #{discriminator_sngan_forward.13} parent=127 // pred_region
          %s1152 = sand.u32 %s126, 1
          %s1153 = sand.u32 %s126, 1
          %s1154 = smul.addr %s1153, 32
          %s1155 = scalar_lea.vmem [#allocation4], %s1154
        $region132: #{discriminator_sngan_forward.13} parent=127 // pred_fallthru
          _
      $region128: #{discriminator_sngan_forward.13} parent=5 // pred_fallthru
        _
    $region6: #{discriminator_sngan_forward.13} parent=1 // loop_footer
      %s13 = sadd.s32 1, %s9
    $region7: #{discriminator_sngan_forward.13} parent=1 // loop_footer_branch
      %8 = sbr.rel target = $region3
    $region8: #{discriminator_sngan_forward.13} parent=1 // loop_exit
      _

</llo_original>
